<compile_context>
chip_gen: v7x
topology: tpu7x:2x2x1
jax: 0.10.0
libtpu: 0.0.40
codegen_flags: <defaults>
</compile_context>

<pallas_src>
import functools

import jax
import jax.numpy as jnp
from jax.experimental import pallas as pl
from jax.experimental.pallas import tpu as pltpu

NEG_SLOPE = 0.01          # torch.nn.LeakyReLU default
BN_EPS = 1e-5             # torch.nn.BatchNorm2d default


def _default_vmem_limit():
    """~3/4 of physical VMEM per generation; conservative fallback (v7x-safe)."""
    try:
        cap = int(pltpu.get_tpu_info().vmem_capacity_bytes)
        return int(min(cap * 3 // 4, 100 * 1024 * 1024))
    except Exception:
        return 48 * 1024 * 1024


VMEM_LIMIT = _default_vmem_limit()


# ------------------------------ Pallas kernels ------------------------------ #

def _conv_bn_kernel(x_ref, ps_ref, pb_ref, w_ref, y_ref, sum_ref, ssq_ref,
                    pad_ref, col_ref, *, H, W, p, d, Cin, Cout, prev_bn, prev_act):
    """One image: [prev-block BN(+LeakyReLU)] -> zero-halo pad -> VMEM im2col ->
    single (H*W, 9*Cin) x (9*Cin, Cout) MXU GEMM (f32 acc) -> partial BN stats."""
    Hp = H + 2 * p
    Wp = W + 2 * p

    # Zero only the halo rows/columns; the interior is fully overwritten below.
    if p > 0:
        pad_ref[0:p, :, :] = jnp.zeros((p, Wp, Cin), pad_ref.dtype)
        pad_ref[p + H:Hp, :, :] = jnp.zeros((p, Wp, Cin), pad_ref.dtype)
        pad_ref[p:p + H, 0:p, :] = jnp.zeros((H, p, Cin), pad_ref.dtype)
        pad_ref[p:p + H, p + W:Wp, :] = jnp.zeros((H, p, Cin), pad_ref.dtype)

    # Previous block's BatchNorm + activation, fused into this block's load
    # (statically skipped for block 0 where it would be the identity).
    t = x_ref[0]                                           # (H, W, Cin) bf16
    if prev_bn:
        tf = t.astype(jnp.float32) * ps_ref[...] + pb_ref[...]
        if prev_act:
            tf = jnp.where(tf >= 0.0, tf, NEG_SLOPE * tf)
        t = tf.astype(pad_ref.dtype)
    pad_ref[p:p + H, p:p + W, :] = t

    # im2col in VMEM: col[h*W + w, (kh*3 + kw)*Cin + c] = pad[h + kh*d, w + kw*d, c]
    # (tap reshape keeps the minor dim, so it is a cheap leading-dim merge).
    for kh in range(3):
        for kw in range(3):
            tap = pad_ref[kh * d:kh * d + H, kw * d:kw * d + W, :]   # (H, W, Cin)
            t_idx = kh * 3 + kw
            col_ref[:, t_idx * Cin:(t_idx + 1) * Cin] = tap.reshape(H * W, Cin)

    # Single MXU GEMM, K = 9*Cin, bf16 operands, f32 accumulation.
    acc = jnp.dot(col_ref[...], w_ref[...], preferred_element_type=jnp.float32)
    y_ref[0] = acc.astype(y_ref.dtype)

    # Per-image partial BatchNorm statistics (reduced across the batch in JAX),
    # computed from the f32 accumulator.
    sum_ref[0] = jnp.sum(acc, axis=0, keepdims=True)
    ssq_ref[0] = jnp.sum(acc * acc, axis=0, keepdims=True)


def conv_block(x, prev_scale, prev_shift, w, *, padding, dilation, prev_bn, prev_act):
    """x: (B, H, W, Cin) bf16 NHWC.  w: (9*Cin, Cout) bf16.
    Returns raw conv output (B, H*W, Cout) bf16 plus per-image BN partial sums."""
    B, H, W, Cin = x.shape
    K, Cout = w.shape
    assert K == 9 * Cin
    assert padding == dilation, "shape-preserving 3x3 conv, as in ResConvLayer"
    p, dil = padding, dilation
    Hp, Wp = H + 2 * p, W + 2 * p

    kern = functools.partial(_conv_bn_kernel, H=H, W=W, p=p, d=dil, Cin=Cin,
                             Cout=Cout, prev_bn=prev_bn, prev_act=prev_act)
    return pl.pallas_call(
        kern,
        out_shape=(jax.ShapeDtypeStruct((B, H * W, Cout), jnp.bfloat16),
                   jax.ShapeDtypeStruct((B, 1, Cout), jnp.float32),
                   jax.ShapeDtypeStruct((B, 1, Cout), jnp.float32)),
        grid=(B,),
        in_specs=[pl.BlockSpec((1, H, W, Cin), lambda b: (b, 0, 0, 0)),
                  pl.BlockSpec((1, 1, Cin), lambda b: (0, 0, 0)),
                  pl.BlockSpec((1, 1, Cin), lambda b: (0, 0, 0)),
                  pl.BlockSpec((K, Cout), lambda b: (0, 0))],
        out_specs=(pl.BlockSpec((1, H * W, Cout), lambda b: (b, 0, 0)),
                   pl.BlockSpec((1, 1, Cout), lambda b: (b, 0, 0)),
                   pl.BlockSpec((1, 1, Cout), lambda b: (b, 0, 0))),
        scratch_shapes=[pltpu.VMEM((Hp, Wp, Cin), jnp.bfloat16),
                        pltpu.VMEM((H * W, 9 * Cin), jnp.bfloat16)],
        compiler_params=pltpu.CompilerParams(
            dimension_semantics=("parallel",),      # per-image outputs, no residents
            vmem_limit_bytes=VMEM_LIMIT),
    )(x, prev_scale, prev_shift, w)


def _bn_act_kernel(x_ref, s_ref, b_ref, o_ref, *, act):
    y = x_ref[...].astype(jnp.float32) * s_ref[...] + b_ref[...]
    if act:
        y = jnp.where(y >= 0.0, y, NEG_SLOPE * y)
    o_ref[...] = y.astype(o_ref.dtype)


def _row_tile(rows, lanes):
    budget = max((1 << 21) // max(lanes, 1), 8)     # ~8 MiB f32 output per block
    for cand in (4096, 2048, 1024, 512, 256, 128, 64, 32, 16, 8):
        if cand <= rows and cand <= budget and rows % cand == 0:
            return cand
    return rows


def bn_act_rows(y2d, scale_rows, shift_rows, *, act, out_dtype=jnp.float32):
    """Final block's BatchNorm (+ optional LeakyReLU) on the bf16 activation
    already laid out NCHW-flat as (B*C, H*W): lane-dense, per-row scale/shift."""
    rows, lanes = y2d.shape
    tm = _row_tile(rows, lanes)
    return pl.pallas_call(
        functools.partial(_bn_act_kernel, act=act),
        out_shape=jax.ShapeDtypeStruct((rows, lanes), out_dtype),
        grid=(rows // tm,),
        in_specs=[pl.BlockSpec((tm, lanes), lambda i: (i, 0)),
                  pl.BlockSpec((tm, 1), lambda i: (i, 0)),
                  pl.BlockSpec((tm, 1), lambda i: (i, 0))],
        out_specs=pl.BlockSpec((tm, lanes), lambda i: (i, 0)),
        compiler_params=pltpu.CompilerParams(
            dimension_semantics=("parallel",),
            vmem_limit_bytes=VMEM_LIMIT),
    )(y2d, scale_rows, shift_rows)


# -------------------------------- glue (JAX) -------------------------------- #

def res_conv_layer_forward(x_nchw, weights, configs):
    """ResConvLayer forward (training-mode BatchNorm with batch statistics).

    weights: tuple of (w (9*Cin, Cout) bf16, gamma (Cout,), beta (Cout,)).
    configs (static): tuple of (padding, dilation, has_activation) per block."""
    B, C0, H, W = x_nchw.shape
    h = jnp.transpose(x_nchw, (0, 2, 3, 1)).astype(jnp.bfloat16)     # NHWC bf16
    M = B * H * W

    scale = shift = None
    prev_act = False
    y = h.reshape(B, H * W, C0)
    Cout = C0
    for (w, gamma, beta), (pad_, dil, has_act) in zip(weights, configs):
        Cin = h.shape[-1]
        Cout = w.shape[1]
        if scale is None:                                 # block 0: no previous BN
            ps = jnp.zeros((1, 1, Cin), jnp.float32)
            pb = jnp.zeros((1, 1, Cin), jnp.float32)
            prev_bn = False
        else:
            ps = scale.reshape(1, 1, Cin)
            pb = shift.reshape(1, 1, Cin)
            prev_bn = True
        y, s, ss = conv_block(h, ps, pb, w, padding=pad_, dilation=dil,
                              prev_bn=prev_bn, prev_act=prev_act)
        mean = jnp.sum(s, axis=(0, 1)) / M
        var = jnp.maximum(jnp.sum(ss, axis=(0, 1)) / M - mean * mean, 0.0)
        scale = gamma * jax.lax.rsqrt(var + BN_EPS)
        shift = beta - mean * scale
        prev_act = has_act
        h = y.reshape(B, H, W, Cout)      # free row-major reshape of the HBM buffer

    # Final block's BN (+ activation if configured; ResConvLayer's last block has
    # none), fused with the NHWC->NCHW layout change: the transpose runs on bf16
    # and the BN pass writes the final f32 NCHW tensor directly (lanes = H*W).
    y_nchw = jnp.transpose(y, (0, 2, 1)).reshape(B * Cout, H * W)
    scale_rows = jnp.tile(scale, B).reshape(B * Cout, 1)
    shift_rows = jnp.tile(shift, B).reshape(B * Cout, 1)
    out = bn_act_rows(y_nchw, scale_rows, shift_rows, act=prev_act)
    return out.reshape(B, Cout, H, W)


def init_params(key, in_channels, out_channels, dilation, num_blocks=2):
    """Mirrors ResConvLayer's block structure (kaiming init replaced by scaled normal)."""
    assert num_blocks > 0
    if num_blocks == 1:
        cfg = [(in_channels, out_channels, dilation, dilation, False)]
    else:
        cfg = [(in_channels, out_channels, 1, 1, True)]
        cfg += [(out_channels, out_channels, dilation, dilation, True)] * (num_blocks - 2)
        cfg += [(out_channels, out_channels, dilation, dilation, False)]

    keys = jax.random.split(key, 3 * len(cfg))
    weights, configs = [], []
    for i, (cin, cout, pad, dil, act) in enumerate(cfg):
        kw_, kg, kb = keys[3 * i], keys[3 * i + 1], keys[3 * i + 2]
        w = jax.random.normal(kw_, (3, 3, cin, cout), jnp.float32) * 0.1
        gamma = 1.0 + 0.1 * jax.random.normal(kg, (cout,), jnp.float32)
        beta = 0.1 * jax.random.normal(kb, (cout,), jnp.float32)
        weights.append((w.reshape(9 * cin, cout).astype(jnp.bfloat16), gamma, beta))
        configs.append((pad, dil, act))
    return tuple(weights), tuple(configs)


def ref_forward(x_nchw, weights, configs):
    """Pure-JAX reference (f32 math, same bf16-rounded weights and input)."""
    h = jnp.transpose(x_nchw, (0, 2, 3, 1)).astype(jnp.bfloat16).astype(jnp.float32)
    for (w, gamma, beta), (pad_, dil, has_act) in zip(weights, configs):
        K, cout = w.shape
        cin = K // 9
        w4 = w.astype(jnp.float32).reshape(3, 3, cin, cout)
        y = jax.lax.conv_general_dilated(
            h, w4, window_strides=(1, 1), padding=((pad_, pad_), (pad_, pad_)),
            rhs_dilation=(dil, dil), dimension_numbers=("NHWC", "HWIO", "NHWC"))
        mean = y.mean(axis=(0, 1, 2))
        var = y.var(axis=(0, 1, 2))
        y = (y - mean) * jax.lax.rsqrt(var + BN_EPS) * gamma + beta
        if has_act:
            y = jnp.where(y >= 0, y, NEG_SLOPE * y)
        h = y
    return jnp.transpose(h, (0, 3, 1, 2))


if __name__ == "__main__":
    key = jax.random.PRNGKey(0)
    kx, kp = jax.random.split(key)

    B, Cin, H, W = 2, 4, 16, 16
    Cout, dilation = 32, 2

    x = jax.random.normal(kx, (B, Cin, H, W), jnp.float32)
    weights, configs = init_params(kp, Cin, Cout, dilation, num_blocks=2)

    fwd = jax.jit(res_conv_layer_forward, static_argnums=2)
    out = jax.block_until_ready(fwd(x, weights, configs))

    assert out.shape == (B, Cout, H, W), out.shape
    assert bool(jnp.isfinite(out).all())

    ref = ref_forward(x, weights, configs)
    max_err = float(jnp.max(jnp.abs(out - ref)))
    assert max_err < 0.2, f"max abs error vs reference: {max_err}"

    print("KERNEL_OK")
</pallas_src>

<mosaic_0001>
module attributes {stable_mosaic.version = 11 : i64} {
  func.func @_conv_bn_kernel(%arg0: i32, %arg1: memref<1x16x16x4xbf16, #tpu.memory_space<vmem>>, %arg2: memref<1x1x4xf32, #tpu.memory_space<vmem>>, %arg3: memref<1x1x4xf32, #tpu.memory_space<vmem>>, %arg4: memref<36x32xbf16, #tpu.memory_space<vmem>>, %arg5: memref<1x256x32xbf16, #tpu.memory_space<vmem>>, %arg6: memref<1x1x32xf32, #tpu.memory_space<vmem>>, %arg7: memref<1x1x32xf32, #tpu.memory_space<vmem>>, %arg8: memref<18x18x4xbf16, #tpu.memory_space<vmem>>, %arg9: memref<256x36xbf16, #tpu.memory_space<vmem>>) attributes {dimension_semantics = [#tpu.dimension_semantics<parallel>], iteration_bounds = array<i64: 2>, scalar_prefetch = 0 : i64, scratch_operands = 2 : i64, tpu.core_type = #tpu.core_type<tc>, window_params = [{transform_indices = @transform_0, window_bounds = array<i64: 1, 16, 16, 4>}, {pipeline_mode = #tpu.pipeline_mode<synchronous>, transform_indices = @transform_1, window_bounds = array<i64: 1, 1, 4>}, {pipeline_mode = #tpu.pipeline_mode<synchronous>, transform_indices = @transform_2, window_bounds = array<i64: 1, 1, 4>}, {pipeline_mode = #tpu.pipeline_mode<synchronous>, transform_indices = @transform_3, window_bounds = array<i64: 36, 32>}, {transform_indices = @transform_4, window_bounds = array<i64: 1, 256, 32>}, {transform_indices = @transform_5, window_bounds = array<i64: 1, 1, 32>}, {transform_indices = @transform_6, window_bounds = array<i64: 1, 1, 32>}]} {
    %cst = arith.constant 0.000000e+00 : bf16
    %0 = vector.broadcast %cst : bf16 to vector<1x18x4xbf16>
    %c0 = arith.constant 0 : index
    %c0_0 = arith.constant 0 : index
    %c0_1 = arith.constant 0 : index
    %1 = vector.load %arg8[%c0, %c0_0, %c0_1] : memref<18x18x4xbf16, #tpu.memory_space<vmem>>, vector<1x18x4xbf16>
    tpu.vector_store %arg8[%c0, %c0_0, %c0_1], %0 {strides = array<i32>} : memref<18x18x4xbf16, #tpu.memory_space<vmem>>, vector<1x18x4xbf16>,
    %cst_2 = arith.constant 0.000000e+00 : bf16
    %2 = vector.broadcast %cst_2 : bf16 to vector<1x18x4xbf16>
    %c17 = arith.constant 17 : index
    %c0_3 = arith.constant 0 : index
    %c0_4 = arith.constant 0 : index
    %3 = vector.load %arg8[%c17, %c0_3, %c0_4] : memref<18x18x4xbf16, #tpu.memory_space<vmem>>, vector<1x18x4xbf16>
    tpu.vector_store %arg8[%c17, %c0_3, %c0_4], %2 {strides = array<i32>} : memref<18x18x4xbf16, #tpu.memory_space<vmem>>, vector<1x18x4xbf16>,
    %cst_5 = arith.constant 0.000000e+00 : bf16
    %4 = vector.broadcast %cst_5 : bf16 to vector<16x1x4xbf16>
    %c1 = arith.constant 1 : index
    %c0_6 = arith.constant 0 : index
    %c0_7 = arith.constant 0 : index
    %5 = vector.load %arg8[%c1, %c0_6, %c0_7] : memref<18x18x4xbf16, #tpu.memory_space<vmem>>, vector<16x1x4xbf16>
    tpu.vector_store %arg8[%c1, %c0_6, %c0_7], %4 {strides = array<i32>} : memref<18x18x4xbf16, #tpu.memory_space<vmem>>, vector<16x1x4xbf16>,
    %cst_8 = arith.constant 0.000000e+00 : bf16
    %6 = vector.broadcast %cst_8 : bf16 to vector<16x1x4xbf16>
    %c1_9 = arith.constant 1 : index
    %c17_10 = arith.constant 17 : index
    %c0_11 = arith.constant 0 : index
    %7 = vector.load %arg8[%c1_9, %c17_10, %c0_11] : memref<18x18x4xbf16, #tpu.memory_space<vmem>>, vector<16x1x4xbf16>
    tpu.vector_store %arg8[%c1_9, %c17_10, %c0_11], %6 {strides = array<i32>} : memref<18x18x4xbf16, #tpu.memory_space<vmem>>, vector<16x1x4xbf16>,
    %c0_12 = arith.constant 0 : index
    %c0_13 = arith.constant 0 : index
    %c0_14 = arith.constant 0 : index
    %c0_15 = arith.constant 0 : index
    %8 = vector.load %arg1[%c0_12, %c0_13, %c0_14, %c0_15] : memref<1x16x16x4xbf16, #tpu.memory_space<vmem>>, vector<1x16x16x4xbf16>
    %9 = vector.shape_cast %8 : vector<1x16x16x4xbf16> to vector<16x16x4xbf16>
    %c1_16 = arith.constant 1 : index
    %c1_17 = arith.constant 1 : index
    %c0_18 = arith.constant 0 : index
    %10 = vector.load %arg8[%c1_16, %c1_17, %c0_18] : memref<18x18x4xbf16, #tpu.memory_space<vmem>>, vector<16x16x4xbf16>
    tpu.vector_store %arg8[%c1_16, %c1_17, %c0_18], %9 {strides = array<i32>} : memref<18x18x4xbf16, #tpu.memory_space<vmem>>, vector<16x16x4xbf16>,
    %c0_19 = arith.constant 0 : index
    %c0_20 = arith.constant 0 : index
    %c0_21 = arith.constant 0 : index
    %11 = vector.load %arg8[%c0_19, %c0_20, %c0_21] : memref<18x18x4xbf16, #tpu.memory_space<vmem>>, vector<16x16x4xbf16>
    %12 = vector.shape_cast %11 : vector<16x16x4xbf16> to vector<256x4xbf16>
    %c0_22 = arith.constant 0 : index
    %c0_23 = arith.constant 0 : index
    %13 = vector.load %arg9[%c0_22, %c0_23] : memref<256x36xbf16, #tpu.memory_space<vmem>>, vector<256x4xbf16>
    tpu.vector_store %arg9[%c0_22, %c0_23], %12 {strides = array<i32>} : memref<256x36xbf16, #tpu.memory_space<vmem>>, vector<256x4xbf16>,
    %c0_24 = arith.constant 0 : index
    %c1_25 = arith.constant 1 : index
    %c0_26 = arith.constant 0 : index
    %14 = vector.load %arg8[%c0_24, %c1_25, %c0_26] : memref<18x18x4xbf16, #tpu.memory_space<vmem>>, vector<16x16x4xbf16>
    %15 = vector.shape_cast %14 : vector<16x16x4xbf16> to vector<256x4xbf16>
    %c0_27 = arith.constant 0 : index
    %c4 = arith.constant 4 : index
    %16 = vector.load %arg9[%c0_27, %c4] : memref<256x36xbf16, #tpu.memory_space<vmem>>, vector<256x4xbf16>
    tpu.vector_store %arg9[%c0_27, %c4], %15 {strides = array<i32>} : memref<256x36xbf16, #tpu.memory_space<vmem>>, vector<256x4xbf16>,
    %c0_28 = arith.constant 0 : index
    %c2 = arith.constant 2 : index
    %c0_29 = arith.constant 0 : index
    %17 = vector.load %arg8[%c0_28, %c2, %c0_29] : memref<18x18x4xbf16, #tpu.memory_space<vmem>>, vector<16x16x4xbf16>
    %18 = vector.shape_cast %17 : vector<16x16x4xbf16> to vector<256x4xbf16>
    %c0_30 = arith.constant 0 : index
    %c8 = arith.constant 8 : index
    %19 = vector.load %arg9[%c0_30, %c8] : memref<256x36xbf16, #tpu.memory_space<vmem>>, vector<256x4xbf16>
    tpu.vector_store %arg9[%c0_30, %c8], %18 {strides = array<i32>} : memref<256x36xbf16, #tpu.memory_space<vmem>>, vector<256x4xbf16>,
    %c1_31 = arith.constant 1 : index
    %c0_32 = arith.constant 0 : index
    %c0_33 = arith.constant 0 : index
    %20 = vector.load %arg8[%c1_31, %c0_32, %c0_33] : memref<18x18x4xbf16, #tpu.memory_space<vmem>>, vector<16x16x4xbf16>
    %21 = vector.shape_cast %20 : vector<16x16x4xbf16> to vector<256x4xbf16>
    %c0_34 = arith.constant 0 : index
    %c12 = arith.constant 12 : index
    %22 = vector.load %arg9[%c0_34, %c12] : memref<256x36xbf16, #tpu.memory_space<vmem>>, vector<256x4xbf16>
    tpu.vector_store %arg9[%c0_34, %c12], %21 {strides = array<i32>} : memref<256x36xbf16, #tpu.memory_space<vmem>>, vector<256x4xbf16>,
    %c1_35 = arith.constant 1 : index
    %c1_36 = arith.constant 1 : index
    %c0_37 = arith.constant 0 : index
    %23 = vector.load %arg8[%c1_35, %c1_36, %c0_37] : memref<18x18x4xbf16, #tpu.memory_space<vmem>>, vector<16x16x4xbf16>
    %24 = vector.shape_cast %23 : vector<16x16x4xbf16> to vector<256x4xbf16>
    %c0_38 = arith.constant 0 : index
    %c16 = arith.constant 16 : index
    %25 = vector.load %arg9[%c0_38, %c16] : memref<256x36xbf16, #tpu.memory_space<vmem>>, vector<256x4xbf16>
    tpu.vector_store %arg9[%c0_38, %c16], %24 {strides = array<i32>} : memref<256x36xbf16, #tpu.memory_space<vmem>>, vector<256x4xbf16>,
    %c1_39 = arith.constant 1 : index
    %c2_40 = arith.constant 2 : index
    %c0_41 = arith.constant 0 : index
    %26 = vector.load %arg8[%c1_39, %c2_40, %c0_41] : memref<18x18x4xbf16, #tpu.memory_space<vmem>>, vector<16x16x4xbf16>
    %27 = vector.shape_cast %26 : vector<16x16x4xbf16> to vector<256x4xbf16>
    %c0_42 = arith.constant 0 : index
    %c20 = arith.constant 20 : index
    %28 = vector.load %arg9[%c0_42, %c20] : memref<256x36xbf16, #tpu.memory_space<vmem>>, vector<256x4xbf16>
    tpu.vector_store %arg9[%c0_42, %c20], %27 {strides = array<i32>} : memref<256x36xbf16, #tpu.memory_space<vmem>>, vector<256x4xbf16>,
    %c2_43 = arith.constant 2 : index
    %c0_44 = arith.constant 0 : index
    %c0_45 = arith.constant 0 : index
    %29 = vector.load %arg8[%c2_43, %c0_44, %c0_45] : memref<18x18x4xbf16, #tpu.memory_space<vmem>>, vector<16x16x4xbf16>
    %30 = vector.shape_cast %29 : vector<16x16x4xbf16> to vector<256x4xbf16>
    %c0_46 = arith.constant 0 : index
    %c24 = arith.constant 24 : index
    %31 = vector.load %arg9[%c0_46, %c24] : memref<256x36xbf16, #tpu.memory_space<vmem>>, vector<256x4xbf16>
    tpu.vector_store %arg9[%c0_46, %c24], %30 {strides = array<i32>} : memref<256x36xbf16, #tpu.memory_space<vmem>>, vector<256x4xbf16>,
    %c2_47 = arith.constant 2 : index
    %c1_48 = arith.constant 1 : index
    %c0_49 = arith.constant 0 : index
    %32 = vector.load %arg8[%c2_47, %c1_48, %c0_49] : memref<18x18x4xbf16, #tpu.memory_space<vmem>>, vector<16x16x4xbf16>
    %33 = vector.shape_cast %32 : vector<16x16x4xbf16> to vector<256x4xbf16>
    %c0_50 = arith.constant 0 : index
    %c28 = arith.constant 28 : index
    %34 = vector.load %arg9[%c0_50, %c28] : memref<256x36xbf16, #tpu.memory_space<vmem>>, vector<256x4xbf16>
    tpu.vector_store %arg9[%c0_50, %c28], %33 {strides = array<i32>} : memref<256x36xbf16, #tpu.memory_space<vmem>>, vector<256x4xbf16>,
    %c2_51 = arith.constant 2 : index
    %c2_52 = arith.constant 2 : index
    %c0_53 = arith.constant 0 : index
    %35 = vector.load %arg8[%c2_51, %c2_52, %c0_53] : memref<18x18x4xbf16, #tpu.memory_space<vmem>>, vector<16x16x4xbf16>
    %36 = vector.shape_cast %35 : vector<16x16x4xbf16> to vector<256x4xbf16>
    %c0_54 = arith.constant 0 : index
    %c32 = arith.constant 32 : index
    %37 = vector.load %arg9[%c0_54, %c32] : memref<256x36xbf16, #tpu.memory_space<vmem>>, vector<256x4xbf16>
    tpu.vector_store %arg9[%c0_54, %c32], %36 {strides = array<i32>} : memref<256x36xbf16, #tpu.memory_space<vmem>>, vector<256x4xbf16>,
    %c0_55 = arith.constant 0 : index
    %c0_56 = arith.constant 0 : index
    %38 = vector.load %arg9[%c0_55, %c0_56] : memref<256x36xbf16, #tpu.memory_space<vmem>>, vector<256x36xbf16>
    %c0_57 = arith.constant 0 : index
    %c0_58 = arith.constant 0 : index
    %39 = vector.load %arg4[%c0_57, %c0_58] : memref<36x32xbf16, #tpu.memory_space<vmem>>, vector<36x32xbf16>
    %cst_59 = arith.constant dense<0.000000e+00> : vector<256x32xf32>
    %40 = tpu.matmul %38, %39, %cst_59 {dimension_numbers = #tpu.dot_dimension_numbers<[1], [0], [0], [1], [0, 0, 1, 1], [], []>} : vector<256x36xbf16>, vector<36x32xbf16>, vector<256x32xf32> -> vector<256x32xf32>
    %41 = arith.truncf %40 : vector<256x32xf32> to vector<256x32xbf16>
    %c0_60 = arith.constant 0 : index
    %c0_61 = arith.constant 0 : index
    %c0_62 = arith.constant 0 : index
    %42 = vector.load %arg5[%c0_60, %c0_61, %c0_62] : memref<1x256x32xbf16, #tpu.memory_space<vmem>>, vector<1x256x32xbf16>
    %43 = vector.shape_cast %42 : vector<1x256x32xbf16> to vector<256x32xbf16>
    %44 = vector.shape_cast %41 : vector<256x32xbf16> to vector<1x256x32xbf16>
    tpu.vector_store %arg5[%c0_60, %c0_61, %c0_62], %44 {strides = array<i32>} : memref<1x256x32xbf16, #tpu.memory_space<vmem>>, vector<1x256x32xbf16>,
    %cst_63 = arith.constant dense<0.000000e+00> : vector<32xf32>
    %45 = vector.multi_reduction <add>, %40, %cst_63 [0] : vector<256x32xf32> to vector<32xf32>
    %46 = vector.shape_cast %45 : vector<32xf32> to vector<1x32xf32>
    %c0_64 = arith.constant 0 : index
    %c0_65 = arith.constant 0 : index
    %c0_66 = arith.constant 0 : index
    %47 = vector.load %arg6[%c0_64, %c0_65, %c0_66] : memref<1x1x32xf32, #tpu.memory_space<vmem>>, vector<1x1x32xf32>
    %48 = vector.shape_cast %47 : vector<1x1x32xf32> to vector<1x32xf32>
    %49 = vector.shape_cast %46 : vector<1x32xf32> to vector<1x1x32xf32>
    tpu.vector_store %arg6[%c0_64, %c0_65, %c0_66], %49 {strides = array<i32>} : memref<1x1x32xf32, #tpu.memory_space<vmem>>, vector<1x1x32xf32>,
    %50 = arith.mulf %40, %40 : vector<256x32xf32>
    %cst_67 = arith.constant dense<0.000000e+00> : vector<32xf32>
    %51 = vector.multi_reduction <add>, %50, %cst_67 [0] : vector<256x32xf32> to vector<32xf32>
    %52 = vector.shape_cast %51 : vector<32xf32> to vector<1x32xf32>
    %c0_68 = arith.constant 0 : index
    %c0_69 = arith.constant 0 : index
    %c0_70 = arith.constant 0 : index
    %53 = vector.load %arg7[%c0_68, %c0_69, %c0_70] : memref<1x1x32xf32, #tpu.memory_space<vmem>>, vector<1x1x32xf32>
    %54 = vector.shape_cast %53 : vector<1x1x32xf32> to vector<1x32xf32>
    %55 = vector.shape_cast %52 : vector<1x32xf32> to vector<1x1x32xf32>
    tpu.vector_store %arg7[%c0_68, %c0_69, %c0_70], %55 {strides = array<i32>} : memref<1x1x32xf32, #tpu.memory_space<vmem>>, vector<1x1x32xf32>,
    return
  }
  func.func @transform_0(%arg0: i32) -> (i32, i32, i32, i32) {
    %c0_i32 = arith.constant 0 : i32
    %c0_i32_0 = arith.constant 0 : i32
    %c0_i32_1 = arith.constant 0 : i32
    %c0_i32_2 = arith.constant 0 : i32
    return %arg0, %c0_i32, %c0_i32_0, %c0_i32_1 : i32, i32, i32, i32
  }
  func.func @transform_1(%arg0: i32) -> (i32, i32, i32) {
    %c0_i32 = arith.constant 0 : i32
    %c0_i32_0 = arith.constant 0 : i32
    %c0_i32_1 = arith.constant 0 : i32
    %c0_i32_2 = arith.constant 0 : i32
    return %c0_i32, %c0_i32_0, %c0_i32_1 : i32, i32, i32
  }
  func.func @transform_2(%arg0: i32) -> (i32, i32, i32) {
    %c0_i32 = arith.constant 0 : i32
    %c0_i32_0 = arith.constant 0 : i32
    %c0_i32_1 = arith.constant 0 : i32
    %c0_i32_2 = arith.constant 0 : i32
    return %c0_i32, %c0_i32_0, %c0_i32_1 : i32, i32, i32
  }
  func.func @transform_3(%arg0: i32) -> (i32, i32) {
    %c0_i32 = arith.constant 0 : i32
    %c0_i32_0 = arith.constant 0 : i32
    %c0_i32_1 = arith.constant 0 : i32
    return %c0_i32, %c0_i32_0 : i32, i32
  }
  func.func @transform_4(%arg0: i32) -> (i32, i32, i32) {
    %c0_i32 = arith.constant 0 : i32
    %c0_i32_0 = arith.constant 0 : i32
    %c0_i32_1 = arith.constant 0 : i32
    return %arg0, %c0_i32, %c0_i32_0 : i32, i32, i32
  }
  func.func @transform_5(%arg0: i32) -> (i32, i32, i32) {
    %c0_i32 = arith.constant 0 : i32
    %c0_i32_0 = arith.constant 0 : i32
    %c0_i32_1 = arith.constant 0 : i32
    return %arg0, %c0_i32, %c0_i32_0 : i32, i32, i32
  }
  func.func @transform_6(%arg0: i32) -> (i32, i32, i32) {
    %c0_i32 = arith.constant 0 : i32
    %c0_i32_0 = arith.constant 0 : i32
    %c0_i32_1 = arith.constant 0 : i32
    return %arg0, %c0_i32, %c0_i32_0 : i32, i32, i32
  }
}

module attributes {stable_mosaic.version = 11 : i64} {
  func.func @_conv_bn_kernel(%arg0: i32, %arg1: memref<1x16x16x32xbf16, #tpu.memory_space<vmem>>, %arg2: memref<1x1x32xf32, #tpu.memory_space<vmem>>, %arg3: memref<1x1x32xf32, #tpu.memory_space<vmem>>, %arg4: memref<288x32xbf16, #tpu.memory_space<vmem>>, %arg5: memref<1x256x32xbf16, #tpu.memory_space<vmem>>, %arg6: memref<1x1x32xf32, #tpu.memory_space<vmem>>, %arg7: memref<1x1x32xf32, #tpu.memory_space<vmem>>, %arg8: memref<20x20x32xbf16, #tpu.memory_space<vmem>>, %arg9: memref<256x288xbf16, #tpu.memory_space<vmem>>) attributes {dimension_semantics = [#tpu.dimension_semantics<parallel>], iteration_bounds = array<i64: 2>, scalar_prefetch = 0 : i64, scratch_operands = 2 : i64, tpu.core_type = #tpu.core_type<tc>, window_params = [{transform_indices = @transform_0, window_bounds = array<i64: 1, 16, 16, 32>}, {pipeline_mode = #tpu.pipeline_mode<synchronous>, transform_indices = @transform_1, window_bounds = array<i64: 1, 1, 32>}, {pipeline_mode = #tpu.pipeline_mode<synchronous>, transform_indices = @transform_2, window_bounds = array<i64: 1, 1, 32>}, {pipeline_mode = #tpu.pipeline_mode<synchronous>, transform_indices = @transform_3, window_bounds = array<i64: 288, 32>}, {transform_indices = @transform_4, window_bounds = array<i64: 1, 256, 32>}, {transform_indices = @transform_5, window_bounds = array<i64: 1, 1, 32>}, {transform_indices = @transform_6, window_bounds = array<i64: 1, 1, 32>}]} {
    %cst = arith.constant 0.000000e+00 : bf16
    %0 = vector.broadcast %cst : bf16 to vector<2x20x32xbf16>
    %c0 = arith.constant 0 : index
    %c0_0 = arith.constant 0 : index
    %c0_1 = arith.constant 0 : index
    %1 = vector.load %arg8[%c0, %c0_0, %c0_1] : memref<20x20x32xbf16, #tpu.memory_space<vmem>>, vector<2x20x32xbf16>
    tpu.vector_store %arg8[%c0, %c0_0, %c0_1], %0 {strides = array<i32>} : memref<20x20x32xbf16, #tpu.memory_space<vmem>>, vector<2x20x32xbf16>,
    %cst_2 = arith.constant 0.000000e+00 : bf16
    %2 = vector.broadcast %cst_2 : bf16 to vector<2x20x32xbf16>
    %c18 = arith.constant 18 : index
    %c0_3 = arith.constant 0 : index
    %c0_4 = arith.constant 0 : index
    %3 = vector.load %arg8[%c18, %c0_3, %c0_4] : memref<20x20x32xbf16, #tpu.memory_space<vmem>>, vector<2x20x32xbf16>
    tpu.vector_store %arg8[%c18, %c0_3, %c0_4], %2 {strides = array<i32>} : memref<20x20x32xbf16, #tpu.memory_space<vmem>>, vector<2x20x32xbf16>,
    %cst_5 = arith.constant 0.000000e+00 : bf16
    %4 = vector.broadcast %cst_5 : bf16 to vector<16x2x32xbf16>
    %c2 = arith.constant 2 : index
    %c0_6 = arith.constant 0 : index
    %c0_7 = arith.constant 0 : index
    %5 = vector.load %arg8[%c2, %c0_6, %c0_7] : memref<20x20x32xbf16, #tpu.memory_space<vmem>>, vector<16x2x32xbf16>
    tpu.vector_store %arg8[%c2, %c0_6, %c0_7], %4 {strides = array<i32>} : memref<20x20x32xbf16, #tpu.memory_space<vmem>>, vector<16x2x32xbf16>,
    %cst_8 = arith.constant 0.000000e+00 : bf16
    %6 = vector.broadcast %cst_8 : bf16 to vector<16x2x32xbf16>
    %c2_9 = arith.constant 2 : index
    %c18_10 = arith.constant 18 : index
    %c0_11 = arith.constant 0 : index
    %7 = vector.load %arg8[%c2_9, %c18_10, %c0_11] : memref<20x20x32xbf16, #tpu.memory_space<vmem>>, vector<16x2x32xbf16>
    tpu.vector_store %arg8[%c2_9, %c18_10, %c0_11], %6 {strides = array<i32>} : memref<20x20x32xbf16, #tpu.memory_space<vmem>>, vector<16x2x32xbf16>,
    %c0_12 = arith.constant 0 : index
    %c0_13 = arith.constant 0 : index
    %c0_14 = arith.constant 0 : index
    %c0_15 = arith.constant 0 : index
    %8 = vector.load %arg1[%c0_12, %c0_13, %c0_14, %c0_15] : memref<1x16x16x32xbf16, #tpu.memory_space<vmem>>, vector<1x16x16x32xbf16>
    %9 = vector.shape_cast %8 : vector<1x16x16x32xbf16> to vector<16x16x32xbf16>
    %10 = arith.extf %9 : vector<16x16x32xbf16> to vector<16x16x32xf32>
    %c0_16 = arith.constant 0 : index
    %c0_17 = arith.constant 0 : index
    %c0_18 = arith.constant 0 : index
    %11 = vector.load %arg2[%c0_16, %c0_17, %c0_18] : memref<1x1x32xf32, #tpu.memory_space<vmem>>, vector<1x1x32xf32>
    %12 = vector.broadcast %11 : vector<1x1x32xf32> to vector<16x16x32xf32>
    %13 = arith.mulf %10, %12 : vector<16x16x32xf32>
    %c0_19 = arith.constant 0 : index
    %c0_20 = arith.constant 0 : index
    %c0_21 = arith.constant 0 : index
    %14 = vector.load %arg3[%c0_19, %c0_20, %c0_21] : memref<1x1x32xf32, #tpu.memory_space<vmem>>, vector<1x1x32xf32>
    %15 = vector.broadcast %14 : vector<1x1x32xf32> to vector<16x16x32xf32>
    %16 = arith.addf %13, %15 : vector<16x16x32xf32>
    %cst_22 = arith.constant 0.000000e+00 : f32
    %17 = vector.broadcast %cst_22 : f32 to vector<16x16x32xf32>
    %18 = arith.cmpf oge, %16, %17 : vector<16x16x32xf32>
    %cst_23 = arith.constant 0.00999999977 : f32
    %19 = vector.broadcast %cst_23 : f32 to vector<16x16x32xf32>
    %20 = arith.mulf %19, %16 : vector<16x16x32xf32>
    %21 = arith.select %18, %16, %20 : vector<16x16x32xi1>, vector<16x16x32xf32>
    %22 = arith.truncf %21 : vector<16x16x32xf32> to vector<16x16x32xbf16>
    %c2_24 = arith.constant 2 : index
    %c2_25 = arith.constant 2 : index
    %c0_26 = arith.constant 0 : index
    %23 = vector.load %arg8[%c2_24, %c2_25, %c0_26] : memref<20x20x32xbf16, #tpu.memory_space<vmem>>, vector<16x16x32xbf16>
    tpu.vector_store %arg8[%c2_24, %c2_25, %c0_26], %22 {strides = array<i32>} : memref<20x20x32xbf16, #tpu.memory_space<vmem>>, vector<16x16x32xbf16>,
    %c0_27 = arith.constant 0 : index
    %c0_28 = arith.constant 0 : index
    %c0_29 = arith.constant 0 : index
    %24 = vector.load %arg8[%c0_27, %c0_28, %c0_29] : memref<20x20x32xbf16, #tpu.memory_space<vmem>>, vector<16x16x32xbf16>
    %25 = vector.shape_cast %24 : vector<16x16x32xbf16> to vector<256x32xbf16>
    %c0_30 = arith.constant 0 : index
    %c0_31 = arith.constant 0 : index
    %26 = vector.load %arg9[%c0_30, %c0_31] : memref<256x288xbf16, #tpu.memory_space<vmem>>, vector<256x32xbf16>
    tpu.vector_store %arg9[%c0_30, %c0_31], %25 {strides = array<i32>} : memref<256x288xbf16, #tpu.memory_space<vmem>>, vector<256x32xbf16>,
    %c0_32 = arith.constant 0 : index
    %c2_33 = arith.constant 2 : index
    %c0_34 = arith.constant 0 : index
    %27 = vector.load %arg8[%c0_32, %c2_33, %c0_34] : memref<20x20x32xbf16, #tpu.memory_space<vmem>>, vector<16x16x32xbf16>
    %28 = vector.shape_cast %27 : vector<16x16x32xbf16> to vector<256x32xbf16>
    %c0_35 = arith.constant 0 : index
    %c32 = arith.constant 32 : index
    %29 = vector.load %arg9[%c0_35, %c32] : memref<256x288xbf16, #tpu.memory_space<vmem>>, vector<256x32xbf16>
    tpu.vector_store %arg9[%c0_35, %c32], %28 {strides = array<i32>} : memref<256x288xbf16, #tpu.memory_space<vmem>>, vector<256x32xbf16>,
    %c0_36 = arith.constant 0 : index
    %c4 = arith.constant 4 : index
    %c0_37 = arith.constant 0 : index
    %30 = vector.load %arg8[%c0_36, %c4, %c0_37] : memref<20x20x32xbf16, #tpu.memory_space<vmem>>, vector<16x16x32xbf16>
    %31 = vector.shape_cast %30 : vector<16x16x32xbf16> to vector<256x32xbf16>
    %c0_38 = arith.constant 0 : index
    %c64 = arith.constant 64 : index
    %32 = vector.load %arg9[%c0_38, %c64] : memref<256x288xbf16, #tpu.memory_space<vmem>>, vector<256x32xbf16>
    tpu.vector_store %arg9[%c0_38, %c64], %31 {strides = array<i32>} : memref<256x288xbf16, #tpu.memory_space<vmem>>, vector<256x32xbf16>,
    %c2_39 = arith.constant 2 : index
    %c0_40 = arith.constant 0 : index
    %c0_41 = arith.constant 0 : index
    %33 = vector.load %arg8[%c2_39, %c0_40, %c0_41] : memref<20x20x32xbf16, #tpu.memory_space<vmem>>, vector<16x16x32xbf16>
    %34 = vector.shape_cast %33 : vector<16x16x32xbf16> to vector<256x32xbf16>
    %c0_42 = arith.constant 0 : index
    %c96 = arith.constant 96 : index
    %35 = vector.load %arg9[%c0_42, %c96] : memref<256x288xbf16, #tpu.memory_space<vmem>>, vector<256x32xbf16>
    tpu.vector_store %arg9[%c0_42, %c96], %34 {strides = array<i32>} : memref<256x288xbf16, #tpu.memory_space<vmem>>, vector<256x32xbf16>,
    %c2_43 = arith.constant 2 : index
    %c2_44 = arith.constant 2 : index
    %c0_45 = arith.constant 0 : index
    %36 = vector.load %arg8[%c2_43, %c2_44, %c0_45] : memref<20x20x32xbf16, #tpu.memory_space<vmem>>, vector<16x16x32xbf16>
    %37 = vector.shape_cast %36 : vector<16x16x32xbf16> to vector<256x32xbf16>
    %c0_46 = arith.constant 0 : index
    %c128 = arith.constant 128 : index
    %38 = vector.load %arg9[%c0_46, %c128] : memref<256x288xbf16, #tpu.memory_space<vmem>>, vector<256x32xbf16>
    tpu.vector_store %arg9[%c0_46, %c128], %37 {strides = array<i32>} : memref<256x288xbf16, #tpu.memory_space<vmem>>, vector<256x32xbf16>,
    %c2_47 = arith.constant 2 : index
    %c4_48 = arith.constant 4 : index
    %c0_49 = arith.constant 0 : index
    %39 = vector.load %arg8[%c2_47, %c4_48, %c0_49] : memref<20x20x32xbf16, #tpu.memory_space<vmem>>, vector<16x16x32xbf16>
    %40 = vector.shape_cast %39 : vector<16x16x32xbf16> to vector<256x32xbf16>
    %c0_50 = arith.constant 0 : index
    %c160 = arith.constant 160 : index
    %41 = vector.load %arg9[%c0_50, %c160] : memref<256x288xbf16, #tpu.memory_space<vmem>>, vector<256x32xbf16>
    tpu.vector_store %arg9[%c0_50, %c160], %40 {strides = array<i32>} : memref<256x288xbf16, #tpu.memory_space<vmem>>, vector<256x32xbf16>,
    %c4_51 = arith.constant 4 : index
    %c0_52 = arith.constant 0 : index
    %c0_53 = arith.constant 0 : index
    %42 = vector.load %arg8[%c4_51, %c0_52, %c0_53] : memref<20x20x32xbf16, #tpu.memory_space<vmem>>, vector<16x16x32xbf16>
    %43 = vector.shape_cast %42 : vector<16x16x32xbf16> to vector<256x32xbf16>
    %c0_54 = arith.constant 0 : index
    %c192 = arith.constant 192 : index
    %44 = vector.load %arg9[%c0_54, %c192] : memref<256x288xbf16, #tpu.memory_space<vmem>>, vector<256x32xbf16>
    tpu.vector_store %arg9[%c0_54, %c192], %43 {strides = array<i32>} : memref<256x288xbf16, #tpu.memory_space<vmem>>, vector<256x32xbf16>,
    %c4_55 = arith.constant 4 : index
    %c2_56 = arith.constant 2 : index
    %c0_57 = arith.constant 0 : index
    %45 = vector.load %arg8[%c4_55, %c2_56, %c0_57] : memref<20x20x32xbf16, #tpu.memory_space<vmem>>, vector<16x16x32xbf16>
    %46 = vector.shape_cast %45 : vector<16x16x32xbf16> to vector<256x32xbf16>
    %c0_58 = arith.constant 0 : index
    %c224 = arith.constant 224 : index
    %47 = vector.load %arg9[%c0_58, %c224] : memref<256x288xbf16, #tpu.memory_space<vmem>>, vector<256x32xbf16>
    tpu.vector_store %arg9[%c0_58, %c224], %46 {strides = array<i32>} : memref<256x288xbf16, #tpu.memory_space<vmem>>, vector<256x32xbf16>,
    %c4_59 = arith.constant 4 : index
    %c4_60 = arith.constant 4 : index
    %c0_61 = arith.constant 0 : index
    %48 = vector.load %arg8[%c4_59, %c4_60, %c0_61] : memref<20x20x32xbf16, #tpu.memory_space<vmem>>, vector<16x16x32xbf16>
    %49 = vector.shape_cast %48 : vector<16x16x32xbf16> to vector<256x32xbf16>
    %c0_62 = arith.constant 0 : index
    %c256 = arith.constant 256 : index
    %50 = vector.load %arg9[%c0_62, %c256] : memref<256x288xbf16, #tpu.memory_space<vmem>>, vector<256x32xbf16>
    tpu.vector_store %arg9[%c0_62, %c256], %49 {strides = array<i32>} : memref<256x288xbf16, #tpu.memory_space<vmem>>, vector<256x32xbf16>,
    %c0_63 = arith.constant 0 : index
    %c0_64 = arith.constant 0 : index
    %51 = vector.load %arg9[%c0_63, %c0_64] : memref<256x288xbf16, #tpu.memory_space<vmem>>, vector<256x288xbf16>
    %c0_65 = arith.constant 0 : index
    %c0_66 = arith.constant 0 : index
    %52 = vector.load %arg4[%c0_65, %c0_66] : memref<288x32xbf16, #tpu.memory_space<vmem>>, vector<288x32xbf16>
    %cst_67 = arith.constant dense<0.000000e+00> : vector<256x32xf32>
    %53 = tpu.matmul %51, %52, %cst_67 {dimension_numbers = #tpu.dot_dimension_numbers<[1], [0], [0], [1], [0, 0, 1, 1], [], []>} : vector<256x288xbf16>, vector<288x32xbf16>, vector<256x32xf32> -> vector<256x32xf32>
    %54 = arith.truncf %53 : vector<256x32xf32> to vector<256x32xbf16>
    %c0_68 = arith.constant 0 : index
    %c0_69 = arith.constant 0 : index
    %c0_70 = arith.constant 0 : index
    %55 = vector.load %arg5[%c0_68, %c0_69, %c0_70] : memref<1x256x32xbf16, #tpu.memory_space<vmem>>, vector<1x256x32xbf16>
    %56 = vector.shape_cast %55 : vector<1x256x32xbf16> to vector<256x32xbf16>
    %57 = vector.shape_cast %54 : vector<256x32xbf16> to vector<1x256x32xbf16>
    tpu.vector_store %arg5[%c0_68, %c0_69, %c0_70], %57 {strides = array<i32>} : memref<1x256x32xbf16, #tpu.memory_space<vmem>>, vector<1x256x32xbf16>,
    %cst_71 = arith.constant dense<0.000000e+00> : vector<32xf32>
    %58 = vector.multi_reduction <add>, %53, %cst_71 [0] : vector<256x32xf32> to vector<32xf32>
    %59 = vector.shape_cast %58 : vector<32xf32> to vector<1x32xf32>
    %c0_72 = arith.constant 0 : index
    %c0_73 = arith.constant 0 : index
    %c0_74 = arith.constant 0 : index
    %60 = vector.load %arg6[%c0_72, %c0_73, %c0_74] : memref<1x1x32xf32, #tpu.memory_space<vmem>>, vector<1x1x32xf32>
    %61 = vector.shape_cast %60 : vector<1x1x32xf32> to vector<1x32xf32>
    %62 = vector.shape_cast %59 : vector<1x32xf32> to vector<1x1x32xf32>
    tpu.vector_store %arg6[%c0_72, %c0_73, %c0_74], %62 {strides = array<i32>} : memref<1x1x32xf32, #tpu.memory_space<vmem>>, vector<1x1x32xf32>,
    %63 = arith.mulf %53, %53 : vector<256x32xf32>
    %cst_75 = arith.constant dense<0.000000e+00> : vector<32xf32>
    %64 = vector.multi_reduction <add>, %63, %cst_75 [0] : vector<256x32xf32> to vector<32xf32>
    %65 = vector.shape_cast %64 : vector<32xf32> to vector<1x32xf32>
    %c0_76 = arith.constant 0 : index
    %c0_77 = arith.constant 0 : index
    %c0_78 = arith.constant 0 : index
    %66 = vector.load %arg7[%c0_76, %c0_77, %c0_78] : memref<1x1x32xf32, #tpu.memory_space<vmem>>, vector<1x1x32xf32>
    %67 = vector.shape_cast %66 : vector<1x1x32xf32> to vector<1x32xf32>
    %68 = vector.shape_cast %65 : vector<1x32xf32> to vector<1x1x32xf32>
    tpu.vector_store %arg7[%c0_76, %c0_77, %c0_78], %68 {strides = array<i32>} : memref<1x1x32xf32, #tpu.memory_space<vmem>>, vector<1x1x32xf32>,
    return
  }
  func.func @transform_0(%arg0: i32) -> (i32, i32, i32, i32) {
    %c0_i32 = arith.constant 0 : i32
    %c0_i32_0 = arith.constant 0 : i32
    %c0_i32_1 = arith.constant 0 : i32
    %c0_i32_2 = arith.constant 0 : i32
    return %arg0, %c0_i32, %c0_i32_0, %c0_i32_1 : i32, i32, i32, i32
  }
  func.func @transform_1(%arg0: i32) -> (i32, i32, i32) {
    %c0_i32 = arith.constant 0 : i32
    %c0_i32_0 = arith.constant 0 : i32
    %c0_i32_1 = arith.constant 0 : i32
    %c0_i32_2 = arith.constant 0 : i32
    return %c0_i32, %c0_i32_0, %c0_i32_1 : i32, i32, i32
  }
  func.func @transform_2(%arg0: i32) -> (i32, i32, i32) {
    %c0_i32 = arith.constant 0 : i32
    %c0_i32_0 = arith.constant 0 : i32
    %c0_i32_1 = arith.constant 0 : i32
    %c0_i32_2 = arith.constant 0 : i32
    return %c0_i32, %c0_i32_0, %c0_i32_1 : i32, i32, i32
  }
  func.func @transform_3(%arg0: i32) -> (i32, i32) {
    %c0_i32 = arith.constant 0 : i32
    %c0_i32_0 = arith.constant 0 : i32
    %c0_i32_1 = arith.constant 0 : i32
    return %c0_i32, %c0_i32_0 : i32, i32
  }
  func.func @transform_4(%arg0: i32) -> (i32, i32, i32) {
    %c0_i32 = arith.constant 0 : i32
    %c0_i32_0 = arith.constant 0 : i32
    %c0_i32_1 = arith.constant 0 : i32
    return %arg0, %c0_i32, %c0_i32_0 : i32, i32, i32
  }
  func.func @transform_5(%arg0: i32) -> (i32, i32, i32) {
    %c0_i32 = arith.constant 0 : i32
    %c0_i32_0 = arith.constant 0 : i32
    %c0_i32_1 = arith.constant 0 : i32
    return %arg0, %c0_i32, %c0_i32_0 : i32, i32, i32
  }
  func.func @transform_6(%arg0: i32) -> (i32, i32, i32) {
    %c0_i32 = arith.constant 0 : i32
    %c0_i32_0 = arith.constant 0 : i32
    %c0_i32_1 = arith.constant 0 : i32
    return %arg0, %c0_i32, %c0_i32_0 : i32, i32, i32
  }
}

module attributes {stable_mosaic.version = 11 : i64} {
  func.func @_bn_act_kernel(%arg0: i32, %arg1: memref<64x256xbf16, #tpu.memory_space<vmem>>, %arg2: memref<64x1xf32, #tpu.memory_space<vmem>>, %arg3: memref<64x1xf32, #tpu.memory_space<vmem>>, %arg4: memref<64x256xf32, #tpu.memory_space<vmem>>) attributes {dimension_semantics = [#tpu.dimension_semantics<parallel>], iteration_bounds = array<i64: 1>, scalar_prefetch = 0 : i64, scratch_operands = 0 : i64, tpu.core_type = #tpu.core_type<tc>, window_params = [{transform_indices = @transform_0, window_bounds = array<i64: 64, 256>}, {transform_indices = @transform_1, window_bounds = array<i64: 64, 1>}, {transform_indices = @transform_2, window_bounds = array<i64: 64, 1>}, {transform_indices = @transform_3, window_bounds = array<i64: 64, 256>}]} {
    %c0 = arith.constant 0 : index
    %c0_0 = arith.constant 0 : index
    %0 = vector.load %arg1[%c0, %c0_0] : memref<64x256xbf16, #tpu.memory_space<vmem>>, vector<64x256xbf16>
    %1 = arith.extf %0 : vector<64x256xbf16> to vector<64x256xf32>
    %c0_1 = arith.constant 0 : index
    %c0_2 = arith.constant 0 : index
    %2 = vector.load %arg2[%c0_1, %c0_2] : memref<64x1xf32, #tpu.memory_space<vmem>>, vector<64x1xf32>
    %3 = vector.broadcast %2 : vector<64x1xf32> to vector<64x256xf32>
    %4 = arith.mulf %1, %3 : vector<64x256xf32>
    %c0_3 = arith.constant 0 : index
    %c0_4 = arith.constant 0 : index
    %5 = vector.load %arg3[%c0_3, %c0_4] : memref<64x1xf32, #tpu.memory_space<vmem>>, vector<64x1xf32>
    %6 = vector.broadcast %5 : vector<64x1xf32> to vector<64x256xf32>
    %7 = arith.addf %4, %6 : vector<64x256xf32>
    %c0_5 = arith.constant 0 : index
    %c0_6 = arith.constant 0 : index
    %8 = vector.load %arg4[%c0_5, %c0_6] : memref<64x256xf32, #tpu.memory_space<vmem>>, vector<64x256xf32>
    tpu.vector_store %arg4[%c0_5, %c0_6], %7 {strides = array<i32>} : memref<64x256xf32, #tpu.memory_space<vmem>>, vector<64x256xf32>,
    return
  }
  func.func @transform_0(%arg0: i32) -> (i32, i32) {
    %c0_i32 = arith.constant 0 : i32
    %c0_i32_0 = arith.constant 0 : i32
    return %arg0, %c0_i32 : i32, i32
  }
  func.func @transform_1(%arg0: i32) -> (i32, i32) {
    %c0_i32 = arith.constant 0 : i32
    %c0_i32_0 = arith.constant 0 : i32
    return %arg0, %c0_i32 : i32, i32
  }
  func.func @transform_2(%arg0: i32) -> (i32, i32) {
    %c0_i32 = arith.constant 0 : i32
    %c0_i32_0 = arith.constant 0 : i32
    return %arg0, %c0_i32 : i32, i32
  }
  func.func @transform_3(%arg0: i32) -> (i32, i32) {
    %c0_i32 = arith.constant 0 : i32
    %c0_i32_0 = arith.constant 0 : i32
    return %arg0, %c0_i32 : i32, i32
  }
}

</mosaic_0001>

<llo_original>
// kernel: tile.18
$region0: #{tile.18}
  #allocation0 [shape = 's32[1]{0}', space=sflag, size = 0x4, scoped, tag = 'scoped memory for tile.18']
  %s0 = inlined_call_operand.vmem [shape: f32[32], index: 0, kind: input, shape index: {}]
  %s1 = inlined_call_operand.vmem [shape: f32[2,32], index: 1, kind: output, shape index: {}]
  // Predicated region
  $region2: #{tile.18} parent=0 // pred_check
    _
  $region3: #{tile.18} parent=0 // pred_check_branch
    %3 = sbr.rel (0) target = $region5
  $region4: #{tile.18} parent=0 // pred_region
    _
  $region5: #{tile.18} parent=0 // pred_fallthru
    _
  %v4 = vld [vmem:[%s0] ss:$0 sm:$0xff]
  %5 = vst [vmem:[%s1] sm:$0x3] %v4

// kernel: tile.0
$region0: #{tile.0}
  %s0 = inlined_call_operand.vmem [shape: f32[2,32], index: 0, kind: input, shape index: {}]
  %s1 = inlined_call_operand.vmem [shape: f32[64,1], index: 1, kind: output, shape index: {}]
  $region1: #{tile.0} parent=0
    #allocation0 [shape = 'u8[4096]{0}', space=vmem, size = 0x1000, scoped, tag = 'scoped mem for input reshape']
    %s3 = sshllo.u32 0, 2
    %v4 = vld [vmem:[%s0] sm:%s3]
    %5 = vst [vmem:[#allocation0] sm:%s3] %v4
    %v6 = vld [vmem:[#allocation0] sm:$0x3]
    %vm7 = vcmask 7168
    %8 = vst.msk [vmem:[%s1] sm:$0x1] %vm7, %v6
    %s9 = scalar_lea.vmem %s1, 31
    %10 = vst.msk [vmem:[%s9] sm:$0x2] %vm7, %v6
    %v11 = vld [vmem:[#allocation0] sm:$0x3]
    %12 = vrot.lane.b32.xlu0 %v11, 127
    %v13 = vpop.permute.xlu0 %12
    %vm14 = vcmask 7168
    %s15 = scalar_lea.vmem %s1, 1
    %16 = vst.msk [vmem:[%s15] sm:$0x1] %vm14, %v13
    %s17 = scalar_lea.vmem %s1, 32
    %18 = vst.msk [vmem:[%s17] sm:$0x2] %vm14, %v13
    %v19 = vld [vmem:[#allocation0] sm:$0x3]
    %20 = vrot.lane.b32.xlu0 %v19, 126
    %v21 = vpop.permute.xlu0 %20
    %vm22 = vcmask 7168
    %s23 = scalar_lea.vmem %s1, 2
    %24 = vst.msk [vmem:[%s23] sm:$0x1] %vm22, %v21
    %s25 = scalar_lea.vmem %s1, 33
    %26 = vst.msk [vmem:[%s25] sm:$0x2] %vm22, %v21
    %v27 = vld [vmem:[#allocation0] sm:$0x3]
    %28 = vrot.lane.b32.xlu0 %v27, 125
    %v29 = vpop.permute.xlu0 %28
    %vm30 = vcmask 7168
    %s31 = scalar_lea.vmem %s1, 3
    %32 = vst.msk [vmem:[%s31] sm:$0x1] %vm30, %v29
    %s33 = scalar_lea.vmem %s1, 34
    %34 = vst.msk [vmem:[%s33] sm:$0x2] %vm30, %v29
    %v35 = vld [vmem:[#allocation0] sm:$0x3]
    %36 = vrot.lane.b32.xlu0 %v35, 124
    %v37 = vpop.permute.xlu0 %36
    %vm38 = vcmask 7168
    %s39 = scalar_lea.vmem %s1, 4
    %40 = vst.msk [vmem:[%s39] sm:$0x1] %vm38, %v37
    %s41 = scalar_lea.vmem %s1, 35
    %42 = vst.msk [vmem:[%s41] sm:$0x2] %vm38, %v37
    %v43 = vld [vmem:[#allocation0] sm:$0x3]
    %44 = vrot.lane.b32.xlu0 %v43, 123
    %v45 = vpop.permute.xlu0 %44
    %vm46 = vcmask 7168
    %s47 = scalar_lea.vmem %s1, 5
    %48 = vst.msk [vmem:[%s47] sm:$0x1] %vm46, %v45
    %s49 = scalar_lea.vmem %s1, 36
    %50 = vst.msk [vmem:[%s49] sm:$0x2] %vm46, %v45
    %v51 = vld [vmem:[#allocation0] sm:$0x3]
    %52 = vrot.lane.b32.xlu0 %v51, 122
    %v53 = vpop.permute.xlu0 %52
    %vm54 = vcmask 7168
    %s55 = scalar_lea.vmem %s1, 6
    %56 = vst.msk [vmem:[%s55] sm:$0x1] %vm54, %v53
    %s57 = scalar_lea.vmem %s1, 37
    %58 = vst.msk [vmem:[%s57] sm:$0x2] %vm54, %v53
    %v59 = vld [vmem:[#allocation0] sm:$0x3]
    %60 = vrot.lane.b32.xlu0 %v59, 121
    %v61 = vpop.permute.xlu0 %60
    %vm62 = vcmask 7168
    %s63 = scalar_lea.vmem %s1, 7
    %64 = vst.msk [vmem:[%s63] sm:$0x1] %vm62, %v61
    %s65 = scalar_lea.vmem %s1, 38
    %66 = vst.msk [vmem:[%s65] sm:$0x2] %vm62, %v61
    %v67 = vld [vmem:[#allocation0] sm:$0x3]
    %68 = vrot.lane.b32.xlu0 %v67, 120
    %v69 = vpop.permute.xlu0 %68
    %vm70 = vcmask 7168
    %s71 = scalar_lea.vmem %s1, 8
    %72 = vst.msk [vmem:[%s71] sm:$0x1] %vm70, %v69
    %s73 = scalar_lea.vmem %s1, 39
    %74 = vst.msk [vmem:[%s73] sm:$0x2] %vm70, %v69
    %v75 = vld [vmem:[#allocation0] sm:$0x3]
    %76 = vrot.lane.b32.xlu0 %v75, 119
    %v77 = vpop.permute.xlu0 %76
    %vm78 = vcmask 7168
    %s79 = scalar_lea.vmem %s1, 9
    %80 = vst.msk [vmem:[%s79] sm:$0x1] %vm78, %v77
    %s81 = scalar_lea.vmem %s1, 40
    %82 = vst.msk [vmem:[%s81] sm:$0x2] %vm78, %v77
    %v83 = vld [vmem:[#allocation0] sm:$0x3]
    %84 = vrot.lane.b32.xlu0 %v83, 118
    %v85 = vpop.permute.xlu0 %84
    %vm86 = vcmask 7168
    %s87 = scalar_lea.vmem %s1, 10
    %88 = vst.msk [vmem:[%s87] sm:$0x1] %vm86, %v85
    %s89 = scalar_lea.vmem %s1, 41
    %90 = vst.msk [vmem:[%s89] sm:$0x2] %vm86, %v85
    %v91 = vld [vmem:[#allocation0] sm:$0x3]
    %92 = vrot.lane.b32.xlu0 %v91, 117
    %v93 = vpop.permute.xlu0 %92
    %vm94 = vcmask 7168
    %s95 = scalar_lea.vmem %s1, 11
    %96 = vst.msk [vmem:[%s95] sm:$0x1] %vm94, %v93
    %s97 = scalar_lea.vmem %s1, 42
    %98 = vst.msk [vmem:[%s97] sm:$0x2] %vm94, %v93
    %v99 = vld [vmem:[#allocation0] sm:$0x3]
    %100 = vrot.lane.b32.xlu0 %v99, 116
    %v101 = vpop.permute.xlu0 %100
    %vm102 = vcmask 7168
    %s103 = scalar_lea.vmem %s1, 12
    %104 = vst.msk [vmem:[%s103] sm:$0x1] %vm102, %v101
    %s105 = scalar_lea.vmem %s1, 43
    %106 = vst.msk [vmem:[%s105] sm:$0x2] %vm102, %v101
    %v107 = vld [vmem:[#allocation0] sm:$0x3]
    %108 = vrot.lane.b32.xlu0 %v107, 115
    %v109 = vpop.permute.xlu0 %108
    %vm110 = vcmask 7168
    %s111 = scalar_lea.vmem %s1, 13
    %112 = vst.msk [vmem:[%s111] sm:$0x1] %vm110, %v109
    %s113 = scalar_lea.vmem %s1, 44
    %114 = vst.msk [vmem:[%s113] sm:$0x2] %vm110, %v109
    %v115 = vld [vmem:[#allocation0] sm:$0x3]
    %116 = vrot.lane.b32.xlu0 %v115, 114
    %v117 = vpop.permute.xlu0 %116
    %vm118 = vcmask 7168
    %s119 = scalar_lea.vmem %s1, 14
    %120 = vst.msk [vmem:[%s119] sm:$0x1] %vm118, %v117
    %s121 = scalar_lea.vmem %s1, 45
    %122 = vst.msk [vmem:[%s121] sm:$0x2] %vm118, %v117
    %v123 = vld [vmem:[#allocation0] sm:$0x3]
    %124 = vrot.lane.b32.xlu0 %v123, 113
    %v125 = vpop.permute.xlu0 %124
    %vm126 = vcmask 7168
    %s127 = scalar_lea.vmem %s1, 15
    %128 = vst.msk [vmem:[%s127] sm:$0x1] %vm126, %v125
    %s129 = scalar_lea.vmem %s1, 46
    %130 = vst.msk [vmem:[%s129] sm:$0x2] %vm126, %v125
    %v131 = vld [vmem:[#allocation0] sm:$0x3]
    %132 = vrot.lane.b32.xlu0 %v131, 112
    %v133 = vpop.permute.xlu0 %132
    %vm134 = vcmask 7168
    %s135 = scalar_lea.vmem %s1, 16
    %136 = vst.msk [vmem:[%s135] sm:$0x1] %vm134, %v133
    %s137 = scalar_lea.vmem %s1, 47
    %138 = vst.msk [vmem:[%s137] sm:$0x2] %vm134, %v133
    %v139 = vld [vmem:[#allocation0] sm:$0x3]
    %140 = vrot.lane.b32.xlu0 %v139, 111
    %v141 = vpop.permute.xlu0 %140
    %vm142 = vcmask 7168
    %s143 = scalar_lea.vmem %s1, 17
    %144 = vst.msk [vmem:[%s143] sm:$0x1] %vm142, %v141
    %s145 = scalar_lea.vmem %s1, 48
    %146 = vst.msk [vmem:[%s145] sm:$0x2] %vm142, %v141
    %v147 = vld [vmem:[#allocation0] sm:$0x3]
    %148 = vrot.lane.b32.xlu0 %v147, 110
    %v149 = vpop.permute.xlu0 %148
    %vm150 = vcmask 7168
    %s151 = scalar_lea.vmem %s1, 18
    %152 = vst.msk [vmem:[%s151] sm:$0x1] %vm150, %v149
    %s153 = scalar_lea.vmem %s1, 49
    %154 = vst.msk [vmem:[%s153] sm:$0x2] %vm150, %v149
    %v155 = vld [vmem:[#allocation0] sm:$0x3]
    %156 = vrot.lane.b32.xlu0 %v155, 109
    %v157 = vpop.permute.xlu0 %156
    %vm158 = vcmask 7168
    %s159 = scalar_lea.vmem %s1, 19
    %160 = vst.msk [vmem:[%s159] sm:$0x1] %vm158, %v157
    %s161 = scalar_lea.vmem %s1, 50
    %162 = vst.msk [vmem:[%s161] sm:$0x2] %vm158, %v157
    %v163 = vld [vmem:[#allocation0] sm:$0x3]
    %164 = vrot.lane.b32.xlu0 %v163, 108
    %v165 = vpop.permute.xlu0 %164
    %vm166 = vcmask 7168
    %s167 = scalar_lea.vmem %s1, 20
    %168 = vst.msk [vmem:[%s167] sm:$0x1] %vm166, %v165
    %s169 = scalar_lea.vmem %s1, 51
    %170 = vst.msk [vmem:[%s169] sm:$0x2] %vm166, %v165
    %v171 = vld [vmem:[#allocation0] sm:$0x3]
    %172 = vrot.lane.b32.xlu0 %v171, 107
    %v173 = vpop.permute.xlu0 %172
    %vm174 = vcmask 7168
    %s175 = scalar_lea.vmem %s1, 21
    %176 = vst.msk [vmem:[%s175] sm:$0x1] %vm174, %v173
    %s177 = scalar_lea.vmem %s1, 52
    %178 = vst.msk [vmem:[%s177] sm:$0x2] %vm174, %v173
    %v179 = vld [vmem:[#allocation0] sm:$0x3]
    %180 = vrot.lane.b32.xlu0 %v179, 106
    %v181 = vpop.permute.xlu0 %180
    %vm182 = vcmask 7168
    %s183 = scalar_lea.vmem %s1, 22
    %184 = vst.msk [vmem:[%s183] sm:$0x1] %vm182, %v181
    %s185 = scalar_lea.vmem %s1, 53
    %186 = vst.msk [vmem:[%s185] sm:$0x2] %vm182, %v181
    %v187 = vld [vmem:[#allocation0] sm:$0x3]
    %188 = vrot.lane.b32.xlu0 %v187, 105
    %v189 = vpop.permute.xlu0 %188
    %vm190 = vcmask 7168
    %s191 = scalar_lea.vmem %s1, 23
    %192 = vst.msk [vmem:[%s191] sm:$0x1] %vm190, %v189
    %s193 = scalar_lea.vmem %s1, 54
    %194 = vst.msk [vmem:[%s193] sm:$0x2] %vm190, %v189
    %v195 = vld [vmem:[#allocation0] sm:$0x3]
    %196 = vrot.lane.b32.xlu0 %v195, 104
    %v197 = vpop.permute.xlu0 %196
    %vm198 = vcmask 7168
    %s199 = scalar_lea.vmem %s1, 24
    %200 = vst.msk [vmem:[%s199] sm:$0x1] %vm198, %v197
    %s201 = scalar_lea.vmem %s1, 55
    %202 = vst.msk [vmem:[%s201] sm:$0x2] %vm198, %v197
    %v203 = vld [vmem:[#allocation0] sm:$0x3]
    %204 = vrot.lane.b32.xlu0 %v203, 103
    %v205 = vpop.permute.xlu0 %204
    %vm206 = vcmask 7168
    %s207 = scalar_lea.vmem %s1, 25
    %208 = vst.msk [vmem:[%s207] sm:$0x1] %vm206, %v205
    %s209 = scalar_lea.vmem %s1, 56
    %210 = vst.msk [vmem:[%s209] sm:$0x2] %vm206, %v205
    %v211 = vld [vmem:[#allocation0] sm:$0x3]
    %212 = vrot.lane.b32.xlu0 %v211, 102
    %v213 = vpop.permute.xlu0 %212
    %vm214 = vcmask 7168
    %s215 = scalar_lea.vmem %s1, 26
    %216 = vst.msk [vmem:[%s215] sm:$0x1] %vm214, %v213
    %s217 = scalar_lea.vmem %s1, 57
    %218 = vst.msk [vmem:[%s217] sm:$0x2] %vm214, %v213
    %v219 = vld [vmem:[#allocation0] sm:$0x3]
    %220 = vrot.lane.b32.xlu0 %v219, 101
    %v221 = vpop.permute.xlu0 %220
    %vm222 = vcmask 7168
    %s223 = scalar_lea.vmem %s1, 27
    %224 = vst.msk [vmem:[%s223] sm:$0x1] %vm222, %v221
    %s225 = scalar_lea.vmem %s1, 58
    %226 = vst.msk [vmem:[%s225] sm:$0x2] %vm222, %v221
    %v227 = vld [vmem:[#allocation0] sm:$0x3]
    %228 = vrot.lane.b32.xlu0 %v227, 100
    %v229 = vpop.permute.xlu0 %228
    %vm230 = vcmask 7168
    %s231 = scalar_lea.vmem %s1, 28
    %232 = vst.msk [vmem:[%s231] sm:$0x1] %vm230, %v229
    %s233 = scalar_lea.vmem %s1, 59
    %234 = vst.msk [vmem:[%s233] sm:$0x2] %vm230, %v229
    %v235 = vld [vmem:[#allocation0] sm:$0x3]
    %236 = vrot.lane.b32.xlu0 %v235, 99
    %v237 = vpop.permute.xlu0 %236
    %vm238 = vcmask 7168
    %s239 = scalar_lea.vmem %s1, 29
    %240 = vst.msk [vmem:[%s239] sm:$0x1] %vm238, %v237
    %s241 = scalar_lea.vmem %s1, 60
    %242 = vst.msk [vmem:[%s241] sm:$0x2] %vm238, %v237
    %v243 = vld [vmem:[#allocation0] sm:$0x3]
    %244 = vrot.lane.b32.xlu0 %v243, 98
    %v245 = vpop.permute.xlu0 %244
    %vm246 = vcmask 7168
    %s247 = scalar_lea.vmem %s1, 30
    %248 = vst.msk [vmem:[%s247] sm:$0x1] %vm246, %v245
    %s249 = scalar_lea.vmem %s1, 61
    %250 = vst.msk [vmem:[%s249] sm:$0x2] %vm246, %v245
    %v251 = vld [vmem:[#allocation0] sm:$0x3]
    %252 = vrot.lane.b32.xlu0 %v251, 97
    %v253 = vpop.permute.xlu0 %252
    %vm254 = vcmask 7168
    %s255 = scalar_lea.vmem %s1, 31
    %256 = vst.msk [vmem:[%s255] sm:$0x1] %vm254, %v253
    %s257 = scalar_lea.vmem %s1, 62
    %258 = vst.msk [vmem:[%s257] sm:$0x2] %vm254, %v253

// kernel: res_conv_layer_forward.5
$region0: #{res_conv_layer_forward.5}
  #allocation0 [shape = 'u32[]', space=smem, size = 0x4, offset = 0x4, fixed_abs, tag = 'smem constant byte address 0x4 - core index']
  #allocation1 [shape = 'u32[144,128]{1,0:T(1,128)}', space=vmem, size = 0x12000, scoped, tag = 'internal scratch']
  %s0 = inlined_call_operand.vmem [shape: bf16[64,256], index: 0, kind: input, shape index: {}]
  %s1 = inlined_call_operand.vmem [shape: f32[64,1], index: 1, kind: input, shape index: {}]
  %s2 = inlined_call_operand.vmem [shape: f32[64,1], index: 2, kind: input, shape index: {}]
  %s3 = inlined_call_operand.vmem [shape: f32[64,256], index: 3, kind: output, shape index: {}]
  %s4 = sld [smem:[#allocation0]]
  $region22: #{res_conv_layer_forward.5} parent=0
    _
  %s6 = ssub.s32 1, %s4
  %s7 = scalar_select 0, %s6, %s4
  // Predicated region
  $region2: #{res_conv_layer_forward.5} parent=0 // pred_check
    _
  $region3: #{res_conv_layer_forward.5} parent=0 // pred_check_branch
    %9 = sbr.rel (0) target = $region5
  $region4: #{res_conv_layer_forward.5} parent=0 // pred_region
    _
  $region5: #{res_conv_layer_forward.5} parent=0 // pred_fallthru
    _
  // Predicated region
  $region6: #{res_conv_layer_forward.5} parent=0 // pred_check
    _
  $region7: #{res_conv_layer_forward.5} parent=0 // pred_check_branch
    %11 = sbr.rel (0) target = $region9
  $region8: #{res_conv_layer_forward.5} parent=0 // pred_region
    _
  $region9: #{res_conv_layer_forward.5} parent=0 // pred_fallthru
    _
  // Predicated region
  $region10: #{res_conv_layer_forward.5} parent=0 // pred_check
    _
  $region11: #{res_conv_layer_forward.5} parent=0 // pred_check_branch
    %13 = sbr.rel (0) target = $region13
  $region12: #{res_conv_layer_forward.5} parent=0 // pred_region
    _
  $region13: #{res_conv_layer_forward.5} parent=0 // pred_fallthru
    _
  %v14 = vld [vmem:[%s0] sm:$0xff]
  %v15 = vld [vmem:[%s0 + $0x8] sm:$0xff]
  %v16 = vld [vmem:[%s0 + $0x10] sm:$0xff]
  %v17 = vld [vmem:[%s0 + $0x18] sm:$0xff]
  %v18 = vld [vmem:[%s0 + $0x20] sm:$0xff]
  %v19 = vld [vmem:[%s0 + $0x28] sm:$0xff]
  %v20 = vld [vmem:[%s0 + $0x30] sm:$0xff]
  %v21 = vld [vmem:[%s0 + $0x38] sm:$0xff]
  %v22 = vunpack.c.l.bf16 %v14
  %v23 = vunpack.c.h.bf16 %v14
  %v24 = vunpack.c.l.bf16 %v15
  %v25 = vunpack.c.h.bf16 %v15
  %v26 = vunpack.c.l.bf16 %v16
  %v27 = vunpack.c.h.bf16 %v16
  %v28 = vunpack.c.l.bf16 %v17
  %v29 = vunpack.c.h.bf16 %v17
  %v30 = vunpack.c.l.bf16 %v18
  %v31 = vunpack.c.h.bf16 %v18
  %v32 = vunpack.c.l.bf16 %v19
  %v33 = vunpack.c.h.bf16 %v19
  %v34 = vunpack.c.l.bf16 %v20
  %v35 = vunpack.c.h.bf16 %v20
  %v36 = vunpack.c.l.bf16 %v21
  %v37 = vunpack.c.h.bf16 %v21
  %v38 = vld [vmem:[%s1] sm:$0xff]
  %v39 = vld [vmem:[%s1 + $0x8] sm:$0xff]
  %v40 = vld [vmem:[%s1 + $0x10] sm:$0xff]
  %v41 = vld [vmem:[%s1 + $0x18] sm:$0xff]
  %v42 = vld [vmem:[%s1 + $0x20] sm:$0xff]
  %v43 = vld [vmem:[%s1 + $0x28] sm:$0xff]
  %v44 = vld [vmem:[%s1 + $0x30] sm:$0xff]
  %v45 = vld [vmem:[%s1 + $0x38] sm:$0xff]
  %47 = vset.pattern.permute.xlu0 0
  %48 = vperm.xlu0 %47, %v38
  %v49 = vpop.permute.xlu0 %48
  %52 = vset.pattern.permute.xlu0 0
  %53 = vperm.xlu0 %52, %v39
  %v54 = vpop.permute.xlu0 %53
  %57 = vset.pattern.permute.xlu0 0
  %58 = vperm.xlu0 %57, %v40
  %v59 = vpop.permute.xlu0 %58
  %62 = vset.pattern.permute.xlu0 0
  %63 = vperm.xlu0 %62, %v41
  %v64 = vpop.permute.xlu0 %63
  %67 = vset.pattern.permute.xlu0 0
  %68 = vperm.xlu0 %67, %v42
  %v69 = vpop.permute.xlu0 %68
  %72 = vset.pattern.permute.xlu0 0
  %73 = vperm.xlu0 %72, %v43
  %v74 = vpop.permute.xlu0 %73
  %77 = vset.pattern.permute.xlu0 0
  %78 = vperm.xlu0 %77, %v44
  %v79 = vpop.permute.xlu0 %78
  %82 = vset.pattern.permute.xlu0 0
  %83 = vperm.xlu0 %82, %v45
  %v84 = vpop.permute.xlu0 %83
  %v86 = vmul.f32 %v22, %v49
  %v87 = vmul.f32 %v23, %v49
  %v88 = vmul.f32 %v24, %v54
  %v89 = vmul.f32 %v25, %v54
  %v90 = vmul.f32 %v26, %v59
  %v91 = vmul.f32 %v27, %v59
  %v92 = vmul.f32 %v28, %v64
  %v93 = vmul.f32 %v29, %v64
  %v94 = vmul.f32 %v30, %v69
  %v95 = vmul.f32 %v31, %v69
  %v96 = vmul.f32 %v32, %v74
  %v97 = vmul.f32 %v33, %v74
  %v98 = vmul.f32 %v34, %v79
  %v99 = vmul.f32 %v35, %v79
  %v100 = vmul.f32 %v36, %v84
  %v101 = vmul.f32 %v37, %v84
  %v102 = vld [vmem:[%s2] sm:$0xff]
  %v103 = vld [vmem:[%s2 + $0x8] sm:$0xff]
  %v104 = vld [vmem:[%s2 + $0x10] sm:$0xff]
  %v105 = vld [vmem:[%s2 + $0x18] sm:$0xff]
  %v106 = vld [vmem:[%s2 + $0x20] sm:$0xff]
  %v107 = vld [vmem:[%s2 + $0x28] sm:$0xff]
  %v108 = vld [vmem:[%s2 + $0x30] sm:$0xff]
  %v109 = vld [vmem:[%s2 + $0x38] sm:$0xff]
  %111 = vset.pattern.permute.xlu0 0
  %112 = vperm.xlu0 %111, %v102
  %v113 = vpop.permute.xlu0 %112
  %116 = vset.pattern.permute.xlu0 0
  %117 = vperm.xlu0 %116, %v103
  %v118 = vpop.permute.xlu0 %117
  %121 = vset.pattern.permute.xlu0 0
  %122 = vperm.xlu0 %121, %v104
  %v123 = vpop.permute.xlu0 %122
  %126 = vset.pattern.permute.xlu0 0
  %127 = vperm.xlu0 %126, %v105
  %v128 = vpop.permute.xlu0 %127
  %131 = vset.pattern.permute.xlu0 0
  %132 = vperm.xlu0 %131, %v106
  %v133 = vpop.permute.xlu0 %132
  %136 = vset.pattern.permute.xlu0 0
  %137 = vperm.xlu0 %136, %v107
  %v138 = vpop.permute.xlu0 %137
  %141 = vset.pattern.permute.xlu0 0
  %142 = vperm.xlu0 %141, %v108
  %v143 = vpop.permute.xlu0 %142
  %146 = vset.pattern.permute.xlu0 0
  %147 = vperm.xlu0 %146, %v109
  %v148 = vpop.permute.xlu0 %147
  %v150 = vadd.f32 %v86, %v113
  %v151 = vadd.f32 %v87, %v113
  %v152 = vadd.f32 %v88, %v118
  %v153 = vadd.f32 %v89, %v118
  %v154 = vadd.f32 %v90, %v123
  %v155 = vadd.f32 %v91, %v123
  %v156 = vadd.f32 %v92, %v128
  %v157 = vadd.f32 %v93, %v128
  %v158 = vadd.f32 %v94, %v133
  %v159 = vadd.f32 %v95, %v133
  %v160 = vadd.f32 %v96, %v138
  %v161 = vadd.f32 %v97, %v138
  %v162 = vadd.f32 %v98, %v143
  %v163 = vadd.f32 %v99, %v143
  %v164 = vadd.f32 %v100, %v148
  %v165 = vadd.f32 %v101, %v148
  %166 = vst [vmem:[%s3] sm:$0xff] %v150
  %167 = vst [vmem:[%s3 + $0x8] sm:$0xff] %v151
  %168 = vst [vmem:[%s3 + $0x10] sm:$0xff] %v152
  %169 = vst [vmem:[%s3 + $0x18] sm:$0xff] %v153
  %170 = vst [vmem:[%s3 + $0x20] sm:$0xff] %v154
  %171 = vst [vmem:[%s3 + $0x28] sm:$0xff] %v155
  %172 = vst [vmem:[%s3 + $0x30] sm:$0xff] %v156
  %173 = vst [vmem:[%s3 + $0x38] sm:$0xff] %v157
  %174 = vst [vmem:[%s3 + $0x40] sm:$0xff] %v158
  %175 = vst [vmem:[%s3 + $0x48] sm:$0xff] %v159
  %176 = vst [vmem:[%s3 + $0x50] sm:$0xff] %v160
  %177 = vst [vmem:[%s3 + $0x58] sm:$0xff] %v161
  %178 = vst [vmem:[%s3 + $0x60] sm:$0xff] %v162
  %179 = vst [vmem:[%s3 + $0x68] sm:$0xff] %v163
  %180 = vst [vmem:[%s3 + $0x70] sm:$0xff] %v164
  %181 = vst [vmem:[%s3 + $0x78] sm:$0xff] %v165
  // Predicated region
  $region14: #{res_conv_layer_forward.5} parent=0 // pred_check
    _
  $region15: #{res_conv_layer_forward.5} parent=0 // pred_check_branch
    %183 = sbr.rel (0) target = $region17
  $region16: #{res_conv_layer_forward.5} parent=0 // pred_region
    _
  $region17: #{res_conv_layer_forward.5} parent=0 // pred_fallthru
    _
  // Predicated region
  $region18: #{res_conv_layer_forward.5} parent=0 // pred_check
    _
  $region19: #{res_conv_layer_forward.5} parent=0 // pred_check_branch
    %185 = sbr.rel (0) target = $region21
  $region20: #{res_conv_layer_forward.5} parent=0 // pred_region
    _
  $region21: #{res_conv_layer_forward.5} parent=0 // pred_fallthru
    _

// kernel: res_conv_layer_forward.4
$region0: #{res_conv_layer_forward.4}
  #allocation0 [shape = 'u32[]', space=smem, size = 0x4, offset = 0x4, fixed_abs, tag = 'smem constant byte address 0x4 - core index']
  #allocation1 [shape = 'u32[144,128]{1,0:T(1,128)}', space=vmem, size = 0x12000, scoped, tag = 'internal scratch']
  #allocation2 [shape = 'bf16[20,20,32]{2,1,0:T(8,128)(2,1)}', space=vmem, size = 0x1e000, scoped, tag = 'scratch operand']
  #allocation3 [shape = 'bf16[256,288]{1,0:T(16,128)(2,1)}', space=vmem, size = 0x30000, scoped, tag = 'scratch operand']
  %s0 = inlined_call_operand.vmem [shape: bf16[2,16,16,32], index: 0, kind: input, shape index: {}]
  %s1 = inlined_call_operand.vmem [shape: f32[1,1,32], index: 1, kind: input, shape index: {}]
  %s2 = inlined_call_operand.vmem [shape: f32[1,1,32], index: 2, kind: input, shape index: {}]
  %s3 = inlined_call_operand.vmem [shape: bf16[288,32], index: 3, kind: input, shape index: {}]
  %s4 = inlined_call_operand.vmem [shape: bf16[2,256,32], index: 4, kind: output, shape index: {0}]
  %s5 = inlined_call_operand.vmem [shape: f32[2,1,32], index: 5, kind: output, shape index: {1}]
  %s6 = inlined_call_operand.vmem [shape: f32[2,1,32], index: 6, kind: output, shape index: {2}]
  %7 = xla_tuple %s4, %s5, %s6
  %s8 = sld [smem:[#allocation0]]
  $region65: #{res_conv_layer_forward.4} parent=0
    _
  %s10 = ssub.s32 1, %s8
  %s11 = scalar_select 0, %s10, %s8
  loop: start=0, step=1, limit=4
  $region2: #{res_conv_layer_forward.4} parent=0 // loop_pre_header
    _
  $region3: #{res_conv_layer_forward.4} parent=0 // loop_header
    %s13 = sphi 0, %s17
    %p14 = scmp.ge.s32.totalorder %s13, 4
    %s23 = sphi 0, %s25
    %s26 = sphi 0, %s23
    %s27 = sphi 0, %s26
    %s43 = sphi 0, %s27
    %s47 = sphi 0, %s47
    %s49 = sphi 0, %s47
    %s50 = sphi 0, %s49
    %s64 = sphi 0, %s50
    %s68 = sphi 0, %s68
    %s70 = sphi 0, %s68
    %s71 = sphi 0, %s70
    %s85 = sphi 0, %s71
    %s89 = sphi 0, %s89
    %s91 = sphi 0, %s89
    %s92 = sphi 0, %s91
    %s106 = sphi 0, %s92
    %s112 = sphi 0, %s114
    %s115 = sphi 0, %s112
    %s116 = sphi 0, %s115
    %s132 = sphi 0, %s116
    %s138 = sphi 0, %s140
    %s141 = sphi 0, %s138
    %s142 = sphi 0, %s141
    %s158 = sphi 0, %s142
    %s164 = sphi 0, %s166
    %s167 = sphi 0, %s164
    %s168 = sphi 0, %s167
    %s184 = sphi 0, %s168
  $region4: #{res_conv_layer_forward.4} parent=0 // loop_header_branch
    %16 = sbr.rel (%p14) target = $region8
  $region5: #{res_conv_layer_forward.4} parent=0 // loop_body
    %s18 = ssub.s32 %s13, 1
    %s19 = ssub.s32 %s13, 2
    %s20 = sadd.s32 %s13, 1
    %s21 = ssub.s32 %s13, %s20
    %p22 = scmp.eq.s32.totalorder %s21, 0
    %s24 = sadd.s32 %s23, 1
    %s25 = scalar_select %p22, %s23, %s24
    %p28 = pneg %p22
    %p29 = scmp.eq.s32.totalorder %s13, 1
    %p30 = por %p28, %p29
    %p31 = scmp.ne.s32.totalorder %s23, %s26
    %p32 = scmp.eq.s32.totalorder %s13, 0
    %p33 = por %p31, %p32
    %p34 = scmp.ne.s32.totalorder %s23, %s26
    %p35 = scmp.eq.s32.totalorder %s18, 1
    %p36 = por %p34, %p35
    %p37 = scmp.ne.s32.totalorder %s26, %s27
    %p38 = scmp.eq.s32.totalorder %s18, 0
    %p39 = por %p37, %p38
    %p40 = scmp.ne.s32.totalorder %s26, %s27
    %p41 = scmp.eq.s32.totalorder %s19, 1
    %p42 = por %p40, %p41
    %p44 = scmp.ne.s32.totalorder %s27, %s43
    %p45 = scmp.eq.s32.totalorder %s19, 0
    %p46 = por %p44, %p45
    %s48 = sadd.s32 %s47, 1
    %p51 = scmp.eq.s32.totalorder %s13, 1
    %p52 = scmp.ne.s32.totalorder %s47, %s49
    %p53 = scmp.eq.s32.totalorder %s13, 0
    %p54 = por %p52, %p53
    %p55 = scmp.ne.s32.totalorder %s47, %s49
    %p56 = scmp.eq.s32.totalorder %s18, 1
    %p57 = por %p55, %p56
    %p58 = scmp.ne.s32.totalorder %s49, %s50
    %p59 = scmp.eq.s32.totalorder %s18, 0
    %p60 = por %p58, %p59
    %p61 = scmp.ne.s32.totalorder %s49, %s50
    %p62 = scmp.eq.s32.totalorder %s19, 1
    %p63 = por %p61, %p62
    %p65 = scmp.ne.s32.totalorder %s50, %s64
    %p66 = scmp.eq.s32.totalorder %s19, 0
    %p67 = por %p65, %p66
    %s69 = sadd.s32 %s68, 1
    %p72 = scmp.eq.s32.totalorder %s13, 1
    %p73 = scmp.ne.s32.totalorder %s68, %s70
    %p74 = scmp.eq.s32.totalorder %s13, 0
    %p75 = por %p73, %p74
    %p76 = scmp.ne.s32.totalorder %s68, %s70
    %p77 = scmp.eq.s32.totalorder %s18, 1
    %p78 = por %p76, %p77
    %p79 = scmp.ne.s32.totalorder %s70, %s71
    %p80 = scmp.eq.s32.totalorder %s18, 0
    %p81 = por %p79, %p80
    %p82 = scmp.ne.s32.totalorder %s70, %s71
    %p83 = scmp.eq.s32.totalorder %s19, 1
    %p84 = por %p82, %p83
    %p86 = scmp.ne.s32.totalorder %s71, %s85
    %p87 = scmp.eq.s32.totalorder %s19, 0
    %p88 = por %p86, %p87
    %s90 = sadd.s32 %s89, 1
    %p93 = scmp.eq.s32.totalorder %s13, 1
    %p94 = scmp.ne.s32.totalorder %s89, %s91
    %p95 = scmp.eq.s32.totalorder %s13, 0
    %p96 = por %p94, %p95
    %p97 = scmp.ne.s32.totalorder %s89, %s91
    %p98 = scmp.eq.s32.totalorder %s18, 1
    %p99 = por %p97, %p98
    %p100 = scmp.ne.s32.totalorder %s91, %s92
    %p101 = scmp.eq.s32.totalorder %s18, 0
    %p102 = por %p100, %p101
    %p103 = scmp.ne.s32.totalorder %s91, %s92
    %p104 = scmp.eq.s32.totalorder %s19, 1
    %p105 = por %p103, %p104
    %p107 = scmp.ne.s32.totalorder %s92, %s106
    %p108 = scmp.eq.s32.totalorder %s19, 0
    %p109 = por %p107, %p108
    %s110 = ssub.s32 %s13, %s20
    %p111 = scmp.eq.s32.totalorder %s110, 0
    %s113 = sadd.s32 %s112, 1
    %s114 = scalar_select %p111, %s112, %s113
    %p117 = pneg %p111
    %p118 = scmp.eq.s32.totalorder %s13, 1
    %p119 = por %p117, %p118
    %p120 = scmp.ne.s32.totalorder %s112, %s115
    %p121 = scmp.eq.s32.totalorder %s13, 0
    %p122 = por %p120, %p121
    %p123 = scmp.ne.s32.totalorder %s112, %s115
    %p124 = scmp.eq.s32.totalorder %s18, 1
    %p125 = por %p123, %p124
    %p126 = scmp.ne.s32.totalorder %s115, %s116
    %p127 = scmp.eq.s32.totalorder %s18, 0
    %p128 = por %p126, %p127
    %p129 = scmp.ne.s32.totalorder %s115, %s116
    %p130 = scmp.eq.s32.totalorder %s19, 1
    %p131 = por %p129, %p130
    %p133 = scmp.ne.s32.totalorder %s116, %s132
    %p134 = scmp.eq.s32.totalorder %s19, 0
    %p135 = por %p133, %p134
    %s136 = ssub.s32 %s13, %s20
    %p137 = scmp.eq.s32.totalorder %s136, 0
    %s139 = sadd.s32 %s138, 1
    %s140 = scalar_select %p137, %s138, %s139
    %p143 = pneg %p137
    %p144 = scmp.eq.s32.totalorder %s13, 1
    %p145 = por %p143, %p144
    %p146 = scmp.ne.s32.totalorder %s138, %s141
    %p147 = scmp.eq.s32.totalorder %s13, 0
    %p148 = por %p146, %p147
    %p149 = scmp.ne.s32.totalorder %s138, %s141
    %p150 = scmp.eq.s32.totalorder %s18, 1
    %p151 = por %p149, %p150
    %p152 = scmp.ne.s32.totalorder %s141, %s142
    %p153 = scmp.eq.s32.totalorder %s18, 0
    %p154 = por %p152, %p153
    %p155 = scmp.ne.s32.totalorder %s141, %s142
    %p156 = scmp.eq.s32.totalorder %s19, 1
    %p157 = por %p155, %p156
    %p159 = scmp.ne.s32.totalorder %s142, %s158
    %p160 = scmp.eq.s32.totalorder %s19, 0
    %p161 = por %p159, %p160
    %s162 = ssub.s32 %s13, %s20
    %p163 = scmp.eq.s32.totalorder %s162, 0
    %s165 = sadd.s32 %s164, 1
    %s166 = scalar_select %p163, %s164, %s165
    %p169 = pneg %p163
    %p170 = scmp.eq.s32.totalorder %s13, 1
    %p171 = por %p169, %p170
    %p172 = scmp.ne.s32.totalorder %s164, %s167
    %p173 = scmp.eq.s32.totalorder %s13, 0
    %p174 = por %p172, %p173
    %p175 = scmp.ne.s32.totalorder %s164, %s167
    %p176 = scmp.eq.s32.totalorder %s18, 1
    %p177 = por %p175, %p176
    %p178 = scmp.ne.s32.totalorder %s167, %s168
    %p179 = scmp.eq.s32.totalorder %s18, 0
    %p180 = por %p178, %p179
    %p181 = scmp.ne.s32.totalorder %s167, %s168
    %p182 = scmp.eq.s32.totalorder %s19, 1
    %p183 = por %p181, %p182
    %p185 = scmp.ne.s32.totalorder %s168, %s184
    %p186 = scmp.eq.s32.totalorder %s19, 0
    %p187 = por %p185, %p186
    %p188 = scmp.le.s32.totalorder 1, %s13
    %p189 = scmp.lt.s32.totalorder %s13, 3
    %p190 = pnand %p188, %p189
    %p191 = pneg %p190
    // Predicated region
    $region9: #{res_conv_layer_forward.4} parent=5 // pred_check
      _
    $region10: #{res_conv_layer_forward.4} parent=5 // pred_check_branch
      %193 = sbr.rel (%p190) target = $region12
    $region11: #{res_conv_layer_forward.4} parent=5 // pred_region
      %s194 = ssub.s32 %s13, 1
      // Predicated region
      $region13: #{res_conv_layer_forward.4} parent=11 // pred_check
        %p195 = pneg %p60
      $region14: #{res_conv_layer_forward.4} parent=11 // pred_check_branch
        %197 = sbr.rel (%p195) target = $region16
      $region15: #{res_conv_layer_forward.4} parent=11 // pred_region
        _
      $region16: #{res_conv_layer_forward.4} parent=11 // pred_fallthru
        _
      // Predicated region
      $region17: #{res_conv_layer_forward.4} parent=11 // pred_check
        %p198 = pneg %p81
      $region18: #{res_conv_layer_forward.4} parent=11 // pred_check_branch
        %200 = sbr.rel (%p198) target = $region20
      $region19: #{res_conv_layer_forward.4} parent=11 // pred_region
        _
      $region20: #{res_conv_layer_forward.4} parent=11 // pred_fallthru
        _
      // Predicated region
      $region21: #{res_conv_layer_forward.4} parent=11 // pred_check
        %p201 = pneg %p102
      $region22: #{res_conv_layer_forward.4} parent=11 // pred_check_branch
        %203 = sbr.rel (%p201) target = $region24
      $region23: #{res_conv_layer_forward.4} parent=11 // pred_region
        _
      $region24: #{res_conv_layer_forward.4} parent=11 // pred_fallthru
        _
    $region12: #{res_conv_layer_forward.4} parent=5 // pred_fallthru
      _
    %p204 = scmp.lt.s32.totalorder %s13, 2
    // Predicated region
    $region25: #{res_conv_layer_forward.4} parent=5 // pred_check
      %p205 = pneg %p204
    $region26: #{res_conv_layer_forward.4} parent=5 // pred_check_branch
      %207 = sbr.rel (%p205) target = $region28
    $region27: #{res_conv_layer_forward.4} parent=5 // pred_region
      // Predicated region
      $region29: #{res_conv_layer_forward.4} parent=27 // pred_check
        %p208 = pneg %p33
      $region30: #{res_conv_layer_forward.4} parent=27 // pred_check_branch
        %210 = sbr.rel (%p208) target = $region32
      $region31: #{res_conv_layer_forward.4} parent=27 // pred_region
        %p211 = scmp.lt.s32.totalorder %s13, 1
        %s212 = scalar_select %p211, %s13, 1
        %s213 = smul.addr %s212, 32
        %s214 = smul.addr %s213, 4
        %s215 = scalar_lea.vmem %s0, %s214
      $region32: #{res_conv_layer_forward.4} parent=27 // pred_fallthru
        _
    $region28: #{res_conv_layer_forward.4} parent=5 // pred_fallthru
      _
    %p216 = scmp.le.s32.totalorder 1, %s13
    %p217 = scmp.lt.s32.totalorder %s13, 3
    %p218 = pnand %p216, %p217
    %p219 = pneg %p218
    // Predicated region
    $region33: #{res_conv_layer_forward.4} parent=5 // pred_check
      _
    $region34: #{res_conv_layer_forward.4} parent=5 // pred_check_branch
      %221 = sbr.rel (%p218) target = $region36
    $region35: #{res_conv_layer_forward.4} parent=5 // pred_region
      %s222 = ssub.s32 %s13, 1
      %p223 = scmp.lt.s32.totalorder %s18, 1
      %s224 = scalar_select %p223, %s18, 1
      %s225 = smul.addr %s224, 32
      %s226 = smul.addr %s225, 4
      %s227 = scalar_lea.vmem %s0, %s226
      %p228 = pneg %p39
      %p229 = pneg %p36
      %p230 = pneg %p60
      %p231 = pneg %p57
      %p232 = pneg %p81
      %p233 = pneg %p78
      %p234 = pneg %p102
      %p235 = pneg %p99
      %p236 = pneg %p128
      %p237 = pneg %p125
      %p238 = scmp.lt.s32.totalorder %s18, 1
      %s239 = scalar_select %p238, %s18, 1
      %s240 = smul.addr %s239, 32
      %s241 = smul.addr %s240, 4
      %s242 = scalar_lea.vmem %s4, %s241
      %p243 = pneg %p154
      %p244 = pneg %p151
      %p245 = scmp.lt.s32.totalorder %s18, 1
      %s246 = scalar_select %p245, %s18, 1
      %s247 = scalar_lea.vmem %s5, %s246
      %p248 = pneg %p180
      %p249 = pneg %p177
      %p250 = scmp.lt.s32.totalorder %s18, 1
      %s251 = scalar_select %p250, %s18, 1
      %s252 = scalar_lea.vmem %s6, %s251
      %p253 = scmp.lt.s32.totalorder %s18, 1
      %s254 = scalar_select %p253, %s18, 1
      %s255 = smul.addr %s254, 32
      %s256 = smul.addr %s255, 4
      %s257 = scalar_lea.vmem %s0, %s256
      %p258 = scmp.lt.s32.totalorder %s18, 1
      %s259 = scalar_select %p258, %s18, 1
      %s260 = smul.addr %s259, 32
      %s261 = smul.addr %s260, 4
      %s262 = scalar_lea.vmem %s4, %s261
      %p263 = scmp.lt.s32.totalorder %s18, 1
      %s264 = scalar_select %p263, %s18, 1
      %s265 = scalar_lea.vmem %s5, %s264
      %p266 = scmp.lt.s32.totalorder %s18, 1
      %s267 = scalar_select %p266, %s18, 1
      %s268 = scalar_lea.vmem %s6, %s267
      %vm270 = vcmask 257024
      %271 = vst.msk [vmem:[#allocation2] sm:$0xf] %vm270, 0
      %272 = vst.msk [vmem:[#allocation2 + $0x4] sm:$0xf] %vm270, 0
      %vm273 = vcmask 254976
      %274 = vst.msk [vmem:[#allocation2 + $0x8] sm:$0x3] %vm273, 0
      %275 = vst.msk [vmem:[#allocation2 + $0xc] sm:$0xf] %vm270, 0
      %276 = vst.msk [vmem:[#allocation2 + $0x10] sm:$0xf] %vm270, 0
      %277 = vst.msk [vmem:[#allocation2 + $0x14] sm:$0x3] %vm273, 0
      %s278 = scalar_lea.vmem [#allocation2], 216
      %279 = vst.msk [vmem:[%s278] sm:$0xf] %vm270, 0
      %280 = vst.msk [vmem:[%s278 + $0x4] sm:$0xf] %vm270, 0
      %281 = vst.msk [vmem:[%s278 + $0x8] sm:$0x3] %vm273, 0
      %282 = vst.msk [vmem:[%s278 + $0xc] sm:$0xf] %vm270, 0
      %283 = vst.msk [vmem:[%s278 + $0x10] sm:$0xf] %vm270, 0
      %284 = vst.msk [vmem:[%s278 + $0x14] sm:$0x3] %vm273, 0
      %s285 = scalar_lea.vmem [#allocation2], 24
      %vm286 = vcmask 253952
      %287 = vst.msk [vmem:[%s285] sm:$0x1] %vm286, 0
      %288 = vst.msk [vmem:[%s285 + $0xc] sm:$0x1] %vm286, 0
      %289 = vst.msk [vmem:[%s285 + $0x18] sm:$0x1] %vm286, 0
      %290 = vst.msk [vmem:[%s285 + $0x24] sm:$0x1] %vm286, 0
      %291 = vst.msk [vmem:[%s285 + $0x30] sm:$0x1] %vm286, 0
      %292 = vst.msk [vmem:[%s285 + $0x3c] sm:$0x1] %vm286, 0
      %293 = vst.msk [vmem:[%s285 + $0x48] sm:$0x1] %vm286, 0
      %294 = vst.msk [vmem:[%s285 + $0x54] sm:$0x1] %vm286, 0
      %295 = vst.msk [vmem:[%s285 + $0x60] sm:$0x1] %vm286, 0
      %296 = vst.msk [vmem:[%s285 + $0x6c] sm:$0x1] %vm286, 0
      %297 = vst.msk [vmem:[%s285 + $0x78] sm:$0x1] %vm286, 0
      %298 = vst.msk [vmem:[%s285 + $0x84] sm:$0x1] %vm286, 0
      %299 = vst.msk [vmem:[%s285 + $0x90] sm:$0x1] %vm286, 0
      %300 = vst.msk [vmem:[%s285 + $0x9c] sm:$0x1] %vm286, 0
      %301 = vst.msk [vmem:[%s285 + $0xa8] sm:$0x1] %vm286, 0
      %302 = vst.msk [vmem:[%s285 + $0xb4] sm:$0x1] %vm286, 0
      %vm303 = vcmask 254977
      %304 = vst.msk [vmem:[%s285 + $0x8] sm:$0x2] %vm303, 0
      %305 = vst.msk [vmem:[%s285 + $0x14] sm:$0x2] %vm303, 0
      %306 = vst.msk [vmem:[%s285 + $0x20] sm:$0x2] %vm303, 0
      %307 = vst.msk [vmem:[%s285 + $0x2c] sm:$0x2] %vm303, 0
      %308 = vst.msk [vmem:[%s285 + $0x38] sm:$0x2] %vm303, 0
      %309 = vst.msk [vmem:[%s285 + $0x44] sm:$0x2] %vm303, 0
      %310 = vst.msk [vmem:[%s285 + $0x50] sm:$0x2] %vm303, 0
      %311 = vst.msk [vmem:[%s285 + $0x5c] sm:$0x2] %vm303, 0
      %312 = vst.msk [vmem:[%s285 + $0x68] sm:$0x2] %vm303, 0
      %313 = vst.msk [vmem:[%s285 + $0x74] sm:$0x2] %vm303, 0
      %314 = vst.msk [vmem:[%s285 + $0x80] sm:$0x2] %vm303, 0
      %315 = vst.msk [vmem:[%s285 + $0x8c] sm:$0x2] %vm303, 0
      %316 = vst.msk [vmem:[%s285 + $0x98] sm:$0x2] %vm303, 0
      %317 = vst.msk [vmem:[%s285 + $0xa4] sm:$0x2] %vm303, 0
      %318 = vst.msk [vmem:[%s285 + $0xb0] sm:$0x2] %vm303, 0
      %319 = vst.msk [vmem:[%s285 + $0xbc] sm:$0x2] %vm303, 0
      %v320 = vld [vmem:[%s257] sm:$0xf]
      %v321 = vld [vmem:[%s257 + $0x4] sm:$0xf]
      %v322 = vld [vmem:[%s257 + $0x8] sm:$0xf]
      %v323 = vld [vmem:[%s257 + $0xc] sm:$0xf]
      %v324 = vld [vmem:[%s257 + $0x10] sm:$0xf]
      %v325 = vld [vmem:[%s257 + $0x14] sm:$0xf]
      %v326 = vld [vmem:[%s257 + $0x18] sm:$0xf]
      %v327 = vld [vmem:[%s257 + $0x1c] sm:$0xf]
      %v328 = vld [vmem:[%s257 + $0x20] sm:$0xf]
      %v329 = vld [vmem:[%s257 + $0x24] sm:$0xf]
      %v330 = vld [vmem:[%s257 + $0x28] sm:$0xf]
      %v331 = vld [vmem:[%s257 + $0x2c] sm:$0xf]
      %v332 = vld [vmem:[%s257 + $0x30] sm:$0xf]
      %v333 = vld [vmem:[%s257 + $0x34] sm:$0xf]
      %v334 = vld [vmem:[%s257 + $0x38] sm:$0xf]
      %v335 = vld [vmem:[%s257 + $0x3c] sm:$0xf]
      %v336 = vld [vmem:[%s257 + $0x40] sm:$0xf]
      %v337 = vld [vmem:[%s257 + $0x44] sm:$0xf]
      %v338 = vld [vmem:[%s257 + $0x48] sm:$0xf]
      %v339 = vld [vmem:[%s257 + $0x4c] sm:$0xf]
      %v340 = vld [vmem:[%s257 + $0x50] sm:$0xf]
      %v341 = vld [vmem:[%s257 + $0x54] sm:$0xf]
      %v342 = vld [vmem:[%s257 + $0x58] sm:$0xf]
      %v343 = vld [vmem:[%s257 + $0x5c] sm:$0xf]
      %v344 = vld [vmem:[%s257 + $0x60] sm:$0xf]
      %v345 = vld [vmem:[%s257 + $0x64] sm:$0xf]
      %v346 = vld [vmem:[%s257 + $0x68] sm:$0xf]
      %v347 = vld [vmem:[%s257 + $0x6c] sm:$0xf]
      %v348 = vld [vmem:[%s257 + $0x70] sm:$0xf]
      %v349 = vld [vmem:[%s257 + $0x74] sm:$0xf]
      %v350 = vld [vmem:[%s257 + $0x78] sm:$0xf]
      %v351 = vld [vmem:[%s257 + $0x7c] sm:$0xf]
      %v352 = vunpack.c.l.bf16 %v320
      %v353 = vunpack.c.l.bf16 %v321
      %v354 = vunpack.c.l.bf16 %v322
      %v355 = vunpack.c.l.bf16 %v323
      %v356 = vunpack.c.l.bf16 %v324
      %v357 = vunpack.c.l.bf16 %v325
      %v358 = vunpack.c.l.bf16 %v326
      %v359 = vunpack.c.l.bf16 %v327
      %v360 = vunpack.c.l.bf16 %v328
      %v361 = vunpack.c.l.bf16 %v329
      %v362 = vunpack.c.l.bf16 %v330
      %v363 = vunpack.c.l.bf16 %v331
      %v364 = vunpack.c.l.bf16 %v332
      %v365 = vunpack.c.l.bf16 %v333
      %v366 = vunpack.c.l.bf16 %v334
      %v367 = vunpack.c.l.bf16 %v335
      %v368 = vunpack.c.l.bf16 %v336
      %v369 = vunpack.c.l.bf16 %v337
      %v370 = vunpack.c.l.bf16 %v338
      %v371 = vunpack.c.l.bf16 %v339
      %v372 = vunpack.c.l.bf16 %v340
      %v373 = vunpack.c.l.bf16 %v341
      %v374 = vunpack.c.l.bf16 %v342
      %v375 = vunpack.c.l.bf16 %v343
      %v376 = vunpack.c.l.bf16 %v344
      %v377 = vunpack.c.l.bf16 %v345
      %v378 = vunpack.c.l.bf16 %v346
      %v379 = vunpack.c.l.bf16 %v347
      %v380 = vunpack.c.l.bf16 %v348
      %v381 = vunpack.c.l.bf16 %v349
      %v382 = vunpack.c.l.bf16 %v350
      %v383 = vunpack.c.l.bf16 %v351
      %v384 = vld [vmem:[%s1] sm:$0x1]
      %v386 = vlaneseq
      %v387 = vshrl.u32 %v386, 7
      %v388 = vsub.s32 0, %v387
      %v389 = vrot.slane %v384, %v388
      %v391 = vmul.f32 %v352, %v389
      %v392 = vmul.f32 %v353, %v389
      %v393 = vmul.f32 %v354, %v389
      %v394 = vmul.f32 %v355, %v389
      %v395 = vmul.f32 %v356, %v389
      %v396 = vmul.f32 %v357, %v389
      %v397 = vmul.f32 %v358, %v389
      %v398 = vmul.f32 %v359, %v389
      %v399 = vmul.f32 %v360, %v389
      %v400 = vmul.f32 %v361, %v389
      %v401 = vmul.f32 %v362, %v389
      %v402 = vmul.f32 %v363, %v389
      %v403 = vmul.f32 %v364, %v389
      %v404 = vmul.f32 %v365, %v389
      %v405 = vmul.f32 %v366, %v389
      %v406 = vmul.f32 %v367, %v389
      %v407 = vmul.f32 %v368, %v389
      %v408 = vmul.f32 %v369, %v389
      %v409 = vmul.f32 %v370, %v389
      %v410 = vmul.f32 %v371, %v389
      %v411 = vmul.f32 %v372, %v389
      %v412 = vmul.f32 %v373, %v389
      %v413 = vmul.f32 %v374, %v389
      %v414 = vmul.f32 %v375, %v389
      %v415 = vmul.f32 %v376, %v389
      %v416 = vmul.f32 %v377, %v389
      %v417 = vmul.f32 %v378, %v389
      %v418 = vmul.f32 %v379, %v389
      %v419 = vmul.f32 %v380, %v389
      %v420 = vmul.f32 %v381, %v389
      %v421 = vmul.f32 %v382, %v389
      %v422 = vmul.f32 %v383, %v389
      %v423 = vld [vmem:[%s2] sm:$0x1]
      %v425 = vlaneseq
      %v426 = vshrl.u32 %v425, 7
      %v427 = vsub.s32 0, %v426
      %v428 = vrot.slane %v423, %v427
      %v430 = vadd.f32 %v391, %v428
      %v431 = vadd.f32 %v392, %v428
      %v432 = vadd.f32 %v393, %v428
      %v433 = vadd.f32 %v394, %v428
      %v434 = vadd.f32 %v395, %v428
      %v435 = vadd.f32 %v396, %v428
      %v436 = vadd.f32 %v397, %v428
      %v437 = vadd.f32 %v398, %v428
      %v438 = vadd.f32 %v399, %v428
      %v439 = vadd.f32 %v400, %v428
      %v440 = vadd.f32 %v401, %v428
      %v441 = vadd.f32 %v402, %v428
      %v442 = vadd.f32 %v403, %v428
      %v443 = vadd.f32 %v404, %v428
      %v444 = vadd.f32 %v405, %v428
      %v445 = vadd.f32 %v406, %v428
      %v446 = vadd.f32 %v407, %v428
      %v447 = vadd.f32 %v408, %v428
      %v448 = vadd.f32 %v409, %v428
      %v449 = vadd.f32 %v410, %v428
      %v450 = vadd.f32 %v411, %v428
      %v451 = vadd.f32 %v412, %v428
      %v452 = vadd.f32 %v413, %v428
      %v453 = vadd.f32 %v414, %v428
      %v454 = vadd.f32 %v415, %v428
      %v455 = vadd.f32 %v416, %v428
      %v456 = vadd.f32 %v417, %v428
      %v457 = vadd.f32 %v418, %v428
      %v458 = vadd.f32 %v419, %v428
      %v459 = vadd.f32 %v420, %v428
      %v460 = vadd.f32 %v421, %v428
      %v461 = vadd.f32 %v422, %v428
      %vm462 = vcmp.ge.f32.partialorder %v430, 0.0
      %vm463 = vcmp.ge.f32.partialorder %v431, 0.0
      %vm464 = vcmp.ge.f32.partialorder %v432, 0.0
      %vm465 = vcmp.ge.f32.partialorder %v433, 0.0
      %vm466 = vcmp.ge.f32.partialorder %v434, 0.0
      %vm467 = vcmp.ge.f32.partialorder %v435, 0.0
      %vm468 = vcmp.ge.f32.partialorder %v436, 0.0
      %vm469 = vcmp.ge.f32.partialorder %v437, 0.0
      %vm470 = vcmp.ge.f32.partialorder %v438, 0.0
      %vm471 = vcmp.ge.f32.partialorder %v439, 0.0
      %vm472 = vcmp.ge.f32.partialorder %v440, 0.0
      %vm473 = vcmp.ge.f32.partialorder %v441, 0.0
      %vm474 = vcmp.ge.f32.partialorder %v442, 0.0
      %vm475 = vcmp.ge.f32.partialorder %v443, 0.0
      %vm476 = vcmp.ge.f32.partialorder %v444, 0.0
      %vm477 = vcmp.ge.f32.partialorder %v445, 0.0
      %vm478 = vcmp.ge.f32.partialorder %v446, 0.0
      %vm479 = vcmp.ge.f32.partialorder %v447, 0.0
      %vm480 = vcmp.ge.f32.partialorder %v448, 0.0
      %vm481 = vcmp.ge.f32.partialorder %v449, 0.0
      %vm482 = vcmp.ge.f32.partialorder %v450, 0.0
      %vm483 = vcmp.ge.f32.partialorder %v451, 0.0
      %vm484 = vcmp.ge.f32.partialorder %v452, 0.0
      %vm485 = vcmp.ge.f32.partialorder %v453, 0.0
      %vm486 = vcmp.ge.f32.partialorder %v454, 0.0
      %vm487 = vcmp.ge.f32.partialorder %v455, 0.0
      %vm488 = vcmp.ge.f32.partialorder %v456, 0.0
      %vm489 = vcmp.ge.f32.partialorder %v457, 0.0
      %vm490 = vcmp.ge.f32.partialorder %v458, 0.0
      %vm491 = vcmp.ge.f32.partialorder %v459, 0.0
      %vm492 = vcmp.ge.f32.partialorder %v460, 0.0
      %vm493 = vcmp.ge.f32.partialorder %v461, 0.0
      %v494 = vmul.f32 %v430, 0.01
      %v495 = vmul.f32 %v431, 0.01
      %v496 = vmul.f32 %v432, 0.01
      %v497 = vmul.f32 %v433, 0.01
      %v498 = vmul.f32 %v434, 0.01
      %v499 = vmul.f32 %v435, 0.01
      %v500 = vmul.f32 %v436, 0.01
      %v501 = vmul.f32 %v437, 0.01
      %v502 = vmul.f32 %v438, 0.01
      %v503 = vmul.f32 %v439, 0.01
      %v504 = vmul.f32 %v440, 0.01
      %v505 = vmul.f32 %v441, 0.01
      %v506 = vmul.f32 %v442, 0.01
      %v507 = vmul.f32 %v443, 0.01
      %v508 = vmul.f32 %v444, 0.01
      %v509 = vmul.f32 %v445, 0.01
      %v510 = vmul.f32 %v446, 0.01
      %v511 = vmul.f32 %v447, 0.01
      %v512 = vmul.f32 %v448, 0.01
      %v513 = vmul.f32 %v449, 0.01
      %v514 = vmul.f32 %v450, 0.01
      %v515 = vmul.f32 %v451, 0.01
      %v516 = vmul.f32 %v452, 0.01
      %v517 = vmul.f32 %v453, 0.01
      %v518 = vmul.f32 %v454, 0.01
      %v519 = vmul.f32 %v455, 0.01
      %v520 = vmul.f32 %v456, 0.01
      %v521 = vmul.f32 %v457, 0.01
      %v522 = vmul.f32 %v458, 0.01
      %v523 = vmul.f32 %v459, 0.01
      %v524 = vmul.f32 %v460, 0.01
      %v525 = vmul.f32 %v461, 0.01
      %v526 = vsel %vm462, %v430, %v494
      %v527 = vsel %vm463, %v431, %v495
      %v528 = vsel %vm464, %v432, %v496
      %v529 = vsel %vm465, %v433, %v497
      %v530 = vsel %vm466, %v434, %v498
      %v531 = vsel %vm467, %v435, %v499
      %v532 = vsel %vm468, %v436, %v500
      %v533 = vsel %vm469, %v437, %v501
      %v534 = vsel %vm470, %v438, %v502
      %v535 = vsel %vm471, %v439, %v503
      %v536 = vsel %vm472, %v440, %v504
      %v537 = vsel %vm473, %v441, %v505
      %v538 = vsel %vm474, %v442, %v506
      %v539 = vsel %vm475, %v443, %v507
      %v540 = vsel %vm476, %v444, %v508
      %v541 = vsel %vm477, %v445, %v509
      %v542 = vsel %vm478, %v446, %v510
      %v543 = vsel %vm479, %v447, %v511
      %v544 = vsel %vm480, %v448, %v512
      %v545 = vsel %vm481, %v449, %v513
      %v546 = vsel %vm482, %v450, %v514
      %v547 = vsel %vm483, %v451, %v515
      %v548 = vsel %vm484, %v452, %v516
      %v549 = vsel %vm485, %v453, %v517
      %v550 = vsel %vm486, %v454, %v518
      %v551 = vsel %vm487, %v455, %v519
      %v552 = vsel %vm488, %v456, %v520
      %v553 = vsel %vm489, %v457, %v521
      %v554 = vsel %vm490, %v458, %v522
      %v555 = vsel %vm491, %v459, %v523
      %v556 = vsel %vm492, %v460, %v524
      %v557 = vsel %vm493, %v461, %v525
      %v558 = vpack.c.bf16 %v527, %v526
      %v559 = vpack.c.bf16 %v529, %v528
      %v560 = vpack.c.bf16 %v531, %v530
      %v561 = vpack.c.bf16 %v533, %v532
      %v562 = vpack.c.bf16 %v535, %v534
      %v563 = vpack.c.bf16 %v537, %v536
      %v564 = vpack.c.bf16 %v539, %v538
      %v565 = vpack.c.bf16 %v541, %v540
      %v566 = vpack.c.bf16 %v543, %v542
      %v567 = vpack.c.bf16 %v545, %v544
      %v568 = vpack.c.bf16 %v547, %v546
      %v569 = vpack.c.bf16 %v549, %v548
      %v570 = vpack.c.bf16 %v551, %v550
      %v571 = vpack.c.bf16 %v553, %v552
      %v572 = vpack.c.bf16 %v555, %v554
      %v573 = vpack.c.bf16 %v557, %v556
      %v590 = vunpack.c.l.b16 %v558
      %v591 = vunpack.c.h.b16 %v558
      %v592 = vunpack.c.l.b16 %v559
      %v593 = vunpack.c.h.b16 %v559
      %v594 = vunpack.c.l.b16 %v560
      %v595 = vunpack.c.h.b16 %v560
      %v596 = vunpack.c.l.b16 %v561
      %v597 = vunpack.c.h.b16 %v561
      %v598 = vunpack.c.l.b16 %v562
      %v599 = vunpack.c.h.b16 %v562
      %v600 = vunpack.c.l.b16 %v563
      %v601 = vunpack.c.h.b16 %v563
      %v602 = vunpack.c.l.b16 %v564
      %v603 = vunpack.c.h.b16 %v564
      %v604 = vunpack.c.l.b16 %v565
      %v605 = vunpack.c.h.b16 %v565
      %v606 = vunpack.c.l.b16 %v566
      %v607 = vunpack.c.h.b16 %v566
      %v608 = vunpack.c.l.b16 %v567
      %v609 = vunpack.c.h.b16 %v567
      %v610 = vunpack.c.l.b16 %v568
      %v611 = vunpack.c.h.b16 %v568
      %v612 = vunpack.c.l.b16 %v569
      %v613 = vunpack.c.h.b16 %v569
      %v614 = vunpack.c.l.b16 %v570
      %v615 = vunpack.c.h.b16 %v570
      %v616 = vunpack.c.l.b16 %v571
      %v617 = vunpack.c.h.b16 %v571
      %v618 = vunpack.c.l.b16 %v572
      %v619 = vunpack.c.h.b16 %v572
      %v620 = vunpack.c.l.b16 %v573
      %v621 = vunpack.c.h.b16 %v573
      %v622 = vpack.c.b16 %v590, %v590
      %v623 = vpack.c.b16 %v591, %v591
      %v624 = vpack.c.b16 %v592, %v592
      %v625 = vpack.c.b16 %v593, %v593
      %v626 = vpack.c.b16 %v594, %v594
      %v627 = vpack.c.b16 %v595, %v595
      %v628 = vpack.c.b16 %v596, %v596
      %v629 = vpack.c.b16 %v597, %v597
      %v630 = vpack.c.b16 %v598, %v598
      %v631 = vpack.c.b16 %v599, %v599
      %v632 = vpack.c.b16 %v600, %v600
      %v633 = vpack.c.b16 %v601, %v601
      %v634 = vpack.c.b16 %v602, %v602
      %v635 = vpack.c.b16 %v603, %v603
      %v636 = vpack.c.b16 %v604, %v604
      %v637 = vpack.c.b16 %v605, %v605
      %v638 = vpack.c.b16 %v606, %v606
      %v639 = vpack.c.b16 %v607, %v607
      %v640 = vpack.c.b16 %v608, %v608
      %v641 = vpack.c.b16 %v609, %v609
      %v642 = vpack.c.b16 %v610, %v610
      %v643 = vpack.c.b16 %v611, %v611
      %v644 = vpack.c.b16 %v612, %v612
      %v645 = vpack.c.b16 %v613, %v613
      %v646 = vpack.c.b16 %v614, %v614
      %v647 = vpack.c.b16 %v615, %v615
      %v648 = vpack.c.b16 %v616, %v616
      %v649 = vpack.c.b16 %v617, %v617
      %v650 = vpack.c.b16 %v618, %v618
      %v651 = vpack.c.b16 %v619, %v619
      %v652 = vpack.c.b16 %v620, %v620
      %v653 = vpack.c.b16 %v621, %v621
      %vm654 = vcmask 1040384
      %vm655 = vcmask 1044484
      %vm656 = vmor %vm654, %vm655
      %v657 = vrot.slane %v622, 7
      %v658 = vrot.slane %v657, 4
      %v659 = vrot.slane %v623, 7
      %v660 = vsel %vm656, %v658, %v659
      %v661 = vrot.slane %v659, 4
      %v662 = vrot.slane %v624, 7
      %v663 = vrot.slane %v662, 4
      %v664 = vrot.slane %v625, 7
      %v665 = vsel %vm656, %v663, %v664
      %v666 = vrot.slane %v664, 4
      %v667 = vrot.slane %v626, 7
      %v668 = vrot.slane %v667, 4
      %v669 = vrot.slane %v627, 7
      %v670 = vsel %vm656, %v668, %v669
      %v671 = vrot.slane %v669, 4
      %v672 = vrot.slane %v628, 7
      %v673 = vrot.slane %v672, 4
      %v674 = vrot.slane %v629, 7
      %v675 = vsel %vm656, %v673, %v674
      %v676 = vrot.slane %v674, 4
      %v677 = vrot.slane %v630, 7
      %v678 = vrot.slane %v677, 4
      %v679 = vrot.slane %v631, 7
      %v680 = vsel %vm656, %v678, %v679
      %v681 = vrot.slane %v679, 4
      %v682 = vrot.slane %v632, 7
      %v683 = vrot.slane %v682, 4
      %v684 = vrot.slane %v633, 7
      %v685 = vsel %vm656, %v683, %v684
      %v686 = vrot.slane %v684, 4
      %v687 = vrot.slane %v634, 7
      %v688 = vrot.slane %v687, 4
      %v689 = vrot.slane %v635, 7
      %v690 = vsel %vm656, %v688, %v689
      %v691 = vrot.slane %v689, 4
      %v692 = vrot.slane %v636, 7
      %v693 = vrot.slane %v692, 4
      %v694 = vrot.slane %v637, 7
      %v695 = vsel %vm656, %v693, %v694
      %v696 = vrot.slane %v694, 4
      %v697 = vrot.slane %v638, 7
      %v698 = vrot.slane %v697, 4
      %v699 = vrot.slane %v639, 7
      %v700 = vsel %vm656, %v698, %v699
      %v701 = vrot.slane %v699, 4
      %v702 = vrot.slane %v640, 7
      %v703 = vrot.slane %v702, 4
      %v704 = vrot.slane %v641, 7
      %v705 = vsel %vm656, %v703, %v704
      %v706 = vrot.slane %v704, 4
      %v707 = vrot.slane %v642, 7
      %v708 = vrot.slane %v707, 4
      %v709 = vrot.slane %v643, 7
      %v710 = vsel %vm656, %v708, %v709
      %v711 = vrot.slane %v709, 4
      %v712 = vrot.slane %v644, 7
      %v713 = vrot.slane %v712, 4
      %v714 = vrot.slane %v645, 7
      %v715 = vsel %vm656, %v713, %v714
      %v716 = vrot.slane %v714, 4
      %v717 = vrot.slane %v646, 7
      %v718 = vrot.slane %v717, 4
      %v719 = vrot.slane %v647, 7
      %v720 = vsel %vm656, %v718, %v719
      %v721 = vrot.slane %v719, 4
      %v722 = vrot.slane %v648, 7
      %v723 = vrot.slane %v722, 4
      %v724 = vrot.slane %v649, 7
      %v725 = vsel %vm656, %v723, %v724
      %v726 = vrot.slane %v724, 4
      %v727 = vrot.slane %v650, 7
      %v728 = vrot.slane %v727, 4
      %v729 = vrot.slane %v651, 7
      %v730 = vsel %vm656, %v728, %v729
      %v731 = vrot.slane %v729, 4
      %v732 = vrot.slane %v652, 7
      %v733 = vrot.slane %v732, 4
      %v734 = vrot.slane %v653, 7
      %v735 = vsel %vm656, %v733, %v734
      %v736 = vrot.slane %v734, 4
      %vm785 = vcmask 257025
      %786 = vst.msk [vmem:[%s285] sm:$0xe] %vm785, %v657
      %787 = vst.msk [vmem:[%s285 + $0x4] sm:$0xf] %vm270, %v660
      %788 = vst.msk [vmem:[%s285 + $0x8] sm:$0x1] %vm286, %v661
      %789 = vst.msk [vmem:[%s285 + $0xc] sm:$0xe] %vm785, %v662
      %790 = vst.msk [vmem:[%s285 + $0x10] sm:$0xf] %vm270, %v665
      %791 = vst.msk [vmem:[%s285 + $0x14] sm:$0x1] %vm286, %v666
      %792 = vst.msk [vmem:[%s285 + $0x18] sm:$0xe] %vm785, %v667
      %793 = vst.msk [vmem:[%s285 + $0x1c] sm:$0xf] %vm270, %v670
      %794 = vst.msk [vmem:[%s285 + $0x20] sm:$0x1] %vm286, %v671
      %795 = vst.msk [vmem:[%s285 + $0x24] sm:$0xe] %vm785, %v672
      %796 = vst.msk [vmem:[%s285 + $0x28] sm:$0xf] %vm270, %v675
      %797 = vst.msk [vmem:[%s285 + $0x2c] sm:$0x1] %vm286, %v676
      %798 = vst.msk [vmem:[%s285 + $0x30] sm:$0xe] %vm785, %v677
      %799 = vst.msk [vmem:[%s285 + $0x34] sm:$0xf] %vm270, %v680
      %800 = vst.msk [vmem:[%s285 + $0x38] sm:$0x1] %vm286, %v681
      %801 = vst.msk [vmem:[%s285 + $0x3c] sm:$0xe] %vm785, %v682
      %802 = vst.msk [vmem:[%s285 + $0x40] sm:$0xf] %vm270, %v685
      %803 = vst.msk [vmem:[%s285 + $0x44] sm:$0x1] %vm286, %v686
      %804 = vst.msk [vmem:[%s285 + $0x48] sm:$0xe] %vm785, %v687
      %805 = vst.msk [vmem:[%s285 + $0x4c] sm:$0xf] %vm270, %v690
      %806 = vst.msk [vmem:[%s285 + $0x50] sm:$0x1] %vm286, %v691
      %807 = vst.msk [vmem:[%s285 + $0x54] sm:$0xe] %vm785, %v692
      %808 = vst.msk [vmem:[%s285 + $0x58] sm:$0xf] %vm270, %v695
      %809 = vst.msk [vmem:[%s285 + $0x5c] sm:$0x1] %vm286, %v696
      %810 = vst.msk [vmem:[%s285 + $0x60] sm:$0xe] %vm785, %v697
      %811 = vst.msk [vmem:[%s285 + $0x64] sm:$0xf] %vm270, %v700
      %812 = vst.msk [vmem:[%s285 + $0x68] sm:$0x1] %vm286, %v701
      %813 = vst.msk [vmem:[%s285 + $0x6c] sm:$0xe] %vm785, %v702
      %814 = vst.msk [vmem:[%s285 + $0x70] sm:$0xf] %vm270, %v705
      %815 = vst.msk [vmem:[%s285 + $0x74] sm:$0x1] %vm286, %v706
      %816 = vst.msk [vmem:[%s285 + $0x78] sm:$0xe] %vm785, %v707
      %817 = vst.msk [vmem:[%s285 + $0x7c] sm:$0xf] %vm270, %v710
      %818 = vst.msk [vmem:[%s285 + $0x80] sm:$0x1] %vm286, %v711
      %819 = vst.msk [vmem:[%s285 + $0x84] sm:$0xe] %vm785, %v712
      %820 = vst.msk [vmem:[%s285 + $0x88] sm:$0xf] %vm270, %v715
      %821 = vst.msk [vmem:[%s285 + $0x8c] sm:$0x1] %vm286, %v716
      %822 = vst.msk [vmem:[%s285 + $0x90] sm:$0xe] %vm785, %v717
      %823 = vst.msk [vmem:[%s285 + $0x94] sm:$0xf] %vm270, %v720
      %824 = vst.msk [vmem:[%s285 + $0x98] sm:$0x1] %vm286, %v721
      %825 = vst.msk [vmem:[%s285 + $0x9c] sm:$0xe] %vm785, %v722
      %826 = vst.msk [vmem:[%s285 + $0xa0] sm:$0xf] %vm270, %v725
      %827 = vst.msk [vmem:[%s285 + $0xa4] sm:$0x1] %vm286, %v726
      %828 = vst.msk [vmem:[%s285 + $0xa8] sm:$0xe] %vm785, %v727
      %829 = vst.msk [vmem:[%s285 + $0xac] sm:$0xf] %vm270, %v730
      %830 = vst.msk [vmem:[%s285 + $0xb0] sm:$0x1] %vm286, %v731
      %831 = vst.msk [vmem:[%s285 + $0xb4] sm:$0xe] %vm785, %v732
      %832 = vst.msk [vmem:[%s285 + $0xb8] sm:$0xf] %vm270, %v735
      %833 = vst.msk [vmem:[%s285 + $0xbc] sm:$0x1] %vm286, %v736
      %v834 = vld [vmem:[#allocation2] sm:$0xf]
      %v835 = vld [vmem:[#allocation2 + $0x4] sm:$0xf]
      %v836 = vld [vmem:[#allocation2 + $0xc] sm:$0xf]
      %v837 = vld [vmem:[#allocation2 + $0x10] sm:$0xf]
      %v838 = vld [vmem:[#allocation2 + $0x18] sm:$0xf]
      %v839 = vld [vmem:[#allocation2 + $0x1c] sm:$0xf]
      %v840 = vld [vmem:[#allocation2 + $0x24] sm:$0xf]
      %v841 = vld [vmem:[#allocation2 + $0x28] sm:$0xf]
      %v842 = vld [vmem:[#allocation2 + $0x30] sm:$0xf]
      %v843 = vld [vmem:[#allocation2 + $0x34] sm:$0xf]
      %v844 = vld [vmem:[#allocation2 + $0x3c] sm:$0xf]
      %v845 = vld [vmem:[#allocation2 + $0x40] sm:$0xf]
      %v846 = vld [vmem:[#allocation2 + $0x48] sm:$0xf]
      %v847 = vld [vmem:[#allocation2 + $0x4c] sm:$0xf]
      %v848 = vld [vmem:[#allocation2 + $0x54] sm:$0xf]
      %v849 = vld [vmem:[#allocation2 + $0x58] sm:$0xf]
      %v850 = vld [vmem:[#allocation2 + $0x60] sm:$0xf]
      %v851 = vld [vmem:[#allocation2 + $0x64] sm:$0xf]
      %v852 = vld [vmem:[#allocation2 + $0x6c] sm:$0xf]
      %v853 = vld [vmem:[#allocation2 + $0x70] sm:$0xf]
      %v854 = vld [vmem:[#allocation2 + $0x78] sm:$0xf]
      %v855 = vld [vmem:[#allocation2 + $0x7c] sm:$0xf]
      %v856 = vld [vmem:[#allocation2 + $0x84] sm:$0xf]
      %v857 = vld [vmem:[#allocation2 + $0x88] sm:$0xf]
      %v858 = vld [vmem:[#allocation2 + $0x90] sm:$0xf]
      %v859 = vld [vmem:[#allocation2 + $0x94] sm:$0xf]
      %v860 = vld [vmem:[#allocation2 + $0x9c] sm:$0xf]
      %v861 = vld [vmem:[#allocation2 + $0xa0] sm:$0xf]
      %v862 = vld [vmem:[#allocation2 + $0xa8] sm:$0xf]
      %v863 = vld [vmem:[#allocation2 + $0xac] sm:$0xf]
      %v864 = vld [vmem:[#allocation2 + $0xb4] sm:$0xf]
      %v865 = vld [vmem:[#allocation2 + $0xb8] sm:$0xf]
      %v898 = vunpack.c.l.b16 %v834
      %v899 = vunpack.c.l.b16 %v835
      %v900 = vunpack.c.l.b16 %v836
      %v901 = vunpack.c.l.b16 %v837
      %v902 = vunpack.c.l.b16 %v838
      %v903 = vunpack.c.l.b16 %v839
      %v904 = vunpack.c.l.b16 %v840
      %v905 = vunpack.c.l.b16 %v841
      %v906 = vunpack.c.l.b16 %v842
      %v907 = vunpack.c.l.b16 %v843
      %v908 = vunpack.c.l.b16 %v844
      %v909 = vunpack.c.l.b16 %v845
      %v910 = vunpack.c.l.b16 %v846
      %v911 = vunpack.c.l.b16 %v847
      %v912 = vunpack.c.l.b16 %v848
      %v913 = vunpack.c.l.b16 %v849
      %v914 = vunpack.c.l.b16 %v850
      %v915 = vunpack.c.l.b16 %v851
      %v916 = vunpack.c.l.b16 %v852
      %v917 = vunpack.c.l.b16 %v853
      %v918 = vunpack.c.l.b16 %v854
      %v919 = vunpack.c.l.b16 %v855
      %v920 = vunpack.c.l.b16 %v856
      %v921 = vunpack.c.l.b16 %v857
      %v922 = vunpack.c.l.b16 %v858
      %v923 = vunpack.c.l.b16 %v859
      %v924 = vunpack.c.l.b16 %v860
      %v925 = vunpack.c.l.b16 %v861
      %v926 = vunpack.c.l.b16 %v862
      %v927 = vunpack.c.l.b16 %v863
      %v928 = vunpack.c.l.b16 %v864
      %v929 = vunpack.c.l.b16 %v865
      %v930 = vpack.c.b16 %v899, %v898
      %v931 = vpack.c.b16 %v901, %v900
      %v932 = vpack.c.b16 %v903, %v902
      %v933 = vpack.c.b16 %v905, %v904
      %v934 = vpack.c.b16 %v907, %v906
      %v935 = vpack.c.b16 %v909, %v908
      %v936 = vpack.c.b16 %v911, %v910
      %v937 = vpack.c.b16 %v913, %v912
      %v938 = vpack.c.b16 %v915, %v914
      %v939 = vpack.c.b16 %v917, %v916
      %v940 = vpack.c.b16 %v919, %v918
      %v941 = vpack.c.b16 %v921, %v920
      %v942 = vpack.c.b16 %v923, %v922
      %v943 = vpack.c.b16 %v925, %v924
      %v944 = vpack.c.b16 %v927, %v926
      %v945 = vpack.c.b16 %v929, %v928
      %vm962 = vcmask 261120
      %963 = vst.msk [vmem:[#allocation3] sm:$0xff] %vm962, %v930
      %964 = vst.msk [vmem:[#allocation3 + $0x18] sm:$0xff] %vm962, %v931
      %965 = vst.msk [vmem:[#allocation3 + $0x30] sm:$0xff] %vm962, %v932
      %966 = vst.msk [vmem:[#allocation3 + $0x48] sm:$0xff] %vm962, %v933
      %967 = vst.msk [vmem:[#allocation3 + $0x60] sm:$0xff] %vm962, %v934
      %968 = vst.msk [vmem:[#allocation3 + $0x78] sm:$0xff] %vm962, %v935
      %969 = vst.msk [vmem:[#allocation3 + $0x90] sm:$0xff] %vm962, %v936
      %970 = vst.msk [vmem:[#allocation3 + $0xa8] sm:$0xff] %vm962, %v937
      %971 = vst.msk [vmem:[#allocation3 + $0xc0] sm:$0xff] %vm962, %v938
      %972 = vst.msk [vmem:[#allocation3 + $0xd8] sm:$0xff] %vm962, %v939
      %973 = vst.msk [vmem:[#allocation3 + $0xf0] sm:$0xff] %vm962, %v940
      %974 = vst.msk [vmem:[#allocation3 + $0x108] sm:$0xff] %vm962, %v941
      %975 = vst.msk [vmem:[#allocation3 + $0x120] sm:$0xff] %vm962, %v942
      %976 = vst.msk [vmem:[#allocation3 + $0x138] sm:$0xff] %vm962, %v943
      %977 = vst.msk [vmem:[#allocation3 + $0x150] sm:$0xff] %vm962, %v944
      %978 = vst.msk [vmem:[#allocation3 + $0x168] sm:$0xff] %vm962, %v945
      %v979 = vld [vmem:[#allocation2] sm:$0xe]
      %v980 = vld [vmem:[#allocation2 + $0x4] sm:$0xf]
      %v981 = vld [vmem:[#allocation2 + $0x8] sm:$0x1]
      %v982 = vld [vmem:[#allocation2 + $0xc] sm:$0xe]
      %v983 = vld [vmem:[#allocation2 + $0x10] sm:$0xf]
      %v984 = vld [vmem:[#allocation2 + $0x14] sm:$0x1]
      %v985 = vld [vmem:[#allocation2 + $0x18] sm:$0xe]
      %v986 = vld [vmem:[#allocation2 + $0x1c] sm:$0xf]
      %v987 = vld [vmem:[#allocation2 + $0x20] sm:$0x1]
      %v988 = vld [vmem:[#allocation2 + $0x24] sm:$0xe]
      %v989 = vld [vmem:[#allocation2 + $0x28] sm:$0xf]
      %v990 = vld [vmem:[#allocation2 + $0x2c] sm:$0x1]
      %v991 = vld [vmem:[#allocation2 + $0x30] sm:$0xe]
      %v992 = vld [vmem:[#allocation2 + $0x34] sm:$0xf]
      %v993 = vld [vmem:[#allocation2 + $0x38] sm:$0x1]
      %v994 = vld [vmem:[#allocation2 + $0x3c] sm:$0xe]
      %v995 = vld [vmem:[#allocation2 + $0x40] sm:$0xf]
      %v996 = vld [vmem:[#allocation2 + $0x44] sm:$0x1]
      %v997 = vld [vmem:[#allocation2 + $0x48] sm:$0xe]
      %v998 = vld [vmem:[#allocation2 + $0x4c] sm:$0xf]
      %v999 = vld [vmem:[#allocation2 + $0x50] sm:$0x1]
      %v1000 = vld [vmem:[#allocation2 + $0x54] sm:$0xe]
      %v1001 = vld [vmem:[#allocation2 + $0x58] sm:$0xf]
      %v1002 = vld [vmem:[#allocation2 + $0x5c] sm:$0x1]
      %v1003 = vld [vmem:[#allocation2 + $0x60] sm:$0xe]
      %v1004 = vld [vmem:[#allocation2 + $0x64] sm:$0xf]
      %v1005 = vld [vmem:[#allocation2 + $0x68] sm:$0x1]
      %v1006 = vld [vmem:[#allocation2 + $0x6c] sm:$0xe]
      %v1007 = vld [vmem:[#allocation2 + $0x70] sm:$0xf]
      %v1008 = vld [vmem:[#allocation2 + $0x74] sm:$0x1]
      %v1009 = vld [vmem:[#allocation2 + $0x78] sm:$0xe]
      %v1010 = vld [vmem:[#allocation2 + $0x7c] sm:$0xf]
      %v1011 = vld [vmem:[#allocation2 + $0x80] sm:$0x1]
      %v1012 = vld [vmem:[#allocation2 + $0x84] sm:$0xe]
      %v1013 = vld [vmem:[#allocation2 + $0x88] sm:$0xf]
      %v1014 = vld [vmem:[#allocation2 + $0x8c] sm:$0x1]
      %v1015 = vld [vmem:[#allocation2 + $0x90] sm:$0xe]
      %v1016 = vld [vmem:[#allocation2 + $0x94] sm:$0xf]
      %v1017 = vld [vmem:[#allocation2 + $0x98] sm:$0x1]
      %v1018 = vld [vmem:[#allocation2 + $0x9c] sm:$0xe]
      %v1019 = vld [vmem:[#allocation2 + $0xa0] sm:$0xf]
      %v1020 = vld [vmem:[#allocation2 + $0xa4] sm:$0x1]
      %v1021 = vld [vmem:[#allocation2 + $0xa8] sm:$0xe]
      %v1022 = vld [vmem:[#allocation2 + $0xac] sm:$0xf]
      %v1023 = vld [vmem:[#allocation2 + $0xb0] sm:$0x1]
      %v1024 = vld [vmem:[#allocation2 + $0xb4] sm:$0xe]
      %v1025 = vld [vmem:[#allocation2 + $0xb8] sm:$0xf]
      %v1026 = vld [vmem:[#allocation2 + $0xbc] sm:$0x1]
      %vm1075 = vcmask 1042432
      %vm1076 = vcmask 1046532
      %vm1077 = vmor %vm1075, %vm1076
      %v1078 = vrot.slane %v979, 5
      %v1079 = vrot.slane %v1078, 4
      %v1080 = vrot.slane %v980, 5
      %v1081 = vsel %vm1077, %v1079, %v1080
      %v1082 = vrot.slane %v1080, 4
      %v1083 = vrot.slane %v981, 5
      %v1084 = vsel %vm1077, %v1082, %v1083
      %v1085 = vrot.slane %v982, 5
      %v1086 = vrot.slane %v1085, 4
      %v1087 = vrot.slane %v983, 5
      %v1088 = vsel %vm1077, %v1086, %v1087
      %v1089 = vrot.slane %v1087, 4
      %v1090 = vrot.slane %v984, 5
      %v1091 = vsel %vm1077, %v1089, %v1090
      %v1092 = vrot.slane %v985, 5
      %v1093 = vrot.slane %v1092, 4
      %v1094 = vrot.slane %v986, 5
      %v1095 = vsel %vm1077, %v1093, %v1094
      %v1096 = vrot.slane %v1094, 4
      %v1097 = vrot.slane %v987, 5
      %v1098 = vsel %vm1077, %v1096, %v1097
      %v1099 = vrot.slane %v988, 5
      %v1100 = vrot.slane %v1099, 4
      %v1101 = vrot.slane %v989, 5
      %v1102 = vsel %vm1077, %v1100, %v1101
      %v1103 = vrot.slane %v1101, 4
      %v1104 = vrot.slane %v990, 5
      %v1105 = vsel %vm1077, %v1103, %v1104
      %v1106 = vrot.slane %v991, 5
      %v1107 = vrot.slane %v1106, 4
      %v1108 = vrot.slane %v992, 5
      %v1109 = vsel %vm1077, %v1107, %v1108
      %v1110 = vrot.slane %v1108, 4
      %v1111 = vrot.slane %v993, 5
      %v1112 = vsel %vm1077, %v1110, %v1111
      %v1113 = vrot.slane %v994, 5
      %v1114 = vrot.slane %v1113, 4
      %v1115 = vrot.slane %v995, 5
      %v1116 = vsel %vm1077, %v1114, %v1115
      %v1117 = vrot.slane %v1115, 4
      %v1118 = vrot.slane %v996, 5
      %v1119 = vsel %vm1077, %v1117, %v1118
      %v1120 = vrot.slane %v997, 5
      %v1121 = vrot.slane %v1120, 4
      %v1122 = vrot.slane %v998, 5
      %v1123 = vsel %vm1077, %v1121, %v1122
      %v1124 = vrot.slane %v1122, 4
      %v1125 = vrot.slane %v999, 5
      %v1126 = vsel %vm1077, %v1124, %v1125
      %v1127 = vrot.slane %v1000, 5
      %v1128 = vrot.slane %v1127, 4
      %v1129 = vrot.slane %v1001, 5
      %v1130 = vsel %vm1077, %v1128, %v1129
      %v1131 = vrot.slane %v1129, 4
      %v1132 = vrot.slane %v1002, 5
      %v1133 = vsel %vm1077, %v1131, %v1132
      %v1134 = vrot.slane %v1003, 5
      %v1135 = vrot.slane %v1134, 4
      %v1136 = vrot.slane %v1004, 5
      %v1137 = vsel %vm1077, %v1135, %v1136
      %v1138 = vrot.slane %v1136, 4
      %v1139 = vrot.slane %v1005, 5
      %v1140 = vsel %vm1077, %v1138, %v1139
      %v1141 = vrot.slane %v1006, 5
      %v1142 = vrot.slane %v1141, 4
      %v1143 = vrot.slane %v1007, 5
      %v1144 = vsel %vm1077, %v1142, %v1143
      %v1145 = vrot.slane %v1143, 4
      %v1146 = vrot.slane %v1008, 5
      %v1147 = vsel %vm1077, %v1145, %v1146
      %v1148 = vrot.slane %v1009, 5
      %v1149 = vrot.slane %v1148, 4
      %v1150 = vrot.slane %v1010, 5
      %v1151 = vsel %vm1077, %v1149, %v1150
      %v1152 = vrot.slane %v1150, 4
      %v1153 = vrot.slane %v1011, 5
      %v1154 = vsel %vm1077, %v1152, %v1153
      %v1155 = vrot.slane %v1012, 5
      %v1156 = vrot.slane %v1155, 4
      %v1157 = vrot.slane %v1013, 5
      %v1158 = vsel %vm1077, %v1156, %v1157
      %v1159 = vrot.slane %v1157, 4
      %v1160 = vrot.slane %v1014, 5
      %v1161 = vsel %vm1077, %v1159, %v1160
      %v1162 = vrot.slane %v1015, 5
      %v1163 = vrot.slane %v1162, 4
      %v1164 = vrot.slane %v1016, 5
      %v1165 = vsel %vm1077, %v1163, %v1164
      %v1166 = vrot.slane %v1164, 4
      %v1167 = vrot.slane %v1017, 5
      %v1168 = vsel %vm1077, %v1166, %v1167
      %v1169 = vrot.slane %v1018, 5
      %v1170 = vrot.slane %v1169, 4
      %v1171 = vrot.slane %v1019, 5
      %v1172 = vsel %vm1077, %v1170, %v1171
      %v1173 = vrot.slane %v1171, 4
      %v1174 = vrot.slane %v1020, 5
      %v1175 = vsel %vm1077, %v1173, %v1174
      %v1176 = vrot.slane %v1021, 5
      %v1177 = vrot.slane %v1176, 4
      %v1178 = vrot.slane %v1022, 5
      %v1179 = vsel %vm1077, %v1177, %v1178
      %v1180 = vrot.slane %v1178, 4
      %v1181 = vrot.slane %v1023, 5
      %v1182 = vsel %vm1077, %v1180, %v1181
      %v1183 = vrot.slane %v1024, 5
      %v1184 = vrot.slane %v1183, 4
      %v1185 = vrot.slane %v1025, 5
      %v1186 = vsel %vm1077, %v1184, %v1185
      %v1187 = vrot.slane %v1185, 4
      %v1188 = vrot.slane %v1026, 5
      %v1189 = vsel %vm1077, %v1187, %v1188
      %v1190 = vunpack.c.l.b16 %v1081
      %v1191 = vunpack.c.l.b16 %v1084
      %v1192 = vunpack.c.l.b16 %v1088
      %v1193 = vunpack.c.l.b16 %v1091
      %v1194 = vunpack.c.l.b16 %v1095
      %v1195 = vunpack.c.l.b16 %v1098
      %v1196 = vunpack.c.l.b16 %v1102
      %v1197 = vunpack.c.l.b16 %v1105
      %v1198 = vunpack.c.l.b16 %v1109
      %v1199 = vunpack.c.l.b16 %v1112
      %v1200 = vunpack.c.l.b16 %v1116
      %v1201 = vunpack.c.l.b16 %v1119
      %v1202 = vunpack.c.l.b16 %v1123
      %v1203 = vunpack.c.l.b16 %v1126
      %v1204 = vunpack.c.l.b16 %v1130
      %v1205 = vunpack.c.l.b16 %v1133
      %v1206 = vunpack.c.l.b16 %v1137
      %v1207 = vunpack.c.l.b16 %v1140
      %v1208 = vunpack.c.l.b16 %v1144
      %v1209 = vunpack.c.l.b16 %v1147
      %v1210 = vunpack.c.l.b16 %v1151
      %v1211 = vunpack.c.l.b16 %v1154
      %v1212 = vunpack.c.l.b16 %v1158
      %v1213 = vunpack.c.l.b16 %v1161
      %v1214 = vunpack.c.l.b16 %v1165
      %v1215 = vunpack.c.l.b16 %v1168
      %v1216 = vunpack.c.l.b16 %v1172
      %v1217 = vunpack.c.l.b16 %v1175
      %v1218 = vunpack.c.l.b16 %v1179
      %v1219 = vunpack.c.l.b16 %v1182
      %v1220 = vunpack.c.l.b16 %v1186
      %v1221 = vunpack.c.l.b16 %v1189
      %v1222 = vpack.c.b16 %v1191, %v1190
      %v1223 = vpack.c.b16 %v1193, %v1192
      %v1224 = vpack.c.b16 %v1195, %v1194
      %v1225 = vpack.c.b16 %v1197, %v1196
      %v1226 = vpack.c.b16 %v1199, %v1198
      %v1227 = vpack.c.b16 %v1201, %v1200
      %v1228 = vpack.c.b16 %v1203, %v1202
      %v1229 = vpack.c.b16 %v1205, %v1204
      %v1230 = vpack.c.b16 %v1207, %v1206
      %v1231 = vpack.c.b16 %v1209, %v1208
      %v1232 = vpack.c.b16 %v1211, %v1210
      %v1233 = vpack.c.b16 %v1213, %v1212
      %v1234 = vpack.c.b16 %v1215, %v1214
      %v1235 = vpack.c.b16 %v1217, %v1216
      %v1236 = vpack.c.b16 %v1219, %v1218
      %v1237 = vpack.c.b16 %v1221, %v1220
      %1238 = vrot.lane.b32.xlu0 %v1222, 32
      %v1239 = vpop.permute.xlu0 %1238
      %1240 = vrot.lane.b32.xlu0 %v1223, 32
      %v1241 = vpop.permute.xlu0 %1240
      %1242 = vrot.lane.b32.xlu0 %v1224, 32
      %v1243 = vpop.permute.xlu0 %1242
      %1244 = vrot.lane.b32.xlu0 %v1225, 32
      %v1245 = vpop.permute.xlu0 %1244
      %1246 = vrot.lane.b32.xlu0 %v1226, 32
      %v1247 = vpop.permute.xlu0 %1246
      %1248 = vrot.lane.b32.xlu0 %v1227, 32
      %v1249 = vpop.permute.xlu0 %1248
      %1250 = vrot.lane.b32.xlu0 %v1228, 32
      %v1251 = vpop.permute.xlu0 %1250
      %1252 = vrot.lane.b32.xlu0 %v1229, 32
      %v1253 = vpop.permute.xlu0 %1252
      %1254 = vrot.lane.b32.xlu0 %v1230, 32
      %v1255 = vpop.permute.xlu0 %1254
      %1256 = vrot.lane.b32.xlu0 %v1231, 32
      %v1257 = vpop.permute.xlu0 %1256
      %1258 = vrot.lane.b32.xlu0 %v1232, 32
      %v1259 = vpop.permute.xlu0 %1258
      %1260 = vrot.lane.b32.xlu0 %v1233, 32
      %v1261 = vpop.permute.xlu0 %1260
      %1262 = vrot.lane.b32.xlu0 %v1234, 32
      %v1263 = vpop.permute.xlu0 %1262
      %1264 = vrot.lane.b32.xlu0 %v1235, 32
      %v1265 = vpop.permute.xlu0 %1264
      %1266 = vrot.lane.b32.xlu0 %v1236, 32
      %v1267 = vpop.permute.xlu0 %1266
      %1268 = vrot.lane.b32.xlu0 %v1237, 32
      %v1269 = vpop.permute.xlu0 %1268
      %vm1286 = vcmask 523520
      %1287 = vst.msk [vmem:[#allocation3] sm:$0xff] %vm1286, %v1239
      %1288 = vst.msk [vmem:[#allocation3 + $0x18] sm:$0xff] %vm1286, %v1241
      %1289 = vst.msk [vmem:[#allocation3 + $0x30] sm:$0xff] %vm1286, %v1243
      %1290 = vst.msk [vmem:[#allocation3 + $0x48] sm:$0xff] %vm1286, %v1245
      %1291 = vst.msk [vmem:[#allocation3 + $0x60] sm:$0xff] %vm1286, %v1247
      %1292 = vst.msk [vmem:[#allocation3 + $0x78] sm:$0xff] %vm1286, %v1249
      %1293 = vst.msk [vmem:[#allocation3 + $0x90] sm:$0xff] %vm1286, %v1251
      %1294 = vst.msk [vmem:[#allocation3 + $0xa8] sm:$0xff] %vm1286, %v1253
      %1295 = vst.msk [vmem:[#allocation3 + $0xc0] sm:$0xff] %vm1286, %v1255
      %1296 = vst.msk [vmem:[#allocation3 + $0xd8] sm:$0xff] %vm1286, %v1257
      %1297 = vst.msk [vmem:[#allocation3 + $0xf0] sm:$0xff] %vm1286, %v1259
      %1298 = vst.msk [vmem:[#allocation3 + $0x108] sm:$0xff] %vm1286, %v1261
      %1299 = vst.msk [vmem:[#allocation3 + $0x120] sm:$0xff] %vm1286, %v1263
      %1300 = vst.msk [vmem:[#allocation3 + $0x138] sm:$0xff] %vm1286, %v1265
      %1301 = vst.msk [vmem:[#allocation3 + $0x150] sm:$0xff] %vm1286, %v1267
      %1302 = vst.msk [vmem:[#allocation3 + $0x168] sm:$0xff] %vm1286, %v1269
      %v1303 = vld [vmem:[#allocation2] sm:$0xc]
      %v1304 = vld [vmem:[#allocation2 + $0x4] sm:$0xf]
      %v1305 = vld [vmem:[#allocation2 + $0x8] sm:$0x3]
      %v1306 = vld [vmem:[#allocation2 + $0xc] sm:$0xc]
      %v1307 = vld [vmem:[#allocation2 + $0x10] sm:$0xf]
      %v1308 = vld [vmem:[#allocation2 + $0x14] sm:$0x3]
      %v1309 = vld [vmem:[#allocation2 + $0x18] sm:$0xc]
      %v1310 = vld [vmem:[#allocation2 + $0x1c] sm:$0xf]
      %v1311 = vld [vmem:[#allocation2 + $0x20] sm:$0x3]
      %v1312 = vld [vmem:[#allocation2 + $0x24] sm:$0xc]
      %v1313 = vld [vmem:[#allocation2 + $0x28] sm:$0xf]
      %v1314 = vld [vmem:[#allocation2 + $0x2c] sm:$0x3]
      %v1315 = vld [vmem:[#allocation2 + $0x30] sm:$0xc]
      %v1316 = vld [vmem:[#allocation2 + $0x34] sm:$0xf]
      %v1317 = vld [vmem:[#allocation2 + $0x38] sm:$0x3]
      %v1318 = vld [vmem:[#allocation2 + $0x3c] sm:$0xc]
      %v1319 = vld [vmem:[#allocation2 + $0x40] sm:$0xf]
      %v1320 = vld [vmem:[#allocation2 + $0x44] sm:$0x3]
      %v1321 = vld [vmem:[#allocation2 + $0x48] sm:$0xc]
      %v1322 = vld [vmem:[#allocation2 + $0x4c] sm:$0xf]
      %v1323 = vld [vmem:[#allocation2 + $0x50] sm:$0x3]
      %v1324 = vld [vmem:[#allocation2 + $0x54] sm:$0xc]
      %v1325 = vld [vmem:[#allocation2 + $0x58] sm:$0xf]
      %v1326 = vld [vmem:[#allocation2 + $0x5c] sm:$0x3]
      %v1327 = vld [vmem:[#allocation2 + $0x60] sm:$0xc]
      %v1328 = vld [vmem:[#allocation2 + $0x64] sm:$0xf]
      %v1329 = vld [vmem:[#allocation2 + $0x68] sm:$0x3]
      %v1330 = vld [vmem:[#allocation2 + $0x6c] sm:$0xc]
      %v1331 = vld [vmem:[#allocation2 + $0x70] sm:$0xf]
      %v1332 = vld [vmem:[#allocation2 + $0x74] sm:$0x3]
      %v1333 = vld [vmem:[#allocation2 + $0x78] sm:$0xc]
      %v1334 = vld [vmem:[#allocation2 + $0x7c] sm:$0xf]
      %v1335 = vld [vmem:[#allocation2 + $0x80] sm:$0x3]
      %v1336 = vld [vmem:[#allocation2 + $0x84] sm:$0xc]
      %v1337 = vld [vmem:[#allocation2 + $0x88] sm:$0xf]
      %v1338 = vld [vmem:[#allocation2 + $0x8c] sm:$0x3]
      %v1339 = vld [vmem:[#allocation2 + $0x90] sm:$0xc]
      %v1340 = vld [vmem:[#allocation2 + $0x94] sm:$0xf]
      %v1341 = vld [vmem:[#allocation2 + $0x98] sm:$0x3]
      %v1342 = vld [vmem:[#allocation2 + $0x9c] sm:$0xc]
      %v1343 = vld [vmem:[#allocation2 + $0xa0] sm:$0xf]
      %v1344 = vld [vmem:[#allocation2 + $0xa4] sm:$0x3]
      %v1345 = vld [vmem:[#allocation2 + $0xa8] sm:$0xc]
      %v1346 = vld [vmem:[#allocation2 + $0xac] sm:$0xf]
      %v1347 = vld [vmem:[#allocation2 + $0xb0] sm:$0x3]
      %v1348 = vld [vmem:[#allocation2 + $0xb4] sm:$0xc]
      %v1349 = vld [vmem:[#allocation2 + $0xb8] sm:$0xf]
      %v1350 = vld [vmem:[#allocation2 + $0xbc] sm:$0x3]
      %vm1399 = vcmask 1041408
      %vm1400 = vcmask 1045508
      %vm1401 = vmor %vm1399, %vm1400
      %v1402 = vrot.slane %v1303, 6
      %v1403 = vrot.slane %v1402, 4
      %v1404 = vrot.slane %v1304, 6
      %v1405 = vsel %vm1401, %v1403, %v1404
      %v1406 = vrot.slane %v1404, 4
      %v1407 = vrot.slane %v1305, 6
      %v1408 = vsel %vm1401, %v1406, %v1407
      %v1409 = vrot.slane %v1306, 6
      %v1410 = vrot.slane %v1409, 4
      %v1411 = vrot.slane %v1307, 6
      %v1412 = vsel %vm1401, %v1410, %v1411
      %v1413 = vrot.slane %v1411, 4
      %v1414 = vrot.slane %v1308, 6
      %v1415 = vsel %vm1401, %v1413, %v1414
      %v1416 = vrot.slane %v1309, 6
      %v1417 = vrot.slane %v1416, 4
      %v1418 = vrot.slane %v1310, 6
      %v1419 = vsel %vm1401, %v1417, %v1418
      %v1420 = vrot.slane %v1418, 4
      %v1421 = vrot.slane %v1311, 6
      %v1422 = vsel %vm1401, %v1420, %v1421
      %v1423 = vrot.slane %v1312, 6
      %v1424 = vrot.slane %v1423, 4
      %v1425 = vrot.slane %v1313, 6
      %v1426 = vsel %vm1401, %v1424, %v1425
      %v1427 = vrot.slane %v1425, 4
      %v1428 = vrot.slane %v1314, 6
      %v1429 = vsel %vm1401, %v1427, %v1428
      %v1430 = vrot.slane %v1315, 6
      %v1431 = vrot.slane %v1430, 4
      %v1432 = vrot.slane %v1316, 6
      %v1433 = vsel %vm1401, %v1431, %v1432
      %v1434 = vrot.slane %v1432, 4
      %v1435 = vrot.slane %v1317, 6
      %v1436 = vsel %vm1401, %v1434, %v1435
      %v1437 = vrot.slane %v1318, 6
      %v1438 = vrot.slane %v1437, 4
      %v1439 = vrot.slane %v1319, 6
      %v1440 = vsel %vm1401, %v1438, %v1439
      %v1441 = vrot.slane %v1439, 4
      %v1442 = vrot.slane %v1320, 6
      %v1443 = vsel %vm1401, %v1441, %v1442
      %v1444 = vrot.slane %v1321, 6
      %v1445 = vrot.slane %v1444, 4
      %v1446 = vrot.slane %v1322, 6
      %v1447 = vsel %vm1401, %v1445, %v1446
      %v1448 = vrot.slane %v1446, 4
      %v1449 = vrot.slane %v1323, 6
      %v1450 = vsel %vm1401, %v1448, %v1449
      %v1451 = vrot.slane %v1324, 6
      %v1452 = vrot.slane %v1451, 4
      %v1453 = vrot.slane %v1325, 6
      %v1454 = vsel %vm1401, %v1452, %v1453
      %v1455 = vrot.slane %v1453, 4
      %v1456 = vrot.slane %v1326, 6
      %v1457 = vsel %vm1401, %v1455, %v1456
      %v1458 = vrot.slane %v1327, 6
      %v1459 = vrot.slane %v1458, 4
      %v1460 = vrot.slane %v1328, 6
      %v1461 = vsel %vm1401, %v1459, %v1460
      %v1462 = vrot.slane %v1460, 4
      %v1463 = vrot.slane %v1329, 6
      %v1464 = vsel %vm1401, %v1462, %v1463
      %v1465 = vrot.slane %v1330, 6
      %v1466 = vrot.slane %v1465, 4
      %v1467 = vrot.slane %v1331, 6
      %v1468 = vsel %vm1401, %v1466, %v1467
      %v1469 = vrot.slane %v1467, 4
      %v1470 = vrot.slane %v1332, 6
      %v1471 = vsel %vm1401, %v1469, %v1470
      %v1472 = vrot.slane %v1333, 6
      %v1473 = vrot.slane %v1472, 4
      %v1474 = vrot.slane %v1334, 6
      %v1475 = vsel %vm1401, %v1473, %v1474
      %v1476 = vrot.slane %v1474, 4
      %v1477 = vrot.slane %v1335, 6
      %v1478 = vsel %vm1401, %v1476, %v1477
      %v1479 = vrot.slane %v1336, 6
      %v1480 = vrot.slane %v1479, 4
      %v1481 = vrot.slane %v1337, 6
      %v1482 = vsel %vm1401, %v1480, %v1481
      %v1483 = vrot.slane %v1481, 4
      %v1484 = vrot.slane %v1338, 6
      %v1485 = vsel %vm1401, %v1483, %v1484
      %v1486 = vrot.slane %v1339, 6
      %v1487 = vrot.slane %v1486, 4
      %v1488 = vrot.slane %v1340, 6
      %v1489 = vsel %vm1401, %v1487, %v1488
      %v1490 = vrot.slane %v1488, 4
      %v1491 = vrot.slane %v1341, 6
      %v1492 = vsel %vm1401, %v1490, %v1491
      %v1493 = vrot.slane %v1342, 6
      %v1494 = vrot.slane %v1493, 4
      %v1495 = vrot.slane %v1343, 6
      %v1496 = vsel %vm1401, %v1494, %v1495
      %v1497 = vrot.slane %v1495, 4
      %v1498 = vrot.slane %v1344, 6
      %v1499 = vsel %vm1401, %v1497, %v1498
      %v1500 = vrot.slane %v1345, 6
      %v1501 = vrot.slane %v1500, 4
      %v1502 = vrot.slane %v1346, 6
      %v1503 = vsel %vm1401, %v1501, %v1502
      %v1504 = vrot.slane %v1502, 4
      %v1505 = vrot.slane %v1347, 6
      %v1506 = vsel %vm1401, %v1504, %v1505
      %v1507 = vrot.slane %v1348, 6
      %v1508 = vrot.slane %v1507, 4
      %v1509 = vrot.slane %v1349, 6
      %v1510 = vsel %vm1401, %v1508, %v1509
      %v1511 = vrot.slane %v1509, 4
      %v1512 = vrot.slane %v1350, 6
      %v1513 = vsel %vm1401, %v1511, %v1512
      %v1514 = vunpack.c.l.b16 %v1405
      %v1515 = vunpack.c.l.b16 %v1408
      %v1516 = vunpack.c.l.b16 %v1412
      %v1517 = vunpack.c.l.b16 %v1415
      %v1518 = vunpack.c.l.b16 %v1419
      %v1519 = vunpack.c.l.b16 %v1422
      %v1520 = vunpack.c.l.b16 %v1426
      %v1521 = vunpack.c.l.b16 %v1429
      %v1522 = vunpack.c.l.b16 %v1433
      %v1523 = vunpack.c.l.b16 %v1436
      %v1524 = vunpack.c.l.b16 %v1440
      %v1525 = vunpack.c.l.b16 %v1443
      %v1526 = vunpack.c.l.b16 %v1447
      %v1527 = vunpack.c.l.b16 %v1450
      %v1528 = vunpack.c.l.b16 %v1454
      %v1529 = vunpack.c.l.b16 %v1457
      %v1530 = vunpack.c.l.b16 %v1461
      %v1531 = vunpack.c.l.b16 %v1464
      %v1532 = vunpack.c.l.b16 %v1468
      %v1533 = vunpack.c.l.b16 %v1471
      %v1534 = vunpack.c.l.b16 %v1475
      %v1535 = vunpack.c.l.b16 %v1478
      %v1536 = vunpack.c.l.b16 %v1482
      %v1537 = vunpack.c.l.b16 %v1485
      %v1538 = vunpack.c.l.b16 %v1489
      %v1539 = vunpack.c.l.b16 %v1492
      %v1540 = vunpack.c.l.b16 %v1496
      %v1541 = vunpack.c.l.b16 %v1499
      %v1542 = vunpack.c.l.b16 %v1503
      %v1543 = vunpack.c.l.b16 %v1506
      %v1544 = vunpack.c.l.b16 %v1510
      %v1545 = vunpack.c.l.b16 %v1513
      %v1546 = vpack.c.b16 %v1515, %v1514
      %v1547 = vpack.c.b16 %v1517, %v1516
      %v1548 = vpack.c.b16 %v1519, %v1518
      %v1549 = vpack.c.b16 %v1521, %v1520
      %v1550 = vpack.c.b16 %v1523, %v1522
      %v1551 = vpack.c.b16 %v1525, %v1524
      %v1552 = vpack.c.b16 %v1527, %v1526
      %v1553 = vpack.c.b16 %v1529, %v1528
      %v1554 = vpack.c.b16 %v1531, %v1530
      %v1555 = vpack.c.b16 %v1533, %v1532
      %v1556 = vpack.c.b16 %v1535, %v1534
      %v1557 = vpack.c.b16 %v1537, %v1536
      %v1558 = vpack.c.b16 %v1539, %v1538
      %v1559 = vpack.c.b16 %v1541, %v1540
      %v1560 = vpack.c.b16 %v1543, %v1542
      %v1561 = vpack.c.b16 %v1545, %v1544
      %1562 = vrot.lane.b32.xlu0 %v1546, 64
      %v1563 = vpop.permute.xlu0 %1562
      %1564 = vrot.lane.b32.xlu0 %v1547, 64
      %v1565 = vpop.permute.xlu0 %1564
      %1566 = vrot.lane.b32.xlu0 %v1548, 64
      %v1567 = vpop.permute.xlu0 %1566
      %1568 = vrot.lane.b32.xlu0 %v1549, 64
      %v1569 = vpop.permute.xlu0 %1568
      %1570 = vrot.lane.b32.xlu0 %v1550, 64
      %v1571 = vpop.permute.xlu0 %1570
      %1572 = vrot.lane.b32.xlu0 %v1551, 64
      %v1573 = vpop.permute.xlu0 %1572
      %1574 = vrot.lane.b32.xlu0 %v1552, 64
      %v1575 = vpop.permute.xlu0 %1574
      %1576 = vrot.lane.b32.xlu0 %v1553, 64
      %v1577 = vpop.permute.xlu0 %1576
      %1578 = vrot.lane.b32.xlu0 %v1554, 64
      %v1579 = vpop.permute.xlu0 %1578
      %1580 = vrot.lane.b32.xlu0 %v1555, 64
      %v1581 = vpop.permute.xlu0 %1580
      %1582 = vrot.lane.b32.xlu0 %v1556, 64
      %v1583 = vpop.permute.xlu0 %1582
      %1584 = vrot.lane.b32.xlu0 %v1557, 64
      %v1585 = vpop.permute.xlu0 %1584
      %1586 = vrot.lane.b32.xlu0 %v1558, 64
      %v1587 = vpop.permute.xlu0 %1586
      %1588 = vrot.lane.b32.xlu0 %v1559, 64
      %v1589 = vpop.permute.xlu0 %1588
      %1590 = vrot.lane.b32.xlu0 %v1560, 64
      %v1591 = vpop.permute.xlu0 %1590
      %1592 = vrot.lane.b32.xlu0 %v1561, 64
      %v1593 = vpop.permute.xlu0 %1592
      %vm1610 = vcmask 785920
      %1611 = vst.msk [vmem:[#allocation3] sm:$0xff] %vm1610, %v1563
      %1612 = vst.msk [vmem:[#allocation3 + $0x18] sm:$0xff] %vm1610, %v1565
      %1613 = vst.msk [vmem:[#allocation3 + $0x30] sm:$0xff] %vm1610, %v1567
      %1614 = vst.msk [vmem:[#allocation3 + $0x48] sm:$0xff] %vm1610, %v1569
      %1615 = vst.msk [vmem:[#allocation3 + $0x60] sm:$0xff] %vm1610, %v1571
      %1616 = vst.msk [vmem:[#allocation3 + $0x78] sm:$0xff] %vm1610, %v1573
      %1617 = vst.msk [vmem:[#allocation3 + $0x90] sm:$0xff] %vm1610, %v1575
      %1618 = vst.msk [vmem:[#allocation3 + $0xa8] sm:$0xff] %vm1610, %v1577
      %1619 = vst.msk [vmem:[#allocation3 + $0xc0] sm:$0xff] %vm1610, %v1579
      %1620 = vst.msk [vmem:[#allocation3 + $0xd8] sm:$0xff] %vm1610, %v1581
      %1621 = vst.msk [vmem:[#allocation3 + $0xf0] sm:$0xff] %vm1610, %v1583
      %1622 = vst.msk [vmem:[#allocation3 + $0x108] sm:$0xff] %vm1610, %v1585
      %1623 = vst.msk [vmem:[#allocation3 + $0x120] sm:$0xff] %vm1610, %v1587
      %1624 = vst.msk [vmem:[#allocation3 + $0x138] sm:$0xff] %vm1610, %v1589
      %1625 = vst.msk [vmem:[#allocation3 + $0x150] sm:$0xff] %vm1610, %v1591
      %1626 = vst.msk [vmem:[#allocation3 + $0x168] sm:$0xff] %vm1610, %v1593
      %v1627 = vld [vmem:[%s285] sm:$0xf]
      %v1628 = vld [vmem:[%s285 + $0x4] sm:$0xf]
      %v1629 = vld [vmem:[%s285 + $0xc] sm:$0xf]
      %v1630 = vld [vmem:[%s285 + $0x10] sm:$0xf]
      %v1631 = vld [vmem:[%s285 + $0x18] sm:$0xf]
      %v1632 = vld [vmem:[%s285 + $0x1c] sm:$0xf]
      %v1633 = vld [vmem:[%s285 + $0x24] sm:$0xf]
      %v1634 = vld [vmem:[%s285 + $0x28] sm:$0xf]
      %v1635 = vld [vmem:[%s285 + $0x30] sm:$0xf]
      %v1636 = vld [vmem:[%s285 + $0x34] sm:$0xf]
      %v1637 = vld [vmem:[%s285 + $0x3c] sm:$0xf]
      %v1638 = vld [vmem:[%s285 + $0x40] sm:$0xf]
      %v1639 = vld [vmem:[%s285 + $0x48] sm:$0xf]
      %v1640 = vld [vmem:[%s285 + $0x4c] sm:$0xf]
      %v1641 = vld [vmem:[%s285 + $0x54] sm:$0xf]
      %v1642 = vld [vmem:[%s285 + $0x58] sm:$0xf]
      %v1643 = vld [vmem:[%s285 + $0x60] sm:$0xf]
      %v1644 = vld [vmem:[%s285 + $0x64] sm:$0xf]
      %v1645 = vld [vmem:[%s285 + $0x6c] sm:$0xf]
      %v1646 = vld [vmem:[%s285 + $0x70] sm:$0xf]
      %v1647 = vld [vmem:[%s285 + $0x78] sm:$0xf]
      %v1648 = vld [vmem:[%s285 + $0x7c] sm:$0xf]
      %v1649 = vld [vmem:[%s285 + $0x84] sm:$0xf]
      %v1650 = vld [vmem:[%s285 + $0x88] sm:$0xf]
      %v1651 = vld [vmem:[%s285 + $0x90] sm:$0xf]
      %v1652 = vld [vmem:[%s285 + $0x94] sm:$0xf]
      %v1653 = vld [vmem:[%s285 + $0x9c] sm:$0xf]
      %v1654 = vld [vmem:[%s285 + $0xa0] sm:$0xf]
      %v1655 = vld [vmem:[%s285 + $0xa8] sm:$0xf]
      %v1656 = vld [vmem:[%s285 + $0xac] sm:$0xf]
      %v1657 = vld [vmem:[%s285 + $0xb4] sm:$0xf]
      %v1658 = vld [vmem:[%s285 + $0xb8] sm:$0xf]
      %v1691 = vunpack.c.l.b16 %v1627
      %v1692 = vunpack.c.l.b16 %v1628
      %v1693 = vunpack.c.l.b16 %v1629
      %v1694 = vunpack.c.l.b16 %v1630
      %v1695 = vunpack.c.l.b16 %v1631
      %v1696 = vunpack.c.l.b16 %v1632
      %v1697 = vunpack.c.l.b16 %v1633
      %v1698 = vunpack.c.l.b16 %v1634
      %v1699 = vunpack.c.l.b16 %v1635
      %v1700 = vunpack.c.l.b16 %v1636
      %v1701 = vunpack.c.l.b16 %v1637
      %v1702 = vunpack.c.l.b16 %v1638
      %v1703 = vunpack.c.l.b16 %v1639
      %v1704 = vunpack.c.l.b16 %v1640
      %v1705 = vunpack.c.l.b16 %v1641
      %v1706 = vunpack.c.l.b16 %v1642
      %v1707 = vunpack.c.l.b16 %v1643
      %v1708 = vunpack.c.l.b16 %v1644
      %v1709 = vunpack.c.l.b16 %v1645
      %v1710 = vunpack.c.l.b16 %v1646
      %v1711 = vunpack.c.l.b16 %v1647
      %v1712 = vunpack.c.l.b16 %v1648
      %v1713 = vunpack.c.l.b16 %v1649
      %v1714 = vunpack.c.l.b16 %v1650
      %v1715 = vunpack.c.l.b16 %v1651
      %v1716 = vunpack.c.l.b16 %v1652
      %v1717 = vunpack.c.l.b16 %v1653
      %v1718 = vunpack.c.l.b16 %v1654
      %v1719 = vunpack.c.l.b16 %v1655
      %v1720 = vunpack.c.l.b16 %v1656
      %v1721 = vunpack.c.l.b16 %v1657
      %v1722 = vunpack.c.l.b16 %v1658
      %v1723 = vpack.c.b16 %v1692, %v1691
      %v1724 = vpack.c.b16 %v1694, %v1693
      %v1725 = vpack.c.b16 %v1696, %v1695
      %v1726 = vpack.c.b16 %v1698, %v1697
      %v1727 = vpack.c.b16 %v1700, %v1699
      %v1728 = vpack.c.b16 %v1702, %v1701
      %v1729 = vpack.c.b16 %v1704, %v1703
      %v1730 = vpack.c.b16 %v1706, %v1705
      %v1731 = vpack.c.b16 %v1708, %v1707
      %v1732 = vpack.c.b16 %v1710, %v1709
      %v1733 = vpack.c.b16 %v1712, %v1711
      %v1734 = vpack.c.b16 %v1714, %v1713
      %v1735 = vpack.c.b16 %v1716, %v1715
      %v1736 = vpack.c.b16 %v1718, %v1717
      %v1737 = vpack.c.b16 %v1720, %v1719
      %v1738 = vpack.c.b16 %v1722, %v1721
      %1739 = vrot.lane.b32.xlu0 %v1723, 96
      %v1740 = vpop.permute.xlu0 %1739
      %1741 = vrot.lane.b32.xlu0 %v1724, 96
      %v1742 = vpop.permute.xlu0 %1741
      %1743 = vrot.lane.b32.xlu0 %v1725, 96
      %v1744 = vpop.permute.xlu0 %1743
      %1745 = vrot.lane.b32.xlu0 %v1726, 96
      %v1746 = vpop.permute.xlu0 %1745
      %1747 = vrot.lane.b32.xlu0 %v1727, 96
      %v1748 = vpop.permute.xlu0 %1747
      %1749 = vrot.lane.b32.xlu0 %v1728, 96
      %v1750 = vpop.permute.xlu0 %1749
      %1751 = vrot.lane.b32.xlu0 %v1729, 96
      %v1752 = vpop.permute.xlu0 %1751
      %1753 = vrot.lane.b32.xlu0 %v1730, 96
      %v1754 = vpop.permute.xlu0 %1753
      %1755 = vrot.lane.b32.xlu0 %v1731, 96
      %v1756 = vpop.permute.xlu0 %1755
      %1757 = vrot.lane.b32.xlu0 %v1732, 96
      %v1758 = vpop.permute.xlu0 %1757
      %1759 = vrot.lane.b32.xlu0 %v1733, 96
      %v1760 = vpop.permute.xlu0 %1759
      %1761 = vrot.lane.b32.xlu0 %v1734, 96
      %v1762 = vpop.permute.xlu0 %1761
      %1763 = vrot.lane.b32.xlu0 %v1735, 96
      %v1764 = vpop.permute.xlu0 %1763
      %1765 = vrot.lane.b32.xlu0 %v1736, 96
      %v1766 = vpop.permute.xlu0 %1765
      %1767 = vrot.lane.b32.xlu0 %v1737, 96
      %v1768 = vpop.permute.xlu0 %1767
      %1769 = vrot.lane.b32.xlu0 %v1738, 96
      %v1770 = vpop.permute.xlu0 %1769
      %vm1787 = vcmask 1048320
      %1788 = vst.msk [vmem:[#allocation3] sm:$0xff] %vm1787, %v1740
      %1789 = vst.msk [vmem:[#allocation3 + $0x18] sm:$0xff] %vm1787, %v1742
      %1790 = vst.msk [vmem:[#allocation3 + $0x30] sm:$0xff] %vm1787, %v1744
      %1791 = vst.msk [vmem:[#allocation3 + $0x48] sm:$0xff] %vm1787, %v1746
      %1792 = vst.msk [vmem:[#allocation3 + $0x60] sm:$0xff] %vm1787, %v1748
      %1793 = vst.msk [vmem:[#allocation3 + $0x78] sm:$0xff] %vm1787, %v1750
      %1794 = vst.msk [vmem:[#allocation3 + $0x90] sm:$0xff] %vm1787, %v1752
      %1795 = vst.msk [vmem:[#allocation3 + $0xa8] sm:$0xff] %vm1787, %v1754
      %1796 = vst.msk [vmem:[#allocation3 + $0xc0] sm:$0xff] %vm1787, %v1756
      %1797 = vst.msk [vmem:[#allocation3 + $0xd8] sm:$0xff] %vm1787, %v1758
      %1798 = vst.msk [vmem:[#allocation3 + $0xf0] sm:$0xff] %vm1787, %v1760
      %1799 = vst.msk [vmem:[#allocation3 + $0x108] sm:$0xff] %vm1787, %v1762
      %1800 = vst.msk [vmem:[#allocation3 + $0x120] sm:$0xff] %vm1787, %v1764
      %1801 = vst.msk [vmem:[#allocation3 + $0x138] sm:$0xff] %vm1787, %v1766
      %1802 = vst.msk [vmem:[#allocation3 + $0x150] sm:$0xff] %vm1787, %v1768
      %1803 = vst.msk [vmem:[#allocation3 + $0x168] sm:$0xff] %vm1787, %v1770
      %v1804 = vld [vmem:[%s285] sm:$0xe]
      %v1805 = vld [vmem:[%s285 + $0x4] sm:$0xf]
      %v1806 = vld [vmem:[%s285 + $0x8] sm:$0x1]
      %v1807 = vld [vmem:[%s285 + $0xc] sm:$0xe]
      %v1808 = vld [vmem:[%s285 + $0x10] sm:$0xf]
      %v1809 = vld [vmem:[%s285 + $0x14] sm:$0x1]
      %v1810 = vld [vmem:[%s285 + $0x18] sm:$0xe]
      %v1811 = vld [vmem:[%s285 + $0x1c] sm:$0xf]
      %v1812 = vld [vmem:[%s285 + $0x20] sm:$0x1]
      %v1813 = vld [vmem:[%s285 + $0x24] sm:$0xe]
      %v1814 = vld [vmem:[%s285 + $0x28] sm:$0xf]
      %v1815 = vld [vmem:[%s285 + $0x2c] sm:$0x1]
      %v1816 = vld [vmem:[%s285 + $0x30] sm:$0xe]
      %v1817 = vld [vmem:[%s285 + $0x34] sm:$0xf]
      %v1818 = vld [vmem:[%s285 + $0x38] sm:$0x1]
      %v1819 = vld [vmem:[%s285 + $0x3c] sm:$0xe]
      %v1820 = vld [vmem:[%s285 + $0x40] sm:$0xf]
      %v1821 = vld [vmem:[%s285 + $0x44] sm:$0x1]
      %v1822 = vld [vmem:[%s285 + $0x48] sm:$0xe]
      %v1823 = vld [vmem:[%s285 + $0x4c] sm:$0xf]
      %v1824 = vld [vmem:[%s285 + $0x50] sm:$0x1]
      %v1825 = vld [vmem:[%s285 + $0x54] sm:$0xe]
      %v1826 = vld [vmem:[%s285 + $0x58] sm:$0xf]
      %v1827 = vld [vmem:[%s285 + $0x5c] sm:$0x1]
      %v1828 = vld [vmem:[%s285 + $0x60] sm:$0xe]
      %v1829 = vld [vmem:[%s285 + $0x64] sm:$0xf]
      %v1830 = vld [vmem:[%s285 + $0x68] sm:$0x1]
      %v1831 = vld [vmem:[%s285 + $0x6c] sm:$0xe]
      %v1832 = vld [vmem:[%s285 + $0x70] sm:$0xf]
      %v1833 = vld [vmem:[%s285 + $0x74] sm:$0x1]
      %v1834 = vld [vmem:[%s285 + $0x78] sm:$0xe]
      %v1835 = vld [vmem:[%s285 + $0x7c] sm:$0xf]
      %v1836 = vld [vmem:[%s285 + $0x80] sm:$0x1]
      %v1837 = vld [vmem:[%s285 + $0x84] sm:$0xe]
      %v1838 = vld [vmem:[%s285 + $0x88] sm:$0xf]
      %v1839 = vld [vmem:[%s285 + $0x8c] sm:$0x1]
      %v1840 = vld [vmem:[%s285 + $0x90] sm:$0xe]
      %v1841 = vld [vmem:[%s285 + $0x94] sm:$0xf]
      %v1842 = vld [vmem:[%s285 + $0x98] sm:$0x1]
      %v1843 = vld [vmem:[%s285 + $0x9c] sm:$0xe]
      %v1844 = vld [vmem:[%s285 + $0xa0] sm:$0xf]
      %v1845 = vld [vmem:[%s285 + $0xa4] sm:$0x1]
      %v1846 = vld [vmem:[%s285 + $0xa8] sm:$0xe]
      %v1847 = vld [vmem:[%s285 + $0xac] sm:$0xf]
      %v1848 = vld [vmem:[%s285 + $0xb0] sm:$0x1]
      %v1849 = vld [vmem:[%s285 + $0xb4] sm:$0xe]
      %v1850 = vld [vmem:[%s285 + $0xb8] sm:$0xf]
      %v1851 = vld [vmem:[%s285 + $0xbc] sm:$0x1]
      %v1900 = vrot.slane %v1804, 5
      %v1901 = vrot.slane %v1900, 4
      %v1902 = vrot.slane %v1805, 5
      %v1903 = vsel %vm1077, %v1901, %v1902
      %v1904 = vrot.slane %v1902, 4
      %v1905 = vrot.slane %v1806, 5
      %v1906 = vsel %vm1077, %v1904, %v1905
      %v1907 = vrot.slane %v1807, 5
      %v1908 = vrot.slane %v1907, 4
      %v1909 = vrot.slane %v1808, 5
      %v1910 = vsel %vm1077, %v1908, %v1909
      %v1911 = vrot.slane %v1909, 4
      %v1912 = vrot.slane %v1809, 5
      %v1913 = vsel %vm1077, %v1911, %v1912
      %v1914 = vrot.slane %v1810, 5
      %v1915 = vrot.slane %v1914, 4
      %v1916 = vrot.slane %v1811, 5
      %v1917 = vsel %vm1077, %v1915, %v1916
      %v1918 = vrot.slane %v1916, 4
      %v1919 = vrot.slane %v1812, 5
      %v1920 = vsel %vm1077, %v1918, %v1919
      %v1921 = vrot.slane %v1813, 5
      %v1922 = vrot.slane %v1921, 4
      %v1923 = vrot.slane %v1814, 5
      %v1924 = vsel %vm1077, %v1922, %v1923
      %v1925 = vrot.slane %v1923, 4
      %v1926 = vrot.slane %v1815, 5
      %v1927 = vsel %vm1077, %v1925, %v1926
      %v1928 = vrot.slane %v1816, 5
      %v1929 = vrot.slane %v1928, 4
      %v1930 = vrot.slane %v1817, 5
      %v1931 = vsel %vm1077, %v1929, %v1930
      %v1932 = vrot.slane %v1930, 4
      %v1933 = vrot.slane %v1818, 5
      %v1934 = vsel %vm1077, %v1932, %v1933
      %v1935 = vrot.slane %v1819, 5
      %v1936 = vrot.slane %v1935, 4
      %v1937 = vrot.slane %v1820, 5
      %v1938 = vsel %vm1077, %v1936, %v1937
      %v1939 = vrot.slane %v1937, 4
      %v1940 = vrot.slane %v1821, 5
      %v1941 = vsel %vm1077, %v1939, %v1940
      %v1942 = vrot.slane %v1822, 5
      %v1943 = vrot.slane %v1942, 4
      %v1944 = vrot.slane %v1823, 5
      %v1945 = vsel %vm1077, %v1943, %v1944
      %v1946 = vrot.slane %v1944, 4
      %v1947 = vrot.slane %v1824, 5
      %v1948 = vsel %vm1077, %v1946, %v1947
      %v1949 = vrot.slane %v1825, 5
      %v1950 = vrot.slane %v1949, 4
      %v1951 = vrot.slane %v1826, 5
      %v1952 = vsel %vm1077, %v1950, %v1951
      %v1953 = vrot.slane %v1951, 4
      %v1954 = vrot.slane %v1827, 5
      %v1955 = vsel %vm1077, %v1953, %v1954
      %v1956 = vrot.slane %v1828, 5
      %v1957 = vrot.slane %v1956, 4
      %v1958 = vrot.slane %v1829, 5
      %v1959 = vsel %vm1077, %v1957, %v1958
      %v1960 = vrot.slane %v1958, 4
      %v1961 = vrot.slane %v1830, 5
      %v1962 = vsel %vm1077, %v1960, %v1961
      %v1963 = vrot.slane %v1831, 5
      %v1964 = vrot.slane %v1963, 4
      %v1965 = vrot.slane %v1832, 5
      %v1966 = vsel %vm1077, %v1964, %v1965
      %v1967 = vrot.slane %v1965, 4
      %v1968 = vrot.slane %v1833, 5
      %v1969 = vsel %vm1077, %v1967, %v1968
      %v1970 = vrot.slane %v1834, 5
      %v1971 = vrot.slane %v1970, 4
      %v1972 = vrot.slane %v1835, 5
      %v1973 = vsel %vm1077, %v1971, %v1972
      %v1974 = vrot.slane %v1972, 4
      %v1975 = vrot.slane %v1836, 5
      %v1976 = vsel %vm1077, %v1974, %v1975
      %v1977 = vrot.slane %v1837, 5
      %v1978 = vrot.slane %v1977, 4
      %v1979 = vrot.slane %v1838, 5
      %v1980 = vsel %vm1077, %v1978, %v1979
      %v1981 = vrot.slane %v1979, 4
      %v1982 = vrot.slane %v1839, 5
      %v1983 = vsel %vm1077, %v1981, %v1982
      %v1984 = vrot.slane %v1840, 5
      %v1985 = vrot.slane %v1984, 4
      %v1986 = vrot.slane %v1841, 5
      %v1987 = vsel %vm1077, %v1985, %v1986
      %v1988 = vrot.slane %v1986, 4
      %v1989 = vrot.slane %v1842, 5
      %v1990 = vsel %vm1077, %v1988, %v1989
      %v1991 = vrot.slane %v1843, 5
      %v1992 = vrot.slane %v1991, 4
      %v1993 = vrot.slane %v1844, 5
      %v1994 = vsel %vm1077, %v1992, %v1993
      %v1995 = vrot.slane %v1993, 4
      %v1996 = vrot.slane %v1845, 5
      %v1997 = vsel %vm1077, %v1995, %v1996
      %v1998 = vrot.slane %v1846, 5
      %v1999 = vrot.slane %v1998, 4
      %v2000 = vrot.slane %v1847, 5
      %v2001 = vsel %vm1077, %v1999, %v2000
      %v2002 = vrot.slane %v2000, 4
      %v2003 = vrot.slane %v1848, 5
      %v2004 = vsel %vm1077, %v2002, %v2003
      %v2005 = vrot.slane %v1849, 5
      %v2006 = vrot.slane %v2005, 4
      %v2007 = vrot.slane %v1850, 5
      %v2008 = vsel %vm1077, %v2006, %v2007
      %v2009 = vrot.slane %v2007, 4
      %v2010 = vrot.slane %v1851, 5
      %v2011 = vsel %vm1077, %v2009, %v2010
      %v2012 = vunpack.c.l.b16 %v1903
      %v2013 = vunpack.c.l.b16 %v1906
      %v2014 = vunpack.c.l.b16 %v1910
      %v2015 = vunpack.c.l.b16 %v1913
      %v2016 = vunpack.c.l.b16 %v1917
      %v2017 = vunpack.c.l.b16 %v1920
      %v2018 = vunpack.c.l.b16 %v1924
      %v2019 = vunpack.c.l.b16 %v1927
      %v2020 = vunpack.c.l.b16 %v1931
      %v2021 = vunpack.c.l.b16 %v1934
      %v2022 = vunpack.c.l.b16 %v1938
      %v2023 = vunpack.c.l.b16 %v1941
      %v2024 = vunpack.c.l.b16 %v1945
      %v2025 = vunpack.c.l.b16 %v1948
      %v2026 = vunpack.c.l.b16 %v1952
      %v2027 = vunpack.c.l.b16 %v1955
      %v2028 = vunpack.c.l.b16 %v1959
      %v2029 = vunpack.c.l.b16 %v1962
      %v2030 = vunpack.c.l.b16 %v1966
      %v2031 = vunpack.c.l.b16 %v1969
      %v2032 = vunpack.c.l.b16 %v1973
      %v2033 = vunpack.c.l.b16 %v1976
      %v2034 = vunpack.c.l.b16 %v1980
      %v2035 = vunpack.c.l.b16 %v1983
      %v2036 = vunpack.c.l.b16 %v1987
      %v2037 = vunpack.c.l.b16 %v1990
      %v2038 = vunpack.c.l.b16 %v1994
      %v2039 = vunpack.c.l.b16 %v1997
      %v2040 = vunpack.c.l.b16 %v2001
      %v2041 = vunpack.c.l.b16 %v2004
      %v2042 = vunpack.c.l.b16 %v2008
      %v2043 = vunpack.c.l.b16 %v2011
      %v2044 = vpack.c.b16 %v2013, %v2012
      %v2045 = vpack.c.b16 %v2015, %v2014
      %v2046 = vpack.c.b16 %v2017, %v2016
      %v2047 = vpack.c.b16 %v2019, %v2018
      %v2048 = vpack.c.b16 %v2021, %v2020
      %v2049 = vpack.c.b16 %v2023, %v2022
      %v2050 = vpack.c.b16 %v2025, %v2024
      %v2051 = vpack.c.b16 %v2027, %v2026
      %v2052 = vpack.c.b16 %v2029, %v2028
      %v2053 = vpack.c.b16 %v2031, %v2030
      %v2054 = vpack.c.b16 %v2033, %v2032
      %v2055 = vpack.c.b16 %v2035, %v2034
      %v2056 = vpack.c.b16 %v2037, %v2036
      %v2057 = vpack.c.b16 %v2039, %v2038
      %v2058 = vpack.c.b16 %v2041, %v2040
      %v2059 = vpack.c.b16 %v2043, %v2042
      %2076 = vst.msk [vmem:[#allocation3 + $0x8] sm:$0xff] %vm962, %v2044
      %2077 = vst.msk [vmem:[#allocation3 + $0x20] sm:$0xff] %vm962, %v2045
      %2078 = vst.msk [vmem:[#allocation3 + $0x38] sm:$0xff] %vm962, %v2046
      %2079 = vst.msk [vmem:[#allocation3 + $0x50] sm:$0xff] %vm962, %v2047
      %2080 = vst.msk [vmem:[#allocation3 + $0x68] sm:$0xff] %vm962, %v2048
      %2081 = vst.msk [vmem:[#allocation3 + $0x80] sm:$0xff] %vm962, %v2049
      %2082 = vst.msk [vmem:[#allocation3 + $0x98] sm:$0xff] %vm962, %v2050
      %2083 = vst.msk [vmem:[#allocation3 + $0xb0] sm:$0xff] %vm962, %v2051
      %2084 = vst.msk [vmem:[#allocation3 + $0xc8] sm:$0xff] %vm962, %v2052
      %2085 = vst.msk [vmem:[#allocation3 + $0xe0] sm:$0xff] %vm962, %v2053
      %2086 = vst.msk [vmem:[#allocation3 + $0xf8] sm:$0xff] %vm962, %v2054
      %2087 = vst.msk [vmem:[#allocation3 + $0x110] sm:$0xff] %vm962, %v2055
      %2088 = vst.msk [vmem:[#allocation3 + $0x128] sm:$0xff] %vm962, %v2056
      %2089 = vst.msk [vmem:[#allocation3 + $0x140] sm:$0xff] %vm962, %v2057
      %2090 = vst.msk [vmem:[#allocation3 + $0x158] sm:$0xff] %vm962, %v2058
      %2091 = vst.msk [vmem:[#allocation3 + $0x170] sm:$0xff] %vm962, %v2059
      %v2092 = vld [vmem:[%s285] sm:$0xc]
      %v2093 = vld [vmem:[%s285 + $0x4] sm:$0xf]
      %v2094 = vld [vmem:[%s285 + $0x8] sm:$0x3]
      %v2095 = vld [vmem:[%s285 + $0xc] sm:$0xc]
      %v2096 = vld [vmem:[%s285 + $0x10] sm:$0xf]
      %v2097 = vld [vmem:[%s285 + $0x14] sm:$0x3]
      %v2098 = vld [vmem:[%s285 + $0x18] sm:$0xc]
      %v2099 = vld [vmem:[%s285 + $0x1c] sm:$0xf]
      %v2100 = vld [vmem:[%s285 + $0x20] sm:$0x3]
      %v2101 = vld [vmem:[%s285 + $0x24] sm:$0xc]
      %v2102 = vld [vmem:[%s285 + $0x28] sm:$0xf]
      %v2103 = vld [vmem:[%s285 + $0x2c] sm:$0x3]
      %v2104 = vld [vmem:[%s285 + $0x30] sm:$0xc]
      %v2105 = vld [vmem:[%s285 + $0x34] sm:$0xf]
      %v2106 = vld [vmem:[%s285 + $0x38] sm:$0x3]
      %v2107 = vld [vmem:[%s285 + $0x3c] sm:$0xc]
      %v2108 = vld [vmem:[%s285 + $0x40] sm:$0xf]
      %v2109 = vld [vmem:[%s285 + $0x44] sm:$0x3]
      %v2110 = vld [vmem:[%s285 + $0x48] sm:$0xc]
      %v2111 = vld [vmem:[%s285 + $0x4c] sm:$0xf]
      %v2112 = vld [vmem:[%s285 + $0x50] sm:$0x3]
      %v2113 = vld [vmem:[%s285 + $0x54] sm:$0xc]
      %v2114 = vld [vmem:[%s285 + $0x58] sm:$0xf]
      %v2115 = vld [vmem:[%s285 + $0x5c] sm:$0x3]
      %v2116 = vld [vmem:[%s285 + $0x60] sm:$0xc]
      %v2117 = vld [vmem:[%s285 + $0x64] sm:$0xf]
      %v2118 = vld [vmem:[%s285 + $0x68] sm:$0x3]
      %v2119 = vld [vmem:[%s285 + $0x6c] sm:$0xc]
      %v2120 = vld [vmem:[%s285 + $0x70] sm:$0xf]
      %v2121 = vld [vmem:[%s285 + $0x74] sm:$0x3]
      %v2122 = vld [vmem:[%s285 + $0x78] sm:$0xc]
      %v2123 = vld [vmem:[%s285 + $0x7c] sm:$0xf]
      %v2124 = vld [vmem:[%s285 + $0x80] sm:$0x3]
      %v2125 = vld [vmem:[%s285 + $0x84] sm:$0xc]
      %v2126 = vld [vmem:[%s285 + $0x88] sm:$0xf]
      %v2127 = vld [vmem:[%s285 + $0x8c] sm:$0x3]
      %v2128 = vld [vmem:[%s285 + $0x90] sm:$0xc]
      %v2129 = vld [vmem:[%s285 + $0x94] sm:$0xf]
      %v2130 = vld [vmem:[%s285 + $0x98] sm:$0x3]
      %v2131 = vld [vmem:[%s285 + $0x9c] sm:$0xc]
      %v2132 = vld [vmem:[%s285 + $0xa0] sm:$0xf]
      %v2133 = vld [vmem:[%s285 + $0xa4] sm:$0x3]
      %v2134 = vld [vmem:[%s285 + $0xa8] sm:$0xc]
      %v2135 = vld [vmem:[%s285 + $0xac] sm:$0xf]
      %v2136 = vld [vmem:[%s285 + $0xb0] sm:$0x3]
      %v2137 = vld [vmem:[%s285 + $0xb4] sm:$0xc]
      %v2138 = vld [vmem:[%s285 + $0xb8] sm:$0xf]
      %v2139 = vld [vmem:[%s285 + $0xbc] sm:$0x3]
      %v2188 = vrot.slane %v2092, 6
      %v2189 = vrot.slane %v2188, 4
      %v2190 = vrot.slane %v2093, 6
      %v2191 = vsel %vm1401, %v2189, %v2190
      %v2192 = vrot.slane %v2190, 4
      %v2193 = vrot.slane %v2094, 6
      %v2194 = vsel %vm1401, %v2192, %v2193
      %v2195 = vrot.slane %v2095, 6
      %v2196 = vrot.slane %v2195, 4
      %v2197 = vrot.slane %v2096, 6
      %v2198 = vsel %vm1401, %v2196, %v2197
      %v2199 = vrot.slane %v2197, 4
      %v2200 = vrot.slane %v2097, 6
      %v2201 = vsel %vm1401, %v2199, %v2200
      %v2202 = vrot.slane %v2098, 6
      %v2203 = vrot.slane %v2202, 4
      %v2204 = vrot.slane %v2099, 6
      %v2205 = vsel %vm1401, %v2203, %v2204
      %v2206 = vrot.slane %v2204, 4
      %v2207 = vrot.slane %v2100, 6
      %v2208 = vsel %vm1401, %v2206, %v2207
      %v2209 = vrot.slane %v2101, 6
      %v2210 = vrot.slane %v2209, 4
      %v2211 = vrot.slane %v2102, 6
      %v2212 = vsel %vm1401, %v2210, %v2211
      %v2213 = vrot.slane %v2211, 4
      %v2214 = vrot.slane %v2103, 6
      %v2215 = vsel %vm1401, %v2213, %v2214
      %v2216 = vrot.slane %v2104, 6
      %v2217 = vrot.slane %v2216, 4
      %v2218 = vrot.slane %v2105, 6
      %v2219 = vsel %vm1401, %v2217, %v2218
      %v2220 = vrot.slane %v2218, 4
      %v2221 = vrot.slane %v2106, 6
      %v2222 = vsel %vm1401, %v2220, %v2221
      %v2223 = vrot.slane %v2107, 6
      %v2224 = vrot.slane %v2223, 4
      %v2225 = vrot.slane %v2108, 6
      %v2226 = vsel %vm1401, %v2224, %v2225
      %v2227 = vrot.slane %v2225, 4
      %v2228 = vrot.slane %v2109, 6
      %v2229 = vsel %vm1401, %v2227, %v2228
      %v2230 = vrot.slane %v2110, 6
      %v2231 = vrot.slane %v2230, 4
      %v2232 = vrot.slane %v2111, 6
      %v2233 = vsel %vm1401, %v2231, %v2232
      %v2234 = vrot.slane %v2232, 4
      %v2235 = vrot.slane %v2112, 6
      %v2236 = vsel %vm1401, %v2234, %v2235
      %v2237 = vrot.slane %v2113, 6
      %v2238 = vrot.slane %v2237, 4
      %v2239 = vrot.slane %v2114, 6
      %v2240 = vsel %vm1401, %v2238, %v2239
      %v2241 = vrot.slane %v2239, 4
      %v2242 = vrot.slane %v2115, 6
      %v2243 = vsel %vm1401, %v2241, %v2242
      %v2244 = vrot.slane %v2116, 6
      %v2245 = vrot.slane %v2244, 4
      %v2246 = vrot.slane %v2117, 6
      %v2247 = vsel %vm1401, %v2245, %v2246
      %v2248 = vrot.slane %v2246, 4
      %v2249 = vrot.slane %v2118, 6
      %v2250 = vsel %vm1401, %v2248, %v2249
      %v2251 = vrot.slane %v2119, 6
      %v2252 = vrot.slane %v2251, 4
      %v2253 = vrot.slane %v2120, 6
      %v2254 = vsel %vm1401, %v2252, %v2253
      %v2255 = vrot.slane %v2253, 4
      %v2256 = vrot.slane %v2121, 6
      %v2257 = vsel %vm1401, %v2255, %v2256
      %v2258 = vrot.slane %v2122, 6
      %v2259 = vrot.slane %v2258, 4
      %v2260 = vrot.slane %v2123, 6
      %v2261 = vsel %vm1401, %v2259, %v2260
      %v2262 = vrot.slane %v2260, 4
      %v2263 = vrot.slane %v2124, 6
      %v2264 = vsel %vm1401, %v2262, %v2263
      %v2265 = vrot.slane %v2125, 6
      %v2266 = vrot.slane %v2265, 4
      %v2267 = vrot.slane %v2126, 6
      %v2268 = vsel %vm1401, %v2266, %v2267
      %v2269 = vrot.slane %v2267, 4
      %v2270 = vrot.slane %v2127, 6
      %v2271 = vsel %vm1401, %v2269, %v2270
      %v2272 = vrot.slane %v2128, 6
      %v2273 = vrot.slane %v2272, 4
      %v2274 = vrot.slane %v2129, 6
      %v2275 = vsel %vm1401, %v2273, %v2274
      %v2276 = vrot.slane %v2274, 4
      %v2277 = vrot.slane %v2130, 6
      %v2278 = vsel %vm1401, %v2276, %v2277
      %v2279 = vrot.slane %v2131, 6
      %v2280 = vrot.slane %v2279, 4
      %v2281 = vrot.slane %v2132, 6
      %v2282 = vsel %vm1401, %v2280, %v2281
      %v2283 = vrot.slane %v2281, 4
      %v2284 = vrot.slane %v2133, 6
      %v2285 = vsel %vm1401, %v2283, %v2284
      %v2286 = vrot.slane %v2134, 6
      %v2287 = vrot.slane %v2286, 4
      %v2288 = vrot.slane %v2135, 6
      %v2289 = vsel %vm1401, %v2287, %v2288
      %v2290 = vrot.slane %v2288, 4
      %v2291 = vrot.slane %v2136, 6
      %v2292 = vsel %vm1401, %v2290, %v2291
      %v2293 = vrot.slane %v2137, 6
      %v2294 = vrot.slane %v2293, 4
      %v2295 = vrot.slane %v2138, 6
      %v2296 = vsel %vm1401, %v2294, %v2295
      %v2297 = vrot.slane %v2295, 4
      %v2298 = vrot.slane %v2139, 6
      %v2299 = vsel %vm1401, %v2297, %v2298
      %v2300 = vunpack.c.l.b16 %v2191
      %v2301 = vunpack.c.l.b16 %v2194
      %v2302 = vunpack.c.l.b16 %v2198
      %v2303 = vunpack.c.l.b16 %v2201
      %v2304 = vunpack.c.l.b16 %v2205
      %v2305 = vunpack.c.l.b16 %v2208
      %v2306 = vunpack.c.l.b16 %v2212
      %v2307 = vunpack.c.l.b16 %v2215
      %v2308 = vunpack.c.l.b16 %v2219
      %v2309 = vunpack.c.l.b16 %v2222
      %v2310 = vunpack.c.l.b16 %v2226
      %v2311 = vunpack.c.l.b16 %v2229
      %v2312 = vunpack.c.l.b16 %v2233
      %v2313 = vunpack.c.l.b16 %v2236
      %v2314 = vunpack.c.l.b16 %v2240
      %v2315 = vunpack.c.l.b16 %v2243
      %v2316 = vunpack.c.l.b16 %v2247
      %v2317 = vunpack.c.l.b16 %v2250
      %v2318 = vunpack.c.l.b16 %v2254
      %v2319 = vunpack.c.l.b16 %v2257
      %v2320 = vunpack.c.l.b16 %v2261
      %v2321 = vunpack.c.l.b16 %v2264
      %v2322 = vunpack.c.l.b16 %v2268
      %v2323 = vunpack.c.l.b16 %v2271
      %v2324 = vunpack.c.l.b16 %v2275
      %v2325 = vunpack.c.l.b16 %v2278
      %v2326 = vunpack.c.l.b16 %v2282
      %v2327 = vunpack.c.l.b16 %v2285
      %v2328 = vunpack.c.l.b16 %v2289
      %v2329 = vunpack.c.l.b16 %v2292
      %v2330 = vunpack.c.l.b16 %v2296
      %v2331 = vunpack.c.l.b16 %v2299
      %v2332 = vpack.c.b16 %v2301, %v2300
      %v2333 = vpack.c.b16 %v2303, %v2302
      %v2334 = vpack.c.b16 %v2305, %v2304
      %v2335 = vpack.c.b16 %v2307, %v2306
      %v2336 = vpack.c.b16 %v2309, %v2308
      %v2337 = vpack.c.b16 %v2311, %v2310
      %v2338 = vpack.c.b16 %v2313, %v2312
      %v2339 = vpack.c.b16 %v2315, %v2314
      %v2340 = vpack.c.b16 %v2317, %v2316
      %v2341 = vpack.c.b16 %v2319, %v2318
      %v2342 = vpack.c.b16 %v2321, %v2320
      %v2343 = vpack.c.b16 %v2323, %v2322
      %v2344 = vpack.c.b16 %v2325, %v2324
      %v2345 = vpack.c.b16 %v2327, %v2326
      %v2346 = vpack.c.b16 %v2329, %v2328
      %v2347 = vpack.c.b16 %v2331, %v2330
      %2348 = vrot.lane.b32.xlu0 %v2332, 32
      %v2349 = vpop.permute.xlu0 %2348
      %2350 = vrot.lane.b32.xlu0 %v2333, 32
      %v2351 = vpop.permute.xlu0 %2350
      %2352 = vrot.lane.b32.xlu0 %v2334, 32
      %v2353 = vpop.permute.xlu0 %2352
      %2354 = vrot.lane.b32.xlu0 %v2335, 32
      %v2355 = vpop.permute.xlu0 %2354
      %2356 = vrot.lane.b32.xlu0 %v2336, 32
      %v2357 = vpop.permute.xlu0 %2356
      %2358 = vrot.lane.b32.xlu0 %v2337, 32
      %v2359 = vpop.permute.xlu0 %2358
      %2360 = vrot.lane.b32.xlu0 %v2338, 32
      %v2361 = vpop.permute.xlu0 %2360
      %2362 = vrot.lane.b32.xlu0 %v2339, 32
      %v2363 = vpop.permute.xlu0 %2362
      %2364 = vrot.lane.b32.xlu0 %v2340, 32
      %v2365 = vpop.permute.xlu0 %2364
      %2366 = vrot.lane.b32.xlu0 %v2341, 32
      %v2367 = vpop.permute.xlu0 %2366
      %2368 = vrot.lane.b32.xlu0 %v2342, 32
      %v2369 = vpop.permute.xlu0 %2368
      %2370 = vrot.lane.b32.xlu0 %v2343, 32
      %v2371 = vpop.permute.xlu0 %2370
      %2372 = vrot.lane.b32.xlu0 %v2344, 32
      %v2373 = vpop.permute.xlu0 %2372
      %2374 = vrot.lane.b32.xlu0 %v2345, 32
      %v2375 = vpop.permute.xlu0 %2374
      %2376 = vrot.lane.b32.xlu0 %v2346, 32
      %v2377 = vpop.permute.xlu0 %2376
      %2378 = vrot.lane.b32.xlu0 %v2347, 32
      %v2379 = vpop.permute.xlu0 %2378
      %2396 = vst.msk [vmem:[#allocation3 + $0x8] sm:$0xff] %vm1286, %v2349
      %2397 = vst.msk [vmem:[#allocation3 + $0x20] sm:$0xff] %vm1286, %v2351
      %2398 = vst.msk [vmem:[#allocation3 + $0x38] sm:$0xff] %vm1286, %v2353
      %2399 = vst.msk [vmem:[#allocation3 + $0x50] sm:$0xff] %vm1286, %v2355
      %2400 = vst.msk [vmem:[#allocation3 + $0x68] sm:$0xff] %vm1286, %v2357
      %2401 = vst.msk [vmem:[#allocation3 + $0x80] sm:$0xff] %vm1286, %v2359
      %2402 = vst.msk [vmem:[#allocation3 + $0x98] sm:$0xff] %vm1286, %v2361
      %2403 = vst.msk [vmem:[#allocation3 + $0xb0] sm:$0xff] %vm1286, %v2363
      %2404 = vst.msk [vmem:[#allocation3 + $0xc8] sm:$0xff] %vm1286, %v2365
      %2405 = vst.msk [vmem:[#allocation3 + $0xe0] sm:$0xff] %vm1286, %v2367
      %2406 = vst.msk [vmem:[#allocation3 + $0xf8] sm:$0xff] %vm1286, %v2369
      %2407 = vst.msk [vmem:[#allocation3 + $0x110] sm:$0xff] %vm1286, %v2371
      %2408 = vst.msk [vmem:[#allocation3 + $0x128] sm:$0xff] %vm1286, %v2373
      %2409 = vst.msk [vmem:[#allocation3 + $0x140] sm:$0xff] %vm1286, %v2375
      %2410 = vst.msk [vmem:[#allocation3 + $0x158] sm:$0xff] %vm1286, %v2377
      %2411 = vst.msk [vmem:[#allocation3 + $0x170] sm:$0xff] %vm1286, %v2379
      %s2412 = scalar_lea.vmem [#allocation2], 48
      %v2413 = vld [vmem:[%s2412] sm:$0xf]
      %v2414 = vld [vmem:[%s2412 + $0x4] sm:$0xf]
      %v2415 = vld [vmem:[%s2412 + $0xc] sm:$0xf]
      %v2416 = vld [vmem:[%s2412 + $0x10] sm:$0xf]
      %v2417 = vld [vmem:[%s2412 + $0x18] sm:$0xf]
      %v2418 = vld [vmem:[%s2412 + $0x1c] sm:$0xf]
      %v2419 = vld [vmem:[%s2412 + $0x24] sm:$0xf]
      %v2420 = vld [vmem:[%s2412 + $0x28] sm:$0xf]
      %v2421 = vld [vmem:[%s2412 + $0x30] sm:$0xf]
      %v2422 = vld [vmem:[%s2412 + $0x34] sm:$0xf]
      %v2423 = vld [vmem:[%s2412 + $0x3c] sm:$0xf]
      %v2424 = vld [vmem:[%s2412 + $0x40] sm:$0xf]
      %v2425 = vld [vmem:[%s2412 + $0x48] sm:$0xf]
      %v2426 = vld [vmem:[%s2412 + $0x4c] sm:$0xf]
      %v2427 = vld [vmem:[%s2412 + $0x54] sm:$0xf]
      %v2428 = vld [vmem:[%s2412 + $0x58] sm:$0xf]
      %v2429 = vld [vmem:[%s2412 + $0x60] sm:$0xf]
      %v2430 = vld [vmem:[%s2412 + $0x64] sm:$0xf]
      %v2431 = vld [vmem:[%s2412 + $0x6c] sm:$0xf]
      %v2432 = vld [vmem:[%s2412 + $0x70] sm:$0xf]
      %v2433 = vld [vmem:[%s2412 + $0x78] sm:$0xf]
      %v2434 = vld [vmem:[%s2412 + $0x7c] sm:$0xf]
      %v2435 = vld [vmem:[%s2412 + $0x84] sm:$0xf]
      %v2436 = vld [vmem:[%s2412 + $0x88] sm:$0xf]
      %v2437 = vld [vmem:[%s2412 + $0x90] sm:$0xf]
      %v2438 = vld [vmem:[%s2412 + $0x94] sm:$0xf]
      %v2439 = vld [vmem:[%s2412 + $0x9c] sm:$0xf]
      %v2440 = vld [vmem:[%s2412 + $0xa0] sm:$0xf]
      %v2441 = vld [vmem:[%s2412 + $0xa8] sm:$0xf]
      %v2442 = vld [vmem:[%s2412 + $0xac] sm:$0xf]
      %v2443 = vld [vmem:[%s2412 + $0xb4] sm:$0xf]
      %v2444 = vld [vmem:[%s2412 + $0xb8] sm:$0xf]
      %v2477 = vunpack.c.l.b16 %v2413
      %v2478 = vunpack.c.l.b16 %v2414
      %v2479 = vunpack.c.l.b16 %v2415
      %v2480 = vunpack.c.l.b16 %v2416
      %v2481 = vunpack.c.l.b16 %v2417
      %v2482 = vunpack.c.l.b16 %v2418
      %v2483 = vunpack.c.l.b16 %v2419
      %v2484 = vunpack.c.l.b16 %v2420
      %v2485 = vunpack.c.l.b16 %v2421
      %v2486 = vunpack.c.l.b16 %v2422
      %v2487 = vunpack.c.l.b16 %v2423
      %v2488 = vunpack.c.l.b16 %v2424
      %v2489 = vunpack.c.l.b16 %v2425
      %v2490 = vunpack.c.l.b16 %v2426
      %v2491 = vunpack.c.l.b16 %v2427
      %v2492 = vunpack.c.l.b16 %v2428
      %v2493 = vunpack.c.l.b16 %v2429
      %v2494 = vunpack.c.l.b16 %v2430
      %v2495 = vunpack.c.l.b16 %v2431
      %v2496 = vunpack.c.l.b16 %v2432
      %v2497 = vunpack.c.l.b16 %v2433
      %v2498 = vunpack.c.l.b16 %v2434
      %v2499 = vunpack.c.l.b16 %v2435
      %v2500 = vunpack.c.l.b16 %v2436
      %v2501 = vunpack.c.l.b16 %v2437
      %v2502 = vunpack.c.l.b16 %v2438
      %v2503 = vunpack.c.l.b16 %v2439
      %v2504 = vunpack.c.l.b16 %v2440
      %v2505 = vunpack.c.l.b16 %v2441
      %v2506 = vunpack.c.l.b16 %v2442
      %v2507 = vunpack.c.l.b16 %v2443
      %v2508 = vunpack.c.l.b16 %v2444
      %v2509 = vpack.c.b16 %v2478, %v2477
      %v2510 = vpack.c.b16 %v2480, %v2479
      %v2511 = vpack.c.b16 %v2482, %v2481
      %v2512 = vpack.c.b16 %v2484, %v2483
      %v2513 = vpack.c.b16 %v2486, %v2485
      %v2514 = vpack.c.b16 %v2488, %v2487
      %v2515 = vpack.c.b16 %v2490, %v2489
      %v2516 = vpack.c.b16 %v2492, %v2491
      %v2517 = vpack.c.b16 %v2494, %v2493
      %v2518 = vpack.c.b16 %v2496, %v2495
      %v2519 = vpack.c.b16 %v2498, %v2497
      %v2520 = vpack.c.b16 %v2500, %v2499
      %v2521 = vpack.c.b16 %v2502, %v2501
      %v2522 = vpack.c.b16 %v2504, %v2503
      %v2523 = vpack.c.b16 %v2506, %v2505
      %v2524 = vpack.c.b16 %v2508, %v2507
      %2525 = vrot.lane.b32.xlu0 %v2509, 64
      %v2526 = vpop.permute.xlu0 %2525
      %2527 = vrot.lane.b32.xlu0 %v2510, 64
      %v2528 = vpop.permute.xlu0 %2527
      %2529 = vrot.lane.b32.xlu0 %v2511, 64
      %v2530 = vpop.permute.xlu0 %2529
      %2531 = vrot.lane.b32.xlu0 %v2512, 64
      %v2532 = vpop.permute.xlu0 %2531
      %2533 = vrot.lane.b32.xlu0 %v2513, 64
      %v2534 = vpop.permute.xlu0 %2533
      %2535 = vrot.lane.b32.xlu0 %v2514, 64
      %v2536 = vpop.permute.xlu0 %2535
      %2537 = vrot.lane.b32.xlu0 %v2515, 64
      %v2538 = vpop.permute.xlu0 %2537
      %2539 = vrot.lane.b32.xlu0 %v2516, 64
      %v2540 = vpop.permute.xlu0 %2539
      %2541 = vrot.lane.b32.xlu0 %v2517, 64
      %v2542 = vpop.permute.xlu0 %2541
      %2543 = vrot.lane.b32.xlu0 %v2518, 64
      %v2544 = vpop.permute.xlu0 %2543
      %2545 = vrot.lane.b32.xlu0 %v2519, 64
      %v2546 = vpop.permute.xlu0 %2545
      %2547 = vrot.lane.b32.xlu0 %v2520, 64
      %v2548 = vpop.permute.xlu0 %2547
      %2549 = vrot.lane.b32.xlu0 %v2521, 64
      %v2550 = vpop.permute.xlu0 %2549
      %2551 = vrot.lane.b32.xlu0 %v2522, 64
      %v2552 = vpop.permute.xlu0 %2551
      %2553 = vrot.lane.b32.xlu0 %v2523, 64
      %v2554 = vpop.permute.xlu0 %2553
      %2555 = vrot.lane.b32.xlu0 %v2524, 64
      %v2556 = vpop.permute.xlu0 %2555
      %2573 = vst.msk [vmem:[#allocation3 + $0x8] sm:$0xff] %vm1610, %v2526
      %2574 = vst.msk [vmem:[#allocation3 + $0x20] sm:$0xff] %vm1610, %v2528
      %2575 = vst.msk [vmem:[#allocation3 + $0x38] sm:$0xff] %vm1610, %v2530
      %2576 = vst.msk [vmem:[#allocation3 + $0x50] sm:$0xff] %vm1610, %v2532
      %2577 = vst.msk [vmem:[#allocation3 + $0x68] sm:$0xff] %vm1610, %v2534
      %2578 = vst.msk [vmem:[#allocation3 + $0x80] sm:$0xff] %vm1610, %v2536
      %2579 = vst.msk [vmem:[#allocation3 + $0x98] sm:$0xff] %vm1610, %v2538
      %2580 = vst.msk [vmem:[#allocation3 + $0xb0] sm:$0xff] %vm1610, %v2540
      %2581 = vst.msk [vmem:[#allocation3 + $0xc8] sm:$0xff] %vm1610, %v2542
      %2582 = vst.msk [vmem:[#allocation3 + $0xe0] sm:$0xff] %vm1610, %v2544
      %2583 = vst.msk [vmem:[#allocation3 + $0xf8] sm:$0xff] %vm1610, %v2546
      %2584 = vst.msk [vmem:[#allocation3 + $0x110] sm:$0xff] %vm1610, %v2548
      %2585 = vst.msk [vmem:[#allocation3 + $0x128] sm:$0xff] %vm1610, %v2550
      %2586 = vst.msk [vmem:[#allocation3 + $0x140] sm:$0xff] %vm1610, %v2552
      %2587 = vst.msk [vmem:[#allocation3 + $0x158] sm:$0xff] %vm1610, %v2554
      %2588 = vst.msk [vmem:[#allocation3 + $0x170] sm:$0xff] %vm1610, %v2556
      %v2589 = vld [vmem:[%s2412] sm:$0xe]
      %v2590 = vld [vmem:[%s2412 + $0x4] sm:$0xf]
      %v2591 = vld [vmem:[%s2412 + $0x8] sm:$0x1]
      %v2592 = vld [vmem:[%s2412 + $0xc] sm:$0xe]
      %v2593 = vld [vmem:[%s2412 + $0x10] sm:$0xf]
      %v2594 = vld [vmem:[%s2412 + $0x14] sm:$0x1]
      %v2595 = vld [vmem:[%s2412 + $0x18] sm:$0xe]
      %v2596 = vld [vmem:[%s2412 + $0x1c] sm:$0xf]
      %v2597 = vld [vmem:[%s2412 + $0x20] sm:$0x1]
      %v2598 = vld [vmem:[%s2412 + $0x24] sm:$0xe]
      %v2599 = vld [vmem:[%s2412 + $0x28] sm:$0xf]
      %v2600 = vld [vmem:[%s2412 + $0x2c] sm:$0x1]
      %v2601 = vld [vmem:[%s2412 + $0x30] sm:$0xe]
      %v2602 = vld [vmem:[%s2412 + $0x34] sm:$0xf]
      %v2603 = vld [vmem:[%s2412 + $0x38] sm:$0x1]
      %v2604 = vld [vmem:[%s2412 + $0x3c] sm:$0xe]
      %v2605 = vld [vmem:[%s2412 + $0x40] sm:$0xf]
      %v2606 = vld [vmem:[%s2412 + $0x44] sm:$0x1]
      %v2607 = vld [vmem:[%s2412 + $0x48] sm:$0xe]
      %v2608 = vld [vmem:[%s2412 + $0x4c] sm:$0xf]
      %v2609 = vld [vmem:[%s2412 + $0x50] sm:$0x1]
      %v2610 = vld [vmem:[%s2412 + $0x54] sm:$0xe]
      %v2611 = vld [vmem:[%s2412 + $0x58] sm:$0xf]
      %v2612 = vld [vmem:[%s2412 + $0x5c] sm:$0x1]
      %v2613 = vld [vmem:[%s2412 + $0x60] sm:$0xe]
      %v2614 = vld [vmem:[%s2412 + $0x64] sm:$0xf]
      %v2615 = vld [vmem:[%s2412 + $0x68] sm:$0x1]
      %v2616 = vld [vmem:[%s2412 + $0x6c] sm:$0xe]
      %v2617 = vld [vmem:[%s2412 + $0x70] sm:$0xf]
      %v2618 = vld [vmem:[%s2412 + $0x74] sm:$0x1]
      %v2619 = vld [vmem:[%s2412 + $0x78] sm:$0xe]
      %v2620 = vld [vmem:[%s2412 + $0x7c] sm:$0xf]
      %v2621 = vld [vmem:[%s2412 + $0x80] sm:$0x1]
      %v2622 = vld [vmem:[%s2412 + $0x84] sm:$0xe]
      %v2623 = vld [vmem:[%s2412 + $0x88] sm:$0xf]
      %v2624 = vld [vmem:[%s2412 + $0x8c] sm:$0x1]
      %v2625 = vld [vmem:[%s2412 + $0x90] sm:$0xe]
      %v2626 = vld [vmem:[%s2412 + $0x94] sm:$0xf]
      %v2627 = vld [vmem:[%s2412 + $0x98] sm:$0x1]
      %v2628 = vld [vmem:[%s2412 + $0x9c] sm:$0xe]
      %v2629 = vld [vmem:[%s2412 + $0xa0] sm:$0xf]
      %v2630 = vld [vmem:[%s2412 + $0xa4] sm:$0x1]
      %v2631 = vld [vmem:[%s2412 + $0xa8] sm:$0xe]
      %v2632 = vld [vmem:[%s2412 + $0xac] sm:$0xf]
      %v2633 = vld [vmem:[%s2412 + $0xb0] sm:$0x1]
      %v2634 = vld [vmem:[%s2412 + $0xb4] sm:$0xe]
      %v2635 = vld [vmem:[%s2412 + $0xb8] sm:$0xf]
      %v2636 = vld [vmem:[%s2412 + $0xbc] sm:$0x1]
      %v2685 = vrot.slane %v2589, 5
      %v2686 = vrot.slane %v2685, 4
      %v2687 = vrot.slane %v2590, 5
      %v2688 = vsel %vm1077, %v2686, %v2687
      %v2689 = vrot.slane %v2687, 4
      %v2690 = vrot.slane %v2591, 5
      %v2691 = vsel %vm1077, %v2689, %v2690
      %v2692 = vrot.slane %v2592, 5
      %v2693 = vrot.slane %v2692, 4
      %v2694 = vrot.slane %v2593, 5
      %v2695 = vsel %vm1077, %v2693, %v2694
      %v2696 = vrot.slane %v2694, 4
      %v2697 = vrot.slane %v2594, 5
      %v2698 = vsel %vm1077, %v2696, %v2697
      %v2699 = vrot.slane %v2595, 5
      %v2700 = vrot.slane %v2699, 4
      %v2701 = vrot.slane %v2596, 5
      %v2702 = vsel %vm1077, %v2700, %v2701
      %v2703 = vrot.slane %v2701, 4
      %v2704 = vrot.slane %v2597, 5
      %v2705 = vsel %vm1077, %v2703, %v2704
      %v2706 = vrot.slane %v2598, 5
      %v2707 = vrot.slane %v2706, 4
      %v2708 = vrot.slane %v2599, 5
      %v2709 = vsel %vm1077, %v2707, %v2708
      %v2710 = vrot.slane %v2708, 4
      %v2711 = vrot.slane %v2600, 5
      %v2712 = vsel %vm1077, %v2710, %v2711
      %v2713 = vrot.slane %v2601, 5
      %v2714 = vrot.slane %v2713, 4
      %v2715 = vrot.slane %v2602, 5
      %v2716 = vsel %vm1077, %v2714, %v2715
      %v2717 = vrot.slane %v2715, 4
      %v2718 = vrot.slane %v2603, 5
      %v2719 = vsel %vm1077, %v2717, %v2718
      %v2720 = vrot.slane %v2604, 5
      %v2721 = vrot.slane %v2720, 4
      %v2722 = vrot.slane %v2605, 5
      %v2723 = vsel %vm1077, %v2721, %v2722
      %v2724 = vrot.slane %v2722, 4
      %v2725 = vrot.slane %v2606, 5
      %v2726 = vsel %vm1077, %v2724, %v2725
      %v2727 = vrot.slane %v2607, 5
      %v2728 = vrot.slane %v2727, 4
      %v2729 = vrot.slane %v2608, 5
      %v2730 = vsel %vm1077, %v2728, %v2729
      %v2731 = vrot.slane %v2729, 4
      %v2732 = vrot.slane %v2609, 5
      %v2733 = vsel %vm1077, %v2731, %v2732
      %v2734 = vrot.slane %v2610, 5
      %v2735 = vrot.slane %v2734, 4
      %v2736 = vrot.slane %v2611, 5
      %v2737 = vsel %vm1077, %v2735, %v2736
      %v2738 = vrot.slane %v2736, 4
      %v2739 = vrot.slane %v2612, 5
      %v2740 = vsel %vm1077, %v2738, %v2739
      %v2741 = vrot.slane %v2613, 5
      %v2742 = vrot.slane %v2741, 4
      %v2743 = vrot.slane %v2614, 5
      %v2744 = vsel %vm1077, %v2742, %v2743
      %v2745 = vrot.slane %v2743, 4
      %v2746 = vrot.slane %v2615, 5
      %v2747 = vsel %vm1077, %v2745, %v2746
      %v2748 = vrot.slane %v2616, 5
      %v2749 = vrot.slane %v2748, 4
      %v2750 = vrot.slane %v2617, 5
      %v2751 = vsel %vm1077, %v2749, %v2750
      %v2752 = vrot.slane %v2750, 4
      %v2753 = vrot.slane %v2618, 5
      %v2754 = vsel %vm1077, %v2752, %v2753
      %v2755 = vrot.slane %v2619, 5
      %v2756 = vrot.slane %v2755, 4
      %v2757 = vrot.slane %v2620, 5
      %v2758 = vsel %vm1077, %v2756, %v2757
      %v2759 = vrot.slane %v2757, 4
      %v2760 = vrot.slane %v2621, 5
      %v2761 = vsel %vm1077, %v2759, %v2760
      %v2762 = vrot.slane %v2622, 5
      %v2763 = vrot.slane %v2762, 4
      %v2764 = vrot.slane %v2623, 5
      %v2765 = vsel %vm1077, %v2763, %v2764
      %v2766 = vrot.slane %v2764, 4
      %v2767 = vrot.slane %v2624, 5
      %v2768 = vsel %vm1077, %v2766, %v2767
      %v2769 = vrot.slane %v2625, 5
      %v2770 = vrot.slane %v2769, 4
      %v2771 = vrot.slane %v2626, 5
      %v2772 = vsel %vm1077, %v2770, %v2771
      %v2773 = vrot.slane %v2771, 4
      %v2774 = vrot.slane %v2627, 5
      %v2775 = vsel %vm1077, %v2773, %v2774
      %v2776 = vrot.slane %v2628, 5
      %v2777 = vrot.slane %v2776, 4
      %v2778 = vrot.slane %v2629, 5
      %v2779 = vsel %vm1077, %v2777, %v2778
      %v2780 = vrot.slane %v2778, 4
      %v2781 = vrot.slane %v2630, 5
      %v2782 = vsel %vm1077, %v2780, %v2781
      %v2783 = vrot.slane %v2631, 5
      %v2784 = vrot.slane %v2783, 4
      %v2785 = vrot.slane %v2632, 5
      %v2786 = vsel %vm1077, %v2784, %v2785
      %v2787 = vrot.slane %v2785, 4
      %v2788 = vrot.slane %v2633, 5
      %v2789 = vsel %vm1077, %v2787, %v2788
      %v2790 = vrot.slane %v2634, 5
      %v2791 = vrot.slane %v2790, 4
      %v2792 = vrot.slane %v2635, 5
      %v2793 = vsel %vm1077, %v2791, %v2792
      %v2794 = vrot.slane %v2792, 4
      %v2795 = vrot.slane %v2636, 5
      %v2796 = vsel %vm1077, %v2794, %v2795
      %v2797 = vunpack.c.l.b16 %v2688
      %v2798 = vunpack.c.l.b16 %v2691
      %v2799 = vunpack.c.l.b16 %v2695
      %v2800 = vunpack.c.l.b16 %v2698
      %v2801 = vunpack.c.l.b16 %v2702
      %v2802 = vunpack.c.l.b16 %v2705
      %v2803 = vunpack.c.l.b16 %v2709
      %v2804 = vunpack.c.l.b16 %v2712
      %v2805 = vunpack.c.l.b16 %v2716
      %v2806 = vunpack.c.l.b16 %v2719
      %v2807 = vunpack.c.l.b16 %v2723
      %v2808 = vunpack.c.l.b16 %v2726
      %v2809 = vunpack.c.l.b16 %v2730
      %v2810 = vunpack.c.l.b16 %v2733
      %v2811 = vunpack.c.l.b16 %v2737
      %v2812 = vunpack.c.l.b16 %v2740
      %v2813 = vunpack.c.l.b16 %v2744
      %v2814 = vunpack.c.l.b16 %v2747
      %v2815 = vunpack.c.l.b16 %v2751
      %v2816 = vunpack.c.l.b16 %v2754
      %v2817 = vunpack.c.l.b16 %v2758
      %v2818 = vunpack.c.l.b16 %v2761
      %v2819 = vunpack.c.l.b16 %v2765
      %v2820 = vunpack.c.l.b16 %v2768
      %v2821 = vunpack.c.l.b16 %v2772
      %v2822 = vunpack.c.l.b16 %v2775
      %v2823 = vunpack.c.l.b16 %v2779
      %v2824 = vunpack.c.l.b16 %v2782
      %v2825 = vunpack.c.l.b16 %v2786
      %v2826 = vunpack.c.l.b16 %v2789
      %v2827 = vunpack.c.l.b16 %v2793
      %v2828 = vunpack.c.l.b16 %v2796
      %v2829 = vpack.c.b16 %v2798, %v2797
      %v2830 = vpack.c.b16 %v2800, %v2799
      %v2831 = vpack.c.b16 %v2802, %v2801
      %v2832 = vpack.c.b16 %v2804, %v2803
      %v2833 = vpack.c.b16 %v2806, %v2805
      %v2834 = vpack.c.b16 %v2808, %v2807
      %v2835 = vpack.c.b16 %v2810, %v2809
      %v2836 = vpack.c.b16 %v2812, %v2811
      %v2837 = vpack.c.b16 %v2814, %v2813
      %v2838 = vpack.c.b16 %v2816, %v2815
      %v2839 = vpack.c.b16 %v2818, %v2817
      %v2840 = vpack.c.b16 %v2820, %v2819
      %v2841 = vpack.c.b16 %v2822, %v2821
      %v2842 = vpack.c.b16 %v2824, %v2823
      %v2843 = vpack.c.b16 %v2826, %v2825
      %v2844 = vpack.c.b16 %v2828, %v2827
      %2845 = vrot.lane.b32.xlu0 %v2829, 96
      %v2846 = vpop.permute.xlu0 %2845
      %2847 = vrot.lane.b32.xlu0 %v2830, 96
      %v2848 = vpop.permute.xlu0 %2847
      %2849 = vrot.lane.b32.xlu0 %v2831, 96
      %v2850 = vpop.permute.xlu0 %2849
      %2851 = vrot.lane.b32.xlu0 %v2832, 96
      %v2852 = vpop.permute.xlu0 %2851
      %2853 = vrot.lane.b32.xlu0 %v2833, 96
      %v2854 = vpop.permute.xlu0 %2853
      %2855 = vrot.lane.b32.xlu0 %v2834, 96
      %v2856 = vpop.permute.xlu0 %2855
      %2857 = vrot.lane.b32.xlu0 %v2835, 96
      %v2858 = vpop.permute.xlu0 %2857
      %2859 = vrot.lane.b32.xlu0 %v2836, 96
      %v2860 = vpop.permute.xlu0 %2859
      %2861 = vrot.lane.b32.xlu0 %v2837, 96
      %v2862 = vpop.permute.xlu0 %2861
      %2863 = vrot.lane.b32.xlu0 %v2838, 96
      %v2864 = vpop.permute.xlu0 %2863
      %2865 = vrot.lane.b32.xlu0 %v2839, 96
      %v2866 = vpop.permute.xlu0 %2865
      %2867 = vrot.lane.b32.xlu0 %v2840, 96
      %v2868 = vpop.permute.xlu0 %2867
      %2869 = vrot.lane.b32.xlu0 %v2841, 96
      %v2870 = vpop.permute.xlu0 %2869
      %2871 = vrot.lane.b32.xlu0 %v2842, 96
      %v2872 = vpop.permute.xlu0 %2871
      %2873 = vrot.lane.b32.xlu0 %v2843, 96
      %v2874 = vpop.permute.xlu0 %2873
      %2875 = vrot.lane.b32.xlu0 %v2844, 96
      %v2876 = vpop.permute.xlu0 %2875
      %2893 = vst.msk [vmem:[#allocation3 + $0x8] sm:$0xff] %vm1787, %v2846
      %2894 = vst.msk [vmem:[#allocation3 + $0x20] sm:$0xff] %vm1787, %v2848
      %2895 = vst.msk [vmem:[#allocation3 + $0x38] sm:$0xff] %vm1787, %v2850
      %2896 = vst.msk [vmem:[#allocation3 + $0x50] sm:$0xff] %vm1787, %v2852
      %2897 = vst.msk [vmem:[#allocation3 + $0x68] sm:$0xff] %vm1787, %v2854
      %2898 = vst.msk [vmem:[#allocation3 + $0x80] sm:$0xff] %vm1787, %v2856
      %2899 = vst.msk [vmem:[#allocation3 + $0x98] sm:$0xff] %vm1787, %v2858
      %2900 = vst.msk [vmem:[#allocation3 + $0xb0] sm:$0xff] %vm1787, %v2860
      %2901 = vst.msk [vmem:[#allocation3 + $0xc8] sm:$0xff] %vm1787, %v2862
      %2902 = vst.msk [vmem:[#allocation3 + $0xe0] sm:$0xff] %vm1787, %v2864
      %2903 = vst.msk [vmem:[#allocation3 + $0xf8] sm:$0xff] %vm1787, %v2866
      %2904 = vst.msk [vmem:[#allocation3 + $0x110] sm:$0xff] %vm1787, %v2868
      %2905 = vst.msk [vmem:[#allocation3 + $0x128] sm:$0xff] %vm1787, %v2870
      %2906 = vst.msk [vmem:[#allocation3 + $0x140] sm:$0xff] %vm1787, %v2872
      %2907 = vst.msk [vmem:[#allocation3 + $0x158] sm:$0xff] %vm1787, %v2874
      %2908 = vst.msk [vmem:[#allocation3 + $0x170] sm:$0xff] %vm1787, %v2876
      %v2909 = vld [vmem:[%s2412] sm:$0xc]
      %v2910 = vld [vmem:[%s2412 + $0x4] sm:$0xf]
      %v2911 = vld [vmem:[%s2412 + $0x8] sm:$0x3]
      %v2912 = vld [vmem:[%s2412 + $0xc] sm:$0xc]
      %v2913 = vld [vmem:[%s2412 + $0x10] sm:$0xf]
      %v2914 = vld [vmem:[%s2412 + $0x14] sm:$0x3]
      %v2915 = vld [vmem:[%s2412 + $0x18] sm:$0xc]
      %v2916 = vld [vmem:[%s2412 + $0x1c] sm:$0xf]
      %v2917 = vld [vmem:[%s2412 + $0x20] sm:$0x3]
      %v2918 = vld [vmem:[%s2412 + $0x24] sm:$0xc]
      %v2919 = vld [vmem:[%s2412 + $0x28] sm:$0xf]
      %v2920 = vld [vmem:[%s2412 + $0x2c] sm:$0x3]
      %v2921 = vld [vmem:[%s2412 + $0x30] sm:$0xc]
      %v2922 = vld [vmem:[%s2412 + $0x34] sm:$0xf]
      %v2923 = vld [vmem:[%s2412 + $0x38] sm:$0x3]
      %v2924 = vld [vmem:[%s2412 + $0x3c] sm:$0xc]
      %v2925 = vld [vmem:[%s2412 + $0x40] sm:$0xf]
      %v2926 = vld [vmem:[%s2412 + $0x44] sm:$0x3]
      %v2927 = vld [vmem:[%s2412 + $0x48] sm:$0xc]
      %v2928 = vld [vmem:[%s2412 + $0x4c] sm:$0xf]
      %v2929 = vld [vmem:[%s2412 + $0x50] sm:$0x3]
      %v2930 = vld [vmem:[%s2412 + $0x54] sm:$0xc]
      %v2931 = vld [vmem:[%s2412 + $0x58] sm:$0xf]
      %v2932 = vld [vmem:[%s2412 + $0x5c] sm:$0x3]
      %v2933 = vld [vmem:[%s2412 + $0x60] sm:$0xc]
      %v2934 = vld [vmem:[%s2412 + $0x64] sm:$0xf]
      %v2935 = vld [vmem:[%s2412 + $0x68] sm:$0x3]
      %v2936 = vld [vmem:[%s2412 + $0x6c] sm:$0xc]
      %v2937 = vld [vmem:[%s2412 + $0x70] sm:$0xf]
      %v2938 = vld [vmem:[%s2412 + $0x74] sm:$0x3]
      %v2939 = vld [vmem:[%s2412 + $0x78] sm:$0xc]
      %v2940 = vld [vmem:[%s2412 + $0x7c] sm:$0xf]
      %v2941 = vld [vmem:[%s2412 + $0x80] sm:$0x3]
      %v2942 = vld [vmem:[%s2412 + $0x84] sm:$0xc]
      %v2943 = vld [vmem:[%s2412 + $0x88] sm:$0xf]
      %v2944 = vld [vmem:[%s2412 + $0x8c] sm:$0x3]
      %v2945 = vld [vmem:[%s2412 + $0x90] sm:$0xc]
      %v2946 = vld [vmem:[%s2412 + $0x94] sm:$0xf]
      %v2947 = vld [vmem:[%s2412 + $0x98] sm:$0x3]
      %v2948 = vld [vmem:[%s2412 + $0x9c] sm:$0xc]
      %v2949 = vld [vmem:[%s2412 + $0xa0] sm:$0xf]
      %v2950 = vld [vmem:[%s2412 + $0xa4] sm:$0x3]
      %v2951 = vld [vmem:[%s2412 + $0xa8] sm:$0xc]
      %v2952 = vld [vmem:[%s2412 + $0xac] sm:$0xf]
      %v2953 = vld [vmem:[%s2412 + $0xb0] sm:$0x3]
      %v2954 = vld [vmem:[%s2412 + $0xb4] sm:$0xc]
      %v2955 = vld [vmem:[%s2412 + $0xb8] sm:$0xf]
      %v2956 = vld [vmem:[%s2412 + $0xbc] sm:$0x3]
      %v3005 = vrot.slane %v2909, 6
      %v3006 = vrot.slane %v3005, 4
      %v3007 = vrot.slane %v2910, 6
      %v3008 = vsel %vm1401, %v3006, %v3007
      %v3009 = vrot.slane %v3007, 4
      %v3010 = vrot.slane %v2911, 6
      %v3011 = vsel %vm1401, %v3009, %v3010
      %v3012 = vrot.slane %v2912, 6
      %v3013 = vrot.slane %v3012, 4
      %v3014 = vrot.slane %v2913, 6
      %v3015 = vsel %vm1401, %v3013, %v3014
      %v3016 = vrot.slane %v3014, 4
      %v3017 = vrot.slane %v2914, 6
      %v3018 = vsel %vm1401, %v3016, %v3017
      %v3019 = vrot.slane %v2915, 6
      %v3020 = vrot.slane %v3019, 4
      %v3021 = vrot.slane %v2916, 6
      %v3022 = vsel %vm1401, %v3020, %v3021
      %v3023 = vrot.slane %v3021, 4
      %v3024 = vrot.slane %v2917, 6
      %v3025 = vsel %vm1401, %v3023, %v3024
      %v3026 = vrot.slane %v2918, 6
      %v3027 = vrot.slane %v3026, 4
      %v3028 = vrot.slane %v2919, 6
      %v3029 = vsel %vm1401, %v3027, %v3028
      %v3030 = vrot.slane %v3028, 4
      %v3031 = vrot.slane %v2920, 6
      %v3032 = vsel %vm1401, %v3030, %v3031
      %v3033 = vrot.slane %v2921, 6
      %v3034 = vrot.slane %v3033, 4
      %v3035 = vrot.slane %v2922, 6
      %v3036 = vsel %vm1401, %v3034, %v3035
      %v3037 = vrot.slane %v3035, 4
      %v3038 = vrot.slane %v2923, 6
      %v3039 = vsel %vm1401, %v3037, %v3038
      %v3040 = vrot.slane %v2924, 6
      %v3041 = vrot.slane %v3040, 4
      %v3042 = vrot.slane %v2925, 6
      %v3043 = vsel %vm1401, %v3041, %v3042
      %v3044 = vrot.slane %v3042, 4
      %v3045 = vrot.slane %v2926, 6
      %v3046 = vsel %vm1401, %v3044, %v3045
      %v3047 = vrot.slane %v2927, 6
      %v3048 = vrot.slane %v3047, 4
      %v3049 = vrot.slane %v2928, 6
      %v3050 = vsel %vm1401, %v3048, %v3049
      %v3051 = vrot.slane %v3049, 4
      %v3052 = vrot.slane %v2929, 6
      %v3053 = vsel %vm1401, %v3051, %v3052
      %v3054 = vrot.slane %v2930, 6
      %v3055 = vrot.slane %v3054, 4
      %v3056 = vrot.slane %v2931, 6
      %v3057 = vsel %vm1401, %v3055, %v3056
      %v3058 = vrot.slane %v3056, 4
      %v3059 = vrot.slane %v2932, 6
      %v3060 = vsel %vm1401, %v3058, %v3059
      %v3061 = vrot.slane %v2933, 6
      %v3062 = vrot.slane %v3061, 4
      %v3063 = vrot.slane %v2934, 6
      %v3064 = vsel %vm1401, %v3062, %v3063
      %v3065 = vrot.slane %v3063, 4
      %v3066 = vrot.slane %v2935, 6
      %v3067 = vsel %vm1401, %v3065, %v3066
      %v3068 = vrot.slane %v2936, 6
      %v3069 = vrot.slane %v3068, 4
      %v3070 = vrot.slane %v2937, 6
      %v3071 = vsel %vm1401, %v3069, %v3070
      %v3072 = vrot.slane %v3070, 4
      %v3073 = vrot.slane %v2938, 6
      %v3074 = vsel %vm1401, %v3072, %v3073
      %v3075 = vrot.slane %v2939, 6
      %v3076 = vrot.slane %v3075, 4
      %v3077 = vrot.slane %v2940, 6
      %v3078 = vsel %vm1401, %v3076, %v3077
      %v3079 = vrot.slane %v3077, 4
      %v3080 = vrot.slane %v2941, 6
      %v3081 = vsel %vm1401, %v3079, %v3080
      %v3082 = vrot.slane %v2942, 6
      %v3083 = vrot.slane %v3082, 4
      %v3084 = vrot.slane %v2943, 6
      %v3085 = vsel %vm1401, %v3083, %v3084
      %v3086 = vrot.slane %v3084, 4
      %v3087 = vrot.slane %v2944, 6
      %v3088 = vsel %vm1401, %v3086, %v3087
      %v3089 = vrot.slane %v2945, 6
      %v3090 = vrot.slane %v3089, 4
      %v3091 = vrot.slane %v2946, 6
      %v3092 = vsel %vm1401, %v3090, %v3091
      %v3093 = vrot.slane %v3091, 4
      %v3094 = vrot.slane %v2947, 6
      %v3095 = vsel %vm1401, %v3093, %v3094
      %v3096 = vrot.slane %v2948, 6
      %v3097 = vrot.slane %v3096, 4
      %v3098 = vrot.slane %v2949, 6
      %v3099 = vsel %vm1401, %v3097, %v3098
      %v3100 = vrot.slane %v3098, 4
      %v3101 = vrot.slane %v2950, 6
      %v3102 = vsel %vm1401, %v3100, %v3101
      %v3103 = vrot.slane %v2951, 6
      %v3104 = vrot.slane %v3103, 4
      %v3105 = vrot.slane %v2952, 6
      %v3106 = vsel %vm1401, %v3104, %v3105
      %v3107 = vrot.slane %v3105, 4
      %v3108 = vrot.slane %v2953, 6
      %v3109 = vsel %vm1401, %v3107, %v3108
      %v3110 = vrot.slane %v2954, 6
      %v3111 = vrot.slane %v3110, 4
      %v3112 = vrot.slane %v2955, 6
      %v3113 = vsel %vm1401, %v3111, %v3112
      %v3114 = vrot.slane %v3112, 4
      %v3115 = vrot.slane %v2956, 6
      %v3116 = vsel %vm1401, %v3114, %v3115
      %v3117 = vunpack.c.l.b16 %v3008
      %v3118 = vunpack.c.l.b16 %v3011
      %v3119 = vunpack.c.l.b16 %v3015
      %v3120 = vunpack.c.l.b16 %v3018
      %v3121 = vunpack.c.l.b16 %v3022
      %v3122 = vunpack.c.l.b16 %v3025
      %v3123 = vunpack.c.l.b16 %v3029
      %v3124 = vunpack.c.l.b16 %v3032
      %v3125 = vunpack.c.l.b16 %v3036
      %v3126 = vunpack.c.l.b16 %v3039
      %v3127 = vunpack.c.l.b16 %v3043
      %v3128 = vunpack.c.l.b16 %v3046
      %v3129 = vunpack.c.l.b16 %v3050
      %v3130 = vunpack.c.l.b16 %v3053
      %v3131 = vunpack.c.l.b16 %v3057
      %v3132 = vunpack.c.l.b16 %v3060
      %v3133 = vunpack.c.l.b16 %v3064
      %v3134 = vunpack.c.l.b16 %v3067
      %v3135 = vunpack.c.l.b16 %v3071
      %v3136 = vunpack.c.l.b16 %v3074
      %v3137 = vunpack.c.l.b16 %v3078
      %v3138 = vunpack.c.l.b16 %v3081
      %v3139 = vunpack.c.l.b16 %v3085
      %v3140 = vunpack.c.l.b16 %v3088
      %v3141 = vunpack.c.l.b16 %v3092
      %v3142 = vunpack.c.l.b16 %v3095
      %v3143 = vunpack.c.l.b16 %v3099
      %v3144 = vunpack.c.l.b16 %v3102
      %v3145 = vunpack.c.l.b16 %v3106
      %v3146 = vunpack.c.l.b16 %v3109
      %v3147 = vunpack.c.l.b16 %v3113
      %v3148 = vunpack.c.l.b16 %v3116
      %v3149 = vpack.c.b16 %v3118, %v3117
      %v3150 = vpack.c.b16 %v3120, %v3119
      %v3151 = vpack.c.b16 %v3122, %v3121
      %v3152 = vpack.c.b16 %v3124, %v3123
      %v3153 = vpack.c.b16 %v3126, %v3125
      %v3154 = vpack.c.b16 %v3128, %v3127
      %v3155 = vpack.c.b16 %v3130, %v3129
      %v3156 = vpack.c.b16 %v3132, %v3131
      %v3157 = vpack.c.b16 %v3134, %v3133
      %v3158 = vpack.c.b16 %v3136, %v3135
      %v3159 = vpack.c.b16 %v3138, %v3137
      %v3160 = vpack.c.b16 %v3140, %v3139
      %v3161 = vpack.c.b16 %v3142, %v3141
      %v3162 = vpack.c.b16 %v3144, %v3143
      %v3163 = vpack.c.b16 %v3146, %v3145
      %v3164 = vpack.c.b16 %v3148, %v3147
      %3181 = vst.msk [vmem:[#allocation3 + $0x10] sm:$0xff] %vm962, %v3149
      %3182 = vst.msk [vmem:[#allocation3 + $0x28] sm:$0xff] %vm962, %v3150
      %3183 = vst.msk [vmem:[#allocation3 + $0x40] sm:$0xff] %vm962, %v3151
      %3184 = vst.msk [vmem:[#allocation3 + $0x58] sm:$0xff] %vm962, %v3152
      %3185 = vst.msk [vmem:[#allocation3 + $0x70] sm:$0xff] %vm962, %v3153
      %3186 = vst.msk [vmem:[#allocation3 + $0x88] sm:$0xff] %vm962, %v3154
      %3187 = vst.msk [vmem:[#allocation3 + $0xa0] sm:$0xff] %vm962, %v3155
      %3188 = vst.msk [vmem:[#allocation3 + $0xb8] sm:$0xff] %vm962, %v3156
      %3189 = vst.msk [vmem:[#allocation3 + $0xd0] sm:$0xff] %vm962, %v3157
      %3190 = vst.msk [vmem:[#allocation3 + $0xe8] sm:$0xff] %vm962, %v3158
      %3191 = vst.msk [vmem:[#allocation3 + $0x100] sm:$0xff] %vm962, %v3159
      %3192 = vst.msk [vmem:[#allocation3 + $0x118] sm:$0xff] %vm962, %v3160
      %3193 = vst.msk [vmem:[#allocation3 + $0x130] sm:$0xff] %vm962, %v3161
      %3194 = vst.msk [vmem:[#allocation3 + $0x148] sm:$0xff] %vm962, %v3162
      %3195 = vst.msk [vmem:[#allocation3 + $0x160] sm:$0xff] %vm962, %v3163
      %3196 = vst.msk [vmem:[#allocation3 + $0x178] sm:$0xff] %vm962, %v3164
      %v3197 = vld [vmem:[#allocation3] sm:$0xff]
      %v3198 = vld [vmem:[#allocation3 + $0x8] sm:$0xff]
      %v3199 = vld [vmem:[#allocation3 + $0x10] sm:$0xff]
      %v3200 = vld [vmem:[#allocation3 + $0x18] sm:$0xff]
      %v3201 = vld [vmem:[#allocation3 + $0x20] sm:$0xff]
      %v3202 = vld [vmem:[#allocation3 + $0x28] sm:$0xff]
      %v3203 = vld [vmem:[#allocation3 + $0x30] sm:$0xff]
      %v3204 = vld [vmem:[#allocation3 + $0x38] sm:$0xff]
      %v3205 = vld [vmem:[#allocation3 + $0x40] sm:$0xff]
      %v3206 = vld [vmem:[#allocation3 + $0x48] sm:$0xff]
      %v3207 = vld [vmem:[#allocation3 + $0x50] sm:$0xff]
      %v3208 = vld [vmem:[#allocation3 + $0x58] sm:$0xff]
      %v3209 = vld [vmem:[#allocation3 + $0x60] sm:$0xff]
      %v3210 = vld [vmem:[#allocation3 + $0x68] sm:$0xff]
      %v3211 = vld [vmem:[#allocation3 + $0x70] sm:$0xff]
      %v3212 = vld [vmem:[#allocation3 + $0x78] sm:$0xff]
      %v3213 = vld [vmem:[#allocation3 + $0x80] sm:$0xff]
      %v3214 = vld [vmem:[#allocation3 + $0x88] sm:$0xff]
      %v3215 = vld [vmem:[#allocation3 + $0x90] sm:$0xff]
      %v3216 = vld [vmem:[#allocation3 + $0x98] sm:$0xff]
      %v3217 = vld [vmem:[#allocation3 + $0xa0] sm:$0xff]
      %v3218 = vld [vmem:[#allocation3 + $0xa8] sm:$0xff]
      %v3219 = vld [vmem:[#allocation3 + $0xb0] sm:$0xff]
      %v3220 = vld [vmem:[#allocation3 + $0xb8] sm:$0xff]
      %v3221 = vld [vmem:[#allocation3 + $0xc0] sm:$0xff]
      %v3222 = vld [vmem:[#allocation3 + $0xc8] sm:$0xff]
      %v3223 = vld [vmem:[#allocation3 + $0xd0] sm:$0xff]
      %v3224 = vld [vmem:[#allocation3 + $0xd8] sm:$0xff]
      %v3225 = vld [vmem:[#allocation3 + $0xe0] sm:$0xff]
      %v3226 = vld [vmem:[#allocation3 + $0xe8] sm:$0xff]
      %v3227 = vld [vmem:[#allocation3 + $0xf0] sm:$0xff]
      %v3228 = vld [vmem:[#allocation3 + $0xf8] sm:$0xff]
      %v3229 = vld [vmem:[#allocation3 + $0x100] sm:$0xff]
      %v3230 = vld [vmem:[#allocation3 + $0x108] sm:$0xff]
      %v3231 = vld [vmem:[#allocation3 + $0x110] sm:$0xff]
      %v3232 = vld [vmem:[#allocation3 + $0x118] sm:$0xff]
      %v3233 = vld [vmem:[#allocation3 + $0x120] sm:$0xff]
      %v3234 = vld [vmem:[#allocation3 + $0x128] sm:$0xff]
      %v3235 = vld [vmem:[#allocation3 + $0x130] sm:$0xff]
      %v3236 = vld [vmem:[#allocation3 + $0x138] sm:$0xff]
      %v3237 = vld [vmem:[#allocation3 + $0x140] sm:$0xff]
      %v3238 = vld [vmem:[#allocation3 + $0x148] sm:$0xff]
      %v3239 = vld [vmem:[#allocation3 + $0x150] sm:$0xff]
      %v3240 = vld [vmem:[#allocation3 + $0x158] sm:$0xff]
      %v3241 = vld [vmem:[#allocation3 + $0x160] sm:$0xff]
      %v3242 = vld [vmem:[#allocation3 + $0x168] sm:$0xff]
      %v3243 = vld [vmem:[#allocation3 + $0x170] sm:$0xff]
      %v3244 = vld [vmem:[#allocation3 + $0x178] sm:$0xff]
      %v3245 = vld [vmem:[%s3] sm:$0xf]
      %v3246 = vld [vmem:[%s3 + $0x4] sm:$0xf]
      %v3247 = vld [vmem:[%s3 + $0x8] sm:$0xf]
      %v3248 = vld [vmem:[%s3 + $0xc] sm:$0xf]
      %v3249 = vld [vmem:[%s3 + $0x10] sm:$0xf]
      %v3250 = vld [vmem:[%s3 + $0x14] sm:$0xf]
      %v3251 = vld [vmem:[%s3 + $0x18] sm:$0xf]
      %v3252 = vld [vmem:[%s3 + $0x1c] sm:$0xf]
      %v3253 = vld [vmem:[%s3 + $0x20] sm:$0xf]
      %v3254 = vld [vmem:[%s3 + $0x24] sm:$0xf]
      %v3255 = vld [vmem:[%s3 + $0x28] sm:$0xf]
      %v3256 = vld [vmem:[%s3 + $0x2c] sm:$0xf]
      %v3257 = vld [vmem:[%s3 + $0x30] sm:$0xf]
      %v3258 = vld [vmem:[%s3 + $0x34] sm:$0xf]
      %v3259 = vld [vmem:[%s3 + $0x38] sm:$0xf]
      %v3260 = vld [vmem:[%s3 + $0x3c] sm:$0xf]
      %v3261 = vld [vmem:[%s3 + $0x40] sm:$0xf]
      %v3262 = vld [vmem:[%s3 + $0x44] sm:$0xf]
      %v3263 = vld [vmem:[%s3 + $0x48] sm:$0xf]
      %v3264 = vld [vmem:[%s3 + $0x4c] sm:$0xf]
      %v3265 = vld [vmem:[%s3 + $0x50] sm:$0xf]
      %v3266 = vld [vmem:[%s3 + $0x54] sm:$0xf]
      %v3267 = vld [vmem:[%s3 + $0x58] sm:$0xf]
      %v3268 = vld [vmem:[%s3 + $0x5c] sm:$0xf]
      %v3269 = vld [vmem:[%s3 + $0x60] sm:$0xf]
      %v3270 = vld [vmem:[%s3 + $0x64] sm:$0xf]
      %v3271 = vld [vmem:[%s3 + $0x68] sm:$0xf]
      %v3272 = vld [vmem:[%s3 + $0x6c] sm:$0xf]
      %v3273 = vld [vmem:[%s3 + $0x70] sm:$0xf]
      %v3274 = vld [vmem:[%s3 + $0x74] sm:$0xf]
      %v3275 = vld [vmem:[%s3 + $0x78] sm:$0xf]
      %v3276 = vld [vmem:[%s3 + $0x7c] sm:$0xf]
      %v3277 = vld [vmem:[%s3 + $0x80] sm:$0xf]
      %v3278 = vld [vmem:[%s3 + $0x84] sm:$0xf]
      %v3279 = vld [vmem:[%s3 + $0x88] sm:$0xf]
      %v3280 = vld [vmem:[%s3 + $0x8c] sm:$0xf]
      %v3317 = vunpack.c.l.b16 %v3245
      %v3318 = vunpack.c.l.b16 %v3246
      %v3319 = vunpack.c.l.b16 %v3247
      %v3320 = vunpack.c.l.b16 %v3248
      %v3321 = vunpack.c.l.b16 %v3249
      %v3322 = vunpack.c.l.b16 %v3250
      %v3323 = vunpack.c.l.b16 %v3251
      %v3324 = vunpack.c.l.b16 %v3252
      %v3325 = vunpack.c.l.b16 %v3253
      %v3326 = vunpack.c.l.b16 %v3254
      %v3327 = vunpack.c.l.b16 %v3255
      %v3328 = vunpack.c.l.b16 %v3256
      %v3329 = vunpack.c.l.b16 %v3257
      %v3330 = vunpack.c.l.b16 %v3258
      %v3331 = vunpack.c.l.b16 %v3259
      %v3332 = vunpack.c.l.b16 %v3260
      %v3333 = vunpack.c.l.b16 %v3261
      %v3334 = vunpack.c.l.b16 %v3262
      %v3335 = vunpack.c.l.b16 %v3263
      %v3336 = vunpack.c.l.b16 %v3264
      %v3337 = vunpack.c.l.b16 %v3265
      %v3338 = vunpack.c.l.b16 %v3266
      %v3339 = vunpack.c.l.b16 %v3267
      %v3340 = vunpack.c.l.b16 %v3268
      %v3341 = vunpack.c.l.b16 %v3269
      %v3342 = vunpack.c.l.b16 %v3270
      %v3343 = vunpack.c.l.b16 %v3271
      %v3344 = vunpack.c.l.b16 %v3272
      %v3345 = vunpack.c.l.b16 %v3273
      %v3346 = vunpack.c.l.b16 %v3274
      %v3347 = vunpack.c.l.b16 %v3275
      %v3348 = vunpack.c.l.b16 %v3276
      %v3349 = vunpack.c.l.b16 %v3277
      %v3350 = vunpack.c.l.b16 %v3278
      %v3351 = vunpack.c.l.b16 %v3279
      %v3352 = vunpack.c.l.b16 %v3280
      %v3353 = vpack.c.b16 %v3318, %v3317
      %v3354 = vpack.c.b16 %v3320, %v3319
      %v3355 = vpack.c.b16 %v3322, %v3321
      %v3356 = vpack.c.b16 %v3324, %v3323
      %v3357 = vpack.c.b16 %v3326, %v3325
      %v3358 = vpack.c.b16 %v3328, %v3327
      %v3359 = vpack.c.b16 %v3330, %v3329
      %v3360 = vpack.c.b16 %v3332, %v3331
      %v3361 = vpack.c.b16 %v3334, %v3333
      %v3362 = vpack.c.b16 %v3336, %v3335
      %v3363 = vpack.c.b16 %v3338, %v3337
      %v3364 = vpack.c.b16 %v3340, %v3339
      %v3365 = vpack.c.b16 %v3342, %v3341
      %v3366 = vpack.c.b16 %v3344, %v3343
      %v3367 = vpack.c.b16 %v3346, %v3345
      %v3368 = vpack.c.b16 %v3348, %v3347
      %v3369 = vpack.c.b16 %v3350, %v3349
      %v3370 = vpack.c.b16 %v3352, %v3351
      %v3390 = vsel %vm962, %v3199, 0
      %v3393 = vsel %vm962, %v3202, 0
      %v3396 = vsel %vm962, %v3205, 0
      %v3399 = vsel %vm962, %v3208, 0
      %v3402 = vsel %vm962, %v3211, 0
      %v3405 = vsel %vm962, %v3214, 0
      %v3408 = vsel %vm962, %v3217, 0
      %v3411 = vsel %vm962, %v3220, 0
      %v3414 = vsel %vm962, %v3223, 0
      %v3417 = vsel %vm962, %v3226, 0
      %v3420 = vsel %vm962, %v3229, 0
      %v3423 = vsel %vm962, %v3232, 0
      %v3426 = vsel %vm962, %v3235, 0
      %v3429 = vsel %vm962, %v3238, 0
      %v3432 = vsel %vm962, %v3241, 0
      %v3435 = vsel %vm962, %v3244, 0
      %3437 = vmatprep.subr.bf16.mxu0 0
      %3438 = vmatpush1.bf16.msra.mxu0 %v3353
      %3439 = vmatprep.subr.bf16.mxu0 0
      %3440 = vmatpush1.bf16.msra.mxu0 %v3354
      %3441 = vmatprep.subr.bf16.mxu0 0
      %3442 = vmatpush1.bf16.msra.mxu0 %v3355
      %3443 = vmatprep.subr.bf16.mxu0 0
      %3444 = vmatpush1.bf16.msra.mxu0 %v3356
      %3445 = vmatprep.subr.bf16.mxu0 0
      %3446 = vmatpush1.bf16.msra.mxu0 %v3357
      %3447 = vmatprep.subr.bf16.mxu0 0
      %3448 = vmatpush1.bf16.msra.mxu0 %v3358
      %3449 = vmatprep.subr.bf16.mxu0 0
      %3450 = vmatpush1.bf16.msra.mxu0 %v3359
      %3451 = vmatprep.subr.bf16.mxu0 0
      %3452 = vmatpush1.bf16.msra.mxu0 %v3360
      %3453 = vmatprep.subr.bf16.mxu0 0
      %3454 = vmatpush1.bf16.msra.mxu0 %v3361
      %3455 = vmatprep.subr.bf16.mxu0 0
      %3456 = vmatpush1.bf16.msra.mxu0 %v3362
      %3457 = vmatprep.subr.bf16.mxu0 0
      %3458 = vmatpush1.bf16.msra.mxu0 %v3363
      %3459 = vmatprep.subr.bf16.mxu0 0
      %3460 = vmatpush1.bf16.msra.mxu0 %v3364
      %3461 = vmatprep.subr.bf16.mxu0 0
      %3462 = vmatpush1.bf16.msra.mxu0 %v3365
      %3463 = vmatprep.subr.bf16.mxu0 0
      %3464 = vmatpush1.bf16.msra.mxu0 %v3366
      %3465 = vmatprep.subr.bf16.mxu0 0
      %3466 = vmatpush1.bf16.msra.mxu0 %v3367
      %3467 = vmatprep.subr.bf16.mxu0 0
      %3468 = vmatpush1.bf16.msra.mxu0 %v3368
      %3469 = vmatprep.mubr.bf16.mxu0 %v3198
      %3470 = vmatmul.mubr.bf16.gmra.mrb[0].mxu0 %v3197
      %v3471 = vpop.f32.mrb[0].mxu0
      %v3472 = vadd.f32 0.0, %v3471
      %v3473 = vpop.f32.mrb[0].mxu0
      %v3474 = vpop.f32.mrb[0].mxu0
      %v3475 = vadd.f32 0.0, %v3474
      %v3476 = vpop.f32.mrb[0].mxu0
      %3477 = vmatprep.mubr.bf16.mxu0 %v3201
      %3478 = vmatmul.mubr.bf16.gmra.mrb[0].mxu0 %v3200
      %v3479 = vpop.f32.mrb[0].mxu0
      %v3480 = vadd.f32 0.0, %v3479
      %v3481 = vpop.f32.mrb[0].mxu0
      %v3482 = vpop.f32.mrb[0].mxu0
      %v3483 = vadd.f32 0.0, %v3482
      %v3484 = vpop.f32.mrb[0].mxu0
      %3485 = vmatprep.mubr.bf16.mxu0 %v3204
      %3486 = vmatmul.mubr.bf16.gmra.mrb[0].mxu0 %v3203
      %v3487 = vpop.f32.mrb[0].mxu0
      %v3488 = vadd.f32 0.0, %v3487
      %v3489 = vpop.f32.mrb[0].mxu0
      %v3490 = vpop.f32.mrb[0].mxu0
      %v3491 = vadd.f32 0.0, %v3490
      %v3492 = vpop.f32.mrb[0].mxu0
      %3493 = vmatprep.mubr.bf16.mxu0 %v3207
      %3494 = vmatmul.mubr.bf16.gmra.mrb[0].mxu0 %v3206
      %v3495 = vpop.f32.mrb[0].mxu0
      %v3496 = vadd.f32 0.0, %v3495
      %v3497 = vpop.f32.mrb[0].mxu0
      %v3498 = vpop.f32.mrb[0].mxu0
      %v3499 = vadd.f32 0.0, %v3498
      %v3500 = vpop.f32.mrb[0].mxu0
      %3501 = vmatprep.mubr.bf16.mxu0 %v3210
      %3502 = vmatmul.mubr.bf16.gmra.mrb[0].mxu0 %v3209
      %v3503 = vpop.f32.mrb[0].mxu0
      %v3504 = vadd.f32 0.0, %v3503
      %v3505 = vpop.f32.mrb[0].mxu0
      %v3506 = vpop.f32.mrb[0].mxu0
      %v3507 = vadd.f32 0.0, %v3506
      %v3508 = vpop.f32.mrb[0].mxu0
      %3509 = vmatprep.mubr.bf16.mxu0 %v3213
      %3510 = vmatmul.mubr.bf16.gmra.mrb[0].mxu0 %v3212
      %v3511 = vpop.f32.mrb[0].mxu0
      %v3512 = vadd.f32 0.0, %v3511
      %v3513 = vpop.f32.mrb[0].mxu0
      %v3514 = vpop.f32.mrb[0].mxu0
      %v3515 = vadd.f32 0.0, %v3514
      %v3516 = vpop.f32.mrb[0].mxu0
      %3517 = vmatprep.mubr.bf16.mxu0 %v3216
      %3518 = vmatmul.mubr.bf16.gmra.mrb[0].mxu0 %v3215
      %v3519 = vpop.f32.mrb[0].mxu0
      %v3520 = vadd.f32 0.0, %v3519
      %v3521 = vpop.f32.mrb[0].mxu0
      %v3522 = vpop.f32.mrb[0].mxu0
      %v3523 = vadd.f32 0.0, %v3522
      %v3524 = vpop.f32.mrb[0].mxu0
      %3525 = vmatprep.mubr.bf16.mxu0 %v3219
      %3526 = vmatmul.mubr.bf16.gmra.mrb[0].mxu0 %v3218
      %v3527 = vpop.f32.mrb[0].mxu0
      %v3528 = vadd.f32 0.0, %v3527
      %v3529 = vpop.f32.mrb[0].mxu0
      %v3530 = vpop.f32.mrb[0].mxu0
      %v3531 = vadd.f32 0.0, %v3530
      %v3532 = vpop.f32.mrb[0].mxu0
      %3533 = vmatprep.mubr.bf16.mxu0 %v3222
      %3534 = vmatmul.mubr.bf16.gmra.mrb[0].mxu0 %v3221
      %v3535 = vpop.f32.mrb[0].mxu0
      %v3536 = vadd.f32 0.0, %v3535
      %v3537 = vpop.f32.mrb[0].mxu0
      %v3538 = vpop.f32.mrb[0].mxu0
      %v3539 = vadd.f32 0.0, %v3538
      %v3540 = vpop.f32.mrb[0].mxu0
      %3541 = vmatprep.mubr.bf16.mxu0 %v3225
      %3542 = vmatmul.mubr.bf16.gmra.mrb[0].mxu0 %v3224
      %v3543 = vpop.f32.mrb[0].mxu0
      %v3544 = vadd.f32 0.0, %v3543
      %v3545 = vpop.f32.mrb[0].mxu0
      %v3546 = vpop.f32.mrb[0].mxu0
      %v3547 = vadd.f32 0.0, %v3546
      %v3548 = vpop.f32.mrb[0].mxu0
      %3549 = vmatprep.mubr.bf16.mxu0 %v3228
      %3550 = vmatmul.mubr.bf16.gmra.mrb[0].mxu0 %v3227
      %v3551 = vpop.f32.mrb[0].mxu0
      %v3552 = vadd.f32 0.0, %v3551
      %v3553 = vpop.f32.mrb[0].mxu0
      %v3554 = vpop.f32.mrb[0].mxu0
      %v3555 = vadd.f32 0.0, %v3554
      %v3556 = vpop.f32.mrb[0].mxu0
      %3557 = vmatprep.mubr.bf16.mxu0 %v3231
      %3558 = vmatmul.mubr.bf16.gmra.mrb[0].mxu0 %v3230
      %v3559 = vpop.f32.mrb[0].mxu0
      %v3560 = vadd.f32 0.0, %v3559
      %v3561 = vpop.f32.mrb[0].mxu0
      %v3562 = vpop.f32.mrb[0].mxu0
      %v3563 = vadd.f32 0.0, %v3562
      %v3564 = vpop.f32.mrb[0].mxu0
      %3565 = vmatprep.mubr.bf16.mxu0 %v3234
      %3566 = vmatmul.mubr.bf16.gmra.mrb[0].mxu0 %v3233
      %v3567 = vpop.f32.mrb[0].mxu0
      %v3568 = vadd.f32 0.0, %v3567
      %v3569 = vpop.f32.mrb[0].mxu0
      %v3570 = vpop.f32.mrb[0].mxu0
      %v3571 = vadd.f32 0.0, %v3570
      %v3572 = vpop.f32.mrb[0].mxu0
      %3573 = vmatprep.mubr.bf16.mxu0 %v3237
      %3574 = vmatmul.mubr.bf16.gmra.mrb[0].mxu0 %v3236
      %v3575 = vpop.f32.mrb[0].mxu0
      %v3576 = vadd.f32 0.0, %v3575
      %v3577 = vpop.f32.mrb[0].mxu0
      %v3578 = vpop.f32.mrb[0].mxu0
      %v3579 = vadd.f32 0.0, %v3578
      %v3580 = vpop.f32.mrb[0].mxu0
      %3581 = vmatprep.mubr.bf16.mxu0 %v3240
      %3582 = vmatmul.mubr.bf16.gmra.mrb[0].mxu0 %v3239
      %v3583 = vpop.f32.mrb[0].mxu0
      %v3584 = vadd.f32 0.0, %v3583
      %v3585 = vpop.f32.mrb[0].mxu0
      %v3586 = vpop.f32.mrb[0].mxu0
      %v3587 = vadd.f32 0.0, %v3586
      %v3588 = vpop.f32.mrb[0].mxu0
      %3589 = vmatprep.mubr.bf16.mxu0 %v3243
      %3590 = vmatmul.mubr.bf16.gmra.mrb[0].mxu0 %v3242
      %v3591 = vpop.f32.mrb[0].mxu0
      %v3592 = vadd.f32 0.0, %v3591
      %v3593 = vpop.f32.mrb[0].mxu0
      %v3594 = vpop.f32.mrb[0].mxu0
      %v3595 = vadd.f32 0.0, %v3594
      %v3596 = vpop.f32.mrb[0].mxu0
      %3597 = vdwg.mxu0
      %3598 = vmatprep.subr.bf16.mxu0 0
      %3599 = vmatpush1.bf16.msra.mxu0 %v3369
      %3600 = vmatprep.subr.bf16.mxu0 0
      %3601 = vmatpush1.bf16.msra.mxu0 %v3370
      %3602 = vmatprep.subr.bf16.mxu0 0
      %3603 = vmatpush1.bf16.msra.mxu0 0
      %3604 = vmatprep.subr.bf16.mxu0 0
      %3605 = vmatpush1.bf16.msra.mxu0 0
      %3606 = vmatprep.subr.bf16.mxu0 0
      %3607 = vmatpush1.bf16.msra.mxu0 0
      %3608 = vmatprep.subr.bf16.mxu0 0
      %3609 = vmatpush1.bf16.msra.mxu0 0
      %3610 = vmatprep.subr.bf16.mxu0 0
      %3611 = vmatpush1.bf16.msra.mxu0 0
      %3612 = vmatprep.subr.bf16.mxu0 0
      %3613 = vmatpush1.bf16.msra.mxu0 0
      %3614 = vmatprep.subr.bf16.mxu0 0
      %3615 = vmatpush1.bf16.msra.mxu0 0
      %3616 = vmatprep.subr.bf16.mxu0 0
      %3617 = vmatpush1.bf16.msra.mxu0 0
      %3618 = vmatprep.subr.bf16.mxu0 0
      %3619 = vmatpush1.bf16.msra.mxu0 0
      %3620 = vmatprep.subr.bf16.mxu0 0
      %3621 = vmatpush1.bf16.msra.mxu0 0
      %3622 = vmatprep.subr.bf16.mxu0 0
      %3623 = vmatpush1.bf16.msra.mxu0 0
      %3624 = vmatprep.subr.bf16.mxu0 0
      %3625 = vmatpush1.bf16.msra.mxu0 0
      %3626 = vmatprep.subr.bf16.mxu0 0
      %3627 = vmatpush1.bf16.msra.mxu0 0
      %3628 = vmatprep.subr.bf16.mxu0 0
      %3629 = vmatpush1.bf16.msra.mxu0 0
      %3630 = vmatprep.mubr.bf16.mxu0 0
      %3631 = vmatmul.mubr.bf16.gmra.mrb[0].mxu0 %v3390
      %v3632 = vpop.f32.mrb[0].mxu0
      %v3633 = vadd.f32 %v3472, %v3632
      %v3634 = vpop.f32.mrb[0].mxu0
      %v3635 = vpop.f32.mrb[0].mxu0
      %v3636 = vadd.f32 %v3475, %v3635
      %v3637 = vpop.f32.mrb[0].mxu0
      %3638 = vmatprep.mubr.bf16.mxu0 0
      %3639 = vmatmul.mubr.bf16.gmra.mrb[0].mxu0 %v3393
      %v3640 = vpop.f32.mrb[0].mxu0
      %v3641 = vadd.f32 %v3480, %v3640
      %v3642 = vpop.f32.mrb[0].mxu0
      %v3643 = vpop.f32.mrb[0].mxu0
      %v3644 = vadd.f32 %v3483, %v3643
      %v3645 = vpop.f32.mrb[0].mxu0
      %3646 = vmatprep.mubr.bf16.mxu0 0
      %3647 = vmatmul.mubr.bf16.gmra.mrb[0].mxu0 %v3396
      %v3648 = vpop.f32.mrb[0].mxu0
      %v3649 = vadd.f32 %v3488, %v3648
      %v3650 = vpop.f32.mrb[0].mxu0
      %v3651 = vpop.f32.mrb[0].mxu0
      %v3652 = vadd.f32 %v3491, %v3651
      %v3653 = vpop.f32.mrb[0].mxu0
      %3654 = vmatprep.mubr.bf16.mxu0 0
      %3655 = vmatmul.mubr.bf16.gmra.mrb[0].mxu0 %v3399
      %v3656 = vpop.f32.mrb[0].mxu0
      %v3657 = vadd.f32 %v3496, %v3656
      %v3658 = vpop.f32.mrb[0].mxu0
      %v3659 = vpop.f32.mrb[0].mxu0
      %v3660 = vadd.f32 %v3499, %v3659
      %v3661 = vpop.f32.mrb[0].mxu0
      %3662 = vmatprep.mubr.bf16.mxu0 0
      %3663 = vmatmul.mubr.bf16.gmra.mrb[0].mxu0 %v3402
      %v3664 = vpop.f32.mrb[0].mxu0
      %v3665 = vadd.f32 %v3504, %v3664
      %v3666 = vpop.f32.mrb[0].mxu0
      %v3667 = vpop.f32.mrb[0].mxu0
      %v3668 = vadd.f32 %v3507, %v3667
      %v3669 = vpop.f32.mrb[0].mxu0
      %3670 = vmatprep.mubr.bf16.mxu0 0
      %3671 = vmatmul.mubr.bf16.gmra.mrb[0].mxu0 %v3405
      %v3672 = vpop.f32.mrb[0].mxu0
      %v3673 = vadd.f32 %v3512, %v3672
      %v3674 = vpop.f32.mrb[0].mxu0
      %v3675 = vpop.f32.mrb[0].mxu0
      %v3676 = vadd.f32 %v3515, %v3675
      %v3677 = vpop.f32.mrb[0].mxu0
      %3678 = vmatprep.mubr.bf16.mxu0 0
      %3679 = vmatmul.mubr.bf16.gmra.mrb[0].mxu0 %v3408
      %v3680 = vpop.f32.mrb[0].mxu0
      %v3681 = vadd.f32 %v3520, %v3680
      %v3682 = vpop.f32.mrb[0].mxu0
      %v3683 = vpop.f32.mrb[0].mxu0
      %v3684 = vadd.f32 %v3523, %v3683
      %v3685 = vpop.f32.mrb[0].mxu0
      %3686 = vmatprep.mubr.bf16.mxu0 0
      %3687 = vmatmul.mubr.bf16.gmra.mrb[0].mxu0 %v3411
      %v3688 = vpop.f32.mrb[0].mxu0
      %v3689 = vadd.f32 %v3528, %v3688
      %v3690 = vpop.f32.mrb[0].mxu0
      %v3691 = vpop.f32.mrb[0].mxu0
      %v3692 = vadd.f32 %v3531, %v3691
      %v3693 = vpop.f32.mrb[0].mxu0
      %3694 = vmatprep.mubr.bf16.mxu0 0
      %3695 = vmatmul.mubr.bf16.gmra.mrb[0].mxu0 %v3414
      %v3696 = vpop.f32.mrb[0].mxu0
      %v3697 = vadd.f32 %v3536, %v3696
      %v3698 = vpop.f32.mrb[0].mxu0
      %v3699 = vpop.f32.mrb[0].mxu0
      %v3700 = vadd.f32 %v3539, %v3699
      %v3701 = vpop.f32.mrb[0].mxu0
      %3702 = vmatprep.mubr.bf16.mxu0 0
      %3703 = vmatmul.mubr.bf16.gmra.mrb[0].mxu0 %v3417
      %v3704 = vpop.f32.mrb[0].mxu0
      %v3705 = vadd.f32 %v3544, %v3704
      %v3706 = vpop.f32.mrb[0].mxu0
      %v3707 = vpop.f32.mrb[0].mxu0
      %v3708 = vadd.f32 %v3547, %v3707
      %v3709 = vpop.f32.mrb[0].mxu0
      %3710 = vmatprep.mubr.bf16.mxu0 0
      %3711 = vmatmul.mubr.bf16.gmra.mrb[0].mxu0 %v3420
      %v3712 = vpop.f32.mrb[0].mxu0
      %v3713 = vadd.f32 %v3552, %v3712
      %v3714 = vpop.f32.mrb[0].mxu0
      %v3715 = vpop.f32.mrb[0].mxu0
      %v3716 = vadd.f32 %v3555, %v3715
      %v3717 = vpop.f32.mrb[0].mxu0
      %3718 = vmatprep.mubr.bf16.mxu0 0
      %3719 = vmatmul.mubr.bf16.gmra.mrb[0].mxu0 %v3423
      %v3720 = vpop.f32.mrb[0].mxu0
      %v3721 = vadd.f32 %v3560, %v3720
      %v3722 = vpop.f32.mrb[0].mxu0
      %v3723 = vpop.f32.mrb[0].mxu0
      %v3724 = vadd.f32 %v3563, %v3723
      %v3725 = vpop.f32.mrb[0].mxu0
      %3726 = vmatprep.mubr.bf16.mxu0 0
      %3727 = vmatmul.mubr.bf16.gmra.mrb[0].mxu0 %v3426
      %v3728 = vpop.f32.mrb[0].mxu0
      %v3729 = vadd.f32 %v3568, %v3728
      %v3730 = vpop.f32.mrb[0].mxu0
      %v3731 = vpop.f32.mrb[0].mxu0
      %v3732 = vadd.f32 %v3571, %v3731
      %v3733 = vpop.f32.mrb[0].mxu0
      %3734 = vmatprep.mubr.bf16.mxu0 0
      %3735 = vmatmul.mubr.bf16.gmra.mrb[0].mxu0 %v3429
      %v3736 = vpop.f32.mrb[0].mxu0
      %v3737 = vadd.f32 %v3576, %v3736
      %v3738 = vpop.f32.mrb[0].mxu0
      %v3739 = vpop.f32.mrb[0].mxu0
      %v3740 = vadd.f32 %v3579, %v3739
      %v3741 = vpop.f32.mrb[0].mxu0
      %3742 = vmatprep.mubr.bf16.mxu0 0
      %3743 = vmatmul.mubr.bf16.gmra.mrb[0].mxu0 %v3432
      %v3744 = vpop.f32.mrb[0].mxu0
      %v3745 = vadd.f32 %v3584, %v3744
      %v3746 = vpop.f32.mrb[0].mxu0
      %v3747 = vpop.f32.mrb[0].mxu0
      %v3748 = vadd.f32 %v3587, %v3747
      %v3749 = vpop.f32.mrb[0].mxu0
      %3750 = vmatprep.mubr.bf16.mxu0 0
      %3751 = vmatmul.mubr.bf16.gmra.mrb[0].mxu0 %v3435
      %v3752 = vpop.f32.mrb[0].mxu0
      %v3753 = vadd.f32 %v3592, %v3752
      %v3754 = vpop.f32.mrb[0].mxu0
      %v3755 = vpop.f32.mrb[0].mxu0
      %v3756 = vadd.f32 %v3595, %v3755
      %v3757 = vpop.f32.mrb[0].mxu0
      %3758 = vdwg.mxu0
      %v3759 = vpack.c.bf16 %v3636, %v3633
      %v3760 = vpack.c.bf16 %v3644, %v3641
      %v3761 = vpack.c.bf16 %v3652, %v3649
      %v3762 = vpack.c.bf16 %v3660, %v3657
      %v3763 = vpack.c.bf16 %v3668, %v3665
      %v3764 = vpack.c.bf16 %v3676, %v3673
      %v3765 = vpack.c.bf16 %v3684, %v3681
      %v3766 = vpack.c.bf16 %v3692, %v3689
      %v3767 = vpack.c.bf16 %v3700, %v3697
      %v3768 = vpack.c.bf16 %v3708, %v3705
      %v3769 = vpack.c.bf16 %v3716, %v3713
      %v3770 = vpack.c.bf16 %v3724, %v3721
      %v3771 = vpack.c.bf16 %v3732, %v3729
      %v3772 = vpack.c.bf16 %v3740, %v3737
      %v3773 = vpack.c.bf16 %v3748, %v3745
      %v3774 = vpack.c.bf16 %v3756, %v3753
      %v3791 = vunpack.c.l.b16 %v3759
      %v3792 = vunpack.c.h.b16 %v3759
      %v3793 = vunpack.c.l.b16 %v3760
      %v3794 = vunpack.c.h.b16 %v3760
      %v3795 = vunpack.c.l.b16 %v3761
      %v3796 = vunpack.c.h.b16 %v3761
      %v3797 = vunpack.c.l.b16 %v3762
      %v3798 = vunpack.c.h.b16 %v3762
      %v3799 = vunpack.c.l.b16 %v3763
      %v3800 = vunpack.c.h.b16 %v3763
      %v3801 = vunpack.c.l.b16 %v3764
      %v3802 = vunpack.c.h.b16 %v3764
      %v3803 = vunpack.c.l.b16 %v3765
      %v3804 = vunpack.c.h.b16 %v3765
      %v3805 = vunpack.c.l.b16 %v3766
      %v3806 = vunpack.c.h.b16 %v3766
      %v3807 = vunpack.c.l.b16 %v3767
      %v3808 = vunpack.c.h.b16 %v3767
      %v3809 = vunpack.c.l.b16 %v3768
      %v3810 = vunpack.c.h.b16 %v3768
      %v3811 = vunpack.c.l.b16 %v3769
      %v3812 = vunpack.c.h.b16 %v3769
      %v3813 = vunpack.c.l.b16 %v3770
      %v3814 = vunpack.c.h.b16 %v3770
      %v3815 = vunpack.c.l.b16 %v3771
      %v3816 = vunpack.c.h.b16 %v3771
      %v3817 = vunpack.c.l.b16 %v3772
      %v3818 = vunpack.c.h.b16 %v3772
      %v3819 = vunpack.c.l.b16 %v3773
      %v3820 = vunpack.c.h.b16 %v3773
      %v3821 = vunpack.c.l.b16 %v3774
      %v3822 = vunpack.c.h.b16 %v3774
      %v3823 = vpack.c.b16 %v3791, %v3791
      %v3824 = vpack.c.b16 %v3792, %v3792
      %v3825 = vpack.c.b16 %v3793, %v3793
      %v3826 = vpack.c.b16 %v3794, %v3794
      %v3827 = vpack.c.b16 %v3795, %v3795
      %v3828 = vpack.c.b16 %v3796, %v3796
      %v3829 = vpack.c.b16 %v3797, %v3797
      %v3830 = vpack.c.b16 %v3798, %v3798
      %v3831 = vpack.c.b16 %v3799, %v3799
      %v3832 = vpack.c.b16 %v3800, %v3800
      %v3833 = vpack.c.b16 %v3801, %v3801
      %v3834 = vpack.c.b16 %v3802, %v3802
      %v3835 = vpack.c.b16 %v3803, %v3803
      %v3836 = vpack.c.b16 %v3804, %v3804
      %v3837 = vpack.c.b16 %v3805, %v3805
      %v3838 = vpack.c.b16 %v3806, %v3806
      %v3839 = vpack.c.b16 %v3807, %v3807
      %v3840 = vpack.c.b16 %v3808, %v3808
      %v3841 = vpack.c.b16 %v3809, %v3809
      %v3842 = vpack.c.b16 %v3810, %v3810
      %v3843 = vpack.c.b16 %v3811, %v3811
      %v3844 = vpack.c.b16 %v3812, %v3812
      %v3845 = vpack.c.b16 %v3813, %v3813
      %v3846 = vpack.c.b16 %v3814, %v3814
      %v3847 = vpack.c.b16 %v3815, %v3815
      %v3848 = vpack.c.b16 %v3816, %v3816
      %v3849 = vpack.c.b16 %v3817, %v3817
      %v3850 = vpack.c.b16 %v3818, %v3818
      %v3851 = vpack.c.b16 %v3819, %v3819
      %v3852 = vpack.c.b16 %v3820, %v3820
      %v3853 = vpack.c.b16 %v3821, %v3821
      %v3854 = vpack.c.b16 %v3822, %v3822
      %3887 = vst.msk [vmem:[%s262] sm:$0xf] %vm270, %v3823
      %3888 = vst.msk [vmem:[%s262 + $0x4] sm:$0xf] %vm270, %v3824
      %3889 = vst.msk [vmem:[%s262 + $0x8] sm:$0xf] %vm270, %v3825
      %3890 = vst.msk [vmem:[%s262 + $0xc] sm:$0xf] %vm270, %v3826
      %3891 = vst.msk [vmem:[%s262 + $0x10] sm:$0xf] %vm270, %v3827
      %3892 = vst.msk [vmem:[%s262 + $0x14] sm:$0xf] %vm270, %v3828
      %3893 = vst.msk [vmem:[%s262 + $0x18] sm:$0xf] %vm270, %v3829
      %3894 = vst.msk [vmem:[%s262 + $0x1c] sm:$0xf] %vm270, %v3830
      %3895 = vst.msk [vmem:[%s262 + $0x20] sm:$0xf] %vm270, %v3831
      %3896 = vst.msk [vmem:[%s262 + $0x24] sm:$0xf] %vm270, %v3832
      %3897 = vst.msk [vmem:[%s262 + $0x28] sm:$0xf] %vm270, %v3833
      %3898 = vst.msk [vmem:[%s262 + $0x2c] sm:$0xf] %vm270, %v3834
      %3899 = vst.msk [vmem:[%s262 + $0x30] sm:$0xf] %vm270, %v3835
      %3900 = vst.msk [vmem:[%s262 + $0x34] sm:$0xf] %vm270, %v3836
      %3901 = vst.msk [vmem:[%s262 + $0x38] sm:$0xf] %vm270, %v3837
      %3902 = vst.msk [vmem:[%s262 + $0x3c] sm:$0xf] %vm270, %v3838
      %3903 = vst.msk [vmem:[%s262 + $0x40] sm:$0xf] %vm270, %v3839
      %3904 = vst.msk [vmem:[%s262 + $0x44] sm:$0xf] %vm270, %v3840
      %3905 = vst.msk [vmem:[%s262 + $0x48] sm:$0xf] %vm270, %v3841
      %3906 = vst.msk [vmem:[%s262 + $0x4c] sm:$0xf] %vm270, %v3842
      %3907 = vst.msk [vmem:[%s262 + $0x50] sm:$0xf] %vm270, %v3843
      %3908 = vst.msk [vmem:[%s262 + $0x54] sm:$0xf] %vm270, %v3844
      %3909 = vst.msk [vmem:[%s262 + $0x58] sm:$0xf] %vm270, %v3845
      %3910 = vst.msk [vmem:[%s262 + $0x5c] sm:$0xf] %vm270, %v3846
      %3911 = vst.msk [vmem:[%s262 + $0x60] sm:$0xf] %vm270, %v3847
      %3912 = vst.msk [vmem:[%s262 + $0x64] sm:$0xf] %vm270, %v3848
      %3913 = vst.msk [vmem:[%s262 + $0x68] sm:$0xf] %vm270, %v3849
      %3914 = vst.msk [vmem:[%s262 + $0x6c] sm:$0xf] %vm270, %v3850
      %3915 = vst.msk [vmem:[%s262 + $0x70] sm:$0xf] %vm270, %v3851
      %3916 = vst.msk [vmem:[%s262 + $0x74] sm:$0xf] %vm270, %v3852
      %3917 = vst.msk [vmem:[%s262 + $0x78] sm:$0xf] %vm270, %v3853
      %3918 = vst.msk [vmem:[%s262 + $0x7c] sm:$0xf] %vm270, %v3854
      %v3919 = vsel %vm962, %v3633, 0.0
      %v3920 = vsel %vm962, %v3636, 0.0
      %v3921 = vadd.f32 %v3919, %v3920
      %v3922 = vsel %vm962, %v3641, 0.0
      %v3923 = vadd.f32 %v3921, %v3922
      %v3924 = vsel %vm962, %v3644, 0.0
      %v3925 = vadd.f32 %v3923, %v3924
      %v3926 = vsel %vm962, %v3649, 0.0
      %v3927 = vadd.f32 %v3925, %v3926
      %v3928 = vsel %vm962, %v3652, 0.0
      %v3929 = vadd.f32 %v3927, %v3928
      %v3930 = vsel %vm962, %v3657, 0.0
      %v3931 = vadd.f32 %v3929, %v3930
      %v3932 = vsel %vm962, %v3660, 0.0
      %v3933 = vadd.f32 %v3931, %v3932
      %v3934 = vsel %vm962, %v3665, 0.0
      %v3935 = vadd.f32 %v3933, %v3934
      %v3936 = vsel %vm962, %v3668, 0.0
      %v3937 = vadd.f32 %v3935, %v3936
      %v3938 = vsel %vm962, %v3673, 0.0
      %v3939 = vadd.f32 %v3937, %v3938
      %v3940 = vsel %vm962, %v3676, 0.0
      %v3941 = vadd.f32 %v3939, %v3940
      %v3942 = vsel %vm962, %v3681, 0.0
      %v3943 = vadd.f32 %v3941, %v3942
      %v3944 = vsel %vm962, %v3684, 0.0
      %v3945 = vadd.f32 %v3943, %v3944
      %v3946 = vsel %vm962, %v3689, 0.0
      %v3947 = vadd.f32 %v3945, %v3946
      %v3948 = vsel %vm962, %v3692, 0.0
      %v3949 = vadd.f32 %v3947, %v3948
      %v3950 = vsel %vm962, %v3697, 0.0
      %v3951 = vadd.f32 %v3949, %v3950
      %v3952 = vsel %vm962, %v3700, 0.0
      %v3953 = vadd.f32 %v3951, %v3952
      %v3954 = vsel %vm962, %v3705, 0.0
      %v3955 = vadd.f32 %v3953, %v3954
      %v3956 = vsel %vm962, %v3708, 0.0
      %v3957 = vadd.f32 %v3955, %v3956
      %v3958 = vsel %vm962, %v3713, 0.0
      %v3959 = vadd.f32 %v3957, %v3958
      %v3960 = vsel %vm962, %v3716, 0.0
      %v3961 = vadd.f32 %v3959, %v3960
      %v3962 = vsel %vm962, %v3721, 0.0
      %v3963 = vadd.f32 %v3961, %v3962
      %v3964 = vsel %vm962, %v3724, 0.0
      %v3965 = vadd.f32 %v3963, %v3964
      %v3966 = vsel %vm962, %v3729, 0.0
      %v3967 = vadd.f32 %v3965, %v3966
      %v3968 = vsel %vm962, %v3732, 0.0
      %v3969 = vadd.f32 %v3967, %v3968
      %v3970 = vsel %vm962, %v3737, 0.0
      %v3971 = vadd.f32 %v3969, %v3970
      %v3972 = vsel %vm962, %v3740, 0.0
      %v3973 = vadd.f32 %v3971, %v3972
      %v3974 = vsel %vm962, %v3745, 0.0
      %v3975 = vadd.f32 %v3973, %v3974
      %v3976 = vsel %vm962, %v3748, 0.0
      %v3977 = vadd.f32 %v3975, %v3976
      %v3978 = vsel %vm962, %v3753, 0.0
      %v3979 = vadd.f32 %v3977, %v3978
      %v3980 = vsel %vm962, %v3756, 0.0
      %v3981 = vadd.f32 %v3979, %v3980
      %v3982 = vrot.slane %v3981, 4
      %v3983 = vadd.f32 %v3981, %v3982
      %v3984 = vrot.slane %v3983, 2
      %v3985 = vadd.f32 %v3983, %v3984
      %v3986 = vrot.slane %v3985, 1
      %v3987 = vadd.f32 %v3985, %v3986
      %3988 = vst.msk [vmem:[%s265] sm:$0x1] %vm286, %v3987
      %v3989 = vmul.f32 %v3633, %v3633
      %v3990 = vmul.f32 %v3636, %v3636
      %v3991 = vmul.f32 %v3641, %v3641
      %v3992 = vmul.f32 %v3644, %v3644
      %v3993 = vmul.f32 %v3649, %v3649
      %v3994 = vmul.f32 %v3652, %v3652
      %v3995 = vmul.f32 %v3657, %v3657
      %v3996 = vmul.f32 %v3660, %v3660
      %v3997 = vmul.f32 %v3665, %v3665
      %v3998 = vmul.f32 %v3668, %v3668
      %v3999 = vmul.f32 %v3673, %v3673
      %v4000 = vmul.f32 %v3676, %v3676
      %v4001 = vmul.f32 %v3681, %v3681
      %v4002 = vmul.f32 %v3684, %v3684
      %v4003 = vmul.f32 %v3689, %v3689
      %v4004 = vmul.f32 %v3692, %v3692
      %v4005 = vmul.f32 %v3697, %v3697
      %v4006 = vmul.f32 %v3700, %v3700
      %v4007 = vmul.f32 %v3705, %v3705
      %v4008 = vmul.f32 %v3708, %v3708
      %v4009 = vmul.f32 %v3713, %v3713
      %v4010 = vmul.f32 %v3716, %v3716
      %v4011 = vmul.f32 %v3721, %v3721
      %v4012 = vmul.f32 %v3724, %v3724
      %v4013 = vmul.f32 %v3729, %v3729
      %v4014 = vmul.f32 %v3732, %v3732
      %v4015 = vmul.f32 %v3737, %v3737
      %v4016 = vmul.f32 %v3740, %v3740
      %v4017 = vmul.f32 %v3745, %v3745
      %v4018 = vmul.f32 %v3748, %v3748
      %v4019 = vmul.f32 %v3753, %v3753
      %v4020 = vmul.f32 %v3756, %v3756
      %v4021 = vsel %vm962, %v3989, 0.0
      %v4022 = vsel %vm962, %v3990, 0.0
      %v4023 = vadd.f32 %v4021, %v4022
      %v4024 = vsel %vm962, %v3991, 0.0
      %v4025 = vadd.f32 %v4023, %v4024
      %v4026 = vsel %vm962, %v3992, 0.0
      %v4027 = vadd.f32 %v4025, %v4026
      %v4028 = vsel %vm962, %v3993, 0.0
      %v4029 = vadd.f32 %v4027, %v4028
      %v4030 = vsel %vm962, %v3994, 0.0
      %v4031 = vadd.f32 %v4029, %v4030
      %v4032 = vsel %vm962, %v3995, 0.0
      %v4033 = vadd.f32 %v4031, %v4032
      %v4034 = vsel %vm962, %v3996, 0.0
      %v4035 = vadd.f32 %v4033, %v4034
      %v4036 = vsel %vm962, %v3997, 0.0
      %v4037 = vadd.f32 %v4035, %v4036
      %v4038 = vsel %vm962, %v3998, 0.0
      %v4039 = vadd.f32 %v4037, %v4038
      %v4040 = vsel %vm962, %v3999, 0.0
      %v4041 = vadd.f32 %v4039, %v4040
      %v4042 = vsel %vm962, %v4000, 0.0
      %v4043 = vadd.f32 %v4041, %v4042
      %v4044 = vsel %vm962, %v4001, 0.0
      %v4045 = vadd.f32 %v4043, %v4044
      %v4046 = vsel %vm962, %v4002, 0.0
      %v4047 = vadd.f32 %v4045, %v4046
      %v4048 = vsel %vm962, %v4003, 0.0
      %v4049 = vadd.f32 %v4047, %v4048
      %v4050 = vsel %vm962, %v4004, 0.0
      %v4051 = vadd.f32 %v4049, %v4050
      %v4052 = vsel %vm962, %v4005, 0.0
      %v4053 = vadd.f32 %v4051, %v4052
      %v4054 = vsel %vm962, %v4006, 0.0
      %v4055 = vadd.f32 %v4053, %v4054
      %v4056 = vsel %vm962, %v4007, 0.0
      %v4057 = vadd.f32 %v4055, %v4056
      %v4058 = vsel %vm962, %v4008, 0.0
      %v4059 = vadd.f32 %v4057, %v4058
      %v4060 = vsel %vm962, %v4009, 0.0
      %v4061 = vadd.f32 %v4059, %v4060
      %v4062 = vsel %vm962, %v4010, 0.0
      %v4063 = vadd.f32 %v4061, %v4062
      %v4064 = vsel %vm962, %v4011, 0.0
      %v4065 = vadd.f32 %v4063, %v4064
      %v4066 = vsel %vm962, %v4012, 0.0
      %v4067 = vadd.f32 %v4065, %v4066
      %v4068 = vsel %vm962, %v4013, 0.0
      %v4069 = vadd.f32 %v4067, %v4068
      %v4070 = vsel %vm962, %v4014, 0.0
      %v4071 = vadd.f32 %v4069, %v4070
      %v4072 = vsel %vm962, %v4015, 0.0
      %v4073 = vadd.f32 %v4071, %v4072
      %v4074 = vsel %vm962, %v4016, 0.0
      %v4075 = vadd.f32 %v4073, %v4074
      %v4076 = vsel %vm962, %v4017, 0.0
      %v4077 = vadd.f32 %v4075, %v4076
      %v4078 = vsel %vm962, %v4018, 0.0
      %v4079 = vadd.f32 %v4077, %v4078
      %v4080 = vsel %vm962, %v4019, 0.0
      %v4081 = vadd.f32 %v4079, %v4080
      %v4082 = vsel %vm962, %v4020, 0.0
      %v4083 = vadd.f32 %v4081, %v4082
      %v4084 = vrot.slane %v4083, 4
      %v4085 = vadd.f32 %v4083, %v4084
      %v4086 = vrot.slane %v4085, 2
      %v4087 = vadd.f32 %v4085, %v4086
      %v4088 = vrot.slane %v4087, 1
      %v4089 = vadd.f32 %v4087, %v4088
      %4090 = vst.msk [vmem:[%s268] sm:$0x1] %vm286, %v4089
      %p4091 = scmp.lt.s32.totalorder %s18, 1
      %s4092 = scalar_select %p4091, %s18, 1
      %s4093 = smul.addr %s4092, 32
      %s4094 = smul.addr %s4093, 4
      %s4095 = scalar_lea.vmem %s4, %s4094
      %p4096 = scmp.lt.s32.totalorder %s18, 1
      %s4097 = scalar_select %p4096, %s18, 1
      %s4098 = scalar_lea.vmem %s5, %s4097
      %p4099 = scmp.lt.s32.totalorder %s18, 1
      %s4100 = scalar_select %p4099, %s18, 1
      %s4101 = scalar_lea.vmem %s6, %s4100
      // Predicated region
      $region37: #{res_conv_layer_forward.4} parent=35 // pred_check
        %p4102 = pneg %p125
      $region38: #{res_conv_layer_forward.4} parent=35 // pred_check_branch
        %4104 = sbr.rel (%p4102) target = $region40
      $region39: #{res_conv_layer_forward.4} parent=35 // pred_region
        _
      $region40: #{res_conv_layer_forward.4} parent=35 // pred_fallthru
        _
      // Predicated region
      $region41: #{res_conv_layer_forward.4} parent=35 // pred_check
        %p4105 = pneg %p151
      $region42: #{res_conv_layer_forward.4} parent=35 // pred_check_branch
        %4107 = sbr.rel (%p4105) target = $region44
      $region43: #{res_conv_layer_forward.4} parent=35 // pred_region
        _
      $region44: #{res_conv_layer_forward.4} parent=35 // pred_fallthru
        _
      // Predicated region
      $region45: #{res_conv_layer_forward.4} parent=35 // pred_check
        %p4108 = pneg %p177
      $region46: #{res_conv_layer_forward.4} parent=35 // pred_check_branch
        %4110 = sbr.rel (%p4108) target = $region48
      $region47: #{res_conv_layer_forward.4} parent=35 // pred_region
        _
      $region48: #{res_conv_layer_forward.4} parent=35 // pred_fallthru
        _
    $region36: #{res_conv_layer_forward.4} parent=5 // pred_fallthru
      _
    %p4111 = scmp.le.s32.totalorder 2, %s13
    // Predicated region
    $region49: #{res_conv_layer_forward.4} parent=5 // pred_check
      %p4112 = pneg %p4111
    $region50: #{res_conv_layer_forward.4} parent=5 // pred_check_branch
      %4114 = sbr.rel (%p4112) target = $region52
    $region51: #{res_conv_layer_forward.4} parent=5 // pred_region
      %s4115 = ssub.s32 %s13, 2
      // Predicated region
      $region53: #{res_conv_layer_forward.4} parent=51 // pred_check
        %p4116 = pneg %p131
      $region54: #{res_conv_layer_forward.4} parent=51 // pred_check_branch
        %4118 = sbr.rel (%p4116) target = $region56
      $region55: #{res_conv_layer_forward.4} parent=51 // pred_region
        %p4119 = scmp.lt.s32.totalorder %s19, 1
        %s4120 = scalar_select %p4119, %s19, 1
        %s4121 = smul.addr %s4120, 32
        %s4122 = smul.addr %s4121, 4
        %s4123 = scalar_lea.vmem %s4, %s4122
      $region56: #{res_conv_layer_forward.4} parent=51 // pred_fallthru
        _
      // Predicated region
      $region57: #{res_conv_layer_forward.4} parent=51 // pred_check
        %p4124 = pneg %p157
      $region58: #{res_conv_layer_forward.4} parent=51 // pred_check_branch
        %4126 = sbr.rel (%p4124) target = $region60
      $region59: #{res_conv_layer_forward.4} parent=51 // pred_region
        %p4127 = scmp.lt.s32.totalorder %s19, 1
        %s4128 = scalar_select %p4127, %s19, 1
        %s4129 = scalar_lea.vmem %s5, %s4128
      $region60: #{res_conv_layer_forward.4} parent=51 // pred_fallthru
        _
      // Predicated region
      $region61: #{res_conv_layer_forward.4} parent=51 // pred_check
        %p4130 = pneg %p183
      $region62: #{res_conv_layer_forward.4} parent=51 // pred_check_branch
        %4132 = sbr.rel (%p4130) target = $region64
      $region63: #{res_conv_layer_forward.4} parent=51 // pred_region
        %p4133 = scmp.lt.s32.totalorder %s19, 1
        %s4134 = scalar_select %p4133, %s19, 1
        %s4135 = scalar_lea.vmem %s6, %s4134
      $region64: #{res_conv_layer_forward.4} parent=51 // pred_fallthru
        _
    $region52: #{res_conv_layer_forward.4} parent=5 // pred_fallthru
      _
  $region6: #{res_conv_layer_forward.4} parent=0 // loop_footer
    %s17 = sadd.s32 1, %s13
  $region7: #{res_conv_layer_forward.4} parent=0 // loop_footer_branch
    %12 = sbr.rel target = $region3
  $region8: #{res_conv_layer_forward.4} parent=0 // loop_exit
    _

// kernel: res_conv_layer_forward.3
$region0: #{res_conv_layer_forward.3}
  #allocation0 [shape = 'u32[]', space=smem, size = 0x4, offset = 0x4, fixed_abs, tag = 'smem constant byte address 0x4 - core index']
  #allocation1 [shape = 'u32[144,128]{1,0:T(1,128)}', space=vmem, size = 0x12000, scoped, tag = 'internal scratch']
  #allocation2 [shape = 'bf16[18,18,4]{2,1,0:T(8,128)(2,1)}', space=vmem, size = 0x1b000, scoped, tag = 'scratch operand']
  #allocation3 [shape = 'bf16[256,36]{1,0:T(16,128)(2,1)}', space=vmem, size = 0x10000, scoped, tag = 'scratch operand']
  %s0 = inlined_call_operand.vmem [shape: bf16[2,16,16,4], index: 0, kind: input, shape index: {}]
  %s1 = inlined_call_operand.vmem [shape: f32[1,1,4], index: 1, kind: input, shape index: {}, may-alias: {1,2}]
  %s2 = inlined_call_operand.vmem [shape: f32[1,1,4], index: 2, kind: input, shape index: {}, may-alias: {1,2}]
  %s3 = inlined_call_operand.vmem [shape: bf16[36,32], index: 3, kind: input, shape index: {}]
  %s4 = inlined_call_operand.vmem [shape: bf16[2,256,32], index: 4, kind: output, shape index: {0}]
  %s5 = inlined_call_operand.vmem [shape: f32[2,1,32], index: 5, kind: output, shape index: {1}]
  %s6 = inlined_call_operand.vmem [shape: f32[2,1,32], index: 6, kind: output, shape index: {2}]
  %7 = xla_tuple %s4, %s5, %s6
  %s8 = sld [smem:[#allocation0]]
  $region65: #{res_conv_layer_forward.3} parent=0
    _
  %s10 = ssub.s32 1, %s8
  %s11 = scalar_select 0, %s10, %s8
  loop: start=0, step=1, limit=4
  $region2: #{res_conv_layer_forward.3} parent=0 // loop_pre_header
    _
  $region3: #{res_conv_layer_forward.3} parent=0 // loop_header
    %s13 = sphi 0, %s17
    %p14 = scmp.ge.s32.totalorder %s13, 4
    %s23 = sphi 0, %s25
    %s26 = sphi 0, %s23
    %s27 = sphi 0, %s26
    %s43 = sphi 0, %s27
    %s47 = sphi 0, %s47
    %s49 = sphi 0, %s47
    %s50 = sphi 0, %s49
    %s64 = sphi 0, %s50
    %s68 = sphi 0, %s68
    %s70 = sphi 0, %s68
    %s71 = sphi 0, %s70
    %s85 = sphi 0, %s71
    %s89 = sphi 0, %s89
    %s91 = sphi 0, %s89
    %s92 = sphi 0, %s91
    %s106 = sphi 0, %s92
    %s112 = sphi 0, %s114
    %s115 = sphi 0, %s112
    %s116 = sphi 0, %s115
    %s132 = sphi 0, %s116
    %s138 = sphi 0, %s140
    %s141 = sphi 0, %s138
    %s142 = sphi 0, %s141
    %s158 = sphi 0, %s142
    %s164 = sphi 0, %s166
    %s167 = sphi 0, %s164
    %s168 = sphi 0, %s167
    %s184 = sphi 0, %s168
  $region4: #{res_conv_layer_forward.3} parent=0 // loop_header_branch
    %16 = sbr.rel (%p14) target = $region8
  $region5: #{res_conv_layer_forward.3} parent=0 // loop_body
    %s18 = ssub.s32 %s13, 1
    %s19 = ssub.s32 %s13, 2
    %s20 = sadd.s32 %s13, 1
    %s21 = ssub.s32 %s13, %s20
    %p22 = scmp.eq.s32.totalorder %s21, 0
    %s24 = sadd.s32 %s23, 1
    %s25 = scalar_select %p22, %s23, %s24
    %p28 = pneg %p22
    %p29 = scmp.eq.s32.totalorder %s13, 1
    %p30 = por %p28, %p29
    %p31 = scmp.ne.s32.totalorder %s23, %s26
    %p32 = scmp.eq.s32.totalorder %s13, 0
    %p33 = por %p31, %p32
    %p34 = scmp.ne.s32.totalorder %s23, %s26
    %p35 = scmp.eq.s32.totalorder %s18, 1
    %p36 = por %p34, %p35
    %p37 = scmp.ne.s32.totalorder %s26, %s27
    %p38 = scmp.eq.s32.totalorder %s18, 0
    %p39 = por %p37, %p38
    %p40 = scmp.ne.s32.totalorder %s26, %s27
    %p41 = scmp.eq.s32.totalorder %s19, 1
    %p42 = por %p40, %p41
    %p44 = scmp.ne.s32.totalorder %s27, %s43
    %p45 = scmp.eq.s32.totalorder %s19, 0
    %p46 = por %p44, %p45
    %s48 = sadd.s32 %s47, 1
    %p51 = scmp.eq.s32.totalorder %s13, 1
    %p52 = scmp.ne.s32.totalorder %s47, %s49
    %p53 = scmp.eq.s32.totalorder %s13, 0
    %p54 = por %p52, %p53
    %p55 = scmp.ne.s32.totalorder %s47, %s49
    %p56 = scmp.eq.s32.totalorder %s18, 1
    %p57 = por %p55, %p56
    %p58 = scmp.ne.s32.totalorder %s49, %s50
    %p59 = scmp.eq.s32.totalorder %s18, 0
    %p60 = por %p58, %p59
    %p61 = scmp.ne.s32.totalorder %s49, %s50
    %p62 = scmp.eq.s32.totalorder %s19, 1
    %p63 = por %p61, %p62
    %p65 = scmp.ne.s32.totalorder %s50, %s64
    %p66 = scmp.eq.s32.totalorder %s19, 0
    %p67 = por %p65, %p66
    %s69 = sadd.s32 %s68, 1
    %p72 = scmp.eq.s32.totalorder %s13, 1
    %p73 = scmp.ne.s32.totalorder %s68, %s70
    %p74 = scmp.eq.s32.totalorder %s13, 0
    %p75 = por %p73, %p74
    %p76 = scmp.ne.s32.totalorder %s68, %s70
    %p77 = scmp.eq.s32.totalorder %s18, 1
    %p78 = por %p76, %p77
    %p79 = scmp.ne.s32.totalorder %s70, %s71
    %p80 = scmp.eq.s32.totalorder %s18, 0
    %p81 = por %p79, %p80
    %p82 = scmp.ne.s32.totalorder %s70, %s71
    %p83 = scmp.eq.s32.totalorder %s19, 1
    %p84 = por %p82, %p83
    %p86 = scmp.ne.s32.totalorder %s71, %s85
    %p87 = scmp.eq.s32.totalorder %s19, 0
    %p88 = por %p86, %p87
    %s90 = sadd.s32 %s89, 1
    %p93 = scmp.eq.s32.totalorder %s13, 1
    %p94 = scmp.ne.s32.totalorder %s89, %s91
    %p95 = scmp.eq.s32.totalorder %s13, 0
    %p96 = por %p94, %p95
    %p97 = scmp.ne.s32.totalorder %s89, %s91
    %p98 = scmp.eq.s32.totalorder %s18, 1
    %p99 = por %p97, %p98
    %p100 = scmp.ne.s32.totalorder %s91, %s92
    %p101 = scmp.eq.s32.totalorder %s18, 0
    %p102 = por %p100, %p101
    %p103 = scmp.ne.s32.totalorder %s91, %s92
    %p104 = scmp.eq.s32.totalorder %s19, 1
    %p105 = por %p103, %p104
    %p107 = scmp.ne.s32.totalorder %s92, %s106
    %p108 = scmp.eq.s32.totalorder %s19, 0
    %p109 = por %p107, %p108
    %s110 = ssub.s32 %s13, %s20
    %p111 = scmp.eq.s32.totalorder %s110, 0
    %s113 = sadd.s32 %s112, 1
    %s114 = scalar_select %p111, %s112, %s113
    %p117 = pneg %p111
    %p118 = scmp.eq.s32.totalorder %s13, 1
    %p119 = por %p117, %p118
    %p120 = scmp.ne.s32.totalorder %s112, %s115
    %p121 = scmp.eq.s32.totalorder %s13, 0
    %p122 = por %p120, %p121
    %p123 = scmp.ne.s32.totalorder %s112, %s115
    %p124 = scmp.eq.s32.totalorder %s18, 1
    %p125 = por %p123, %p124
    %p126 = scmp.ne.s32.totalorder %s115, %s116
    %p127 = scmp.eq.s32.totalorder %s18, 0
    %p128 = por %p126, %p127
    %p129 = scmp.ne.s32.totalorder %s115, %s116
    %p130 = scmp.eq.s32.totalorder %s19, 1
    %p131 = por %p129, %p130
    %p133 = scmp.ne.s32.totalorder %s116, %s132
    %p134 = scmp.eq.s32.totalorder %s19, 0
    %p135 = por %p133, %p134
    %s136 = ssub.s32 %s13, %s20
    %p137 = scmp.eq.s32.totalorder %s136, 0
    %s139 = sadd.s32 %s138, 1
    %s140 = scalar_select %p137, %s138, %s139
    %p143 = pneg %p137
    %p144 = scmp.eq.s32.totalorder %s13, 1
    %p145 = por %p143, %p144
    %p146 = scmp.ne.s32.totalorder %s138, %s141
    %p147 = scmp.eq.s32.totalorder %s13, 0
    %p148 = por %p146, %p147
    %p149 = scmp.ne.s32.totalorder %s138, %s141
    %p150 = scmp.eq.s32.totalorder %s18, 1
    %p151 = por %p149, %p150
    %p152 = scmp.ne.s32.totalorder %s141, %s142
    %p153 = scmp.eq.s32.totalorder %s18, 0
    %p154 = por %p152, %p153
    %p155 = scmp.ne.s32.totalorder %s141, %s142
    %p156 = scmp.eq.s32.totalorder %s19, 1
    %p157 = por %p155, %p156
    %p159 = scmp.ne.s32.totalorder %s142, %s158
    %p160 = scmp.eq.s32.totalorder %s19, 0
    %p161 = por %p159, %p160
    %s162 = ssub.s32 %s13, %s20
    %p163 = scmp.eq.s32.totalorder %s162, 0
    %s165 = sadd.s32 %s164, 1
    %s166 = scalar_select %p163, %s164, %s165
    %p169 = pneg %p163
    %p170 = scmp.eq.s32.totalorder %s13, 1
    %p171 = por %p169, %p170
    %p172 = scmp.ne.s32.totalorder %s164, %s167
    %p173 = scmp.eq.s32.totalorder %s13, 0
    %p174 = por %p172, %p173
    %p175 = scmp.ne.s32.totalorder %s164, %s167
    %p176 = scmp.eq.s32.totalorder %s18, 1
    %p177 = por %p175, %p176
    %p178 = scmp.ne.s32.totalorder %s167, %s168
    %p179 = scmp.eq.s32.totalorder %s18, 0
    %p180 = por %p178, %p179
    %p181 = scmp.ne.s32.totalorder %s167, %s168
    %p182 = scmp.eq.s32.totalorder %s19, 1
    %p183 = por %p181, %p182
    %p185 = scmp.ne.s32.totalorder %s168, %s184
    %p186 = scmp.eq.s32.totalorder %s19, 0
    %p187 = por %p185, %p186
    %p188 = scmp.le.s32.totalorder 1, %s13
    %p189 = scmp.lt.s32.totalorder %s13, 3
    %p190 = pnand %p188, %p189
    %p191 = pneg %p190
    // Predicated region
    $region9: #{res_conv_layer_forward.3} parent=5 // pred_check
      _
    $region10: #{res_conv_layer_forward.3} parent=5 // pred_check_branch
      %193 = sbr.rel (%p190) target = $region12
    $region11: #{res_conv_layer_forward.3} parent=5 // pred_region
      %s194 = ssub.s32 %s13, 1
      // Predicated region
      $region13: #{res_conv_layer_forward.3} parent=11 // pred_check
        %p195 = pneg %p60
      $region14: #{res_conv_layer_forward.3} parent=11 // pred_check_branch
        %197 = sbr.rel (%p195) target = $region16
      $region15: #{res_conv_layer_forward.3} parent=11 // pred_region
        _
      $region16: #{res_conv_layer_forward.3} parent=11 // pred_fallthru
        _
      // Predicated region
      $region17: #{res_conv_layer_forward.3} parent=11 // pred_check
        %p198 = pneg %p81
      $region18: #{res_conv_layer_forward.3} parent=11 // pred_check_branch
        %200 = sbr.rel (%p198) target = $region20
      $region19: #{res_conv_layer_forward.3} parent=11 // pred_region
        _
      $region20: #{res_conv_layer_forward.3} parent=11 // pred_fallthru
        _
      // Predicated region
      $region21: #{res_conv_layer_forward.3} parent=11 // pred_check
        %p201 = pneg %p102
      $region22: #{res_conv_layer_forward.3} parent=11 // pred_check_branch
        %203 = sbr.rel (%p201) target = $region24
      $region23: #{res_conv_layer_forward.3} parent=11 // pred_region
        _
      $region24: #{res_conv_layer_forward.3} parent=11 // pred_fallthru
        _
    $region12: #{res_conv_layer_forward.3} parent=5 // pred_fallthru
      _
    %p204 = scmp.lt.s32.totalorder %s13, 2
    // Predicated region
    $region25: #{res_conv_layer_forward.3} parent=5 // pred_check
      %p205 = pneg %p204
    $region26: #{res_conv_layer_forward.3} parent=5 // pred_check_branch
      %207 = sbr.rel (%p205) target = $region28
    $region27: #{res_conv_layer_forward.3} parent=5 // pred_region
      // Predicated region
      $region29: #{res_conv_layer_forward.3} parent=27 // pred_check
        %p208 = pneg %p33
      $region30: #{res_conv_layer_forward.3} parent=27 // pred_check_branch
        %210 = sbr.rel (%p208) target = $region32
      $region31: #{res_conv_layer_forward.3} parent=27 // pred_region
        %p211 = scmp.lt.s32.totalorder %s13, 1
        %s212 = scalar_select %p211, %s13, 1
        %s213 = smul.addr %s212, 32
        %s214 = smul.addr %s213, 4
        %s215 = scalar_lea.vmem %s0, %s214
      $region32: #{res_conv_layer_forward.3} parent=27 // pred_fallthru
        _
    $region28: #{res_conv_layer_forward.3} parent=5 // pred_fallthru
      _
    %p216 = scmp.le.s32.totalorder 1, %s13
    %p217 = scmp.lt.s32.totalorder %s13, 3
    %p218 = pnand %p216, %p217
    %p219 = pneg %p218
    // Predicated region
    $region33: #{res_conv_layer_forward.3} parent=5 // pred_check
      _
    $region34: #{res_conv_layer_forward.3} parent=5 // pred_check_branch
      %221 = sbr.rel (%p218) target = $region36
    $region35: #{res_conv_layer_forward.3} parent=5 // pred_region
      %s222 = ssub.s32 %s13, 1
      %p223 = scmp.lt.s32.totalorder %s18, 1
      %s224 = scalar_select %p223, %s18, 1
      %s225 = smul.addr %s224, 32
      %s226 = smul.addr %s225, 4
      %s227 = scalar_lea.vmem %s0, %s226
      %p228 = pneg %p39
      %p229 = pneg %p36
      %p230 = pneg %p60
      %p231 = pneg %p57
      %p232 = pneg %p81
      %p233 = pneg %p78
      %p234 = pneg %p102
      %p235 = pneg %p99
      %p236 = pneg %p128
      %p237 = pneg %p125
      %p238 = scmp.lt.s32.totalorder %s18, 1
      %s239 = scalar_select %p238, %s18, 1
      %s240 = smul.addr %s239, 32
      %s241 = smul.addr %s240, 4
      %s242 = scalar_lea.vmem %s4, %s241
      %p243 = pneg %p154
      %p244 = pneg %p151
      %p245 = scmp.lt.s32.totalorder %s18, 1
      %s246 = scalar_select %p245, %s18, 1
      %s247 = scalar_lea.vmem %s5, %s246
      %p248 = pneg %p180
      %p249 = pneg %p177
      %p250 = scmp.lt.s32.totalorder %s18, 1
      %s251 = scalar_select %p250, %s18, 1
      %s252 = scalar_lea.vmem %s6, %s251
      %p253 = scmp.lt.s32.totalorder %s18, 1
      %s254 = scalar_select %p253, %s18, 1
      %s255 = smul.addr %s254, 32
      %s256 = smul.addr %s255, 4
      %s257 = scalar_lea.vmem %s0, %s256
      %p258 = scmp.lt.s32.totalorder %s18, 1
      %s259 = scalar_select %p258, %s18, 1
      %s260 = smul.addr %s259, 32
      %s261 = smul.addr %s260, 4
      %s262 = scalar_lea.vmem %s4, %s261
      %p263 = scmp.lt.s32.totalorder %s18, 1
      %s264 = scalar_select %p263, %s18, 1
      %s265 = scalar_lea.vmem %s5, %s264
      %p266 = scmp.lt.s32.totalorder %s18, 1
      %s267 = scalar_select %p266, %s18, 1
      %s268 = scalar_lea.vmem %s6, %s267
      %vm270 = vcmask 27648
      %271 = vst.msk [vmem:[#allocation2] sm:$0xf] %vm270, 0
      %272 = vst.msk [vmem:[#allocation2 + $0x4] sm:$0xf] %vm270, 0
      %vm273 = vcmask 24576
      %274 = vst.msk [vmem:[#allocation2 + $0x8] sm:$0x1] %vm273, 0
      %s275 = scalar_lea.vmem [#allocation2], 204
      %276 = vst.msk [vmem:[%s275] sm:$0xf] %vm270, 0
      %277 = vst.msk [vmem:[%s275 + $0x4] sm:$0xf] %vm270, 0
      %278 = vst.msk [vmem:[%s275 + $0x8] sm:$0x1] %vm273, 0
      %s279 = scalar_lea.vmem [#allocation2], 12
      %vm280 = vcmask 24576
      %vm281 = vsmask.f32 256
      %vm282 = vmand %vm280, %vm281
      %v283 = vld [vmem:[%s279] sm:$0x1]
      %v284 = vsel %vm282, 0, %v283
      %285 = vst [vmem:[%s279] sm:$0x1] %v284
      %v286 = vld [vmem:[%s279 + $0xc] sm:$0x1]
      %v287 = vsel %vm282, 0, %v286
      %288 = vst [vmem:[%s279 + $0xc] sm:$0x1] %v287
      %v289 = vld [vmem:[%s279 + $0x18] sm:$0x1]
      %v290 = vsel %vm282, 0, %v289
      %291 = vst [vmem:[%s279 + $0x18] sm:$0x1] %v290
      %v292 = vld [vmem:[%s279 + $0x24] sm:$0x1]
      %v293 = vsel %vm282, 0, %v292
      %294 = vst [vmem:[%s279 + $0x24] sm:$0x1] %v293
      %v295 = vld [vmem:[%s279 + $0x30] sm:$0x1]
      %v296 = vsel %vm282, 0, %v295
      %297 = vst [vmem:[%s279 + $0x30] sm:$0x1] %v296
      %v298 = vld [vmem:[%s279 + $0x3c] sm:$0x1]
      %v299 = vsel %vm282, 0, %v298
      %300 = vst [vmem:[%s279 + $0x3c] sm:$0x1] %v299
      %v301 = vld [vmem:[%s279 + $0x48] sm:$0x1]
      %v302 = vsel %vm282, 0, %v301
      %303 = vst [vmem:[%s279 + $0x48] sm:$0x1] %v302
      %v304 = vld [vmem:[%s279 + $0x54] sm:$0x1]
      %v305 = vsel %vm282, 0, %v304
      %306 = vst [vmem:[%s279 + $0x54] sm:$0x1] %v305
      %v307 = vld [vmem:[%s279 + $0x60] sm:$0x1]
      %v308 = vsel %vm282, 0, %v307
      %309 = vst [vmem:[%s279 + $0x60] sm:$0x1] %v308
      %v310 = vld [vmem:[%s279 + $0x6c] sm:$0x1]
      %v311 = vsel %vm282, 0, %v310
      %312 = vst [vmem:[%s279 + $0x6c] sm:$0x1] %v311
      %v313 = vld [vmem:[%s279 + $0x78] sm:$0x1]
      %v314 = vsel %vm282, 0, %v313
      %315 = vst [vmem:[%s279 + $0x78] sm:$0x1] %v314
      %v316 = vld [vmem:[%s279 + $0x84] sm:$0x1]
      %v317 = vsel %vm282, 0, %v316
      %318 = vst [vmem:[%s279 + $0x84] sm:$0x1] %v317
      %v319 = vld [vmem:[%s279 + $0x90] sm:$0x1]
      %v320 = vsel %vm282, 0, %v319
      %321 = vst [vmem:[%s279 + $0x90] sm:$0x1] %v320
      %v322 = vld [vmem:[%s279 + $0x9c] sm:$0x1]
      %v323 = vsel %vm282, 0, %v322
      %324 = vst [vmem:[%s279 + $0x9c] sm:$0x1] %v323
      %v325 = vld [vmem:[%s279 + $0xa8] sm:$0x1]
      %v326 = vsel %vm282, 0, %v325
      %327 = vst [vmem:[%s279 + $0xa8] sm:$0x1] %v326
      %v328 = vld [vmem:[%s279 + $0xb4] sm:$0x1]
      %v329 = vsel %vm282, 0, %v328
      %330 = vst [vmem:[%s279 + $0xb4] sm:$0x1] %v329
      %vm331 = vsmask.f32 7938
      %vm332 = vmand %vm280, %vm331
      %v333 = vld [vmem:[%s279 + $0x8] sm:$0x1]
      %v334 = vsel %vm332, 0, %v333
      %335 = vst [vmem:[%s279 + $0x8] sm:$0x1] %v334
      %v336 = vld [vmem:[%s279 + $0x14] sm:$0x1]
      %v337 = vsel %vm332, 0, %v336
      %338 = vst [vmem:[%s279 + $0x14] sm:$0x1] %v337
      %v339 = vld [vmem:[%s279 + $0x20] sm:$0x1]
      %v340 = vsel %vm332, 0, %v339
      %341 = vst [vmem:[%s279 + $0x20] sm:$0x1] %v340
      %v342 = vld [vmem:[%s279 + $0x2c] sm:$0x1]
      %v343 = vsel %vm332, 0, %v342
      %344 = vst [vmem:[%s279 + $0x2c] sm:$0x1] %v343
      %v345 = vld [vmem:[%s279 + $0x38] sm:$0x1]
      %v346 = vsel %vm332, 0, %v345
      %347 = vst [vmem:[%s279 + $0x38] sm:$0x1] %v346
      %v348 = vld [vmem:[%s279 + $0x44] sm:$0x1]
      %v349 = vsel %vm332, 0, %v348
      %350 = vst [vmem:[%s279 + $0x44] sm:$0x1] %v349
      %v351 = vld [vmem:[%s279 + $0x50] sm:$0x1]
      %v352 = vsel %vm332, 0, %v351
      %353 = vst [vmem:[%s279 + $0x50] sm:$0x1] %v352
      %v354 = vld [vmem:[%s279 + $0x5c] sm:$0x1]
      %v355 = vsel %vm332, 0, %v354
      %356 = vst [vmem:[%s279 + $0x5c] sm:$0x1] %v355
      %v357 = vld [vmem:[%s279 + $0x68] sm:$0x1]
      %v358 = vsel %vm332, 0, %v357
      %359 = vst [vmem:[%s279 + $0x68] sm:$0x1] %v358
      %v360 = vld [vmem:[%s279 + $0x74] sm:$0x1]
      %v361 = vsel %vm332, 0, %v360
      %362 = vst [vmem:[%s279 + $0x74] sm:$0x1] %v361
      %v363 = vld [vmem:[%s279 + $0x80] sm:$0x1]
      %v364 = vsel %vm332, 0, %v363
      %365 = vst [vmem:[%s279 + $0x80] sm:$0x1] %v364
      %v366 = vld [vmem:[%s279 + $0x8c] sm:$0x1]
      %v367 = vsel %vm332, 0, %v366
      %368 = vst [vmem:[%s279 + $0x8c] sm:$0x1] %v367
      %v369 = vld [vmem:[%s279 + $0x98] sm:$0x1]
      %v370 = vsel %vm332, 0, %v369
      %371 = vst [vmem:[%s279 + $0x98] sm:$0x1] %v370
      %v372 = vld [vmem:[%s279 + $0xa4] sm:$0x1]
      %v373 = vsel %vm332, 0, %v372
      %374 = vst [vmem:[%s279 + $0xa4] sm:$0x1] %v373
      %v375 = vld [vmem:[%s279 + $0xb0] sm:$0x1]
      %v376 = vsel %vm332, 0, %v375
      %377 = vst [vmem:[%s279 + $0xb0] sm:$0x1] %v376
      %v378 = vld [vmem:[%s279 + $0xbc] sm:$0x1]
      %v379 = vsel %vm332, 0, %v378
      %380 = vst [vmem:[%s279 + $0xbc] sm:$0x1] %v379
      %v381 = vld [vmem:[%s257] sm:$0xf]
      %v382 = vld [vmem:[%s257 + $0x4] sm:$0xf]
      %v383 = vld [vmem:[%s257 + $0x8] sm:$0xf]
      %v384 = vld [vmem:[%s257 + $0xc] sm:$0xf]
      %v385 = vld [vmem:[%s257 + $0x10] sm:$0xf]
      %v386 = vld [vmem:[%s257 + $0x14] sm:$0xf]
      %v387 = vld [vmem:[%s257 + $0x18] sm:$0xf]
      %v388 = vld [vmem:[%s257 + $0x1c] sm:$0xf]
      %v389 = vld [vmem:[%s257 + $0x20] sm:$0xf]
      %v390 = vld [vmem:[%s257 + $0x24] sm:$0xf]
      %v391 = vld [vmem:[%s257 + $0x28] sm:$0xf]
      %v392 = vld [vmem:[%s257 + $0x2c] sm:$0xf]
      %v393 = vld [vmem:[%s257 + $0x30] sm:$0xf]
      %v394 = vld [vmem:[%s257 + $0x34] sm:$0xf]
      %v395 = vld [vmem:[%s257 + $0x38] sm:$0xf]
      %v396 = vld [vmem:[%s257 + $0x3c] sm:$0xf]
      %v397 = vld [vmem:[%s257 + $0x40] sm:$0xf]
      %v398 = vld [vmem:[%s257 + $0x44] sm:$0xf]
      %v399 = vld [vmem:[%s257 + $0x48] sm:$0xf]
      %v400 = vld [vmem:[%s257 + $0x4c] sm:$0xf]
      %v401 = vld [vmem:[%s257 + $0x50] sm:$0xf]
      %v402 = vld [vmem:[%s257 + $0x54] sm:$0xf]
      %v403 = vld [vmem:[%s257 + $0x58] sm:$0xf]
      %v404 = vld [vmem:[%s257 + $0x5c] sm:$0xf]
      %v405 = vld [vmem:[%s257 + $0x60] sm:$0xf]
      %v406 = vld [vmem:[%s257 + $0x64] sm:$0xf]
      %v407 = vld [vmem:[%s257 + $0x68] sm:$0xf]
      %v408 = vld [vmem:[%s257 + $0x6c] sm:$0xf]
      %v409 = vld [vmem:[%s257 + $0x70] sm:$0xf]
      %v410 = vld [vmem:[%s257 + $0x74] sm:$0xf]
      %v411 = vld [vmem:[%s257 + $0x78] sm:$0xf]
      %v412 = vld [vmem:[%s257 + $0x7c] sm:$0xf]
      %vm413 = vsmask.f32 4368
      %vm414 = vmor %vm281, %vm413
      %v416 = vshrl.u32 %v381, 16
      %v418 = vrot.slane %v416, 7
      %v419 = vshll.u32 %v381, 16
      %v421 = vor.u32 %v418, %v419
      %v422 = vrot.slane %v418, 4
      %v424 = vshrl.u32 %v382, 16
      %v426 = vrot.slane %v424, 7
      %v427 = vshll.u32 %v382, 16
      %v429 = vor.u32 %v426, %v427
      %v430 = vsel %vm414, %v422, %v429
      %v431 = vrot.slane %v426, 4
      %v433 = vshrl.u32 %v383, 16
      %v435 = vrot.slane %v433, 7
      %v436 = vshll.u32 %v383, 16
      %v438 = vor.u32 %v435, %v436
      %v439 = vrot.slane %v435, 4
      %v441 = vshrl.u32 %v384, 16
      %v443 = vrot.slane %v441, 7
      %v444 = vshll.u32 %v384, 16
      %v446 = vor.u32 %v443, %v444
      %v447 = vsel %vm414, %v439, %v446
      %v448 = vrot.slane %v443, 4
      %v450 = vshrl.u32 %v385, 16
      %v452 = vrot.slane %v450, 7
      %v453 = vshll.u32 %v385, 16
      %v455 = vor.u32 %v452, %v453
      %v456 = vrot.slane %v452, 4
      %v458 = vshrl.u32 %v386, 16
      %v460 = vrot.slane %v458, 7
      %v461 = vshll.u32 %v386, 16
      %v463 = vor.u32 %v460, %v461
      %v464 = vsel %vm414, %v456, %v463
      %v465 = vrot.slane %v460, 4
      %v467 = vshrl.u32 %v387, 16
      %v469 = vrot.slane %v467, 7
      %v470 = vshll.u32 %v387, 16
      %v472 = vor.u32 %v469, %v470
      %v473 = vrot.slane %v469, 4
      %v475 = vshrl.u32 %v388, 16
      %v477 = vrot.slane %v475, 7
      %v478 = vshll.u32 %v388, 16
      %v480 = vor.u32 %v477, %v478
      %v481 = vsel %vm414, %v473, %v480
      %v482 = vrot.slane %v477, 4
      %v484 = vshrl.u32 %v389, 16
      %v486 = vrot.slane %v484, 7
      %v487 = vshll.u32 %v389, 16
      %v489 = vor.u32 %v486, %v487
      %v490 = vrot.slane %v486, 4
      %v492 = vshrl.u32 %v390, 16
      %v494 = vrot.slane %v492, 7
      %v495 = vshll.u32 %v390, 16
      %v497 = vor.u32 %v494, %v495
      %v498 = vsel %vm414, %v490, %v497
      %v499 = vrot.slane %v494, 4
      %v501 = vshrl.u32 %v391, 16
      %v503 = vrot.slane %v501, 7
      %v504 = vshll.u32 %v391, 16
      %v506 = vor.u32 %v503, %v504
      %v507 = vrot.slane %v503, 4
      %v509 = vshrl.u32 %v392, 16
      %v511 = vrot.slane %v509, 7
      %v512 = vshll.u32 %v392, 16
      %v514 = vor.u32 %v511, %v512
      %v515 = vsel %vm414, %v507, %v514
      %v516 = vrot.slane %v511, 4
      %v518 = vshrl.u32 %v393, 16
      %v520 = vrot.slane %v518, 7
      %v521 = vshll.u32 %v393, 16
      %v523 = vor.u32 %v520, %v521
      %v524 = vrot.slane %v520, 4
      %v526 = vshrl.u32 %v394, 16
      %v528 = vrot.slane %v526, 7
      %v529 = vshll.u32 %v394, 16
      %v531 = vor.u32 %v528, %v529
      %v532 = vsel %vm414, %v524, %v531
      %v533 = vrot.slane %v528, 4
      %v535 = vshrl.u32 %v395, 16
      %v537 = vrot.slane %v535, 7
      %v538 = vshll.u32 %v395, 16
      %v540 = vor.u32 %v537, %v538
      %v541 = vrot.slane %v537, 4
      %v543 = vshrl.u32 %v396, 16
      %v545 = vrot.slane %v543, 7
      %v546 = vshll.u32 %v396, 16
      %v548 = vor.u32 %v545, %v546
      %v549 = vsel %vm414, %v541, %v548
      %v550 = vrot.slane %v545, 4
      %v552 = vshrl.u32 %v397, 16
      %v554 = vrot.slane %v552, 7
      %v555 = vshll.u32 %v397, 16
      %v557 = vor.u32 %v554, %v555
      %v558 = vrot.slane %v554, 4
      %v560 = vshrl.u32 %v398, 16
      %v562 = vrot.slane %v560, 7
      %v563 = vshll.u32 %v398, 16
      %v565 = vor.u32 %v562, %v563
      %v566 = vsel %vm414, %v558, %v565
      %v567 = vrot.slane %v562, 4
      %v569 = vshrl.u32 %v399, 16
      %v571 = vrot.slane %v569, 7
      %v572 = vshll.u32 %v399, 16
      %v574 = vor.u32 %v571, %v572
      %v575 = vrot.slane %v571, 4
      %v577 = vshrl.u32 %v400, 16
      %v579 = vrot.slane %v577, 7
      %v580 = vshll.u32 %v400, 16
      %v582 = vor.u32 %v579, %v580
      %v583 = vsel %vm414, %v575, %v582
      %v584 = vrot.slane %v579, 4
      %v586 = vshrl.u32 %v401, 16
      %v588 = vrot.slane %v586, 7
      %v589 = vshll.u32 %v401, 16
      %v591 = vor.u32 %v588, %v589
      %v592 = vrot.slane %v588, 4
      %v594 = vshrl.u32 %v402, 16
      %v596 = vrot.slane %v594, 7
      %v597 = vshll.u32 %v402, 16
      %v599 = vor.u32 %v596, %v597
      %v600 = vsel %vm414, %v592, %v599
      %v601 = vrot.slane %v596, 4
      %v603 = vshrl.u32 %v403, 16
      %v605 = vrot.slane %v603, 7
      %v606 = vshll.u32 %v403, 16
      %v608 = vor.u32 %v605, %v606
      %v609 = vrot.slane %v605, 4
      %v611 = vshrl.u32 %v404, 16
      %v613 = vrot.slane %v611, 7
      %v614 = vshll.u32 %v404, 16
      %v616 = vor.u32 %v613, %v614
      %v617 = vsel %vm414, %v609, %v616
      %v618 = vrot.slane %v613, 4
      %v620 = vshrl.u32 %v405, 16
      %v622 = vrot.slane %v620, 7
      %v623 = vshll.u32 %v405, 16
      %v625 = vor.u32 %v622, %v623
      %v626 = vrot.slane %v622, 4
      %v628 = vshrl.u32 %v406, 16
      %v630 = vrot.slane %v628, 7
      %v631 = vshll.u32 %v406, 16
      %v633 = vor.u32 %v630, %v631
      %v634 = vsel %vm414, %v626, %v633
      %v635 = vrot.slane %v630, 4
      %v637 = vshrl.u32 %v407, 16
      %v639 = vrot.slane %v637, 7
      %v640 = vshll.u32 %v407, 16
      %v642 = vor.u32 %v639, %v640
      %v643 = vrot.slane %v639, 4
      %v645 = vshrl.u32 %v408, 16
      %v647 = vrot.slane %v645, 7
      %v648 = vshll.u32 %v408, 16
      %v650 = vor.u32 %v647, %v648
      %v651 = vsel %vm414, %v643, %v650
      %v652 = vrot.slane %v647, 4
      %v654 = vshrl.u32 %v409, 16
      %v656 = vrot.slane %v654, 7
      %v657 = vshll.u32 %v409, 16
      %v659 = vor.u32 %v656, %v657
      %v660 = vrot.slane %v656, 4
      %v662 = vshrl.u32 %v410, 16
      %v664 = vrot.slane %v662, 7
      %v665 = vshll.u32 %v410, 16
      %v667 = vor.u32 %v664, %v665
      %v668 = vsel %vm414, %v660, %v667
      %v669 = vrot.slane %v664, 4
      %v671 = vshrl.u32 %v411, 16
      %v673 = vrot.slane %v671, 7
      %v674 = vshll.u32 %v411, 16
      %v676 = vor.u32 %v673, %v674
      %v677 = vrot.slane %v673, 4
      %v679 = vshrl.u32 %v412, 16
      %v681 = vrot.slane %v679, 7
      %v682 = vshll.u32 %v412, 16
      %v684 = vor.u32 %v681, %v682
      %v685 = vsel %vm414, %v677, %v684
      %v686 = vrot.slane %v681, 4
      %vm735 = vcmask 27648
      %vm736 = vmand %vm735, %vm331
      %v737 = vld [vmem:[%s279] sm:$0xf]
      %v738 = vsel %vm736, %v421, %v737
      %739 = vst [vmem:[%s279] sm:$0xf] %v738
      %740 = vst.msk [vmem:[%s279 + $0x4] sm:$0xf] %vm270, %v430
      %v741 = vld [vmem:[%s279 + $0x8] sm:$0x1]
      %v742 = vsel %vm282, %v431, %v741
      %743 = vst [vmem:[%s279 + $0x8] sm:$0x1] %v742
      %v744 = vld [vmem:[%s279 + $0xc] sm:$0xf]
      %v745 = vsel %vm736, %v438, %v744
      %746 = vst [vmem:[%s279 + $0xc] sm:$0xf] %v745
      %747 = vst.msk [vmem:[%s279 + $0x10] sm:$0xf] %vm270, %v447
      %v748 = vld [vmem:[%s279 + $0x14] sm:$0x1]
      %v749 = vsel %vm282, %v448, %v748
      %750 = vst [vmem:[%s279 + $0x14] sm:$0x1] %v749
      %v751 = vld [vmem:[%s279 + $0x18] sm:$0xf]
      %v752 = vsel %vm736, %v455, %v751
      %753 = vst [vmem:[%s279 + $0x18] sm:$0xf] %v752
      %754 = vst.msk [vmem:[%s279 + $0x1c] sm:$0xf] %vm270, %v464
      %v755 = vld [vmem:[%s279 + $0x20] sm:$0x1]
      %v756 = vsel %vm282, %v465, %v755
      %757 = vst [vmem:[%s279 + $0x20] sm:$0x1] %v756
      %v758 = vld [vmem:[%s279 + $0x24] sm:$0xf]
      %v759 = vsel %vm736, %v472, %v758
      %760 = vst [vmem:[%s279 + $0x24] sm:$0xf] %v759
      %761 = vst.msk [vmem:[%s279 + $0x28] sm:$0xf] %vm270, %v481
      %v762 = vld [vmem:[%s279 + $0x2c] sm:$0x1]
      %v763 = vsel %vm282, %v482, %v762
      %764 = vst [vmem:[%s279 + $0x2c] sm:$0x1] %v763
      %v765 = vld [vmem:[%s279 + $0x30] sm:$0xf]
      %v766 = vsel %vm736, %v489, %v765
      %767 = vst [vmem:[%s279 + $0x30] sm:$0xf] %v766
      %768 = vst.msk [vmem:[%s279 + $0x34] sm:$0xf] %vm270, %v498
      %v769 = vld [vmem:[%s279 + $0x38] sm:$0x1]
      %v770 = vsel %vm282, %v499, %v769
      %771 = vst [vmem:[%s279 + $0x38] sm:$0x1] %v770
      %v772 = vld [vmem:[%s279 + $0x3c] sm:$0xf]
      %v773 = vsel %vm736, %v506, %v772
      %774 = vst [vmem:[%s279 + $0x3c] sm:$0xf] %v773
      %775 = vst.msk [vmem:[%s279 + $0x40] sm:$0xf] %vm270, %v515
      %v776 = vld [vmem:[%s279 + $0x44] sm:$0x1]
      %v777 = vsel %vm282, %v516, %v776
      %778 = vst [vmem:[%s279 + $0x44] sm:$0x1] %v777
      %v779 = vld [vmem:[%s279 + $0x48] sm:$0xf]
      %v780 = vsel %vm736, %v523, %v779
      %781 = vst [vmem:[%s279 + $0x48] sm:$0xf] %v780
      %782 = vst.msk [vmem:[%s279 + $0x4c] sm:$0xf] %vm270, %v532
      %v783 = vld [vmem:[%s279 + $0x50] sm:$0x1]
      %v784 = vsel %vm282, %v533, %v783
      %785 = vst [vmem:[%s279 + $0x50] sm:$0x1] %v784
      %v786 = vld [vmem:[%s279 + $0x54] sm:$0xf]
      %v787 = vsel %vm736, %v540, %v786
      %788 = vst [vmem:[%s279 + $0x54] sm:$0xf] %v787
      %789 = vst.msk [vmem:[%s279 + $0x58] sm:$0xf] %vm270, %v549
      %v790 = vld [vmem:[%s279 + $0x5c] sm:$0x1]
      %v791 = vsel %vm282, %v550, %v790
      %792 = vst [vmem:[%s279 + $0x5c] sm:$0x1] %v791
      %v793 = vld [vmem:[%s279 + $0x60] sm:$0xf]
      %v794 = vsel %vm736, %v557, %v793
      %795 = vst [vmem:[%s279 + $0x60] sm:$0xf] %v794
      %796 = vst.msk [vmem:[%s279 + $0x64] sm:$0xf] %vm270, %v566
      %v797 = vld [vmem:[%s279 + $0x68] sm:$0x1]
      %v798 = vsel %vm282, %v567, %v797
      %799 = vst [vmem:[%s279 + $0x68] sm:$0x1] %v798
      %v800 = vld [vmem:[%s279 + $0x6c] sm:$0xf]
      %v801 = vsel %vm736, %v574, %v800
      %802 = vst [vmem:[%s279 + $0x6c] sm:$0xf] %v801
      %803 = vst.msk [vmem:[%s279 + $0x70] sm:$0xf] %vm270, %v583
      %v804 = vld [vmem:[%s279 + $0x74] sm:$0x1]
      %v805 = vsel %vm282, %v584, %v804
      %806 = vst [vmem:[%s279 + $0x74] sm:$0x1] %v805
      %v807 = vld [vmem:[%s279 + $0x78] sm:$0xf]
      %v808 = vsel %vm736, %v591, %v807
      %809 = vst [vmem:[%s279 + $0x78] sm:$0xf] %v808
      %810 = vst.msk [vmem:[%s279 + $0x7c] sm:$0xf] %vm270, %v600
      %v811 = vld [vmem:[%s279 + $0x80] sm:$0x1]
      %v812 = vsel %vm282, %v601, %v811
      %813 = vst [vmem:[%s279 + $0x80] sm:$0x1] %v812
      %v814 = vld [vmem:[%s279 + $0x84] sm:$0xf]
      %v815 = vsel %vm736, %v608, %v814
      %816 = vst [vmem:[%s279 + $0x84] sm:$0xf] %v815
      %817 = vst.msk [vmem:[%s279 + $0x88] sm:$0xf] %vm270, %v617
      %v818 = vld [vmem:[%s279 + $0x8c] sm:$0x1]
      %v819 = vsel %vm282, %v618, %v818
      %820 = vst [vmem:[%s279 + $0x8c] sm:$0x1] %v819
      %v821 = vld [vmem:[%s279 + $0x90] sm:$0xf]
      %v822 = vsel %vm736, %v625, %v821
      %823 = vst [vmem:[%s279 + $0x90] sm:$0xf] %v822
      %824 = vst.msk [vmem:[%s279 + $0x94] sm:$0xf] %vm270, %v634
      %v825 = vld [vmem:[%s279 + $0x98] sm:$0x1]
      %v826 = vsel %vm282, %v635, %v825
      %827 = vst [vmem:[%s279 + $0x98] sm:$0x1] %v826
      %v828 = vld [vmem:[%s279 + $0x9c] sm:$0xf]
      %v829 = vsel %vm736, %v642, %v828
      %830 = vst [vmem:[%s279 + $0x9c] sm:$0xf] %v829
      %831 = vst.msk [vmem:[%s279 + $0xa0] sm:$0xf] %vm270, %v651
      %v832 = vld [vmem:[%s279 + $0xa4] sm:$0x1]
      %v833 = vsel %vm282, %v652, %v832
      %834 = vst [vmem:[%s279 + $0xa4] sm:$0x1] %v833
      %v835 = vld [vmem:[%s279 + $0xa8] sm:$0xf]
      %v836 = vsel %vm736, %v659, %v835
      %837 = vst [vmem:[%s279 + $0xa8] sm:$0xf] %v836
      %838 = vst.msk [vmem:[%s279 + $0xac] sm:$0xf] %vm270, %v668
      %v839 = vld [vmem:[%s279 + $0xb0] sm:$0x1]
      %v840 = vsel %vm282, %v669, %v839
      %841 = vst [vmem:[%s279 + $0xb0] sm:$0x1] %v840
      %v842 = vld [vmem:[%s279 + $0xb4] sm:$0xf]
      %v843 = vsel %vm736, %v676, %v842
      %844 = vst [vmem:[%s279 + $0xb4] sm:$0xf] %v843
      %845 = vst.msk [vmem:[%s279 + $0xb8] sm:$0xf] %vm270, %v685
      %v846 = vld [vmem:[%s279 + $0xbc] sm:$0x1]
      %v847 = vsel %vm282, %v686, %v846
      %848 = vst [vmem:[%s279 + $0xbc] sm:$0x1] %v847
      %v849 = vld [vmem:[#allocation2] sm:$0xf]
      %v850 = vld [vmem:[#allocation2 + $0x4] sm:$0xf]
      %v851 = vld [vmem:[#allocation2 + $0xc] sm:$0xf]
      %v852 = vld [vmem:[#allocation2 + $0x10] sm:$0xf]
      %v853 = vld [vmem:[#allocation2 + $0x18] sm:$0xf]
      %v854 = vld [vmem:[#allocation2 + $0x1c] sm:$0xf]
      %v855 = vld [vmem:[#allocation2 + $0x24] sm:$0xf]
      %v856 = vld [vmem:[#allocation2 + $0x28] sm:$0xf]
      %v857 = vld [vmem:[#allocation2 + $0x30] sm:$0xf]
      %v858 = vld [vmem:[#allocation2 + $0x34] sm:$0xf]
      %v859 = vld [vmem:[#allocation2 + $0x3c] sm:$0xf]
      %v860 = vld [vmem:[#allocation2 + $0x40] sm:$0xf]
      %v861 = vld [vmem:[#allocation2 + $0x48] sm:$0xf]
      %v862 = vld [vmem:[#allocation2 + $0x4c] sm:$0xf]
      %v863 = vld [vmem:[#allocation2 + $0x54] sm:$0xf]
      %v864 = vld [vmem:[#allocation2 + $0x58] sm:$0xf]
      %v865 = vld [vmem:[#allocation2 + $0x60] sm:$0xf]
      %v866 = vld [vmem:[#allocation2 + $0x64] sm:$0xf]
      %v867 = vld [vmem:[#allocation2 + $0x6c] sm:$0xf]
      %v868 = vld [vmem:[#allocation2 + $0x70] sm:$0xf]
      %v869 = vld [vmem:[#allocation2 + $0x78] sm:$0xf]
      %v870 = vld [vmem:[#allocation2 + $0x7c] sm:$0xf]
      %v871 = vld [vmem:[#allocation2 + $0x84] sm:$0xf]
      %v872 = vld [vmem:[#allocation2 + $0x88] sm:$0xf]
      %v873 = vld [vmem:[#allocation2 + $0x90] sm:$0xf]
      %v874 = vld [vmem:[#allocation2 + $0x94] sm:$0xf]
      %v875 = vld [vmem:[#allocation2 + $0x9c] sm:$0xf]
      %v876 = vld [vmem:[#allocation2 + $0xa0] sm:$0xf]
      %v877 = vld [vmem:[#allocation2 + $0xa8] sm:$0xf]
      %v878 = vld [vmem:[#allocation2 + $0xac] sm:$0xf]
      %v879 = vld [vmem:[#allocation2 + $0xb4] sm:$0xf]
      %v880 = vld [vmem:[#allocation2 + $0xb8] sm:$0xf]
      %v913 = vunpack.c.l.b16 %v849
      %v914 = vunpack.c.l.b16 %v850
      %v915 = vunpack.c.l.b16 %v851
      %v916 = vunpack.c.l.b16 %v852
      %v917 = vunpack.c.l.b16 %v853
      %v918 = vunpack.c.l.b16 %v854
      %v919 = vunpack.c.l.b16 %v855
      %v920 = vunpack.c.l.b16 %v856
      %v921 = vunpack.c.l.b16 %v857
      %v922 = vunpack.c.l.b16 %v858
      %v923 = vunpack.c.l.b16 %v859
      %v924 = vunpack.c.l.b16 %v860
      %v925 = vunpack.c.l.b16 %v861
      %v926 = vunpack.c.l.b16 %v862
      %v927 = vunpack.c.l.b16 %v863
      %v928 = vunpack.c.l.b16 %v864
      %v929 = vunpack.c.l.b16 %v865
      %v930 = vunpack.c.l.b16 %v866
      %v931 = vunpack.c.l.b16 %v867
      %v932 = vunpack.c.l.b16 %v868
      %v933 = vunpack.c.l.b16 %v869
      %v934 = vunpack.c.l.b16 %v870
      %v935 = vunpack.c.l.b16 %v871
      %v936 = vunpack.c.l.b16 %v872
      %v937 = vunpack.c.l.b16 %v873
      %v938 = vunpack.c.l.b16 %v874
      %v939 = vunpack.c.l.b16 %v875
      %v940 = vunpack.c.l.b16 %v876
      %v941 = vunpack.c.l.b16 %v877
      %v942 = vunpack.c.l.b16 %v878
      %v943 = vunpack.c.l.b16 %v879
      %v944 = vunpack.c.l.b16 %v880
      %v945 = vpack.c.b16 %v914, %v913
      %v946 = vpack.c.b16 %v916, %v915
      %v947 = vpack.c.b16 %v918, %v917
      %v948 = vpack.c.b16 %v920, %v919
      %v949 = vpack.c.b16 %v922, %v921
      %v950 = vpack.c.b16 %v924, %v923
      %v951 = vpack.c.b16 %v926, %v925
      %v952 = vpack.c.b16 %v928, %v927
      %v953 = vpack.c.b16 %v930, %v929
      %v954 = vpack.c.b16 %v932, %v931
      %v955 = vpack.c.b16 %v934, %v933
      %v956 = vpack.c.b16 %v936, %v935
      %v957 = vpack.c.b16 %v938, %v937
      %v958 = vpack.c.b16 %v940, %v939
      %v959 = vpack.c.b16 %v942, %v941
      %v960 = vpack.c.b16 %v944, %v943
      %vm977 = vcmask 31744
      %978 = vst.msk [vmem:[#allocation3] sm:$0xff] %vm977, %v945
      %979 = vst.msk [vmem:[#allocation3 + $0x8] sm:$0xff] %vm977, %v946
      %980 = vst.msk [vmem:[#allocation3 + $0x10] sm:$0xff] %vm977, %v947
      %981 = vst.msk [vmem:[#allocation3 + $0x18] sm:$0xff] %vm977, %v948
      %982 = vst.msk [vmem:[#allocation3 + $0x20] sm:$0xff] %vm977, %v949
      %983 = vst.msk [vmem:[#allocation3 + $0x28] sm:$0xff] %vm977, %v950
      %984 = vst.msk [vmem:[#allocation3 + $0x30] sm:$0xff] %vm977, %v951
      %985 = vst.msk [vmem:[#allocation3 + $0x38] sm:$0xff] %vm977, %v952
      %986 = vst.msk [vmem:[#allocation3 + $0x40] sm:$0xff] %vm977, %v953
      %987 = vst.msk [vmem:[#allocation3 + $0x48] sm:$0xff] %vm977, %v954
      %988 = vst.msk [vmem:[#allocation3 + $0x50] sm:$0xff] %vm977, %v955
      %989 = vst.msk [vmem:[#allocation3 + $0x58] sm:$0xff] %vm977, %v956
      %990 = vst.msk [vmem:[#allocation3 + $0x60] sm:$0xff] %vm977, %v957
      %991 = vst.msk [vmem:[#allocation3 + $0x68] sm:$0xff] %vm977, %v958
      %992 = vst.msk [vmem:[#allocation3 + $0x70] sm:$0xff] %vm977, %v959
      %993 = vst.msk [vmem:[#allocation3 + $0x78] sm:$0xff] %vm977, %v960
      %v994 = vld [vmem:[#allocation2] sm:$0xf]
      %v995 = vld [vmem:[#allocation2 + $0x4] sm:$0xf]
      %v996 = vld [vmem:[#allocation2 + $0x8] sm:$0x1]
      %v997 = vld [vmem:[#allocation2 + $0xc] sm:$0xf]
      %v998 = vld [vmem:[#allocation2 + $0x10] sm:$0xf]
      %v999 = vld [vmem:[#allocation2 + $0x14] sm:$0x1]
      %v1000 = vld [vmem:[#allocation2 + $0x18] sm:$0xf]
      %v1001 = vld [vmem:[#allocation2 + $0x1c] sm:$0xf]
      %v1002 = vld [vmem:[#allocation2 + $0x20] sm:$0x1]
      %v1003 = vld [vmem:[#allocation2 + $0x24] sm:$0xf]
      %v1004 = vld [vmem:[#allocation2 + $0x28] sm:$0xf]
      %v1005 = vld [vmem:[#allocation2 + $0x2c] sm:$0x1]
      %v1006 = vld [vmem:[#allocation2 + $0x30] sm:$0xf]
      %v1007 = vld [vmem:[#allocation2 + $0x34] sm:$0xf]
      %v1008 = vld [vmem:[#allocation2 + $0x38] sm:$0x1]
      %v1009 = vld [vmem:[#allocation2 + $0x3c] sm:$0xf]
      %v1010 = vld [vmem:[#allocation2 + $0x40] sm:$0xf]
      %v1011 = vld [vmem:[#allocation2 + $0x44] sm:$0x1]
      %v1012 = vld [vmem:[#allocation2 + $0x48] sm:$0xf]
      %v1013 = vld [vmem:[#allocation2 + $0x4c] sm:$0xf]
      %v1014 = vld [vmem:[#allocation2 + $0x50] sm:$0x1]
      %v1015 = vld [vmem:[#allocation2 + $0x54] sm:$0xf]
      %v1016 = vld [vmem:[#allocation2 + $0x58] sm:$0xf]
      %v1017 = vld [vmem:[#allocation2 + $0x5c] sm:$0x1]
      %v1018 = vld [vmem:[#allocation2 + $0x60] sm:$0xf]
      %v1019 = vld [vmem:[#allocation2 + $0x64] sm:$0xf]
      %v1020 = vld [vmem:[#allocation2 + $0x68] sm:$0x1]
      %v1021 = vld [vmem:[#allocation2 + $0x6c] sm:$0xf]
      %v1022 = vld [vmem:[#allocation2 + $0x70] sm:$0xf]
      %v1023 = vld [vmem:[#allocation2 + $0x74] sm:$0x1]
      %v1024 = vld [vmem:[#allocation2 + $0x78] sm:$0xf]
      %v1025 = vld [vmem:[#allocation2 + $0x7c] sm:$0xf]
      %v1026 = vld [vmem:[#allocation2 + $0x80] sm:$0x1]
      %v1027 = vld [vmem:[#allocation2 + $0x84] sm:$0xf]
      %v1028 = vld [vmem:[#allocation2 + $0x88] sm:$0xf]
      %v1029 = vld [vmem:[#allocation2 + $0x8c] sm:$0x1]
      %v1030 = vld [vmem:[#allocation2 + $0x90] sm:$0xf]
      %v1031 = vld [vmem:[#allocation2 + $0x94] sm:$0xf]
      %v1032 = vld [vmem:[#allocation2 + $0x98] sm:$0x1]
      %v1033 = vld [vmem:[#allocation2 + $0x9c] sm:$0xf]
      %v1034 = vld [vmem:[#allocation2 + $0xa0] sm:$0xf]
      %v1035 = vld [vmem:[#allocation2 + $0xa4] sm:$0x1]
      %v1036 = vld [vmem:[#allocation2 + $0xa8] sm:$0xf]
      %v1037 = vld [vmem:[#allocation2 + $0xac] sm:$0xf]
      %v1038 = vld [vmem:[#allocation2 + $0xb0] sm:$0x1]
      %v1039 = vld [vmem:[#allocation2 + $0xb4] sm:$0xf]
      %v1040 = vld [vmem:[#allocation2 + $0xb8] sm:$0xf]
      %v1041 = vld [vmem:[#allocation2 + $0xbc] sm:$0x1]
      %vm1042 = vsmask.f32 3328
      %vm1043 = vsmask.f32 7440
      %vm1044 = vmor %vm1042, %vm1043
      %v1046 = vshrl.u32 %v994, 16
      %v1048 = vrot.slane %v1046, 4
      %v1049 = vshll.u32 %v994, 16
      %v1051 = vrot.slane %v1049, 5
      %v1052 = vor.u32 %v1048, %v1051
      %v1053 = vrot.slane %v1052, 4
      %v1055 = vshll.u32 %v995, 16
      %v1057 = vrot.slane %v1055, 5
      %v1058 = vsel %vm1044, %v1053, %v1057
      %v1059 = vshrl.u32 %v995, 16
      %v1061 = vrot.slane %v1059, 4
      %v1062 = vor.u32 %v1061, %v1057
      %v1063 = vrot.slane %v1062, 4
      %v1065 = vshll.u32 %v996, 16
      %v1067 = vrot.slane %v1065, 5
      %v1068 = vsel %vm1044, %v1063, %v1067
      %v1070 = vshrl.u32 %v997, 16
      %v1072 = vrot.slane %v1070, 4
      %v1073 = vshll.u32 %v997, 16
      %v1075 = vrot.slane %v1073, 5
      %v1076 = vor.u32 %v1072, %v1075
      %v1077 = vrot.slane %v1076, 4
      %v1079 = vshll.u32 %v998, 16
      %v1081 = vrot.slane %v1079, 5
      %v1082 = vsel %vm1044, %v1077, %v1081
      %v1083 = vshrl.u32 %v998, 16
      %v1085 = vrot.slane %v1083, 4
      %v1086 = vor.u32 %v1085, %v1081
      %v1087 = vrot.slane %v1086, 4
      %v1089 = vshll.u32 %v999, 16
      %v1091 = vrot.slane %v1089, 5
      %v1092 = vsel %vm1044, %v1087, %v1091
      %v1094 = vshrl.u32 %v1000, 16
      %v1096 = vrot.slane %v1094, 4
      %v1097 = vshll.u32 %v1000, 16
      %v1099 = vrot.slane %v1097, 5
      %v1100 = vor.u32 %v1096, %v1099
      %v1101 = vrot.slane %v1100, 4
      %v1103 = vshll.u32 %v1001, 16
      %v1105 = vrot.slane %v1103, 5
      %v1106 = vsel %vm1044, %v1101, %v1105
      %v1107 = vshrl.u32 %v1001, 16
      %v1109 = vrot.slane %v1107, 4
      %v1110 = vor.u32 %v1109, %v1105
      %v1111 = vrot.slane %v1110, 4
      %v1113 = vshll.u32 %v1002, 16
      %v1115 = vrot.slane %v1113, 5
      %v1116 = vsel %vm1044, %v1111, %v1115
      %v1118 = vshrl.u32 %v1003, 16
      %v1120 = vrot.slane %v1118, 4
      %v1121 = vshll.u32 %v1003, 16
      %v1123 = vrot.slane %v1121, 5
      %v1124 = vor.u32 %v1120, %v1123
      %v1125 = vrot.slane %v1124, 4
      %v1127 = vshll.u32 %v1004, 16
      %v1129 = vrot.slane %v1127, 5
      %v1130 = vsel %vm1044, %v1125, %v1129
      %v1131 = vshrl.u32 %v1004, 16
      %v1133 = vrot.slane %v1131, 4
      %v1134 = vor.u32 %v1133, %v1129
      %v1135 = vrot.slane %v1134, 4
      %v1137 = vshll.u32 %v1005, 16
      %v1139 = vrot.slane %v1137, 5
      %v1140 = vsel %vm1044, %v1135, %v1139
      %v1142 = vshrl.u32 %v1006, 16
      %v1144 = vrot.slane %v1142, 4
      %v1145 = vshll.u32 %v1006, 16
      %v1147 = vrot.slane %v1145, 5
      %v1148 = vor.u32 %v1144, %v1147
      %v1149 = vrot.slane %v1148, 4
      %v1151 = vshll.u32 %v1007, 16
      %v1153 = vrot.slane %v1151, 5
      %v1154 = vsel %vm1044, %v1149, %v1153
      %v1155 = vshrl.u32 %v1007, 16
      %v1157 = vrot.slane %v1155, 4
      %v1158 = vor.u32 %v1157, %v1153
      %v1159 = vrot.slane %v1158, 4
      %v1161 = vshll.u32 %v1008, 16
      %v1163 = vrot.slane %v1161, 5
      %v1164 = vsel %vm1044, %v1159, %v1163
      %v1166 = vshrl.u32 %v1009, 16
      %v1168 = vrot.slane %v1166, 4
      %v1169 = vshll.u32 %v1009, 16
      %v1171 = vrot.slane %v1169, 5
      %v1172 = vor.u32 %v1168, %v1171
      %v1173 = vrot.slane %v1172, 4
      %v1175 = vshll.u32 %v1010, 16
      %v1177 = vrot.slane %v1175, 5
      %v1178 = vsel %vm1044, %v1173, %v1177
      %v1179 = vshrl.u32 %v1010, 16
      %v1181 = vrot.slane %v1179, 4
      %v1182 = vor.u32 %v1181, %v1177
      %v1183 = vrot.slane %v1182, 4
      %v1185 = vshll.u32 %v1011, 16
      %v1187 = vrot.slane %v1185, 5
      %v1188 = vsel %vm1044, %v1183, %v1187
      %v1190 = vshrl.u32 %v1012, 16
      %v1192 = vrot.slane %v1190, 4
      %v1193 = vshll.u32 %v1012, 16
      %v1195 = vrot.slane %v1193, 5
      %v1196 = vor.u32 %v1192, %v1195
      %v1197 = vrot.slane %v1196, 4
      %v1199 = vshll.u32 %v1013, 16
      %v1201 = vrot.slane %v1199, 5
      %v1202 = vsel %vm1044, %v1197, %v1201
      %v1203 = vshrl.u32 %v1013, 16
      %v1205 = vrot.slane %v1203, 4
      %v1206 = vor.u32 %v1205, %v1201
      %v1207 = vrot.slane %v1206, 4
      %v1209 = vshll.u32 %v1014, 16
      %v1211 = vrot.slane %v1209, 5
      %v1212 = vsel %vm1044, %v1207, %v1211
      %v1214 = vshrl.u32 %v1015, 16
      %v1216 = vrot.slane %v1214, 4
      %v1217 = vshll.u32 %v1015, 16
      %v1219 = vrot.slane %v1217, 5
      %v1220 = vor.u32 %v1216, %v1219
      %v1221 = vrot.slane %v1220, 4
      %v1223 = vshll.u32 %v1016, 16
      %v1225 = vrot.slane %v1223, 5
      %v1226 = vsel %vm1044, %v1221, %v1225
      %v1227 = vshrl.u32 %v1016, 16
      %v1229 = vrot.slane %v1227, 4
      %v1230 = vor.u32 %v1229, %v1225
      %v1231 = vrot.slane %v1230, 4
      %v1233 = vshll.u32 %v1017, 16
      %v1235 = vrot.slane %v1233, 5
      %v1236 = vsel %vm1044, %v1231, %v1235
      %v1238 = vshrl.u32 %v1018, 16
      %v1240 = vrot.slane %v1238, 4
      %v1241 = vshll.u32 %v1018, 16
      %v1243 = vrot.slane %v1241, 5
      %v1244 = vor.u32 %v1240, %v1243
      %v1245 = vrot.slane %v1244, 4
      %v1247 = vshll.u32 %v1019, 16
      %v1249 = vrot.slane %v1247, 5
      %v1250 = vsel %vm1044, %v1245, %v1249
      %v1251 = vshrl.u32 %v1019, 16
      %v1253 = vrot.slane %v1251, 4
      %v1254 = vor.u32 %v1253, %v1249
      %v1255 = vrot.slane %v1254, 4
      %v1257 = vshll.u32 %v1020, 16
      %v1259 = vrot.slane %v1257, 5
      %v1260 = vsel %vm1044, %v1255, %v1259
      %v1262 = vshrl.u32 %v1021, 16
      %v1264 = vrot.slane %v1262, 4
      %v1265 = vshll.u32 %v1021, 16
      %v1267 = vrot.slane %v1265, 5
      %v1268 = vor.u32 %v1264, %v1267
      %v1269 = vrot.slane %v1268, 4
      %v1271 = vshll.u32 %v1022, 16
      %v1273 = vrot.slane %v1271, 5
      %v1274 = vsel %vm1044, %v1269, %v1273
      %v1275 = vshrl.u32 %v1022, 16
      %v1277 = vrot.slane %v1275, 4
      %v1278 = vor.u32 %v1277, %v1273
      %v1279 = vrot.slane %v1278, 4
      %v1281 = vshll.u32 %v1023, 16
      %v1283 = vrot.slane %v1281, 5
      %v1284 = vsel %vm1044, %v1279, %v1283
      %v1286 = vshrl.u32 %v1024, 16
      %v1288 = vrot.slane %v1286, 4
      %v1289 = vshll.u32 %v1024, 16
      %v1291 = vrot.slane %v1289, 5
      %v1292 = vor.u32 %v1288, %v1291
      %v1293 = vrot.slane %v1292, 4
      %v1295 = vshll.u32 %v1025, 16
      %v1297 = vrot.slane %v1295, 5
      %v1298 = vsel %vm1044, %v1293, %v1297
      %v1299 = vshrl.u32 %v1025, 16
      %v1301 = vrot.slane %v1299, 4
      %v1302 = vor.u32 %v1301, %v1297
      %v1303 = vrot.slane %v1302, 4
      %v1305 = vshll.u32 %v1026, 16
      %v1307 = vrot.slane %v1305, 5
      %v1308 = vsel %vm1044, %v1303, %v1307
      %v1310 = vshrl.u32 %v1027, 16
      %v1312 = vrot.slane %v1310, 4
      %v1313 = vshll.u32 %v1027, 16
      %v1315 = vrot.slane %v1313, 5
      %v1316 = vor.u32 %v1312, %v1315
      %v1317 = vrot.slane %v1316, 4
      %v1319 = vshll.u32 %v1028, 16
      %v1321 = vrot.slane %v1319, 5
      %v1322 = vsel %vm1044, %v1317, %v1321
      %v1323 = vshrl.u32 %v1028, 16
      %v1325 = vrot.slane %v1323, 4
      %v1326 = vor.u32 %v1325, %v1321
      %v1327 = vrot.slane %v1326, 4
      %v1329 = vshll.u32 %v1029, 16
      %v1331 = vrot.slane %v1329, 5
      %v1332 = vsel %vm1044, %v1327, %v1331
      %v1334 = vshrl.u32 %v1030, 16
      %v1336 = vrot.slane %v1334, 4
      %v1337 = vshll.u32 %v1030, 16
      %v1339 = vrot.slane %v1337, 5
      %v1340 = vor.u32 %v1336, %v1339
      %v1341 = vrot.slane %v1340, 4
      %v1343 = vshll.u32 %v1031, 16
      %v1345 = vrot.slane %v1343, 5
      %v1346 = vsel %vm1044, %v1341, %v1345
      %v1347 = vshrl.u32 %v1031, 16
      %v1349 = vrot.slane %v1347, 4
      %v1350 = vor.u32 %v1349, %v1345
      %v1351 = vrot.slane %v1350, 4
      %v1353 = vshll.u32 %v1032, 16
      %v1355 = vrot.slane %v1353, 5
      %v1356 = vsel %vm1044, %v1351, %v1355
      %v1358 = vshrl.u32 %v1033, 16
      %v1360 = vrot.slane %v1358, 4
      %v1361 = vshll.u32 %v1033, 16
      %v1363 = vrot.slane %v1361, 5
      %v1364 = vor.u32 %v1360, %v1363
      %v1365 = vrot.slane %v1364, 4
      %v1367 = vshll.u32 %v1034, 16
      %v1369 = vrot.slane %v1367, 5
      %v1370 = vsel %vm1044, %v1365, %v1369
      %v1371 = vshrl.u32 %v1034, 16
      %v1373 = vrot.slane %v1371, 4
      %v1374 = vor.u32 %v1373, %v1369
      %v1375 = vrot.slane %v1374, 4
      %v1377 = vshll.u32 %v1035, 16
      %v1379 = vrot.slane %v1377, 5
      %v1380 = vsel %vm1044, %v1375, %v1379
      %v1382 = vshrl.u32 %v1036, 16
      %v1384 = vrot.slane %v1382, 4
      %v1385 = vshll.u32 %v1036, 16
      %v1387 = vrot.slane %v1385, 5
      %v1388 = vor.u32 %v1384, %v1387
      %v1389 = vrot.slane %v1388, 4
      %v1391 = vshll.u32 %v1037, 16
      %v1393 = vrot.slane %v1391, 5
      %v1394 = vsel %vm1044, %v1389, %v1393
      %v1395 = vshrl.u32 %v1037, 16
      %v1397 = vrot.slane %v1395, 4
      %v1398 = vor.u32 %v1397, %v1393
      %v1399 = vrot.slane %v1398, 4
      %v1401 = vshll.u32 %v1038, 16
      %v1403 = vrot.slane %v1401, 5
      %v1404 = vsel %vm1044, %v1399, %v1403
      %v1406 = vshrl.u32 %v1039, 16
      %v1408 = vrot.slane %v1406, 4
      %v1409 = vshll.u32 %v1039, 16
      %v1411 = vrot.slane %v1409, 5
      %v1412 = vor.u32 %v1408, %v1411
      %v1413 = vrot.slane %v1412, 4
      %v1415 = vshll.u32 %v1040, 16
      %v1417 = vrot.slane %v1415, 5
      %v1418 = vsel %vm1044, %v1413, %v1417
      %v1419 = vshrl.u32 %v1040, 16
      %v1421 = vrot.slane %v1419, 4
      %v1422 = vor.u32 %v1421, %v1417
      %v1423 = vrot.slane %v1422, 4
      %v1425 = vshll.u32 %v1041, 16
      %v1427 = vrot.slane %v1425, 5
      %v1428 = vsel %vm1044, %v1423, %v1427
      %v1429 = vunpack.c.l.b16 %v1058
      %v1430 = vunpack.c.l.b16 %v1068
      %v1431 = vunpack.c.l.b16 %v1082
      %v1432 = vunpack.c.l.b16 %v1092
      %v1433 = vunpack.c.l.b16 %v1106
      %v1434 = vunpack.c.l.b16 %v1116
      %v1435 = vunpack.c.l.b16 %v1130
      %v1436 = vunpack.c.l.b16 %v1140
      %v1437 = vunpack.c.l.b16 %v1154
      %v1438 = vunpack.c.l.b16 %v1164
      %v1439 = vunpack.c.l.b16 %v1178
      %v1440 = vunpack.c.l.b16 %v1188
      %v1441 = vunpack.c.l.b16 %v1202
      %v1442 = vunpack.c.l.b16 %v1212
      %v1443 = vunpack.c.l.b16 %v1226
      %v1444 = vunpack.c.l.b16 %v1236
      %v1445 = vunpack.c.l.b16 %v1250
      %v1446 = vunpack.c.l.b16 %v1260
      %v1447 = vunpack.c.l.b16 %v1274
      %v1448 = vunpack.c.l.b16 %v1284
      %v1449 = vunpack.c.l.b16 %v1298
      %v1450 = vunpack.c.l.b16 %v1308
      %v1451 = vunpack.c.l.b16 %v1322
      %v1452 = vunpack.c.l.b16 %v1332
      %v1453 = vunpack.c.l.b16 %v1346
      %v1454 = vunpack.c.l.b16 %v1356
      %v1455 = vunpack.c.l.b16 %v1370
      %v1456 = vunpack.c.l.b16 %v1380
      %v1457 = vunpack.c.l.b16 %v1394
      %v1458 = vunpack.c.l.b16 %v1404
      %v1459 = vunpack.c.l.b16 %v1418
      %v1460 = vunpack.c.l.b16 %v1428
      %v1461 = vpack.c.b16 %v1430, %v1429
      %v1462 = vpack.c.b16 %v1432, %v1431
      %v1463 = vpack.c.b16 %v1434, %v1433
      %v1464 = vpack.c.b16 %v1436, %v1435
      %v1465 = vpack.c.b16 %v1438, %v1437
      %v1466 = vpack.c.b16 %v1440, %v1439
      %v1467 = vpack.c.b16 %v1442, %v1441
      %v1468 = vpack.c.b16 %v1444, %v1443
      %v1469 = vpack.c.b16 %v1446, %v1445
      %v1470 = vpack.c.b16 %v1448, %v1447
      %v1471 = vpack.c.b16 %v1450, %v1449
      %v1472 = vpack.c.b16 %v1452, %v1451
      %v1473 = vpack.c.b16 %v1454, %v1453
      %v1474 = vpack.c.b16 %v1456, %v1455
      %v1475 = vpack.c.b16 %v1458, %v1457
      %v1476 = vpack.c.b16 %v1460, %v1459
      %1477 = vrot.lane.b32.xlu0 %v1461, 4
      %v1478 = vpop.permute.xlu0 %1477
      %1479 = vrot.lane.b32.xlu0 %v1462, 4
      %v1480 = vpop.permute.xlu0 %1479
      %1481 = vrot.lane.b32.xlu0 %v1463, 4
      %v1482 = vpop.permute.xlu0 %1481
      %1483 = vrot.lane.b32.xlu0 %v1464, 4
      %v1484 = vpop.permute.xlu0 %1483
      %1485 = vrot.lane.b32.xlu0 %v1465, 4
      %v1486 = vpop.permute.xlu0 %1485
      %1487 = vrot.lane.b32.xlu0 %v1466, 4
      %v1488 = vpop.permute.xlu0 %1487
      %1489 = vrot.lane.b32.xlu0 %v1467, 4
      %v1490 = vpop.permute.xlu0 %1489
      %1491 = vrot.lane.b32.xlu0 %v1468, 4
      %v1492 = vpop.permute.xlu0 %1491
      %1493 = vrot.lane.b32.xlu0 %v1469, 4
      %v1494 = vpop.permute.xlu0 %1493
      %1495 = vrot.lane.b32.xlu0 %v1470, 4
      %v1496 = vpop.permute.xlu0 %1495
      %1497 = vrot.lane.b32.xlu0 %v1471, 4
      %v1498 = vpop.permute.xlu0 %1497
      %1499 = vrot.lane.b32.xlu0 %v1472, 4
      %v1500 = vpop.permute.xlu0 %1499
      %1501 = vrot.lane.b32.xlu0 %v1473, 4
      %v1502 = vpop.permute.xlu0 %1501
      %1503 = vrot.lane.b32.xlu0 %v1474, 4
      %v1504 = vpop.permute.xlu0 %1503
      %1505 = vrot.lane.b32.xlu0 %v1475, 4
      %v1506 = vpop.permute.xlu0 %1505
      %1507 = vrot.lane.b32.xlu0 %v1476, 4
      %v1508 = vpop.permute.xlu0 %1507
      %vm1525 = vcmask 64544
      %1526 = vst.msk [vmem:[#allocation3] sm:$0xff] %vm1525, %v1478
      %1527 = vst.msk [vmem:[#allocation3 + $0x8] sm:$0xff] %vm1525, %v1480
      %1528 = vst.msk [vmem:[#allocation3 + $0x10] sm:$0xff] %vm1525, %v1482
      %1529 = vst.msk [vmem:[#allocation3 + $0x18] sm:$0xff] %vm1525, %v1484
      %1530 = vst.msk [vmem:[#allocation3 + $0x20] sm:$0xff] %vm1525, %v1486
      %1531 = vst.msk [vmem:[#allocation3 + $0x28] sm:$0xff] %vm1525, %v1488
      %1532 = vst.msk [vmem:[#allocation3 + $0x30] sm:$0xff] %vm1525, %v1490
      %1533 = vst.msk [vmem:[#allocation3 + $0x38] sm:$0xff] %vm1525, %v1492
      %1534 = vst.msk [vmem:[#allocation3 + $0x40] sm:$0xff] %vm1525, %v1494
      %1535 = vst.msk [vmem:[#allocation3 + $0x48] sm:$0xff] %vm1525, %v1496
      %1536 = vst.msk [vmem:[#allocation3 + $0x50] sm:$0xff] %vm1525, %v1498
      %1537 = vst.msk [vmem:[#allocation3 + $0x58] sm:$0xff] %vm1525, %v1500
      %1538 = vst.msk [vmem:[#allocation3 + $0x60] sm:$0xff] %vm1525, %v1502
      %1539 = vst.msk [vmem:[#allocation3 + $0x68] sm:$0xff] %vm1525, %v1504
      %1540 = vst.msk [vmem:[#allocation3 + $0x70] sm:$0xff] %vm1525, %v1506
      %1541 = vst.msk [vmem:[#allocation3 + $0x78] sm:$0xff] %vm1525, %v1508
      %v1542 = vld [vmem:[#allocation2] sm:$0xe]
      %v1543 = vld [vmem:[#allocation2 + $0x4] sm:$0xf]
      %v1544 = vld [vmem:[#allocation2 + $0x8] sm:$0x1]
      %v1545 = vld [vmem:[#allocation2 + $0xc] sm:$0xe]
      %v1546 = vld [vmem:[#allocation2 + $0x10] sm:$0xf]
      %v1547 = vld [vmem:[#allocation2 + $0x14] sm:$0x1]
      %v1548 = vld [vmem:[#allocation2 + $0x18] sm:$0xe]
      %v1549 = vld [vmem:[#allocation2 + $0x1c] sm:$0xf]
      %v1550 = vld [vmem:[#allocation2 + $0x20] sm:$0x1]
      %v1551 = vld [vmem:[#allocation2 + $0x24] sm:$0xe]
      %v1552 = vld [vmem:[#allocation2 + $0x28] sm:$0xf]
      %v1553 = vld [vmem:[#allocation2 + $0x2c] sm:$0x1]
      %v1554 = vld [vmem:[#allocation2 + $0x30] sm:$0xe]
      %v1555 = vld [vmem:[#allocation2 + $0x34] sm:$0xf]
      %v1556 = vld [vmem:[#allocation2 + $0x38] sm:$0x1]
      %v1557 = vld [vmem:[#allocation2 + $0x3c] sm:$0xe]
      %v1558 = vld [vmem:[#allocation2 + $0x40] sm:$0xf]
      %v1559 = vld [vmem:[#allocation2 + $0x44] sm:$0x1]
      %v1560 = vld [vmem:[#allocation2 + $0x48] sm:$0xe]
      %v1561 = vld [vmem:[#allocation2 + $0x4c] sm:$0xf]
      %v1562 = vld [vmem:[#allocation2 + $0x50] sm:$0x1]
      %v1563 = vld [vmem:[#allocation2 + $0x54] sm:$0xe]
      %v1564 = vld [vmem:[#allocation2 + $0x58] sm:$0xf]
      %v1565 = vld [vmem:[#allocation2 + $0x5c] sm:$0x1]
      %v1566 = vld [vmem:[#allocation2 + $0x60] sm:$0xe]
      %v1567 = vld [vmem:[#allocation2 + $0x64] sm:$0xf]
      %v1568 = vld [vmem:[#allocation2 + $0x68] sm:$0x1]
      %v1569 = vld [vmem:[#allocation2 + $0x6c] sm:$0xe]
      %v1570 = vld [vmem:[#allocation2 + $0x70] sm:$0xf]
      %v1571 = vld [vmem:[#allocation2 + $0x74] sm:$0x1]
      %v1572 = vld [vmem:[#allocation2 + $0x78] sm:$0xe]
      %v1573 = vld [vmem:[#allocation2 + $0x7c] sm:$0xf]
      %v1574 = vld [vmem:[#allocation2 + $0x80] sm:$0x1]
      %v1575 = vld [vmem:[#allocation2 + $0x84] sm:$0xe]
      %v1576 = vld [vmem:[#allocation2 + $0x88] sm:$0xf]
      %v1577 = vld [vmem:[#allocation2 + $0x8c] sm:$0x1]
      %v1578 = vld [vmem:[#allocation2 + $0x90] sm:$0xe]
      %v1579 = vld [vmem:[#allocation2 + $0x94] sm:$0xf]
      %v1580 = vld [vmem:[#allocation2 + $0x98] sm:$0x1]
      %v1581 = vld [vmem:[#allocation2 + $0x9c] sm:$0xe]
      %v1582 = vld [vmem:[#allocation2 + $0xa0] sm:$0xf]
      %v1583 = vld [vmem:[#allocation2 + $0xa4] sm:$0x1]
      %v1584 = vld [vmem:[#allocation2 + $0xa8] sm:$0xe]
      %v1585 = vld [vmem:[#allocation2 + $0xac] sm:$0xf]
      %v1586 = vld [vmem:[#allocation2 + $0xb0] sm:$0x1]
      %v1587 = vld [vmem:[#allocation2 + $0xb4] sm:$0xe]
      %v1588 = vld [vmem:[#allocation2 + $0xb8] sm:$0xf]
      %v1589 = vld [vmem:[#allocation2 + $0xbc] sm:$0x1]
      %vm1638 = vcmask 1042432
      %vm1639 = vcmask 1046532
      %vm1640 = vmor %vm1638, %vm1639
      %v1641 = vrot.slane %v1542, 5
      %v1642 = vrot.slane %v1641, 4
      %v1643 = vrot.slane %v1543, 5
      %v1644 = vsel %vm1640, %v1642, %v1643
      %v1645 = vrot.slane %v1643, 4
      %v1646 = vrot.slane %v1544, 5
      %v1647 = vsel %vm1640, %v1645, %v1646
      %v1648 = vrot.slane %v1545, 5
      %v1649 = vrot.slane %v1648, 4
      %v1650 = vrot.slane %v1546, 5
      %v1651 = vsel %vm1640, %v1649, %v1650
      %v1652 = vrot.slane %v1650, 4
      %v1653 = vrot.slane %v1547, 5
      %v1654 = vsel %vm1640, %v1652, %v1653
      %v1655 = vrot.slane %v1548, 5
      %v1656 = vrot.slane %v1655, 4
      %v1657 = vrot.slane %v1549, 5
      %v1658 = vsel %vm1640, %v1656, %v1657
      %v1659 = vrot.slane %v1657, 4
      %v1660 = vrot.slane %v1550, 5
      %v1661 = vsel %vm1640, %v1659, %v1660
      %v1662 = vrot.slane %v1551, 5
      %v1663 = vrot.slane %v1662, 4
      %v1664 = vrot.slane %v1552, 5
      %v1665 = vsel %vm1640, %v1663, %v1664
      %v1666 = vrot.slane %v1664, 4
      %v1667 = vrot.slane %v1553, 5
      %v1668 = vsel %vm1640, %v1666, %v1667
      %v1669 = vrot.slane %v1554, 5
      %v1670 = vrot.slane %v1669, 4
      %v1671 = vrot.slane %v1555, 5
      %v1672 = vsel %vm1640, %v1670, %v1671
      %v1673 = vrot.slane %v1671, 4
      %v1674 = vrot.slane %v1556, 5
      %v1675 = vsel %vm1640, %v1673, %v1674
      %v1676 = vrot.slane %v1557, 5
      %v1677 = vrot.slane %v1676, 4
      %v1678 = vrot.slane %v1558, 5
      %v1679 = vsel %vm1640, %v1677, %v1678
      %v1680 = vrot.slane %v1678, 4
      %v1681 = vrot.slane %v1559, 5
      %v1682 = vsel %vm1640, %v1680, %v1681
      %v1683 = vrot.slane %v1560, 5
      %v1684 = vrot.slane %v1683, 4
      %v1685 = vrot.slane %v1561, 5
      %v1686 = vsel %vm1640, %v1684, %v1685
      %v1687 = vrot.slane %v1685, 4
      %v1688 = vrot.slane %v1562, 5
      %v1689 = vsel %vm1640, %v1687, %v1688
      %v1690 = vrot.slane %v1563, 5
      %v1691 = vrot.slane %v1690, 4
      %v1692 = vrot.slane %v1564, 5
      %v1693 = vsel %vm1640, %v1691, %v1692
      %v1694 = vrot.slane %v1692, 4
      %v1695 = vrot.slane %v1565, 5
      %v1696 = vsel %vm1640, %v1694, %v1695
      %v1697 = vrot.slane %v1566, 5
      %v1698 = vrot.slane %v1697, 4
      %v1699 = vrot.slane %v1567, 5
      %v1700 = vsel %vm1640, %v1698, %v1699
      %v1701 = vrot.slane %v1699, 4
      %v1702 = vrot.slane %v1568, 5
      %v1703 = vsel %vm1640, %v1701, %v1702
      %v1704 = vrot.slane %v1569, 5
      %v1705 = vrot.slane %v1704, 4
      %v1706 = vrot.slane %v1570, 5
      %v1707 = vsel %vm1640, %v1705, %v1706
      %v1708 = vrot.slane %v1706, 4
      %v1709 = vrot.slane %v1571, 5
      %v1710 = vsel %vm1640, %v1708, %v1709
      %v1711 = vrot.slane %v1572, 5
      %v1712 = vrot.slane %v1711, 4
      %v1713 = vrot.slane %v1573, 5
      %v1714 = vsel %vm1640, %v1712, %v1713
      %v1715 = vrot.slane %v1713, 4
      %v1716 = vrot.slane %v1574, 5
      %v1717 = vsel %vm1640, %v1715, %v1716
      %v1718 = vrot.slane %v1575, 5
      %v1719 = vrot.slane %v1718, 4
      %v1720 = vrot.slane %v1576, 5
      %v1721 = vsel %vm1640, %v1719, %v1720
      %v1722 = vrot.slane %v1720, 4
      %v1723 = vrot.slane %v1577, 5
      %v1724 = vsel %vm1640, %v1722, %v1723
      %v1725 = vrot.slane %v1578, 5
      %v1726 = vrot.slane %v1725, 4
      %v1727 = vrot.slane %v1579, 5
      %v1728 = vsel %vm1640, %v1726, %v1727
      %v1729 = vrot.slane %v1727, 4
      %v1730 = vrot.slane %v1580, 5
      %v1731 = vsel %vm1640, %v1729, %v1730
      %v1732 = vrot.slane %v1581, 5
      %v1733 = vrot.slane %v1732, 4
      %v1734 = vrot.slane %v1582, 5
      %v1735 = vsel %vm1640, %v1733, %v1734
      %v1736 = vrot.slane %v1734, 4
      %v1737 = vrot.slane %v1583, 5
      %v1738 = vsel %vm1640, %v1736, %v1737
      %v1739 = vrot.slane %v1584, 5
      %v1740 = vrot.slane %v1739, 4
      %v1741 = vrot.slane %v1585, 5
      %v1742 = vsel %vm1640, %v1740, %v1741
      %v1743 = vrot.slane %v1741, 4
      %v1744 = vrot.slane %v1586, 5
      %v1745 = vsel %vm1640, %v1743, %v1744
      %v1746 = vrot.slane %v1587, 5
      %v1747 = vrot.slane %v1746, 4
      %v1748 = vrot.slane %v1588, 5
      %v1749 = vsel %vm1640, %v1747, %v1748
      %v1750 = vrot.slane %v1748, 4
      %v1751 = vrot.slane %v1589, 5
      %v1752 = vsel %vm1640, %v1750, %v1751
      %v1753 = vunpack.c.l.b16 %v1644
      %v1754 = vunpack.c.l.b16 %v1647
      %v1755 = vunpack.c.l.b16 %v1651
      %v1756 = vunpack.c.l.b16 %v1654
      %v1757 = vunpack.c.l.b16 %v1658
      %v1758 = vunpack.c.l.b16 %v1661
      %v1759 = vunpack.c.l.b16 %v1665
      %v1760 = vunpack.c.l.b16 %v1668
      %v1761 = vunpack.c.l.b16 %v1672
      %v1762 = vunpack.c.l.b16 %v1675
      %v1763 = vunpack.c.l.b16 %v1679
      %v1764 = vunpack.c.l.b16 %v1682
      %v1765 = vunpack.c.l.b16 %v1686
      %v1766 = vunpack.c.l.b16 %v1689
      %v1767 = vunpack.c.l.b16 %v1693
      %v1768 = vunpack.c.l.b16 %v1696
      %v1769 = vunpack.c.l.b16 %v1700
      %v1770 = vunpack.c.l.b16 %v1703
      %v1771 = vunpack.c.l.b16 %v1707
      %v1772 = vunpack.c.l.b16 %v1710
      %v1773 = vunpack.c.l.b16 %v1714
      %v1774 = vunpack.c.l.b16 %v1717
      %v1775 = vunpack.c.l.b16 %v1721
      %v1776 = vunpack.c.l.b16 %v1724
      %v1777 = vunpack.c.l.b16 %v1728
      %v1778 = vunpack.c.l.b16 %v1731
      %v1779 = vunpack.c.l.b16 %v1735
      %v1780 = vunpack.c.l.b16 %v1738
      %v1781 = vunpack.c.l.b16 %v1742
      %v1782 = vunpack.c.l.b16 %v1745
      %v1783 = vunpack.c.l.b16 %v1749
      %v1784 = vunpack.c.l.b16 %v1752
      %v1785 = vpack.c.b16 %v1754, %v1753
      %v1786 = vpack.c.b16 %v1756, %v1755
      %v1787 = vpack.c.b16 %v1758, %v1757
      %v1788 = vpack.c.b16 %v1760, %v1759
      %v1789 = vpack.c.b16 %v1762, %v1761
      %v1790 = vpack.c.b16 %v1764, %v1763
      %v1791 = vpack.c.b16 %v1766, %v1765
      %v1792 = vpack.c.b16 %v1768, %v1767
      %v1793 = vpack.c.b16 %v1770, %v1769
      %v1794 = vpack.c.b16 %v1772, %v1771
      %v1795 = vpack.c.b16 %v1774, %v1773
      %v1796 = vpack.c.b16 %v1776, %v1775
      %v1797 = vpack.c.b16 %v1778, %v1777
      %v1798 = vpack.c.b16 %v1780, %v1779
      %v1799 = vpack.c.b16 %v1782, %v1781
      %v1800 = vpack.c.b16 %v1784, %v1783
      %1801 = vrot.lane.b32.xlu0 %v1785, 8
      %v1802 = vpop.permute.xlu0 %1801
      %1803 = vrot.lane.b32.xlu0 %v1786, 8
      %v1804 = vpop.permute.xlu0 %1803
      %1805 = vrot.lane.b32.xlu0 %v1787, 8
      %v1806 = vpop.permute.xlu0 %1805
      %1807 = vrot.lane.b32.xlu0 %v1788, 8
      %v1808 = vpop.permute.xlu0 %1807
      %1809 = vrot.lane.b32.xlu0 %v1789, 8
      %v1810 = vpop.permute.xlu0 %1809
      %1811 = vrot.lane.b32.xlu0 %v1790, 8
      %v1812 = vpop.permute.xlu0 %1811
      %1813 = vrot.lane.b32.xlu0 %v1791, 8
      %v1814 = vpop.permute.xlu0 %1813
      %1815 = vrot.lane.b32.xlu0 %v1792, 8
      %v1816 = vpop.permute.xlu0 %1815
      %1817 = vrot.lane.b32.xlu0 %v1793, 8
      %v1818 = vpop.permute.xlu0 %1817
      %1819 = vrot.lane.b32.xlu0 %v1794, 8
      %v1820 = vpop.permute.xlu0 %1819
      %1821 = vrot.lane.b32.xlu0 %v1795, 8
      %v1822 = vpop.permute.xlu0 %1821
      %1823 = vrot.lane.b32.xlu0 %v1796, 8
      %v1824 = vpop.permute.xlu0 %1823
      %1825 = vrot.lane.b32.xlu0 %v1797, 8
      %v1826 = vpop.permute.xlu0 %1825
      %1827 = vrot.lane.b32.xlu0 %v1798, 8
      %v1828 = vpop.permute.xlu0 %1827
      %1829 = vrot.lane.b32.xlu0 %v1799, 8
      %v1830 = vpop.permute.xlu0 %1829
      %1831 = vrot.lane.b32.xlu0 %v1800, 8
      %v1832 = vpop.permute.xlu0 %1831
      %vm1849 = vcmask 97344
      %1850 = vst.msk [vmem:[#allocation3] sm:$0xff] %vm1849, %v1802
      %1851 = vst.msk [vmem:[#allocation3 + $0x8] sm:$0xff] %vm1849, %v1804
      %1852 = vst.msk [vmem:[#allocation3 + $0x10] sm:$0xff] %vm1849, %v1806
      %1853 = vst.msk [vmem:[#allocation3 + $0x18] sm:$0xff] %vm1849, %v1808
      %1854 = vst.msk [vmem:[#allocation3 + $0x20] sm:$0xff] %vm1849, %v1810
      %1855 = vst.msk [vmem:[#allocation3 + $0x28] sm:$0xff] %vm1849, %v1812
      %1856 = vst.msk [vmem:[#allocation3 + $0x30] sm:$0xff] %vm1849, %v1814
      %1857 = vst.msk [vmem:[#allocation3 + $0x38] sm:$0xff] %vm1849, %v1816
      %1858 = vst.msk [vmem:[#allocation3 + $0x40] sm:$0xff] %vm1849, %v1818
      %1859 = vst.msk [vmem:[#allocation3 + $0x48] sm:$0xff] %vm1849, %v1820
      %1860 = vst.msk [vmem:[#allocation3 + $0x50] sm:$0xff] %vm1849, %v1822
      %1861 = vst.msk [vmem:[#allocation3 + $0x58] sm:$0xff] %vm1849, %v1824
      %1862 = vst.msk [vmem:[#allocation3 + $0x60] sm:$0xff] %vm1849, %v1826
      %1863 = vst.msk [vmem:[#allocation3 + $0x68] sm:$0xff] %vm1849, %v1828
      %1864 = vst.msk [vmem:[#allocation3 + $0x70] sm:$0xff] %vm1849, %v1830
      %1865 = vst.msk [vmem:[#allocation3 + $0x78] sm:$0xff] %vm1849, %v1832
      %v1866 = vld [vmem:[%s279] sm:$0xf]
      %v1867 = vld [vmem:[%s279 + $0x4] sm:$0xf]
      %v1868 = vld [vmem:[%s279 + $0xc] sm:$0xf]
      %v1869 = vld [vmem:[%s279 + $0x10] sm:$0xf]
      %v1870 = vld [vmem:[%s279 + $0x18] sm:$0xf]
      %v1871 = vld [vmem:[%s279 + $0x1c] sm:$0xf]
      %v1872 = vld [vmem:[%s279 + $0x24] sm:$0xf]
      %v1873 = vld [vmem:[%s279 + $0x28] sm:$0xf]
      %v1874 = vld [vmem:[%s279 + $0x30] sm:$0xf]
      %v1875 = vld [vmem:[%s279 + $0x34] sm:$0xf]
      %v1876 = vld [vmem:[%s279 + $0x3c] sm:$0xf]
      %v1877 = vld [vmem:[%s279 + $0x40] sm:$0xf]
      %v1878 = vld [vmem:[%s279 + $0x48] sm:$0xf]
      %v1879 = vld [vmem:[%s279 + $0x4c] sm:$0xf]
      %v1880 = vld [vmem:[%s279 + $0x54] sm:$0xf]
      %v1881 = vld [vmem:[%s279 + $0x58] sm:$0xf]
      %v1882 = vld [vmem:[%s279 + $0x60] sm:$0xf]
      %v1883 = vld [vmem:[%s279 + $0x64] sm:$0xf]
      %v1884 = vld [vmem:[%s279 + $0x6c] sm:$0xf]
      %v1885 = vld [vmem:[%s279 + $0x70] sm:$0xf]
      %v1886 = vld [vmem:[%s279 + $0x78] sm:$0xf]
      %v1887 = vld [vmem:[%s279 + $0x7c] sm:$0xf]
      %v1888 = vld [vmem:[%s279 + $0x84] sm:$0xf]
      %v1889 = vld [vmem:[%s279 + $0x88] sm:$0xf]
      %v1890 = vld [vmem:[%s279 + $0x90] sm:$0xf]
      %v1891 = vld [vmem:[%s279 + $0x94] sm:$0xf]
      %v1892 = vld [vmem:[%s279 + $0x9c] sm:$0xf]
      %v1893 = vld [vmem:[%s279 + $0xa0] sm:$0xf]
      %v1894 = vld [vmem:[%s279 + $0xa8] sm:$0xf]
      %v1895 = vld [vmem:[%s279 + $0xac] sm:$0xf]
      %v1896 = vld [vmem:[%s279 + $0xb4] sm:$0xf]
      %v1897 = vld [vmem:[%s279 + $0xb8] sm:$0xf]
      %v1930 = vunpack.c.l.b16 %v1866
      %v1931 = vunpack.c.l.b16 %v1867
      %v1932 = vunpack.c.l.b16 %v1868
      %v1933 = vunpack.c.l.b16 %v1869
      %v1934 = vunpack.c.l.b16 %v1870
      %v1935 = vunpack.c.l.b16 %v1871
      %v1936 = vunpack.c.l.b16 %v1872
      %v1937 = vunpack.c.l.b16 %v1873
      %v1938 = vunpack.c.l.b16 %v1874
      %v1939 = vunpack.c.l.b16 %v1875
      %v1940 = vunpack.c.l.b16 %v1876
      %v1941 = vunpack.c.l.b16 %v1877
      %v1942 = vunpack.c.l.b16 %v1878
      %v1943 = vunpack.c.l.b16 %v1879
      %v1944 = vunpack.c.l.b16 %v1880
      %v1945 = vunpack.c.l.b16 %v1881
      %v1946 = vunpack.c.l.b16 %v1882
      %v1947 = vunpack.c.l.b16 %v1883
      %v1948 = vunpack.c.l.b16 %v1884
      %v1949 = vunpack.c.l.b16 %v1885
      %v1950 = vunpack.c.l.b16 %v1886
      %v1951 = vunpack.c.l.b16 %v1887
      %v1952 = vunpack.c.l.b16 %v1888
      %v1953 = vunpack.c.l.b16 %v1889
      %v1954 = vunpack.c.l.b16 %v1890
      %v1955 = vunpack.c.l.b16 %v1891
      %v1956 = vunpack.c.l.b16 %v1892
      %v1957 = vunpack.c.l.b16 %v1893
      %v1958 = vunpack.c.l.b16 %v1894
      %v1959 = vunpack.c.l.b16 %v1895
      %v1960 = vunpack.c.l.b16 %v1896
      %v1961 = vunpack.c.l.b16 %v1897
      %v1962 = vpack.c.b16 %v1931, %v1930
      %v1963 = vpack.c.b16 %v1933, %v1932
      %v1964 = vpack.c.b16 %v1935, %v1934
      %v1965 = vpack.c.b16 %v1937, %v1936
      %v1966 = vpack.c.b16 %v1939, %v1938
      %v1967 = vpack.c.b16 %v1941, %v1940
      %v1968 = vpack.c.b16 %v1943, %v1942
      %v1969 = vpack.c.b16 %v1945, %v1944
      %v1970 = vpack.c.b16 %v1947, %v1946
      %v1971 = vpack.c.b16 %v1949, %v1948
      %v1972 = vpack.c.b16 %v1951, %v1950
      %v1973 = vpack.c.b16 %v1953, %v1952
      %v1974 = vpack.c.b16 %v1955, %v1954
      %v1975 = vpack.c.b16 %v1957, %v1956
      %v1976 = vpack.c.b16 %v1959, %v1958
      %v1977 = vpack.c.b16 %v1961, %v1960
      %1978 = vrot.lane.b32.xlu0 %v1962, 12
      %v1979 = vpop.permute.xlu0 %1978
      %1980 = vrot.lane.b32.xlu0 %v1963, 12
      %v1981 = vpop.permute.xlu0 %1980
      %1982 = vrot.lane.b32.xlu0 %v1964, 12
      %v1983 = vpop.permute.xlu0 %1982
      %1984 = vrot.lane.b32.xlu0 %v1965, 12
      %v1985 = vpop.permute.xlu0 %1984
      %1986 = vrot.lane.b32.xlu0 %v1966, 12
      %v1987 = vpop.permute.xlu0 %1986
      %1988 = vrot.lane.b32.xlu0 %v1967, 12
      %v1989 = vpop.permute.xlu0 %1988
      %1990 = vrot.lane.b32.xlu0 %v1968, 12
      %v1991 = vpop.permute.xlu0 %1990
      %1992 = vrot.lane.b32.xlu0 %v1969, 12
      %v1993 = vpop.permute.xlu0 %1992
      %1994 = vrot.lane.b32.xlu0 %v1970, 12
      %v1995 = vpop.permute.xlu0 %1994
      %1996 = vrot.lane.b32.xlu0 %v1971, 12
      %v1997 = vpop.permute.xlu0 %1996
      %1998 = vrot.lane.b32.xlu0 %v1972, 12
      %v1999 = vpop.permute.xlu0 %1998
      %2000 = vrot.lane.b32.xlu0 %v1973, 12
      %v2001 = vpop.permute.xlu0 %2000
      %2002 = vrot.lane.b32.xlu0 %v1974, 12
      %v2003 = vpop.permute.xlu0 %2002
      %2004 = vrot.lane.b32.xlu0 %v1975, 12
      %v2005 = vpop.permute.xlu0 %2004
      %2006 = vrot.lane.b32.xlu0 %v1976, 12
      %v2007 = vpop.permute.xlu0 %2006
      %2008 = vrot.lane.b32.xlu0 %v1977, 12
      %v2009 = vpop.permute.xlu0 %2008
      %vm2026 = vcmask 130144
      %2027 = vst.msk [vmem:[#allocation3] sm:$0xff] %vm2026, %v1979
      %2028 = vst.msk [vmem:[#allocation3 + $0x8] sm:$0xff] %vm2026, %v1981
      %2029 = vst.msk [vmem:[#allocation3 + $0x10] sm:$0xff] %vm2026, %v1983
      %2030 = vst.msk [vmem:[#allocation3 + $0x18] sm:$0xff] %vm2026, %v1985
      %2031 = vst.msk [vmem:[#allocation3 + $0x20] sm:$0xff] %vm2026, %v1987
      %2032 = vst.msk [vmem:[#allocation3 + $0x28] sm:$0xff] %vm2026, %v1989
      %2033 = vst.msk [vmem:[#allocation3 + $0x30] sm:$0xff] %vm2026, %v1991
      %2034 = vst.msk [vmem:[#allocation3 + $0x38] sm:$0xff] %vm2026, %v1993
      %2035 = vst.msk [vmem:[#allocation3 + $0x40] sm:$0xff] %vm2026, %v1995
      %2036 = vst.msk [vmem:[#allocation3 + $0x48] sm:$0xff] %vm2026, %v1997
      %2037 = vst.msk [vmem:[#allocation3 + $0x50] sm:$0xff] %vm2026, %v1999
      %2038 = vst.msk [vmem:[#allocation3 + $0x58] sm:$0xff] %vm2026, %v2001
      %2039 = vst.msk [vmem:[#allocation3 + $0x60] sm:$0xff] %vm2026, %v2003
      %2040 = vst.msk [vmem:[#allocation3 + $0x68] sm:$0xff] %vm2026, %v2005
      %2041 = vst.msk [vmem:[#allocation3 + $0x70] sm:$0xff] %vm2026, %v2007
      %2042 = vst.msk [vmem:[#allocation3 + $0x78] sm:$0xff] %vm2026, %v2009
      %v2043 = vld [vmem:[%s279] sm:$0xf]
      %v2044 = vld [vmem:[%s279 + $0x4] sm:$0xf]
      %v2045 = vld [vmem:[%s279 + $0x8] sm:$0x1]
      %v2046 = vld [vmem:[%s279 + $0xc] sm:$0xf]
      %v2047 = vld [vmem:[%s279 + $0x10] sm:$0xf]
      %v2048 = vld [vmem:[%s279 + $0x14] sm:$0x1]
      %v2049 = vld [vmem:[%s279 + $0x18] sm:$0xf]
      %v2050 = vld [vmem:[%s279 + $0x1c] sm:$0xf]
      %v2051 = vld [vmem:[%s279 + $0x20] sm:$0x1]
      %v2052 = vld [vmem:[%s279 + $0x24] sm:$0xf]
      %v2053 = vld [vmem:[%s279 + $0x28] sm:$0xf]
      %v2054 = vld [vmem:[%s279 + $0x2c] sm:$0x1]
      %v2055 = vld [vmem:[%s279 + $0x30] sm:$0xf]
      %v2056 = vld [vmem:[%s279 + $0x34] sm:$0xf]
      %v2057 = vld [vmem:[%s279 + $0x38] sm:$0x1]
      %v2058 = vld [vmem:[%s279 + $0x3c] sm:$0xf]
      %v2059 = vld [vmem:[%s279 + $0x40] sm:$0xf]
      %v2060 = vld [vmem:[%s279 + $0x44] sm:$0x1]
      %v2061 = vld [vmem:[%s279 + $0x48] sm:$0xf]
      %v2062 = vld [vmem:[%s279 + $0x4c] sm:$0xf]
      %v2063 = vld [vmem:[%s279 + $0x50] sm:$0x1]
      %v2064 = vld [vmem:[%s279 + $0x54] sm:$0xf]
      %v2065 = vld [vmem:[%s279 + $0x58] sm:$0xf]
      %v2066 = vld [vmem:[%s279 + $0x5c] sm:$0x1]
      %v2067 = vld [vmem:[%s279 + $0x60] sm:$0xf]
      %v2068 = vld [vmem:[%s279 + $0x64] sm:$0xf]
      %v2069 = vld [vmem:[%s279 + $0x68] sm:$0x1]
      %v2070 = vld [vmem:[%s279 + $0x6c] sm:$0xf]
      %v2071 = vld [vmem:[%s279 + $0x70] sm:$0xf]
      %v2072 = vld [vmem:[%s279 + $0x74] sm:$0x1]
      %v2073 = vld [vmem:[%s279 + $0x78] sm:$0xf]
      %v2074 = vld [vmem:[%s279 + $0x7c] sm:$0xf]
      %v2075 = vld [vmem:[%s279 + $0x80] sm:$0x1]
      %v2076 = vld [vmem:[%s279 + $0x84] sm:$0xf]
      %v2077 = vld [vmem:[%s279 + $0x88] sm:$0xf]
      %v2078 = vld [vmem:[%s279 + $0x8c] sm:$0x1]
      %v2079 = vld [vmem:[%s279 + $0x90] sm:$0xf]
      %v2080 = vld [vmem:[%s279 + $0x94] sm:$0xf]
      %v2081 = vld [vmem:[%s279 + $0x98] sm:$0x1]
      %v2082 = vld [vmem:[%s279 + $0x9c] sm:$0xf]
      %v2083 = vld [vmem:[%s279 + $0xa0] sm:$0xf]
      %v2084 = vld [vmem:[%s279 + $0xa4] sm:$0x1]
      %v2085 = vld [vmem:[%s279 + $0xa8] sm:$0xf]
      %v2086 = vld [vmem:[%s279 + $0xac] sm:$0xf]
      %v2087 = vld [vmem:[%s279 + $0xb0] sm:$0x1]
      %v2088 = vld [vmem:[%s279 + $0xb4] sm:$0xf]
      %v2089 = vld [vmem:[%s279 + $0xb8] sm:$0xf]
      %v2090 = vld [vmem:[%s279 + $0xbc] sm:$0x1]
      %v2092 = vshrl.u32 %v2043, 16
      %v2094 = vrot.slane %v2092, 4
      %v2095 = vshll.u32 %v2043, 16
      %v2097 = vrot.slane %v2095, 5
      %v2098 = vor.u32 %v2094, %v2097
      %v2099 = vrot.slane %v2098, 4
      %v2101 = vshll.u32 %v2044, 16
      %v2103 = vrot.slane %v2101, 5
      %v2104 = vsel %vm1044, %v2099, %v2103
      %v2105 = vshrl.u32 %v2044, 16
      %v2107 = vrot.slane %v2105, 4
      %v2108 = vor.u32 %v2107, %v2103
      %v2109 = vrot.slane %v2108, 4
      %v2111 = vshll.u32 %v2045, 16
      %v2113 = vrot.slane %v2111, 5
      %v2114 = vsel %vm1044, %v2109, %v2113
      %v2116 = vshrl.u32 %v2046, 16
      %v2118 = vrot.slane %v2116, 4
      %v2119 = vshll.u32 %v2046, 16
      %v2121 = vrot.slane %v2119, 5
      %v2122 = vor.u32 %v2118, %v2121
      %v2123 = vrot.slane %v2122, 4
      %v2125 = vshll.u32 %v2047, 16
      %v2127 = vrot.slane %v2125, 5
      %v2128 = vsel %vm1044, %v2123, %v2127
      %v2129 = vshrl.u32 %v2047, 16
      %v2131 = vrot.slane %v2129, 4
      %v2132 = vor.u32 %v2131, %v2127
      %v2133 = vrot.slane %v2132, 4
      %v2135 = vshll.u32 %v2048, 16
      %v2137 = vrot.slane %v2135, 5
      %v2138 = vsel %vm1044, %v2133, %v2137
      %v2140 = vshrl.u32 %v2049, 16
      %v2142 = vrot.slane %v2140, 4
      %v2143 = vshll.u32 %v2049, 16
      %v2145 = vrot.slane %v2143, 5
      %v2146 = vor.u32 %v2142, %v2145
      %v2147 = vrot.slane %v2146, 4
      %v2149 = vshll.u32 %v2050, 16
      %v2151 = vrot.slane %v2149, 5
      %v2152 = vsel %vm1044, %v2147, %v2151
      %v2153 = vshrl.u32 %v2050, 16
      %v2155 = vrot.slane %v2153, 4
      %v2156 = vor.u32 %v2155, %v2151
      %v2157 = vrot.slane %v2156, 4
      %v2159 = vshll.u32 %v2051, 16
      %v2161 = vrot.slane %v2159, 5
      %v2162 = vsel %vm1044, %v2157, %v2161
      %v2164 = vshrl.u32 %v2052, 16
      %v2166 = vrot.slane %v2164, 4
      %v2167 = vshll.u32 %v2052, 16
      %v2169 = vrot.slane %v2167, 5
      %v2170 = vor.u32 %v2166, %v2169
      %v2171 = vrot.slane %v2170, 4
      %v2173 = vshll.u32 %v2053, 16
      %v2175 = vrot.slane %v2173, 5
      %v2176 = vsel %vm1044, %v2171, %v2175
      %v2177 = vshrl.u32 %v2053, 16
      %v2179 = vrot.slane %v2177, 4
      %v2180 = vor.u32 %v2179, %v2175
      %v2181 = vrot.slane %v2180, 4
      %v2183 = vshll.u32 %v2054, 16
      %v2185 = vrot.slane %v2183, 5
      %v2186 = vsel %vm1044, %v2181, %v2185
      %v2188 = vshrl.u32 %v2055, 16
      %v2190 = vrot.slane %v2188, 4
      %v2191 = vshll.u32 %v2055, 16
      %v2193 = vrot.slane %v2191, 5
      %v2194 = vor.u32 %v2190, %v2193
      %v2195 = vrot.slane %v2194, 4
      %v2197 = vshll.u32 %v2056, 16
      %v2199 = vrot.slane %v2197, 5
      %v2200 = vsel %vm1044, %v2195, %v2199
      %v2201 = vshrl.u32 %v2056, 16
      %v2203 = vrot.slane %v2201, 4
      %v2204 = vor.u32 %v2203, %v2199
      %v2205 = vrot.slane %v2204, 4
      %v2207 = vshll.u32 %v2057, 16
      %v2209 = vrot.slane %v2207, 5
      %v2210 = vsel %vm1044, %v2205, %v2209
      %v2212 = vshrl.u32 %v2058, 16
      %v2214 = vrot.slane %v2212, 4
      %v2215 = vshll.u32 %v2058, 16
      %v2217 = vrot.slane %v2215, 5
      %v2218 = vor.u32 %v2214, %v2217
      %v2219 = vrot.slane %v2218, 4
      %v2221 = vshll.u32 %v2059, 16
      %v2223 = vrot.slane %v2221, 5
      %v2224 = vsel %vm1044, %v2219, %v2223
      %v2225 = vshrl.u32 %v2059, 16
      %v2227 = vrot.slane %v2225, 4
      %v2228 = vor.u32 %v2227, %v2223
      %v2229 = vrot.slane %v2228, 4
      %v2231 = vshll.u32 %v2060, 16
      %v2233 = vrot.slane %v2231, 5
      %v2234 = vsel %vm1044, %v2229, %v2233
      %v2236 = vshrl.u32 %v2061, 16
      %v2238 = vrot.slane %v2236, 4
      %v2239 = vshll.u32 %v2061, 16
      %v2241 = vrot.slane %v2239, 5
      %v2242 = vor.u32 %v2238, %v2241
      %v2243 = vrot.slane %v2242, 4
      %v2245 = vshll.u32 %v2062, 16
      %v2247 = vrot.slane %v2245, 5
      %v2248 = vsel %vm1044, %v2243, %v2247
      %v2249 = vshrl.u32 %v2062, 16
      %v2251 = vrot.slane %v2249, 4
      %v2252 = vor.u32 %v2251, %v2247
      %v2253 = vrot.slane %v2252, 4
      %v2255 = vshll.u32 %v2063, 16
      %v2257 = vrot.slane %v2255, 5
      %v2258 = vsel %vm1044, %v2253, %v2257
      %v2260 = vshrl.u32 %v2064, 16
      %v2262 = vrot.slane %v2260, 4
      %v2263 = vshll.u32 %v2064, 16
      %v2265 = vrot.slane %v2263, 5
      %v2266 = vor.u32 %v2262, %v2265
      %v2267 = vrot.slane %v2266, 4
      %v2269 = vshll.u32 %v2065, 16
      %v2271 = vrot.slane %v2269, 5
      %v2272 = vsel %vm1044, %v2267, %v2271
      %v2273 = vshrl.u32 %v2065, 16
      %v2275 = vrot.slane %v2273, 4
      %v2276 = vor.u32 %v2275, %v2271
      %v2277 = vrot.slane %v2276, 4
      %v2279 = vshll.u32 %v2066, 16
      %v2281 = vrot.slane %v2279, 5
      %v2282 = vsel %vm1044, %v2277, %v2281
      %v2284 = vshrl.u32 %v2067, 16
      %v2286 = vrot.slane %v2284, 4
      %v2287 = vshll.u32 %v2067, 16
      %v2289 = vrot.slane %v2287, 5
      %v2290 = vor.u32 %v2286, %v2289
      %v2291 = vrot.slane %v2290, 4
      %v2293 = vshll.u32 %v2068, 16
      %v2295 = vrot.slane %v2293, 5
      %v2296 = vsel %vm1044, %v2291, %v2295
      %v2297 = vshrl.u32 %v2068, 16
      %v2299 = vrot.slane %v2297, 4
      %v2300 = vor.u32 %v2299, %v2295
      %v2301 = vrot.slane %v2300, 4
      %v2303 = vshll.u32 %v2069, 16
      %v2305 = vrot.slane %v2303, 5
      %v2306 = vsel %vm1044, %v2301, %v2305
      %v2308 = vshrl.u32 %v2070, 16
      %v2310 = vrot.slane %v2308, 4
      %v2311 = vshll.u32 %v2070, 16
      %v2313 = vrot.slane %v2311, 5
      %v2314 = vor.u32 %v2310, %v2313
      %v2315 = vrot.slane %v2314, 4
      %v2317 = vshll.u32 %v2071, 16
      %v2319 = vrot.slane %v2317, 5
      %v2320 = vsel %vm1044, %v2315, %v2319
      %v2321 = vshrl.u32 %v2071, 16
      %v2323 = vrot.slane %v2321, 4
      %v2324 = vor.u32 %v2323, %v2319
      %v2325 = vrot.slane %v2324, 4
      %v2327 = vshll.u32 %v2072, 16
      %v2329 = vrot.slane %v2327, 5
      %v2330 = vsel %vm1044, %v2325, %v2329
      %v2332 = vshrl.u32 %v2073, 16
      %v2334 = vrot.slane %v2332, 4
      %v2335 = vshll.u32 %v2073, 16
      %v2337 = vrot.slane %v2335, 5
      %v2338 = vor.u32 %v2334, %v2337
      %v2339 = vrot.slane %v2338, 4
      %v2341 = vshll.u32 %v2074, 16
      %v2343 = vrot.slane %v2341, 5
      %v2344 = vsel %vm1044, %v2339, %v2343
      %v2345 = vshrl.u32 %v2074, 16
      %v2347 = vrot.slane %v2345, 4
      %v2348 = vor.u32 %v2347, %v2343
      %v2349 = vrot.slane %v2348, 4
      %v2351 = vshll.u32 %v2075, 16
      %v2353 = vrot.slane %v2351, 5
      %v2354 = vsel %vm1044, %v2349, %v2353
      %v2356 = vshrl.u32 %v2076, 16
      %v2358 = vrot.slane %v2356, 4
      %v2359 = vshll.u32 %v2076, 16
      %v2361 = vrot.slane %v2359, 5
      %v2362 = vor.u32 %v2358, %v2361
      %v2363 = vrot.slane %v2362, 4
      %v2365 = vshll.u32 %v2077, 16
      %v2367 = vrot.slane %v2365, 5
      %v2368 = vsel %vm1044, %v2363, %v2367
      %v2369 = vshrl.u32 %v2077, 16
      %v2371 = vrot.slane %v2369, 4
      %v2372 = vor.u32 %v2371, %v2367
      %v2373 = vrot.slane %v2372, 4
      %v2375 = vshll.u32 %v2078, 16
      %v2377 = vrot.slane %v2375, 5
      %v2378 = vsel %vm1044, %v2373, %v2377
      %v2380 = vshrl.u32 %v2079, 16
      %v2382 = vrot.slane %v2380, 4
      %v2383 = vshll.u32 %v2079, 16
      %v2385 = vrot.slane %v2383, 5
      %v2386 = vor.u32 %v2382, %v2385
      %v2387 = vrot.slane %v2386, 4
      %v2389 = vshll.u32 %v2080, 16
      %v2391 = vrot.slane %v2389, 5
      %v2392 = vsel %vm1044, %v2387, %v2391
      %v2393 = vshrl.u32 %v2080, 16
      %v2395 = vrot.slane %v2393, 4
      %v2396 = vor.u32 %v2395, %v2391
      %v2397 = vrot.slane %v2396, 4
      %v2399 = vshll.u32 %v2081, 16
      %v2401 = vrot.slane %v2399, 5
      %v2402 = vsel %vm1044, %v2397, %v2401
      %v2404 = vshrl.u32 %v2082, 16
      %v2406 = vrot.slane %v2404, 4
      %v2407 = vshll.u32 %v2082, 16
      %v2409 = vrot.slane %v2407, 5
      %v2410 = vor.u32 %v2406, %v2409
      %v2411 = vrot.slane %v2410, 4
      %v2413 = vshll.u32 %v2083, 16
      %v2415 = vrot.slane %v2413, 5
      %v2416 = vsel %vm1044, %v2411, %v2415
      %v2417 = vshrl.u32 %v2083, 16
      %v2419 = vrot.slane %v2417, 4
      %v2420 = vor.u32 %v2419, %v2415
      %v2421 = vrot.slane %v2420, 4
      %v2423 = vshll.u32 %v2084, 16
      %v2425 = vrot.slane %v2423, 5
      %v2426 = vsel %vm1044, %v2421, %v2425
      %v2428 = vshrl.u32 %v2085, 16
      %v2430 = vrot.slane %v2428, 4
      %v2431 = vshll.u32 %v2085, 16
      %v2433 = vrot.slane %v2431, 5
      %v2434 = vor.u32 %v2430, %v2433
      %v2435 = vrot.slane %v2434, 4
      %v2437 = vshll.u32 %v2086, 16
      %v2439 = vrot.slane %v2437, 5
      %v2440 = vsel %vm1044, %v2435, %v2439
      %v2441 = vshrl.u32 %v2086, 16
      %v2443 = vrot.slane %v2441, 4
      %v2444 = vor.u32 %v2443, %v2439
      %v2445 = vrot.slane %v2444, 4
      %v2447 = vshll.u32 %v2087, 16
      %v2449 = vrot.slane %v2447, 5
      %v2450 = vsel %vm1044, %v2445, %v2449
      %v2452 = vshrl.u32 %v2088, 16
      %v2454 = vrot.slane %v2452, 4
      %v2455 = vshll.u32 %v2088, 16
      %v2457 = vrot.slane %v2455, 5
      %v2458 = vor.u32 %v2454, %v2457
      %v2459 = vrot.slane %v2458, 4
      %v2461 = vshll.u32 %v2089, 16
      %v2463 = vrot.slane %v2461, 5
      %v2464 = vsel %vm1044, %v2459, %v2463
      %v2465 = vshrl.u32 %v2089, 16
      %v2467 = vrot.slane %v2465, 4
      %v2468 = vor.u32 %v2467, %v2463
      %v2469 = vrot.slane %v2468, 4
      %v2471 = vshll.u32 %v2090, 16
      %v2473 = vrot.slane %v2471, 5
      %v2474 = vsel %vm1044, %v2469, %v2473
      %v2475 = vunpack.c.l.b16 %v2104
      %v2476 = vunpack.c.l.b16 %v2114
      %v2477 = vunpack.c.l.b16 %v2128
      %v2478 = vunpack.c.l.b16 %v2138
      %v2479 = vunpack.c.l.b16 %v2152
      %v2480 = vunpack.c.l.b16 %v2162
      %v2481 = vunpack.c.l.b16 %v2176
      %v2482 = vunpack.c.l.b16 %v2186
      %v2483 = vunpack.c.l.b16 %v2200
      %v2484 = vunpack.c.l.b16 %v2210
      %v2485 = vunpack.c.l.b16 %v2224
      %v2486 = vunpack.c.l.b16 %v2234
      %v2487 = vunpack.c.l.b16 %v2248
      %v2488 = vunpack.c.l.b16 %v2258
      %v2489 = vunpack.c.l.b16 %v2272
      %v2490 = vunpack.c.l.b16 %v2282
      %v2491 = vunpack.c.l.b16 %v2296
      %v2492 = vunpack.c.l.b16 %v2306
      %v2493 = vunpack.c.l.b16 %v2320
      %v2494 = vunpack.c.l.b16 %v2330
      %v2495 = vunpack.c.l.b16 %v2344
      %v2496 = vunpack.c.l.b16 %v2354
      %v2497 = vunpack.c.l.b16 %v2368
      %v2498 = vunpack.c.l.b16 %v2378
      %v2499 = vunpack.c.l.b16 %v2392
      %v2500 = vunpack.c.l.b16 %v2402
      %v2501 = vunpack.c.l.b16 %v2416
      %v2502 = vunpack.c.l.b16 %v2426
      %v2503 = vunpack.c.l.b16 %v2440
      %v2504 = vunpack.c.l.b16 %v2450
      %v2505 = vunpack.c.l.b16 %v2464
      %v2506 = vunpack.c.l.b16 %v2474
      %v2507 = vpack.c.b16 %v2476, %v2475
      %v2508 = vpack.c.b16 %v2478, %v2477
      %v2509 = vpack.c.b16 %v2480, %v2479
      %v2510 = vpack.c.b16 %v2482, %v2481
      %v2511 = vpack.c.b16 %v2484, %v2483
      %v2512 = vpack.c.b16 %v2486, %v2485
      %v2513 = vpack.c.b16 %v2488, %v2487
      %v2514 = vpack.c.b16 %v2490, %v2489
      %v2515 = vpack.c.b16 %v2492, %v2491
      %v2516 = vpack.c.b16 %v2494, %v2493
      %v2517 = vpack.c.b16 %v2496, %v2495
      %v2518 = vpack.c.b16 %v2498, %v2497
      %v2519 = vpack.c.b16 %v2500, %v2499
      %v2520 = vpack.c.b16 %v2502, %v2501
      %v2521 = vpack.c.b16 %v2504, %v2503
      %v2522 = vpack.c.b16 %v2506, %v2505
      %2523 = vrot.lane.b32.xlu0 %v2507, 16
      %v2524 = vpop.permute.xlu0 %2523
      %2525 = vrot.lane.b32.xlu0 %v2508, 16
      %v2526 = vpop.permute.xlu0 %2525
      %2527 = vrot.lane.b32.xlu0 %v2509, 16
      %v2528 = vpop.permute.xlu0 %2527
      %2529 = vrot.lane.b32.xlu0 %v2510, 16
      %v2530 = vpop.permute.xlu0 %2529
      %2531 = vrot.lane.b32.xlu0 %v2511, 16
      %v2532 = vpop.permute.xlu0 %2531
      %2533 = vrot.lane.b32.xlu0 %v2512, 16
      %v2534 = vpop.permute.xlu0 %2533
      %2535 = vrot.lane.b32.xlu0 %v2513, 16
      %v2536 = vpop.permute.xlu0 %2535
      %2537 = vrot.lane.b32.xlu0 %v2514, 16
      %v2538 = vpop.permute.xlu0 %2537
      %2539 = vrot.lane.b32.xlu0 %v2515, 16
      %v2540 = vpop.permute.xlu0 %2539
      %2541 = vrot.lane.b32.xlu0 %v2516, 16
      %v2542 = vpop.permute.xlu0 %2541
      %2543 = vrot.lane.b32.xlu0 %v2517, 16
      %v2544 = vpop.permute.xlu0 %2543
      %2545 = vrot.lane.b32.xlu0 %v2518, 16
      %v2546 = vpop.permute.xlu0 %2545
      %2547 = vrot.lane.b32.xlu0 %v2519, 16
      %v2548 = vpop.permute.xlu0 %2547
      %2549 = vrot.lane.b32.xlu0 %v2520, 16
      %v2550 = vpop.permute.xlu0 %2549
      %2551 = vrot.lane.b32.xlu0 %v2521, 16
      %v2552 = vpop.permute.xlu0 %2551
      %2553 = vrot.lane.b32.xlu0 %v2522, 16
      %v2554 = vpop.permute.xlu0 %2553
      %vm2571 = vcmask 162944
      %2572 = vst.msk [vmem:[#allocation3] sm:$0xff] %vm2571, %v2524
      %2573 = vst.msk [vmem:[#allocation3 + $0x8] sm:$0xff] %vm2571, %v2526
      %2574 = vst.msk [vmem:[#allocation3 + $0x10] sm:$0xff] %vm2571, %v2528
      %2575 = vst.msk [vmem:[#allocation3 + $0x18] sm:$0xff] %vm2571, %v2530
      %2576 = vst.msk [vmem:[#allocation3 + $0x20] sm:$0xff] %vm2571, %v2532
      %2577 = vst.msk [vmem:[#allocation3 + $0x28] sm:$0xff] %vm2571, %v2534
      %2578 = vst.msk [vmem:[#allocation3 + $0x30] sm:$0xff] %vm2571, %v2536
      %2579 = vst.msk [vmem:[#allocation3 + $0x38] sm:$0xff] %vm2571, %v2538
      %2580 = vst.msk [vmem:[#allocation3 + $0x40] sm:$0xff] %vm2571, %v2540
      %2581 = vst.msk [vmem:[#allocation3 + $0x48] sm:$0xff] %vm2571, %v2542
      %2582 = vst.msk [vmem:[#allocation3 + $0x50] sm:$0xff] %vm2571, %v2544
      %2583 = vst.msk [vmem:[#allocation3 + $0x58] sm:$0xff] %vm2571, %v2546
      %2584 = vst.msk [vmem:[#allocation3 + $0x60] sm:$0xff] %vm2571, %v2548
      %2585 = vst.msk [vmem:[#allocation3 + $0x68] sm:$0xff] %vm2571, %v2550
      %2586 = vst.msk [vmem:[#allocation3 + $0x70] sm:$0xff] %vm2571, %v2552
      %2587 = vst.msk [vmem:[#allocation3 + $0x78] sm:$0xff] %vm2571, %v2554
      %v2588 = vld [vmem:[%s279] sm:$0xe]
      %v2589 = vld [vmem:[%s279 + $0x4] sm:$0xf]
      %v2590 = vld [vmem:[%s279 + $0x8] sm:$0x1]
      %v2591 = vld [vmem:[%s279 + $0xc] sm:$0xe]
      %v2592 = vld [vmem:[%s279 + $0x10] sm:$0xf]
      %v2593 = vld [vmem:[%s279 + $0x14] sm:$0x1]
      %v2594 = vld [vmem:[%s279 + $0x18] sm:$0xe]
      %v2595 = vld [vmem:[%s279 + $0x1c] sm:$0xf]
      %v2596 = vld [vmem:[%s279 + $0x20] sm:$0x1]
      %v2597 = vld [vmem:[%s279 + $0x24] sm:$0xe]
      %v2598 = vld [vmem:[%s279 + $0x28] sm:$0xf]
      %v2599 = vld [vmem:[%s279 + $0x2c] sm:$0x1]
      %v2600 = vld [vmem:[%s279 + $0x30] sm:$0xe]
      %v2601 = vld [vmem:[%s279 + $0x34] sm:$0xf]
      %v2602 = vld [vmem:[%s279 + $0x38] sm:$0x1]
      %v2603 = vld [vmem:[%s279 + $0x3c] sm:$0xe]
      %v2604 = vld [vmem:[%s279 + $0x40] sm:$0xf]
      %v2605 = vld [vmem:[%s279 + $0x44] sm:$0x1]
      %v2606 = vld [vmem:[%s279 + $0x48] sm:$0xe]
      %v2607 = vld [vmem:[%s279 + $0x4c] sm:$0xf]
      %v2608 = vld [vmem:[%s279 + $0x50] sm:$0x1]
      %v2609 = vld [vmem:[%s279 + $0x54] sm:$0xe]
      %v2610 = vld [vmem:[%s279 + $0x58] sm:$0xf]
      %v2611 = vld [vmem:[%s279 + $0x5c] sm:$0x1]
      %v2612 = vld [vmem:[%s279 + $0x60] sm:$0xe]
      %v2613 = vld [vmem:[%s279 + $0x64] sm:$0xf]
      %v2614 = vld [vmem:[%s279 + $0x68] sm:$0x1]
      %v2615 = vld [vmem:[%s279 + $0x6c] sm:$0xe]
      %v2616 = vld [vmem:[%s279 + $0x70] sm:$0xf]
      %v2617 = vld [vmem:[%s279 + $0x74] sm:$0x1]
      %v2618 = vld [vmem:[%s279 + $0x78] sm:$0xe]
      %v2619 = vld [vmem:[%s279 + $0x7c] sm:$0xf]
      %v2620 = vld [vmem:[%s279 + $0x80] sm:$0x1]
      %v2621 = vld [vmem:[%s279 + $0x84] sm:$0xe]
      %v2622 = vld [vmem:[%s279 + $0x88] sm:$0xf]
      %v2623 = vld [vmem:[%s279 + $0x8c] sm:$0x1]
      %v2624 = vld [vmem:[%s279 + $0x90] sm:$0xe]
      %v2625 = vld [vmem:[%s279 + $0x94] sm:$0xf]
      %v2626 = vld [vmem:[%s279 + $0x98] sm:$0x1]
      %v2627 = vld [vmem:[%s279 + $0x9c] sm:$0xe]
      %v2628 = vld [vmem:[%s279 + $0xa0] sm:$0xf]
      %v2629 = vld [vmem:[%s279 + $0xa4] sm:$0x1]
      %v2630 = vld [vmem:[%s279 + $0xa8] sm:$0xe]
      %v2631 = vld [vmem:[%s279 + $0xac] sm:$0xf]
      %v2632 = vld [vmem:[%s279 + $0xb0] sm:$0x1]
      %v2633 = vld [vmem:[%s279 + $0xb4] sm:$0xe]
      %v2634 = vld [vmem:[%s279 + $0xb8] sm:$0xf]
      %v2635 = vld [vmem:[%s279 + $0xbc] sm:$0x1]
      %v2684 = vrot.slane %v2588, 5
      %v2685 = vrot.slane %v2684, 4
      %v2686 = vrot.slane %v2589, 5
      %v2687 = vsel %vm1640, %v2685, %v2686
      %v2688 = vrot.slane %v2686, 4
      %v2689 = vrot.slane %v2590, 5
      %v2690 = vsel %vm1640, %v2688, %v2689
      %v2691 = vrot.slane %v2591, 5
      %v2692 = vrot.slane %v2691, 4
      %v2693 = vrot.slane %v2592, 5
      %v2694 = vsel %vm1640, %v2692, %v2693
      %v2695 = vrot.slane %v2693, 4
      %v2696 = vrot.slane %v2593, 5
      %v2697 = vsel %vm1640, %v2695, %v2696
      %v2698 = vrot.slane %v2594, 5
      %v2699 = vrot.slane %v2698, 4
      %v2700 = vrot.slane %v2595, 5
      %v2701 = vsel %vm1640, %v2699, %v2700
      %v2702 = vrot.slane %v2700, 4
      %v2703 = vrot.slane %v2596, 5
      %v2704 = vsel %vm1640, %v2702, %v2703
      %v2705 = vrot.slane %v2597, 5
      %v2706 = vrot.slane %v2705, 4
      %v2707 = vrot.slane %v2598, 5
      %v2708 = vsel %vm1640, %v2706, %v2707
      %v2709 = vrot.slane %v2707, 4
      %v2710 = vrot.slane %v2599, 5
      %v2711 = vsel %vm1640, %v2709, %v2710
      %v2712 = vrot.slane %v2600, 5
      %v2713 = vrot.slane %v2712, 4
      %v2714 = vrot.slane %v2601, 5
      %v2715 = vsel %vm1640, %v2713, %v2714
      %v2716 = vrot.slane %v2714, 4
      %v2717 = vrot.slane %v2602, 5
      %v2718 = vsel %vm1640, %v2716, %v2717
      %v2719 = vrot.slane %v2603, 5
      %v2720 = vrot.slane %v2719, 4
      %v2721 = vrot.slane %v2604, 5
      %v2722 = vsel %vm1640, %v2720, %v2721
      %v2723 = vrot.slane %v2721, 4
      %v2724 = vrot.slane %v2605, 5
      %v2725 = vsel %vm1640, %v2723, %v2724
      %v2726 = vrot.slane %v2606, 5
      %v2727 = vrot.slane %v2726, 4
      %v2728 = vrot.slane %v2607, 5
      %v2729 = vsel %vm1640, %v2727, %v2728
      %v2730 = vrot.slane %v2728, 4
      %v2731 = vrot.slane %v2608, 5
      %v2732 = vsel %vm1640, %v2730, %v2731
      %v2733 = vrot.slane %v2609, 5
      %v2734 = vrot.slane %v2733, 4
      %v2735 = vrot.slane %v2610, 5
      %v2736 = vsel %vm1640, %v2734, %v2735
      %v2737 = vrot.slane %v2735, 4
      %v2738 = vrot.slane %v2611, 5
      %v2739 = vsel %vm1640, %v2737, %v2738
      %v2740 = vrot.slane %v2612, 5
      %v2741 = vrot.slane %v2740, 4
      %v2742 = vrot.slane %v2613, 5
      %v2743 = vsel %vm1640, %v2741, %v2742
      %v2744 = vrot.slane %v2742, 4
      %v2745 = vrot.slane %v2614, 5
      %v2746 = vsel %vm1640, %v2744, %v2745
      %v2747 = vrot.slane %v2615, 5
      %v2748 = vrot.slane %v2747, 4
      %v2749 = vrot.slane %v2616, 5
      %v2750 = vsel %vm1640, %v2748, %v2749
      %v2751 = vrot.slane %v2749, 4
      %v2752 = vrot.slane %v2617, 5
      %v2753 = vsel %vm1640, %v2751, %v2752
      %v2754 = vrot.slane %v2618, 5
      %v2755 = vrot.slane %v2754, 4
      %v2756 = vrot.slane %v2619, 5
      %v2757 = vsel %vm1640, %v2755, %v2756
      %v2758 = vrot.slane %v2756, 4
      %v2759 = vrot.slane %v2620, 5
      %v2760 = vsel %vm1640, %v2758, %v2759
      %v2761 = vrot.slane %v2621, 5
      %v2762 = vrot.slane %v2761, 4
      %v2763 = vrot.slane %v2622, 5
      %v2764 = vsel %vm1640, %v2762, %v2763
      %v2765 = vrot.slane %v2763, 4
      %v2766 = vrot.slane %v2623, 5
      %v2767 = vsel %vm1640, %v2765, %v2766
      %v2768 = vrot.slane %v2624, 5
      %v2769 = vrot.slane %v2768, 4
      %v2770 = vrot.slane %v2625, 5
      %v2771 = vsel %vm1640, %v2769, %v2770
      %v2772 = vrot.slane %v2770, 4
      %v2773 = vrot.slane %v2626, 5
      %v2774 = vsel %vm1640, %v2772, %v2773
      %v2775 = vrot.slane %v2627, 5
      %v2776 = vrot.slane %v2775, 4
      %v2777 = vrot.slane %v2628, 5
      %v2778 = vsel %vm1640, %v2776, %v2777
      %v2779 = vrot.slane %v2777, 4
      %v2780 = vrot.slane %v2629, 5
      %v2781 = vsel %vm1640, %v2779, %v2780
      %v2782 = vrot.slane %v2630, 5
      %v2783 = vrot.slane %v2782, 4
      %v2784 = vrot.slane %v2631, 5
      %v2785 = vsel %vm1640, %v2783, %v2784
      %v2786 = vrot.slane %v2784, 4
      %v2787 = vrot.slane %v2632, 5
      %v2788 = vsel %vm1640, %v2786, %v2787
      %v2789 = vrot.slane %v2633, 5
      %v2790 = vrot.slane %v2789, 4
      %v2791 = vrot.slane %v2634, 5
      %v2792 = vsel %vm1640, %v2790, %v2791
      %v2793 = vrot.slane %v2791, 4
      %v2794 = vrot.slane %v2635, 5
      %v2795 = vsel %vm1640, %v2793, %v2794
      %v2796 = vunpack.c.l.b16 %v2687
      %v2797 = vunpack.c.l.b16 %v2690
      %v2798 = vunpack.c.l.b16 %v2694
      %v2799 = vunpack.c.l.b16 %v2697
      %v2800 = vunpack.c.l.b16 %v2701
      %v2801 = vunpack.c.l.b16 %v2704
      %v2802 = vunpack.c.l.b16 %v2708
      %v2803 = vunpack.c.l.b16 %v2711
      %v2804 = vunpack.c.l.b16 %v2715
      %v2805 = vunpack.c.l.b16 %v2718
      %v2806 = vunpack.c.l.b16 %v2722
      %v2807 = vunpack.c.l.b16 %v2725
      %v2808 = vunpack.c.l.b16 %v2729
      %v2809 = vunpack.c.l.b16 %v2732
      %v2810 = vunpack.c.l.b16 %v2736
      %v2811 = vunpack.c.l.b16 %v2739
      %v2812 = vunpack.c.l.b16 %v2743
      %v2813 = vunpack.c.l.b16 %v2746
      %v2814 = vunpack.c.l.b16 %v2750
      %v2815 = vunpack.c.l.b16 %v2753
      %v2816 = vunpack.c.l.b16 %v2757
      %v2817 = vunpack.c.l.b16 %v2760
      %v2818 = vunpack.c.l.b16 %v2764
      %v2819 = vunpack.c.l.b16 %v2767
      %v2820 = vunpack.c.l.b16 %v2771
      %v2821 = vunpack.c.l.b16 %v2774
      %v2822 = vunpack.c.l.b16 %v2778
      %v2823 = vunpack.c.l.b16 %v2781
      %v2824 = vunpack.c.l.b16 %v2785
      %v2825 = vunpack.c.l.b16 %v2788
      %v2826 = vunpack.c.l.b16 %v2792
      %v2827 = vunpack.c.l.b16 %v2795
      %v2828 = vpack.c.b16 %v2797, %v2796
      %v2829 = vpack.c.b16 %v2799, %v2798
      %v2830 = vpack.c.b16 %v2801, %v2800
      %v2831 = vpack.c.b16 %v2803, %v2802
      %v2832 = vpack.c.b16 %v2805, %v2804
      %v2833 = vpack.c.b16 %v2807, %v2806
      %v2834 = vpack.c.b16 %v2809, %v2808
      %v2835 = vpack.c.b16 %v2811, %v2810
      %v2836 = vpack.c.b16 %v2813, %v2812
      %v2837 = vpack.c.b16 %v2815, %v2814
      %v2838 = vpack.c.b16 %v2817, %v2816
      %v2839 = vpack.c.b16 %v2819, %v2818
      %v2840 = vpack.c.b16 %v2821, %v2820
      %v2841 = vpack.c.b16 %v2823, %v2822
      %v2842 = vpack.c.b16 %v2825, %v2824
      %v2843 = vpack.c.b16 %v2827, %v2826
      %2844 = vrot.lane.b32.xlu0 %v2828, 20
      %v2845 = vpop.permute.xlu0 %2844
      %2846 = vrot.lane.b32.xlu0 %v2829, 20
      %v2847 = vpop.permute.xlu0 %2846
      %2848 = vrot.lane.b32.xlu0 %v2830, 20
      %v2849 = vpop.permute.xlu0 %2848
      %2850 = vrot.lane.b32.xlu0 %v2831, 20
      %v2851 = vpop.permute.xlu0 %2850
      %2852 = vrot.lane.b32.xlu0 %v2832, 20
      %v2853 = vpop.permute.xlu0 %2852
      %2854 = vrot.lane.b32.xlu0 %v2833, 20
      %v2855 = vpop.permute.xlu0 %2854
      %2856 = vrot.lane.b32.xlu0 %v2834, 20
      %v2857 = vpop.permute.xlu0 %2856
      %2858 = vrot.lane.b32.xlu0 %v2835, 20
      %v2859 = vpop.permute.xlu0 %2858
      %2860 = vrot.lane.b32.xlu0 %v2836, 20
      %v2861 = vpop.permute.xlu0 %2860
      %2862 = vrot.lane.b32.xlu0 %v2837, 20
      %v2863 = vpop.permute.xlu0 %2862
      %2864 = vrot.lane.b32.xlu0 %v2838, 20
      %v2865 = vpop.permute.xlu0 %2864
      %2866 = vrot.lane.b32.xlu0 %v2839, 20
      %v2867 = vpop.permute.xlu0 %2866
      %2868 = vrot.lane.b32.xlu0 %v2840, 20
      %v2869 = vpop.permute.xlu0 %2868
      %2870 = vrot.lane.b32.xlu0 %v2841, 20
      %v2871 = vpop.permute.xlu0 %2870
      %2872 = vrot.lane.b32.xlu0 %v2842, 20
      %v2873 = vpop.permute.xlu0 %2872
      %2874 = vrot.lane.b32.xlu0 %v2843, 20
      %v2875 = vpop.permute.xlu0 %2874
      %vm2892 = vcmask 195744
      %2893 = vst.msk [vmem:[#allocation3] sm:$0xff] %vm2892, %v2845
      %2894 = vst.msk [vmem:[#allocation3 + $0x8] sm:$0xff] %vm2892, %v2847
      %2895 = vst.msk [vmem:[#allocation3 + $0x10] sm:$0xff] %vm2892, %v2849
      %2896 = vst.msk [vmem:[#allocation3 + $0x18] sm:$0xff] %vm2892, %v2851
      %2897 = vst.msk [vmem:[#allocation3 + $0x20] sm:$0xff] %vm2892, %v2853
      %2898 = vst.msk [vmem:[#allocation3 + $0x28] sm:$0xff] %vm2892, %v2855
      %2899 = vst.msk [vmem:[#allocation3 + $0x30] sm:$0xff] %vm2892, %v2857
      %2900 = vst.msk [vmem:[#allocation3 + $0x38] sm:$0xff] %vm2892, %v2859
      %2901 = vst.msk [vmem:[#allocation3 + $0x40] sm:$0xff] %vm2892, %v2861
      %2902 = vst.msk [vmem:[#allocation3 + $0x48] sm:$0xff] %vm2892, %v2863
      %2903 = vst.msk [vmem:[#allocation3 + $0x50] sm:$0xff] %vm2892, %v2865
      %2904 = vst.msk [vmem:[#allocation3 + $0x58] sm:$0xff] %vm2892, %v2867
      %2905 = vst.msk [vmem:[#allocation3 + $0x60] sm:$0xff] %vm2892, %v2869
      %2906 = vst.msk [vmem:[#allocation3 + $0x68] sm:$0xff] %vm2892, %v2871
      %2907 = vst.msk [vmem:[#allocation3 + $0x70] sm:$0xff] %vm2892, %v2873
      %2908 = vst.msk [vmem:[#allocation3 + $0x78] sm:$0xff] %vm2892, %v2875
      %s2909 = scalar_lea.vmem [#allocation2], 24
      %v2910 = vld [vmem:[%s2909] sm:$0xf]
      %v2911 = vld [vmem:[%s2909 + $0x4] sm:$0xf]
      %v2912 = vld [vmem:[%s2909 + $0xc] sm:$0xf]
      %v2913 = vld [vmem:[%s2909 + $0x10] sm:$0xf]
      %v2914 = vld [vmem:[%s2909 + $0x18] sm:$0xf]
      %v2915 = vld [vmem:[%s2909 + $0x1c] sm:$0xf]
      %v2916 = vld [vmem:[%s2909 + $0x24] sm:$0xf]
      %v2917 = vld [vmem:[%s2909 + $0x28] sm:$0xf]
      %v2918 = vld [vmem:[%s2909 + $0x30] sm:$0xf]
      %v2919 = vld [vmem:[%s2909 + $0x34] sm:$0xf]
      %v2920 = vld [vmem:[%s2909 + $0x3c] sm:$0xf]
      %v2921 = vld [vmem:[%s2909 + $0x40] sm:$0xf]
      %v2922 = vld [vmem:[%s2909 + $0x48] sm:$0xf]
      %v2923 = vld [vmem:[%s2909 + $0x4c] sm:$0xf]
      %v2924 = vld [vmem:[%s2909 + $0x54] sm:$0xf]
      %v2925 = vld [vmem:[%s2909 + $0x58] sm:$0xf]
      %v2926 = vld [vmem:[%s2909 + $0x60] sm:$0xf]
      %v2927 = vld [vmem:[%s2909 + $0x64] sm:$0xf]
      %v2928 = vld [vmem:[%s2909 + $0x6c] sm:$0xf]
      %v2929 = vld [vmem:[%s2909 + $0x70] sm:$0xf]
      %v2930 = vld [vmem:[%s2909 + $0x78] sm:$0xf]
      %v2931 = vld [vmem:[%s2909 + $0x7c] sm:$0xf]
      %v2932 = vld [vmem:[%s2909 + $0x84] sm:$0xf]
      %v2933 = vld [vmem:[%s2909 + $0x88] sm:$0xf]
      %v2934 = vld [vmem:[%s2909 + $0x90] sm:$0xf]
      %v2935 = vld [vmem:[%s2909 + $0x94] sm:$0xf]
      %v2936 = vld [vmem:[%s2909 + $0x9c] sm:$0xf]
      %v2937 = vld [vmem:[%s2909 + $0xa0] sm:$0xf]
      %v2938 = vld [vmem:[%s2909 + $0xa8] sm:$0xf]
      %v2939 = vld [vmem:[%s2909 + $0xac] sm:$0xf]
      %v2940 = vld [vmem:[%s2909 + $0xb4] sm:$0xf]
      %v2941 = vld [vmem:[%s2909 + $0xb8] sm:$0xf]
      %v2974 = vunpack.c.l.b16 %v2910
      %v2975 = vunpack.c.l.b16 %v2911
      %v2976 = vunpack.c.l.b16 %v2912
      %v2977 = vunpack.c.l.b16 %v2913
      %v2978 = vunpack.c.l.b16 %v2914
      %v2979 = vunpack.c.l.b16 %v2915
      %v2980 = vunpack.c.l.b16 %v2916
      %v2981 = vunpack.c.l.b16 %v2917
      %v2982 = vunpack.c.l.b16 %v2918
      %v2983 = vunpack.c.l.b16 %v2919
      %v2984 = vunpack.c.l.b16 %v2920
      %v2985 = vunpack.c.l.b16 %v2921
      %v2986 = vunpack.c.l.b16 %v2922
      %v2987 = vunpack.c.l.b16 %v2923
      %v2988 = vunpack.c.l.b16 %v2924
      %v2989 = vunpack.c.l.b16 %v2925
      %v2990 = vunpack.c.l.b16 %v2926
      %v2991 = vunpack.c.l.b16 %v2927
      %v2992 = vunpack.c.l.b16 %v2928
      %v2993 = vunpack.c.l.b16 %v2929
      %v2994 = vunpack.c.l.b16 %v2930
      %v2995 = vunpack.c.l.b16 %v2931
      %v2996 = vunpack.c.l.b16 %v2932
      %v2997 = vunpack.c.l.b16 %v2933
      %v2998 = vunpack.c.l.b16 %v2934
      %v2999 = vunpack.c.l.b16 %v2935
      %v3000 = vunpack.c.l.b16 %v2936
      %v3001 = vunpack.c.l.b16 %v2937
      %v3002 = vunpack.c.l.b16 %v2938
      %v3003 = vunpack.c.l.b16 %v2939
      %v3004 = vunpack.c.l.b16 %v2940
      %v3005 = vunpack.c.l.b16 %v2941
      %v3006 = vpack.c.b16 %v2975, %v2974
      %v3007 = vpack.c.b16 %v2977, %v2976
      %v3008 = vpack.c.b16 %v2979, %v2978
      %v3009 = vpack.c.b16 %v2981, %v2980
      %v3010 = vpack.c.b16 %v2983, %v2982
      %v3011 = vpack.c.b16 %v2985, %v2984
      %v3012 = vpack.c.b16 %v2987, %v2986
      %v3013 = vpack.c.b16 %v2989, %v2988
      %v3014 = vpack.c.b16 %v2991, %v2990
      %v3015 = vpack.c.b16 %v2993, %v2992
      %v3016 = vpack.c.b16 %v2995, %v2994
      %v3017 = vpack.c.b16 %v2997, %v2996
      %v3018 = vpack.c.b16 %v2999, %v2998
      %v3019 = vpack.c.b16 %v3001, %v3000
      %v3020 = vpack.c.b16 %v3003, %v3002
      %v3021 = vpack.c.b16 %v3005, %v3004
      %3022 = vrot.lane.b32.xlu0 %v3006, 24
      %v3023 = vpop.permute.xlu0 %3022
      %3024 = vrot.lane.b32.xlu0 %v3007, 24
      %v3025 = vpop.permute.xlu0 %3024
      %3026 = vrot.lane.b32.xlu0 %v3008, 24
      %v3027 = vpop.permute.xlu0 %3026
      %3028 = vrot.lane.b32.xlu0 %v3009, 24
      %v3029 = vpop.permute.xlu0 %3028
      %3030 = vrot.lane.b32.xlu0 %v3010, 24
      %v3031 = vpop.permute.xlu0 %3030
      %3032 = vrot.lane.b32.xlu0 %v3011, 24
      %v3033 = vpop.permute.xlu0 %3032
      %3034 = vrot.lane.b32.xlu0 %v3012, 24
      %v3035 = vpop.permute.xlu0 %3034
      %3036 = vrot.lane.b32.xlu0 %v3013, 24
      %v3037 = vpop.permute.xlu0 %3036
      %3038 = vrot.lane.b32.xlu0 %v3014, 24
      %v3039 = vpop.permute.xlu0 %3038
      %3040 = vrot.lane.b32.xlu0 %v3015, 24
      %v3041 = vpop.permute.xlu0 %3040
      %3042 = vrot.lane.b32.xlu0 %v3016, 24
      %v3043 = vpop.permute.xlu0 %3042
      %3044 = vrot.lane.b32.xlu0 %v3017, 24
      %v3045 = vpop.permute.xlu0 %3044
      %3046 = vrot.lane.b32.xlu0 %v3018, 24
      %v3047 = vpop.permute.xlu0 %3046
      %3048 = vrot.lane.b32.xlu0 %v3019, 24
      %v3049 = vpop.permute.xlu0 %3048
      %3050 = vrot.lane.b32.xlu0 %v3020, 24
      %v3051 = vpop.permute.xlu0 %3050
      %3052 = vrot.lane.b32.xlu0 %v3021, 24
      %v3053 = vpop.permute.xlu0 %3052
      %vm3070 = vcmask 228544
      %3071 = vst.msk [vmem:[#allocation3] sm:$0xff] %vm3070, %v3023
      %3072 = vst.msk [vmem:[#allocation3 + $0x8] sm:$0xff] %vm3070, %v3025
      %3073 = vst.msk [vmem:[#allocation3 + $0x10] sm:$0xff] %vm3070, %v3027
      %3074 = vst.msk [vmem:[#allocation3 + $0x18] sm:$0xff] %vm3070, %v3029
      %3075 = vst.msk [vmem:[#allocation3 + $0x20] sm:$0xff] %vm3070, %v3031
      %3076 = vst.msk [vmem:[#allocation3 + $0x28] sm:$0xff] %vm3070, %v3033
      %3077 = vst.msk [vmem:[#allocation3 + $0x30] sm:$0xff] %vm3070, %v3035
      %3078 = vst.msk [vmem:[#allocation3 + $0x38] sm:$0xff] %vm3070, %v3037
      %3079 = vst.msk [vmem:[#allocation3 + $0x40] sm:$0xff] %vm3070, %v3039
      %3080 = vst.msk [vmem:[#allocation3 + $0x48] sm:$0xff] %vm3070, %v3041
      %3081 = vst.msk [vmem:[#allocation3 + $0x50] sm:$0xff] %vm3070, %v3043
      %3082 = vst.msk [vmem:[#allocation3 + $0x58] sm:$0xff] %vm3070, %v3045
      %3083 = vst.msk [vmem:[#allocation3 + $0x60] sm:$0xff] %vm3070, %v3047
      %3084 = vst.msk [vmem:[#allocation3 + $0x68] sm:$0xff] %vm3070, %v3049
      %3085 = vst.msk [vmem:[#allocation3 + $0x70] sm:$0xff] %vm3070, %v3051
      %3086 = vst.msk [vmem:[#allocation3 + $0x78] sm:$0xff] %vm3070, %v3053
      %v3087 = vld [vmem:[%s2909] sm:$0xf]
      %v3088 = vld [vmem:[%s2909 + $0x4] sm:$0xf]
      %v3089 = vld [vmem:[%s2909 + $0x8] sm:$0x1]
      %v3090 = vld [vmem:[%s2909 + $0xc] sm:$0xf]
      %v3091 = vld [vmem:[%s2909 + $0x10] sm:$0xf]
      %v3092 = vld [vmem:[%s2909 + $0x14] sm:$0x1]
      %v3093 = vld [vmem:[%s2909 + $0x18] sm:$0xf]
      %v3094 = vld [vmem:[%s2909 + $0x1c] sm:$0xf]
      %v3095 = vld [vmem:[%s2909 + $0x20] sm:$0x1]
      %v3096 = vld [vmem:[%s2909 + $0x24] sm:$0xf]
      %v3097 = vld [vmem:[%s2909 + $0x28] sm:$0xf]
      %v3098 = vld [vmem:[%s2909 + $0x2c] sm:$0x1]
      %v3099 = vld [vmem:[%s2909 + $0x30] sm:$0xf]
      %v3100 = vld [vmem:[%s2909 + $0x34] sm:$0xf]
      %v3101 = vld [vmem:[%s2909 + $0x38] sm:$0x1]
      %v3102 = vld [vmem:[%s2909 + $0x3c] sm:$0xf]
      %v3103 = vld [vmem:[%s2909 + $0x40] sm:$0xf]
      %v3104 = vld [vmem:[%s2909 + $0x44] sm:$0x1]
      %v3105 = vld [vmem:[%s2909 + $0x48] sm:$0xf]
      %v3106 = vld [vmem:[%s2909 + $0x4c] sm:$0xf]
      %v3107 = vld [vmem:[%s2909 + $0x50] sm:$0x1]
      %v3108 = vld [vmem:[%s2909 + $0x54] sm:$0xf]
      %v3109 = vld [vmem:[%s2909 + $0x58] sm:$0xf]
      %v3110 = vld [vmem:[%s2909 + $0x5c] sm:$0x1]
      %v3111 = vld [vmem:[%s2909 + $0x60] sm:$0xf]
      %v3112 = vld [vmem:[%s2909 + $0x64] sm:$0xf]
      %v3113 = vld [vmem:[%s2909 + $0x68] sm:$0x1]
      %v3114 = vld [vmem:[%s2909 + $0x6c] sm:$0xf]
      %v3115 = vld [vmem:[%s2909 + $0x70] sm:$0xf]
      %v3116 = vld [vmem:[%s2909 + $0x74] sm:$0x1]
      %v3117 = vld [vmem:[%s2909 + $0x78] sm:$0xf]
      %v3118 = vld [vmem:[%s2909 + $0x7c] sm:$0xf]
      %v3119 = vld [vmem:[%s2909 + $0x80] sm:$0x1]
      %v3120 = vld [vmem:[%s2909 + $0x84] sm:$0xf]
      %v3121 = vld [vmem:[%s2909 + $0x88] sm:$0xf]
      %v3122 = vld [vmem:[%s2909 + $0x8c] sm:$0x1]
      %v3123 = vld [vmem:[%s2909 + $0x90] sm:$0xf]
      %v3124 = vld [vmem:[%s2909 + $0x94] sm:$0xf]
      %v3125 = vld [vmem:[%s2909 + $0x98] sm:$0x1]
      %v3126 = vld [vmem:[%s2909 + $0x9c] sm:$0xf]
      %v3127 = vld [vmem:[%s2909 + $0xa0] sm:$0xf]
      %v3128 = vld [vmem:[%s2909 + $0xa4] sm:$0x1]
      %v3129 = vld [vmem:[%s2909 + $0xa8] sm:$0xf]
      %v3130 = vld [vmem:[%s2909 + $0xac] sm:$0xf]
      %v3131 = vld [vmem:[%s2909 + $0xb0] sm:$0x1]
      %v3132 = vld [vmem:[%s2909 + $0xb4] sm:$0xf]
      %v3133 = vld [vmem:[%s2909 + $0xb8] sm:$0xf]
      %v3134 = vld [vmem:[%s2909 + $0xbc] sm:$0x1]
      %v3136 = vshrl.u32 %v3087, 16
      %v3138 = vrot.slane %v3136, 4
      %v3139 = vshll.u32 %v3087, 16
      %v3141 = vrot.slane %v3139, 5
      %v3142 = vor.u32 %v3138, %v3141
      %v3143 = vrot.slane %v3142, 4
      %v3145 = vshll.u32 %v3088, 16
      %v3147 = vrot.slane %v3145, 5
      %v3148 = vsel %vm1044, %v3143, %v3147
      %v3149 = vshrl.u32 %v3088, 16
      %v3151 = vrot.slane %v3149, 4
      %v3152 = vor.u32 %v3151, %v3147
      %v3153 = vrot.slane %v3152, 4
      %v3155 = vshll.u32 %v3089, 16
      %v3157 = vrot.slane %v3155, 5
      %v3158 = vsel %vm1044, %v3153, %v3157
      %v3160 = vshrl.u32 %v3090, 16
      %v3162 = vrot.slane %v3160, 4
      %v3163 = vshll.u32 %v3090, 16
      %v3165 = vrot.slane %v3163, 5
      %v3166 = vor.u32 %v3162, %v3165
      %v3167 = vrot.slane %v3166, 4
      %v3169 = vshll.u32 %v3091, 16
      %v3171 = vrot.slane %v3169, 5
      %v3172 = vsel %vm1044, %v3167, %v3171
      %v3173 = vshrl.u32 %v3091, 16
      %v3175 = vrot.slane %v3173, 4
      %v3176 = vor.u32 %v3175, %v3171
      %v3177 = vrot.slane %v3176, 4
      %v3179 = vshll.u32 %v3092, 16
      %v3181 = vrot.slane %v3179, 5
      %v3182 = vsel %vm1044, %v3177, %v3181
      %v3184 = vshrl.u32 %v3093, 16
      %v3186 = vrot.slane %v3184, 4
      %v3187 = vshll.u32 %v3093, 16
      %v3189 = vrot.slane %v3187, 5
      %v3190 = vor.u32 %v3186, %v3189
      %v3191 = vrot.slane %v3190, 4
      %v3193 = vshll.u32 %v3094, 16
      %v3195 = vrot.slane %v3193, 5
      %v3196 = vsel %vm1044, %v3191, %v3195
      %v3197 = vshrl.u32 %v3094, 16
      %v3199 = vrot.slane %v3197, 4
      %v3200 = vor.u32 %v3199, %v3195
      %v3201 = vrot.slane %v3200, 4
      %v3203 = vshll.u32 %v3095, 16
      %v3205 = vrot.slane %v3203, 5
      %v3206 = vsel %vm1044, %v3201, %v3205
      %v3208 = vshrl.u32 %v3096, 16
      %v3210 = vrot.slane %v3208, 4
      %v3211 = vshll.u32 %v3096, 16
      %v3213 = vrot.slane %v3211, 5
      %v3214 = vor.u32 %v3210, %v3213
      %v3215 = vrot.slane %v3214, 4
      %v3217 = vshll.u32 %v3097, 16
      %v3219 = vrot.slane %v3217, 5
      %v3220 = vsel %vm1044, %v3215, %v3219
      %v3221 = vshrl.u32 %v3097, 16
      %v3223 = vrot.slane %v3221, 4
      %v3224 = vor.u32 %v3223, %v3219
      %v3225 = vrot.slane %v3224, 4
      %v3227 = vshll.u32 %v3098, 16
      %v3229 = vrot.slane %v3227, 5
      %v3230 = vsel %vm1044, %v3225, %v3229
      %v3232 = vshrl.u32 %v3099, 16
      %v3234 = vrot.slane %v3232, 4
      %v3235 = vshll.u32 %v3099, 16
      %v3237 = vrot.slane %v3235, 5
      %v3238 = vor.u32 %v3234, %v3237
      %v3239 = vrot.slane %v3238, 4
      %v3241 = vshll.u32 %v3100, 16
      %v3243 = vrot.slane %v3241, 5
      %v3244 = vsel %vm1044, %v3239, %v3243
      %v3245 = vshrl.u32 %v3100, 16
      %v3247 = vrot.slane %v3245, 4
      %v3248 = vor.u32 %v3247, %v3243
      %v3249 = vrot.slane %v3248, 4
      %v3251 = vshll.u32 %v3101, 16
      %v3253 = vrot.slane %v3251, 5
      %v3254 = vsel %vm1044, %v3249, %v3253
      %v3256 = vshrl.u32 %v3102, 16
      %v3258 = vrot.slane %v3256, 4
      %v3259 = vshll.u32 %v3102, 16
      %v3261 = vrot.slane %v3259, 5
      %v3262 = vor.u32 %v3258, %v3261
      %v3263 = vrot.slane %v3262, 4
      %v3265 = vshll.u32 %v3103, 16
      %v3267 = vrot.slane %v3265, 5
      %v3268 = vsel %vm1044, %v3263, %v3267
      %v3269 = vshrl.u32 %v3103, 16
      %v3271 = vrot.slane %v3269, 4
      %v3272 = vor.u32 %v3271, %v3267
      %v3273 = vrot.slane %v3272, 4
      %v3275 = vshll.u32 %v3104, 16
      %v3277 = vrot.slane %v3275, 5
      %v3278 = vsel %vm1044, %v3273, %v3277
      %v3280 = vshrl.u32 %v3105, 16
      %v3282 = vrot.slane %v3280, 4
      %v3283 = vshll.u32 %v3105, 16
      %v3285 = vrot.slane %v3283, 5
      %v3286 = vor.u32 %v3282, %v3285
      %v3287 = vrot.slane %v3286, 4
      %v3289 = vshll.u32 %v3106, 16
      %v3291 = vrot.slane %v3289, 5
      %v3292 = vsel %vm1044, %v3287, %v3291
      %v3293 = vshrl.u32 %v3106, 16
      %v3295 = vrot.slane %v3293, 4
      %v3296 = vor.u32 %v3295, %v3291
      %v3297 = vrot.slane %v3296, 4
      %v3299 = vshll.u32 %v3107, 16
      %v3301 = vrot.slane %v3299, 5
      %v3302 = vsel %vm1044, %v3297, %v3301
      %v3304 = vshrl.u32 %v3108, 16
      %v3306 = vrot.slane %v3304, 4
      %v3307 = vshll.u32 %v3108, 16
      %v3309 = vrot.slane %v3307, 5
      %v3310 = vor.u32 %v3306, %v3309
      %v3311 = vrot.slane %v3310, 4
      %v3313 = vshll.u32 %v3109, 16
      %v3315 = vrot.slane %v3313, 5
      %v3316 = vsel %vm1044, %v3311, %v3315
      %v3317 = vshrl.u32 %v3109, 16
      %v3319 = vrot.slane %v3317, 4
      %v3320 = vor.u32 %v3319, %v3315
      %v3321 = vrot.slane %v3320, 4
      %v3323 = vshll.u32 %v3110, 16
      %v3325 = vrot.slane %v3323, 5
      %v3326 = vsel %vm1044, %v3321, %v3325
      %v3328 = vshrl.u32 %v3111, 16
      %v3330 = vrot.slane %v3328, 4
      %v3331 = vshll.u32 %v3111, 16
      %v3333 = vrot.slane %v3331, 5
      %v3334 = vor.u32 %v3330, %v3333
      %v3335 = vrot.slane %v3334, 4
      %v3337 = vshll.u32 %v3112, 16
      %v3339 = vrot.slane %v3337, 5
      %v3340 = vsel %vm1044, %v3335, %v3339
      %v3341 = vshrl.u32 %v3112, 16
      %v3343 = vrot.slane %v3341, 4
      %v3344 = vor.u32 %v3343, %v3339
      %v3345 = vrot.slane %v3344, 4
      %v3347 = vshll.u32 %v3113, 16
      %v3349 = vrot.slane %v3347, 5
      %v3350 = vsel %vm1044, %v3345, %v3349
      %v3352 = vshrl.u32 %v3114, 16
      %v3354 = vrot.slane %v3352, 4
      %v3355 = vshll.u32 %v3114, 16
      %v3357 = vrot.slane %v3355, 5
      %v3358 = vor.u32 %v3354, %v3357
      %v3359 = vrot.slane %v3358, 4
      %v3361 = vshll.u32 %v3115, 16
      %v3363 = vrot.slane %v3361, 5
      %v3364 = vsel %vm1044, %v3359, %v3363
      %v3365 = vshrl.u32 %v3115, 16
      %v3367 = vrot.slane %v3365, 4
      %v3368 = vor.u32 %v3367, %v3363
      %v3369 = vrot.slane %v3368, 4
      %v3371 = vshll.u32 %v3116, 16
      %v3373 = vrot.slane %v3371, 5
      %v3374 = vsel %vm1044, %v3369, %v3373
      %v3376 = vshrl.u32 %v3117, 16
      %v3378 = vrot.slane %v3376, 4
      %v3379 = vshll.u32 %v3117, 16
      %v3381 = vrot.slane %v3379, 5
      %v3382 = vor.u32 %v3378, %v3381
      %v3383 = vrot.slane %v3382, 4
      %v3385 = vshll.u32 %v3118, 16
      %v3387 = vrot.slane %v3385, 5
      %v3388 = vsel %vm1044, %v3383, %v3387
      %v3389 = vshrl.u32 %v3118, 16
      %v3391 = vrot.slane %v3389, 4
      %v3392 = vor.u32 %v3391, %v3387
      %v3393 = vrot.slane %v3392, 4
      %v3395 = vshll.u32 %v3119, 16
      %v3397 = vrot.slane %v3395, 5
      %v3398 = vsel %vm1044, %v3393, %v3397
      %v3400 = vshrl.u32 %v3120, 16
      %v3402 = vrot.slane %v3400, 4
      %v3403 = vshll.u32 %v3120, 16
      %v3405 = vrot.slane %v3403, 5
      %v3406 = vor.u32 %v3402, %v3405
      %v3407 = vrot.slane %v3406, 4
      %v3409 = vshll.u32 %v3121, 16
      %v3411 = vrot.slane %v3409, 5
      %v3412 = vsel %vm1044, %v3407, %v3411
      %v3413 = vshrl.u32 %v3121, 16
      %v3415 = vrot.slane %v3413, 4
      %v3416 = vor.u32 %v3415, %v3411
      %v3417 = vrot.slane %v3416, 4
      %v3419 = vshll.u32 %v3122, 16
      %v3421 = vrot.slane %v3419, 5
      %v3422 = vsel %vm1044, %v3417, %v3421
      %v3424 = vshrl.u32 %v3123, 16
      %v3426 = vrot.slane %v3424, 4
      %v3427 = vshll.u32 %v3123, 16
      %v3429 = vrot.slane %v3427, 5
      %v3430 = vor.u32 %v3426, %v3429
      %v3431 = vrot.slane %v3430, 4
      %v3433 = vshll.u32 %v3124, 16
      %v3435 = vrot.slane %v3433, 5
      %v3436 = vsel %vm1044, %v3431, %v3435
      %v3437 = vshrl.u32 %v3124, 16
      %v3439 = vrot.slane %v3437, 4
      %v3440 = vor.u32 %v3439, %v3435
      %v3441 = vrot.slane %v3440, 4
      %v3443 = vshll.u32 %v3125, 16
      %v3445 = vrot.slane %v3443, 5
      %v3446 = vsel %vm1044, %v3441, %v3445
      %v3448 = vshrl.u32 %v3126, 16
      %v3450 = vrot.slane %v3448, 4
      %v3451 = vshll.u32 %v3126, 16
      %v3453 = vrot.slane %v3451, 5
      %v3454 = vor.u32 %v3450, %v3453
      %v3455 = vrot.slane %v3454, 4
      %v3457 = vshll.u32 %v3127, 16
      %v3459 = vrot.slane %v3457, 5
      %v3460 = vsel %vm1044, %v3455, %v3459
      %v3461 = vshrl.u32 %v3127, 16
      %v3463 = vrot.slane %v3461, 4
      %v3464 = vor.u32 %v3463, %v3459
      %v3465 = vrot.slane %v3464, 4
      %v3467 = vshll.u32 %v3128, 16
      %v3469 = vrot.slane %v3467, 5
      %v3470 = vsel %vm1044, %v3465, %v3469
      %v3472 = vshrl.u32 %v3129, 16
      %v3474 = vrot.slane %v3472, 4
      %v3475 = vshll.u32 %v3129, 16
      %v3477 = vrot.slane %v3475, 5
      %v3478 = vor.u32 %v3474, %v3477
      %v3479 = vrot.slane %v3478, 4
      %v3481 = vshll.u32 %v3130, 16
      %v3483 = vrot.slane %v3481, 5
      %v3484 = vsel %vm1044, %v3479, %v3483
      %v3485 = vshrl.u32 %v3130, 16
      %v3487 = vrot.slane %v3485, 4
      %v3488 = vor.u32 %v3487, %v3483
      %v3489 = vrot.slane %v3488, 4
      %v3491 = vshll.u32 %v3131, 16
      %v3493 = vrot.slane %v3491, 5
      %v3494 = vsel %vm1044, %v3489, %v3493
      %v3496 = vshrl.u32 %v3132, 16
      %v3498 = vrot.slane %v3496, 4
      %v3499 = vshll.u32 %v3132, 16
      %v3501 = vrot.slane %v3499, 5
      %v3502 = vor.u32 %v3498, %v3501
      %v3503 = vrot.slane %v3502, 4
      %v3505 = vshll.u32 %v3133, 16
      %v3507 = vrot.slane %v3505, 5
      %v3508 = vsel %vm1044, %v3503, %v3507
      %v3509 = vshrl.u32 %v3133, 16
      %v3511 = vrot.slane %v3509, 4
      %v3512 = vor.u32 %v3511, %v3507
      %v3513 = vrot.slane %v3512, 4
      %v3515 = vshll.u32 %v3134, 16
      %v3517 = vrot.slane %v3515, 5
      %v3518 = vsel %vm1044, %v3513, %v3517
      %v3519 = vunpack.c.l.b16 %v3148
      %v3520 = vunpack.c.l.b16 %v3158
      %v3521 = vunpack.c.l.b16 %v3172
      %v3522 = vunpack.c.l.b16 %v3182
      %v3523 = vunpack.c.l.b16 %v3196
      %v3524 = vunpack.c.l.b16 %v3206
      %v3525 = vunpack.c.l.b16 %v3220
      %v3526 = vunpack.c.l.b16 %v3230
      %v3527 = vunpack.c.l.b16 %v3244
      %v3528 = vunpack.c.l.b16 %v3254
      %v3529 = vunpack.c.l.b16 %v3268
      %v3530 = vunpack.c.l.b16 %v3278
      %v3531 = vunpack.c.l.b16 %v3292
      %v3532 = vunpack.c.l.b16 %v3302
      %v3533 = vunpack.c.l.b16 %v3316
      %v3534 = vunpack.c.l.b16 %v3326
      %v3535 = vunpack.c.l.b16 %v3340
      %v3536 = vunpack.c.l.b16 %v3350
      %v3537 = vunpack.c.l.b16 %v3364
      %v3538 = vunpack.c.l.b16 %v3374
      %v3539 = vunpack.c.l.b16 %v3388
      %v3540 = vunpack.c.l.b16 %v3398
      %v3541 = vunpack.c.l.b16 %v3412
      %v3542 = vunpack.c.l.b16 %v3422
      %v3543 = vunpack.c.l.b16 %v3436
      %v3544 = vunpack.c.l.b16 %v3446
      %v3545 = vunpack.c.l.b16 %v3460
      %v3546 = vunpack.c.l.b16 %v3470
      %v3547 = vunpack.c.l.b16 %v3484
      %v3548 = vunpack.c.l.b16 %v3494
      %v3549 = vunpack.c.l.b16 %v3508
      %v3550 = vunpack.c.l.b16 %v3518
      %v3551 = vpack.c.b16 %v3520, %v3519
      %v3552 = vpack.c.b16 %v3522, %v3521
      %v3553 = vpack.c.b16 %v3524, %v3523
      %v3554 = vpack.c.b16 %v3526, %v3525
      %v3555 = vpack.c.b16 %v3528, %v3527
      %v3556 = vpack.c.b16 %v3530, %v3529
      %v3557 = vpack.c.b16 %v3532, %v3531
      %v3558 = vpack.c.b16 %v3534, %v3533
      %v3559 = vpack.c.b16 %v3536, %v3535
      %v3560 = vpack.c.b16 %v3538, %v3537
      %v3561 = vpack.c.b16 %v3540, %v3539
      %v3562 = vpack.c.b16 %v3542, %v3541
      %v3563 = vpack.c.b16 %v3544, %v3543
      %v3564 = vpack.c.b16 %v3546, %v3545
      %v3565 = vpack.c.b16 %v3548, %v3547
      %v3566 = vpack.c.b16 %v3550, %v3549
      %3567 = vrot.lane.b32.xlu0 %v3551, 28
      %v3568 = vpop.permute.xlu0 %3567
      %3569 = vrot.lane.b32.xlu0 %v3552, 28
      %v3570 = vpop.permute.xlu0 %3569
      %3571 = vrot.lane.b32.xlu0 %v3553, 28
      %v3572 = vpop.permute.xlu0 %3571
      %3573 = vrot.lane.b32.xlu0 %v3554, 28
      %v3574 = vpop.permute.xlu0 %3573
      %3575 = vrot.lane.b32.xlu0 %v3555, 28
      %v3576 = vpop.permute.xlu0 %3575
      %3577 = vrot.lane.b32.xlu0 %v3556, 28
      %v3578 = vpop.permute.xlu0 %3577
      %3579 = vrot.lane.b32.xlu0 %v3557, 28
      %v3580 = vpop.permute.xlu0 %3579
      %3581 = vrot.lane.b32.xlu0 %v3558, 28
      %v3582 = vpop.permute.xlu0 %3581
      %3583 = vrot.lane.b32.xlu0 %v3559, 28
      %v3584 = vpop.permute.xlu0 %3583
      %3585 = vrot.lane.b32.xlu0 %v3560, 28
      %v3586 = vpop.permute.xlu0 %3585
      %3587 = vrot.lane.b32.xlu0 %v3561, 28
      %v3588 = vpop.permute.xlu0 %3587
      %3589 = vrot.lane.b32.xlu0 %v3562, 28
      %v3590 = vpop.permute.xlu0 %3589
      %3591 = vrot.lane.b32.xlu0 %v3563, 28
      %v3592 = vpop.permute.xlu0 %3591
      %3593 = vrot.lane.b32.xlu0 %v3564, 28
      %v3594 = vpop.permute.xlu0 %3593
      %3595 = vrot.lane.b32.xlu0 %v3565, 28
      %v3596 = vpop.permute.xlu0 %3595
      %3597 = vrot.lane.b32.xlu0 %v3566, 28
      %v3598 = vpop.permute.xlu0 %3597
      %vm3615 = vcmask 261344
      %3616 = vst.msk [vmem:[#allocation3] sm:$0xff] %vm3615, %v3568
      %3617 = vst.msk [vmem:[#allocation3 + $0x8] sm:$0xff] %vm3615, %v3570
      %3618 = vst.msk [vmem:[#allocation3 + $0x10] sm:$0xff] %vm3615, %v3572
      %3619 = vst.msk [vmem:[#allocation3 + $0x18] sm:$0xff] %vm3615, %v3574
      %3620 = vst.msk [vmem:[#allocation3 + $0x20] sm:$0xff] %vm3615, %v3576
      %3621 = vst.msk [vmem:[#allocation3 + $0x28] sm:$0xff] %vm3615, %v3578
      %3622 = vst.msk [vmem:[#allocation3 + $0x30] sm:$0xff] %vm3615, %v3580
      %3623 = vst.msk [vmem:[#allocation3 + $0x38] sm:$0xff] %vm3615, %v3582
      %3624 = vst.msk [vmem:[#allocation3 + $0x40] sm:$0xff] %vm3615, %v3584
      %3625 = vst.msk [vmem:[#allocation3 + $0x48] sm:$0xff] %vm3615, %v3586
      %3626 = vst.msk [vmem:[#allocation3 + $0x50] sm:$0xff] %vm3615, %v3588
      %3627 = vst.msk [vmem:[#allocation3 + $0x58] sm:$0xff] %vm3615, %v3590
      %3628 = vst.msk [vmem:[#allocation3 + $0x60] sm:$0xff] %vm3615, %v3592
      %3629 = vst.msk [vmem:[#allocation3 + $0x68] sm:$0xff] %vm3615, %v3594
      %3630 = vst.msk [vmem:[#allocation3 + $0x70] sm:$0xff] %vm3615, %v3596
      %3631 = vst.msk [vmem:[#allocation3 + $0x78] sm:$0xff] %vm3615, %v3598
      %v3632 = vld [vmem:[%s2909] sm:$0xe]
      %v3633 = vld [vmem:[%s2909 + $0x4] sm:$0xf]
      %v3634 = vld [vmem:[%s2909 + $0x8] sm:$0x1]
      %v3635 = vld [vmem:[%s2909 + $0xc] sm:$0xe]
      %v3636 = vld [vmem:[%s2909 + $0x10] sm:$0xf]
      %v3637 = vld [vmem:[%s2909 + $0x14] sm:$0x1]
      %v3638 = vld [vmem:[%s2909 + $0x18] sm:$0xe]
      %v3639 = vld [vmem:[%s2909 + $0x1c] sm:$0xf]
      %v3640 = vld [vmem:[%s2909 + $0x20] sm:$0x1]
      %v3641 = vld [vmem:[%s2909 + $0x24] sm:$0xe]
      %v3642 = vld [vmem:[%s2909 + $0x28] sm:$0xf]
      %v3643 = vld [vmem:[%s2909 + $0x2c] sm:$0x1]
      %v3644 = vld [vmem:[%s2909 + $0x30] sm:$0xe]
      %v3645 = vld [vmem:[%s2909 + $0x34] sm:$0xf]
      %v3646 = vld [vmem:[%s2909 + $0x38] sm:$0x1]
      %v3647 = vld [vmem:[%s2909 + $0x3c] sm:$0xe]
      %v3648 = vld [vmem:[%s2909 + $0x40] sm:$0xf]
      %v3649 = vld [vmem:[%s2909 + $0x44] sm:$0x1]
      %v3650 = vld [vmem:[%s2909 + $0x48] sm:$0xe]
      %v3651 = vld [vmem:[%s2909 + $0x4c] sm:$0xf]
      %v3652 = vld [vmem:[%s2909 + $0x50] sm:$0x1]
      %v3653 = vld [vmem:[%s2909 + $0x54] sm:$0xe]
      %v3654 = vld [vmem:[%s2909 + $0x58] sm:$0xf]
      %v3655 = vld [vmem:[%s2909 + $0x5c] sm:$0x1]
      %v3656 = vld [vmem:[%s2909 + $0x60] sm:$0xe]
      %v3657 = vld [vmem:[%s2909 + $0x64] sm:$0xf]
      %v3658 = vld [vmem:[%s2909 + $0x68] sm:$0x1]
      %v3659 = vld [vmem:[%s2909 + $0x6c] sm:$0xe]
      %v3660 = vld [vmem:[%s2909 + $0x70] sm:$0xf]
      %v3661 = vld [vmem:[%s2909 + $0x74] sm:$0x1]
      %v3662 = vld [vmem:[%s2909 + $0x78] sm:$0xe]
      %v3663 = vld [vmem:[%s2909 + $0x7c] sm:$0xf]
      %v3664 = vld [vmem:[%s2909 + $0x80] sm:$0x1]
      %v3665 = vld [vmem:[%s2909 + $0x84] sm:$0xe]
      %v3666 = vld [vmem:[%s2909 + $0x88] sm:$0xf]
      %v3667 = vld [vmem:[%s2909 + $0x8c] sm:$0x1]
      %v3668 = vld [vmem:[%s2909 + $0x90] sm:$0xe]
      %v3669 = vld [vmem:[%s2909 + $0x94] sm:$0xf]
      %v3670 = vld [vmem:[%s2909 + $0x98] sm:$0x1]
      %v3671 = vld [vmem:[%s2909 + $0x9c] sm:$0xe]
      %v3672 = vld [vmem:[%s2909 + $0xa0] sm:$0xf]
      %v3673 = vld [vmem:[%s2909 + $0xa4] sm:$0x1]
      %v3674 = vld [vmem:[%s2909 + $0xa8] sm:$0xe]
      %v3675 = vld [vmem:[%s2909 + $0xac] sm:$0xf]
      %v3676 = vld [vmem:[%s2909 + $0xb0] sm:$0x1]
      %v3677 = vld [vmem:[%s2909 + $0xb4] sm:$0xe]
      %v3678 = vld [vmem:[%s2909 + $0xb8] sm:$0xf]
      %v3679 = vld [vmem:[%s2909 + $0xbc] sm:$0x1]
      %v3728 = vrot.slane %v3632, 5
      %v3729 = vrot.slane %v3728, 4
      %v3730 = vrot.slane %v3633, 5
      %v3731 = vsel %vm1640, %v3729, %v3730
      %v3732 = vrot.slane %v3730, 4
      %v3733 = vrot.slane %v3634, 5
      %v3734 = vsel %vm1640, %v3732, %v3733
      %v3735 = vrot.slane %v3635, 5
      %v3736 = vrot.slane %v3735, 4
      %v3737 = vrot.slane %v3636, 5
      %v3738 = vsel %vm1640, %v3736, %v3737
      %v3739 = vrot.slane %v3737, 4
      %v3740 = vrot.slane %v3637, 5
      %v3741 = vsel %vm1640, %v3739, %v3740
      %v3742 = vrot.slane %v3638, 5
      %v3743 = vrot.slane %v3742, 4
      %v3744 = vrot.slane %v3639, 5
      %v3745 = vsel %vm1640, %v3743, %v3744
      %v3746 = vrot.slane %v3744, 4
      %v3747 = vrot.slane %v3640, 5
      %v3748 = vsel %vm1640, %v3746, %v3747
      %v3749 = vrot.slane %v3641, 5
      %v3750 = vrot.slane %v3749, 4
      %v3751 = vrot.slane %v3642, 5
      %v3752 = vsel %vm1640, %v3750, %v3751
      %v3753 = vrot.slane %v3751, 4
      %v3754 = vrot.slane %v3643, 5
      %v3755 = vsel %vm1640, %v3753, %v3754
      %v3756 = vrot.slane %v3644, 5
      %v3757 = vrot.slane %v3756, 4
      %v3758 = vrot.slane %v3645, 5
      %v3759 = vsel %vm1640, %v3757, %v3758
      %v3760 = vrot.slane %v3758, 4
      %v3761 = vrot.slane %v3646, 5
      %v3762 = vsel %vm1640, %v3760, %v3761
      %v3763 = vrot.slane %v3647, 5
      %v3764 = vrot.slane %v3763, 4
      %v3765 = vrot.slane %v3648, 5
      %v3766 = vsel %vm1640, %v3764, %v3765
      %v3767 = vrot.slane %v3765, 4
      %v3768 = vrot.slane %v3649, 5
      %v3769 = vsel %vm1640, %v3767, %v3768
      %v3770 = vrot.slane %v3650, 5
      %v3771 = vrot.slane %v3770, 4
      %v3772 = vrot.slane %v3651, 5
      %v3773 = vsel %vm1640, %v3771, %v3772
      %v3774 = vrot.slane %v3772, 4
      %v3775 = vrot.slane %v3652, 5
      %v3776 = vsel %vm1640, %v3774, %v3775
      %v3777 = vrot.slane %v3653, 5
      %v3778 = vrot.slane %v3777, 4
      %v3779 = vrot.slane %v3654, 5
      %v3780 = vsel %vm1640, %v3778, %v3779
      %v3781 = vrot.slane %v3779, 4
      %v3782 = vrot.slane %v3655, 5
      %v3783 = vsel %vm1640, %v3781, %v3782
      %v3784 = vrot.slane %v3656, 5
      %v3785 = vrot.slane %v3784, 4
      %v3786 = vrot.slane %v3657, 5
      %v3787 = vsel %vm1640, %v3785, %v3786
      %v3788 = vrot.slane %v3786, 4
      %v3789 = vrot.slane %v3658, 5
      %v3790 = vsel %vm1640, %v3788, %v3789
      %v3791 = vrot.slane %v3659, 5
      %v3792 = vrot.slane %v3791, 4
      %v3793 = vrot.slane %v3660, 5
      %v3794 = vsel %vm1640, %v3792, %v3793
      %v3795 = vrot.slane %v3793, 4
      %v3796 = vrot.slane %v3661, 5
      %v3797 = vsel %vm1640, %v3795, %v3796
      %v3798 = vrot.slane %v3662, 5
      %v3799 = vrot.slane %v3798, 4
      %v3800 = vrot.slane %v3663, 5
      %v3801 = vsel %vm1640, %v3799, %v3800
      %v3802 = vrot.slane %v3800, 4
      %v3803 = vrot.slane %v3664, 5
      %v3804 = vsel %vm1640, %v3802, %v3803
      %v3805 = vrot.slane %v3665, 5
      %v3806 = vrot.slane %v3805, 4
      %v3807 = vrot.slane %v3666, 5
      %v3808 = vsel %vm1640, %v3806, %v3807
      %v3809 = vrot.slane %v3807, 4
      %v3810 = vrot.slane %v3667, 5
      %v3811 = vsel %vm1640, %v3809, %v3810
      %v3812 = vrot.slane %v3668, 5
      %v3813 = vrot.slane %v3812, 4
      %v3814 = vrot.slane %v3669, 5
      %v3815 = vsel %vm1640, %v3813, %v3814
      %v3816 = vrot.slane %v3814, 4
      %v3817 = vrot.slane %v3670, 5
      %v3818 = vsel %vm1640, %v3816, %v3817
      %v3819 = vrot.slane %v3671, 5
      %v3820 = vrot.slane %v3819, 4
      %v3821 = vrot.slane %v3672, 5
      %v3822 = vsel %vm1640, %v3820, %v3821
      %v3823 = vrot.slane %v3821, 4
      %v3824 = vrot.slane %v3673, 5
      %v3825 = vsel %vm1640, %v3823, %v3824
      %v3826 = vrot.slane %v3674, 5
      %v3827 = vrot.slane %v3826, 4
      %v3828 = vrot.slane %v3675, 5
      %v3829 = vsel %vm1640, %v3827, %v3828
      %v3830 = vrot.slane %v3828, 4
      %v3831 = vrot.slane %v3676, 5
      %v3832 = vsel %vm1640, %v3830, %v3831
      %v3833 = vrot.slane %v3677, 5
      %v3834 = vrot.slane %v3833, 4
      %v3835 = vrot.slane %v3678, 5
      %v3836 = vsel %vm1640, %v3834, %v3835
      %v3837 = vrot.slane %v3835, 4
      %v3838 = vrot.slane %v3679, 5
      %v3839 = vsel %vm1640, %v3837, %v3838
      %v3840 = vunpack.c.l.b16 %v3731
      %v3841 = vunpack.c.l.b16 %v3734
      %v3842 = vunpack.c.l.b16 %v3738
      %v3843 = vunpack.c.l.b16 %v3741
      %v3844 = vunpack.c.l.b16 %v3745
      %v3845 = vunpack.c.l.b16 %v3748
      %v3846 = vunpack.c.l.b16 %v3752
      %v3847 = vunpack.c.l.b16 %v3755
      %v3848 = vunpack.c.l.b16 %v3759
      %v3849 = vunpack.c.l.b16 %v3762
      %v3850 = vunpack.c.l.b16 %v3766
      %v3851 = vunpack.c.l.b16 %v3769
      %v3852 = vunpack.c.l.b16 %v3773
      %v3853 = vunpack.c.l.b16 %v3776
      %v3854 = vunpack.c.l.b16 %v3780
      %v3855 = vunpack.c.l.b16 %v3783
      %v3856 = vunpack.c.l.b16 %v3787
      %v3857 = vunpack.c.l.b16 %v3790
      %v3858 = vunpack.c.l.b16 %v3794
      %v3859 = vunpack.c.l.b16 %v3797
      %v3860 = vunpack.c.l.b16 %v3801
      %v3861 = vunpack.c.l.b16 %v3804
      %v3862 = vunpack.c.l.b16 %v3808
      %v3863 = vunpack.c.l.b16 %v3811
      %v3864 = vunpack.c.l.b16 %v3815
      %v3865 = vunpack.c.l.b16 %v3818
      %v3866 = vunpack.c.l.b16 %v3822
      %v3867 = vunpack.c.l.b16 %v3825
      %v3868 = vunpack.c.l.b16 %v3829
      %v3869 = vunpack.c.l.b16 %v3832
      %v3870 = vunpack.c.l.b16 %v3836
      %v3871 = vunpack.c.l.b16 %v3839
      %v3872 = vpack.c.b16 %v3841, %v3840
      %v3873 = vpack.c.b16 %v3843, %v3842
      %v3874 = vpack.c.b16 %v3845, %v3844
      %v3875 = vpack.c.b16 %v3847, %v3846
      %v3876 = vpack.c.b16 %v3849, %v3848
      %v3877 = vpack.c.b16 %v3851, %v3850
      %v3878 = vpack.c.b16 %v3853, %v3852
      %v3879 = vpack.c.b16 %v3855, %v3854
      %v3880 = vpack.c.b16 %v3857, %v3856
      %v3881 = vpack.c.b16 %v3859, %v3858
      %v3882 = vpack.c.b16 %v3861, %v3860
      %v3883 = vpack.c.b16 %v3863, %v3862
      %v3884 = vpack.c.b16 %v3865, %v3864
      %v3885 = vpack.c.b16 %v3867, %v3866
      %v3886 = vpack.c.b16 %v3869, %v3868
      %v3887 = vpack.c.b16 %v3871, %v3870
      %3888 = vrot.lane.b32.xlu0 %v3872, 32
      %v3889 = vpop.permute.xlu0 %3888
      %3890 = vrot.lane.b32.xlu0 %v3873, 32
      %v3891 = vpop.permute.xlu0 %3890
      %3892 = vrot.lane.b32.xlu0 %v3874, 32
      %v3893 = vpop.permute.xlu0 %3892
      %3894 = vrot.lane.b32.xlu0 %v3875, 32
      %v3895 = vpop.permute.xlu0 %3894
      %3896 = vrot.lane.b32.xlu0 %v3876, 32
      %v3897 = vpop.permute.xlu0 %3896
      %3898 = vrot.lane.b32.xlu0 %v3877, 32
      %v3899 = vpop.permute.xlu0 %3898
      %3900 = vrot.lane.b32.xlu0 %v3878, 32
      %v3901 = vpop.permute.xlu0 %3900
      %3902 = vrot.lane.b32.xlu0 %v3879, 32
      %v3903 = vpop.permute.xlu0 %3902
      %3904 = vrot.lane.b32.xlu0 %v3880, 32
      %v3905 = vpop.permute.xlu0 %3904
      %3906 = vrot.lane.b32.xlu0 %v3881, 32
      %v3907 = vpop.permute.xlu0 %3906
      %3908 = vrot.lane.b32.xlu0 %v3882, 32
      %v3909 = vpop.permute.xlu0 %3908
      %3910 = vrot.lane.b32.xlu0 %v3883, 32
      %v3911 = vpop.permute.xlu0 %3910
      %3912 = vrot.lane.b32.xlu0 %v3884, 32
      %v3913 = vpop.permute.xlu0 %3912
      %3914 = vrot.lane.b32.xlu0 %v3885, 32
      %v3915 = vpop.permute.xlu0 %3914
      %3916 = vrot.lane.b32.xlu0 %v3886, 32
      %v3917 = vpop.permute.xlu0 %3916
      %3918 = vrot.lane.b32.xlu0 %v3887, 32
      %v3919 = vpop.permute.xlu0 %3918
      %vm3936 = vcmask 294144
      %3937 = vst.msk [vmem:[#allocation3] sm:$0xff] %vm3936, %v3889
      %3938 = vst.msk [vmem:[#allocation3 + $0x8] sm:$0xff] %vm3936, %v3891
      %3939 = vst.msk [vmem:[#allocation3 + $0x10] sm:$0xff] %vm3936, %v3893
      %3940 = vst.msk [vmem:[#allocation3 + $0x18] sm:$0xff] %vm3936, %v3895
      %3941 = vst.msk [vmem:[#allocation3 + $0x20] sm:$0xff] %vm3936, %v3897
      %3942 = vst.msk [vmem:[#allocation3 + $0x28] sm:$0xff] %vm3936, %v3899
      %3943 = vst.msk [vmem:[#allocation3 + $0x30] sm:$0xff] %vm3936, %v3901
      %3944 = vst.msk [vmem:[#allocation3 + $0x38] sm:$0xff] %vm3936, %v3903
      %3945 = vst.msk [vmem:[#allocation3 + $0x40] sm:$0xff] %vm3936, %v3905
      %3946 = vst.msk [vmem:[#allocation3 + $0x48] sm:$0xff] %vm3936, %v3907
      %3947 = vst.msk [vmem:[#allocation3 + $0x50] sm:$0xff] %vm3936, %v3909
      %3948 = vst.msk [vmem:[#allocation3 + $0x58] sm:$0xff] %vm3936, %v3911
      %3949 = vst.msk [vmem:[#allocation3 + $0x60] sm:$0xff] %vm3936, %v3913
      %3950 = vst.msk [vmem:[#allocation3 + $0x68] sm:$0xff] %vm3936, %v3915
      %3951 = vst.msk [vmem:[#allocation3 + $0x70] sm:$0xff] %vm3936, %v3917
      %3952 = vst.msk [vmem:[#allocation3 + $0x78] sm:$0xff] %vm3936, %v3919
      %v3953 = vld [vmem:[#allocation3] sm:$0xff]
      %v3954 = vld [vmem:[#allocation3 + $0x8] sm:$0xff]
      %v3955 = vld [vmem:[#allocation3 + $0x10] sm:$0xff]
      %v3956 = vld [vmem:[#allocation3 + $0x18] sm:$0xff]
      %v3957 = vld [vmem:[#allocation3 + $0x20] sm:$0xff]
      %v3958 = vld [vmem:[#allocation3 + $0x28] sm:$0xff]
      %v3959 = vld [vmem:[#allocation3 + $0x30] sm:$0xff]
      %v3960 = vld [vmem:[#allocation3 + $0x38] sm:$0xff]
      %v3961 = vld [vmem:[#allocation3 + $0x40] sm:$0xff]
      %v3962 = vld [vmem:[#allocation3 + $0x48] sm:$0xff]
      %v3963 = vld [vmem:[#allocation3 + $0x50] sm:$0xff]
      %v3964 = vld [vmem:[#allocation3 + $0x58] sm:$0xff]
      %v3965 = vld [vmem:[#allocation3 + $0x60] sm:$0xff]
      %v3966 = vld [vmem:[#allocation3 + $0x68] sm:$0xff]
      %v3967 = vld [vmem:[#allocation3 + $0x70] sm:$0xff]
      %v3968 = vld [vmem:[#allocation3 + $0x78] sm:$0xff]
      %v3969 = vld [vmem:[%s3] sm:$0xf]
      %v3970 = vld [vmem:[%s3 + $0x4] sm:$0xf]
      %v3971 = vld [vmem:[%s3 + $0x8] sm:$0xf]
      %v3972 = vld [vmem:[%s3 + $0xc] sm:$0xf]
      %v3973 = vld [vmem:[%s3 + $0x10] sm:$0x3]
      %v3979 = vunpack.c.l.b16 %v3969
      %v3980 = vunpack.c.l.b16 %v3970
      %v3981 = vunpack.c.l.b16 %v3971
      %v3982 = vunpack.c.l.b16 %v3972
      %v3983 = vunpack.c.l.b16 %v3973
      %v3984 = vpack.c.b16 %v3980, %v3979
      %v3985 = vpack.c.b16 %v3982, %v3981
      %v3986 = vpack.c.b16 %v3983, %v3983
      %vm3989 = vcmask 293888
      %v3991 = vsel %vm3989, %v3953, 0
      %v3994 = vsel %vm3989, %v3954, 0
      %v3997 = vsel %vm3989, %v3955, 0
      %v4000 = vsel %vm3989, %v3956, 0
      %v4003 = vsel %vm3989, %v3957, 0
      %v4006 = vsel %vm3989, %v3958, 0
      %v4009 = vsel %vm3989, %v3959, 0
      %v4012 = vsel %vm3989, %v3960, 0
      %v4015 = vsel %vm3989, %v3961, 0
      %v4018 = vsel %vm3989, %v3962, 0
      %v4021 = vsel %vm3989, %v3963, 0
      %v4024 = vsel %vm3989, %v3964, 0
      %v4027 = vsel %vm3989, %v3965, 0
      %v4030 = vsel %vm3989, %v3966, 0
      %v4033 = vsel %vm3989, %v3967, 0
      %v4036 = vsel %vm3989, %v3968, 0
      %vm4038 = vcmask 1041408
      %v4040 = vsel %vm4038, %v3986, 0
      %4042 = vmatprep.subr.bf16.mxu0 0
      %4043 = vmatpush1.bf16.msra.mxu0 %v3984
      %4044 = vmatprep.subr.bf16.mxu0 0
      %4045 = vmatpush1.bf16.msra.mxu0 %v3985
      %4046 = vmatprep.subr.bf16.mxu0 0
      %4047 = vmatpush1.bf16.msra.mxu0 %v4040
      %4048 = vmatprep.subr.bf16.mxu0 0
      %4049 = vmatpush1.bf16.msra.mxu0 0
      %4050 = vmatprep.subr.bf16.mxu0 0
      %4051 = vmatpush1.bf16.msra.mxu0 0
      %4052 = vmatprep.subr.bf16.mxu0 0
      %4053 = vmatpush1.bf16.msra.mxu0 0
      %4054 = vmatprep.subr.bf16.mxu0 0
      %4055 = vmatpush1.bf16.msra.mxu0 0
      %4056 = vmatprep.subr.bf16.mxu0 0
      %4057 = vmatpush1.bf16.msra.mxu0 0
      %4058 = vmatprep.subr.bf16.mxu0 0
      %4059 = vmatpush1.bf16.msra.mxu0 0
      %4060 = vmatprep.subr.bf16.mxu0 0
      %4061 = vmatpush1.bf16.msra.mxu0 0
      %4062 = vmatprep.subr.bf16.mxu0 0
      %4063 = vmatpush1.bf16.msra.mxu0 0
      %4064 = vmatprep.subr.bf16.mxu0 0
      %4065 = vmatpush1.bf16.msra.mxu0 0
      %4066 = vmatprep.subr.bf16.mxu0 0
      %4067 = vmatpush1.bf16.msra.mxu0 0
      %4068 = vmatprep.subr.bf16.mxu0 0
      %4069 = vmatpush1.bf16.msra.mxu0 0
      %4070 = vmatprep.subr.bf16.mxu0 0
      %4071 = vmatpush1.bf16.msra.mxu0 0
      %4072 = vmatprep.subr.bf16.mxu0 0
      %4073 = vmatpush1.bf16.msra.mxu0 0
      %4074 = vmatprep.mubr.bf16.mxu0 0
      %4075 = vmatmul.mubr.bf16.gmra.mrb[0].mxu0 %v3991
      %v4076 = vpop.f32.mrb[0].mxu0
      %v4077 = vadd.f32 0.0, %v4076
      %v4078 = vpop.f32.mrb[0].mxu0
      %v4079 = vpop.f32.mrb[0].mxu0
      %v4080 = vadd.f32 0.0, %v4079
      %v4081 = vpop.f32.mrb[0].mxu0
      %4082 = vmatprep.mubr.bf16.mxu0 0
      %4083 = vmatmul.mubr.bf16.gmra.mrb[0].mxu0 %v3994
      %v4084 = vpop.f32.mrb[0].mxu0
      %v4085 = vadd.f32 0.0, %v4084
      %v4086 = vpop.f32.mrb[0].mxu0
      %v4087 = vpop.f32.mrb[0].mxu0
      %v4088 = vadd.f32 0.0, %v4087
      %v4089 = vpop.f32.mrb[0].mxu0
      %4090 = vmatprep.mubr.bf16.mxu0 0
      %4091 = vmatmul.mubr.bf16.gmra.mrb[0].mxu0 %v3997
      %v4092 = vpop.f32.mrb[0].mxu0
      %v4093 = vadd.f32 0.0, %v4092
      %v4094 = vpop.f32.mrb[0].mxu0
      %v4095 = vpop.f32.mrb[0].mxu0
      %v4096 = vadd.f32 0.0, %v4095
      %v4097 = vpop.f32.mrb[0].mxu0
      %4098 = vmatprep.mubr.bf16.mxu0 0
      %4099 = vmatmul.mubr.bf16.gmra.mrb[0].mxu0 %v4000
      %v4100 = vpop.f32.mrb[0].mxu0
      %v4101 = vadd.f32 0.0, %v4100
      %v4102 = vpop.f32.mrb[0].mxu0
      %v4103 = vpop.f32.mrb[0].mxu0
      %v4104 = vadd.f32 0.0, %v4103
      %v4105 = vpop.f32.mrb[0].mxu0
      %4106 = vmatprep.mubr.bf16.mxu0 0
      %4107 = vmatmul.mubr.bf16.gmra.mrb[0].mxu0 %v4003
      %v4108 = vpop.f32.mrb[0].mxu0
      %v4109 = vadd.f32 0.0, %v4108
      %v4110 = vpop.f32.mrb[0].mxu0
      %v4111 = vpop.f32.mrb[0].mxu0
      %v4112 = vadd.f32 0.0, %v4111
      %v4113 = vpop.f32.mrb[0].mxu0
      %4114 = vmatprep.mubr.bf16.mxu0 0
      %4115 = vmatmul.mubr.bf16.gmra.mrb[0].mxu0 %v4006
      %v4116 = vpop.f32.mrb[0].mxu0
      %v4117 = vadd.f32 0.0, %v4116
      %v4118 = vpop.f32.mrb[0].mxu0
      %v4119 = vpop.f32.mrb[0].mxu0
      %v4120 = vadd.f32 0.0, %v4119
      %v4121 = vpop.f32.mrb[0].mxu0
      %4122 = vmatprep.mubr.bf16.mxu0 0
      %4123 = vmatmul.mubr.bf16.gmra.mrb[0].mxu0 %v4009
      %v4124 = vpop.f32.mrb[0].mxu0
      %v4125 = vadd.f32 0.0, %v4124
      %v4126 = vpop.f32.mrb[0].mxu0
      %v4127 = vpop.f32.mrb[0].mxu0
      %v4128 = vadd.f32 0.0, %v4127
      %v4129 = vpop.f32.mrb[0].mxu0
      %4130 = vmatprep.mubr.bf16.mxu0 0
      %4131 = vmatmul.mubr.bf16.gmra.mrb[0].mxu0 %v4012
      %v4132 = vpop.f32.mrb[0].mxu0
      %v4133 = vadd.f32 0.0, %v4132
      %v4134 = vpop.f32.mrb[0].mxu0
      %v4135 = vpop.f32.mrb[0].mxu0
      %v4136 = vadd.f32 0.0, %v4135
      %v4137 = vpop.f32.mrb[0].mxu0
      %4138 = vmatprep.mubr.bf16.mxu0 0
      %4139 = vmatmul.mubr.bf16.gmra.mrb[0].mxu0 %v4015
      %v4140 = vpop.f32.mrb[0].mxu0
      %v4141 = vadd.f32 0.0, %v4140
      %v4142 = vpop.f32.mrb[0].mxu0
      %v4143 = vpop.f32.mrb[0].mxu0
      %v4144 = vadd.f32 0.0, %v4143
      %v4145 = vpop.f32.mrb[0].mxu0
      %4146 = vmatprep.mubr.bf16.mxu0 0
      %4147 = vmatmul.mubr.bf16.gmra.mrb[0].mxu0 %v4018
      %v4148 = vpop.f32.mrb[0].mxu0
      %v4149 = vadd.f32 0.0, %v4148
      %v4150 = vpop.f32.mrb[0].mxu0
      %v4151 = vpop.f32.mrb[0].mxu0
      %v4152 = vadd.f32 0.0, %v4151
      %v4153 = vpop.f32.mrb[0].mxu0
      %4154 = vmatprep.mubr.bf16.mxu0 0
      %4155 = vmatmul.mubr.bf16.gmra.mrb[0].mxu0 %v4021
      %v4156 = vpop.f32.mrb[0].mxu0
      %v4157 = vadd.f32 0.0, %v4156
      %v4158 = vpop.f32.mrb[0].mxu0
      %v4159 = vpop.f32.mrb[0].mxu0
      %v4160 = vadd.f32 0.0, %v4159
      %v4161 = vpop.f32.mrb[0].mxu0
      %4162 = vmatprep.mubr.bf16.mxu0 0
      %4163 = vmatmul.mubr.bf16.gmra.mrb[0].mxu0 %v4024
      %v4164 = vpop.f32.mrb[0].mxu0
      %v4165 = vadd.f32 0.0, %v4164
      %v4166 = vpop.f32.mrb[0].mxu0
      %v4167 = vpop.f32.mrb[0].mxu0
      %v4168 = vadd.f32 0.0, %v4167
      %v4169 = vpop.f32.mrb[0].mxu0
      %4170 = vmatprep.mubr.bf16.mxu0 0
      %4171 = vmatmul.mubr.bf16.gmra.mrb[0].mxu0 %v4027
      %v4172 = vpop.f32.mrb[0].mxu0
      %v4173 = vadd.f32 0.0, %v4172
      %v4174 = vpop.f32.mrb[0].mxu0
      %v4175 = vpop.f32.mrb[0].mxu0
      %v4176 = vadd.f32 0.0, %v4175
      %v4177 = vpop.f32.mrb[0].mxu0
      %4178 = vmatprep.mubr.bf16.mxu0 0
      %4179 = vmatmul.mubr.bf16.gmra.mrb[0].mxu0 %v4030
      %v4180 = vpop.f32.mrb[0].mxu0
      %v4181 = vadd.f32 0.0, %v4180
      %v4182 = vpop.f32.mrb[0].mxu0
      %v4183 = vpop.f32.mrb[0].mxu0
      %v4184 = vadd.f32 0.0, %v4183
      %v4185 = vpop.f32.mrb[0].mxu0
      %4186 = vmatprep.mubr.bf16.mxu0 0
      %4187 = vmatmul.mubr.bf16.gmra.mrb[0].mxu0 %v4033
      %v4188 = vpop.f32.mrb[0].mxu0
      %v4189 = vadd.f32 0.0, %v4188
      %v4190 = vpop.f32.mrb[0].mxu0
      %v4191 = vpop.f32.mrb[0].mxu0
      %v4192 = vadd.f32 0.0, %v4191
      %v4193 = vpop.f32.mrb[0].mxu0
      %4194 = vmatprep.mubr.bf16.mxu0 0
      %4195 = vmatmul.mubr.bf16.gmra.mrb[0].mxu0 %v4036
      %v4196 = vpop.f32.mrb[0].mxu0
      %v4197 = vadd.f32 0.0, %v4196
      %v4198 = vpop.f32.mrb[0].mxu0
      %v4199 = vpop.f32.mrb[0].mxu0
      %v4200 = vadd.f32 0.0, %v4199
      %v4201 = vpop.f32.mrb[0].mxu0
      %4202 = vdwg.mxu0
      %v4203 = vpack.c.bf16 %v4080, %v4077
      %v4204 = vpack.c.bf16 %v4088, %v4085
      %v4205 = vpack.c.bf16 %v4096, %v4093
      %v4206 = vpack.c.bf16 %v4104, %v4101
      %v4207 = vpack.c.bf16 %v4112, %v4109
      %v4208 = vpack.c.bf16 %v4120, %v4117
      %v4209 = vpack.c.bf16 %v4128, %v4125
      %v4210 = vpack.c.bf16 %v4136, %v4133
      %v4211 = vpack.c.bf16 %v4144, %v4141
      %v4212 = vpack.c.bf16 %v4152, %v4149
      %v4213 = vpack.c.bf16 %v4160, %v4157
      %v4214 = vpack.c.bf16 %v4168, %v4165
      %v4215 = vpack.c.bf16 %v4176, %v4173
      %v4216 = vpack.c.bf16 %v4184, %v4181
      %v4217 = vpack.c.bf16 %v4192, %v4189
      %v4218 = vpack.c.bf16 %v4200, %v4197
      %v4235 = vunpack.c.l.b16 %v4203
      %v4236 = vunpack.c.h.b16 %v4203
      %v4237 = vunpack.c.l.b16 %v4204
      %v4238 = vunpack.c.h.b16 %v4204
      %v4239 = vunpack.c.l.b16 %v4205
      %v4240 = vunpack.c.h.b16 %v4205
      %v4241 = vunpack.c.l.b16 %v4206
      %v4242 = vunpack.c.h.b16 %v4206
      %v4243 = vunpack.c.l.b16 %v4207
      %v4244 = vunpack.c.h.b16 %v4207
      %v4245 = vunpack.c.l.b16 %v4208
      %v4246 = vunpack.c.h.b16 %v4208
      %v4247 = vunpack.c.l.b16 %v4209
      %v4248 = vunpack.c.h.b16 %v4209
      %v4249 = vunpack.c.l.b16 %v4210
      %v4250 = vunpack.c.h.b16 %v4210
      %v4251 = vunpack.c.l.b16 %v4211
      %v4252 = vunpack.c.h.b16 %v4211
      %v4253 = vunpack.c.l.b16 %v4212
      %v4254 = vunpack.c.h.b16 %v4212
      %v4255 = vunpack.c.l.b16 %v4213
      %v4256 = vunpack.c.h.b16 %v4213
      %v4257 = vunpack.c.l.b16 %v4214
      %v4258 = vunpack.c.h.b16 %v4214
      %v4259 = vunpack.c.l.b16 %v4215
      %v4260 = vunpack.c.h.b16 %v4215
      %v4261 = vunpack.c.l.b16 %v4216
      %v4262 = vunpack.c.h.b16 %v4216
      %v4263 = vunpack.c.l.b16 %v4217
      %v4264 = vunpack.c.h.b16 %v4217
      %v4265 = vunpack.c.l.b16 %v4218
      %v4266 = vunpack.c.h.b16 %v4218
      %v4267 = vpack.c.b16 %v4235, %v4235
      %v4268 = vpack.c.b16 %v4236, %v4236
      %v4269 = vpack.c.b16 %v4237, %v4237
      %v4270 = vpack.c.b16 %v4238, %v4238
      %v4271 = vpack.c.b16 %v4239, %v4239
      %v4272 = vpack.c.b16 %v4240, %v4240
      %v4273 = vpack.c.b16 %v4241, %v4241
      %v4274 = vpack.c.b16 %v4242, %v4242
      %v4275 = vpack.c.b16 %v4243, %v4243
      %v4276 = vpack.c.b16 %v4244, %v4244
      %v4277 = vpack.c.b16 %v4245, %v4245
      %v4278 = vpack.c.b16 %v4246, %v4246
      %v4279 = vpack.c.b16 %v4247, %v4247
      %v4280 = vpack.c.b16 %v4248, %v4248
      %v4281 = vpack.c.b16 %v4249, %v4249
      %v4282 = vpack.c.b16 %v4250, %v4250
      %v4283 = vpack.c.b16 %v4251, %v4251
      %v4284 = vpack.c.b16 %v4252, %v4252
      %v4285 = vpack.c.b16 %v4253, %v4253
      %v4286 = vpack.c.b16 %v4254, %v4254
      %v4287 = vpack.c.b16 %v4255, %v4255
      %v4288 = vpack.c.b16 %v4256, %v4256
      %v4289 = vpack.c.b16 %v4257, %v4257
      %v4290 = vpack.c.b16 %v4258, %v4258
      %v4291 = vpack.c.b16 %v4259, %v4259
      %v4292 = vpack.c.b16 %v4260, %v4260
      %v4293 = vpack.c.b16 %v4261, %v4261
      %v4294 = vpack.c.b16 %v4262, %v4262
      %v4295 = vpack.c.b16 %v4263, %v4263
      %v4296 = vpack.c.b16 %v4264, %v4264
      %v4297 = vpack.c.b16 %v4265, %v4265
      %v4298 = vpack.c.b16 %v4266, %v4266
      %vm4331 = vcmask 257024
      %4332 = vst.msk [vmem:[%s262] sm:$0xf] %vm4331, %v4267
      %4333 = vst.msk [vmem:[%s262 + $0x4] sm:$0xf] %vm4331, %v4268
      %4334 = vst.msk [vmem:[%s262 + $0x8] sm:$0xf] %vm4331, %v4269
      %4335 = vst.msk [vmem:[%s262 + $0xc] sm:$0xf] %vm4331, %v4270
      %4336 = vst.msk [vmem:[%s262 + $0x10] sm:$0xf] %vm4331, %v4271
      %4337 = vst.msk [vmem:[%s262 + $0x14] sm:$0xf] %vm4331, %v4272
      %4338 = vst.msk [vmem:[%s262 + $0x18] sm:$0xf] %vm4331, %v4273
      %4339 = vst.msk [vmem:[%s262 + $0x1c] sm:$0xf] %vm4331, %v4274
      %4340 = vst.msk [vmem:[%s262 + $0x20] sm:$0xf] %vm4331, %v4275
      %4341 = vst.msk [vmem:[%s262 + $0x24] sm:$0xf] %vm4331, %v4276
      %4342 = vst.msk [vmem:[%s262 + $0x28] sm:$0xf] %vm4331, %v4277
      %4343 = vst.msk [vmem:[%s262 + $0x2c] sm:$0xf] %vm4331, %v4278
      %4344 = vst.msk [vmem:[%s262 + $0x30] sm:$0xf] %vm4331, %v4279
      %4345 = vst.msk [vmem:[%s262 + $0x34] sm:$0xf] %vm4331, %v4280
      %4346 = vst.msk [vmem:[%s262 + $0x38] sm:$0xf] %vm4331, %v4281
      %4347 = vst.msk [vmem:[%s262 + $0x3c] sm:$0xf] %vm4331, %v4282
      %4348 = vst.msk [vmem:[%s262 + $0x40] sm:$0xf] %vm4331, %v4283
      %4349 = vst.msk [vmem:[%s262 + $0x44] sm:$0xf] %vm4331, %v4284
      %4350 = vst.msk [vmem:[%s262 + $0x48] sm:$0xf] %vm4331, %v4285
      %4351 = vst.msk [vmem:[%s262 + $0x4c] sm:$0xf] %vm4331, %v4286
      %4352 = vst.msk [vmem:[%s262 + $0x50] sm:$0xf] %vm4331, %v4287
      %4353 = vst.msk [vmem:[%s262 + $0x54] sm:$0xf] %vm4331, %v4288
      %4354 = vst.msk [vmem:[%s262 + $0x58] sm:$0xf] %vm4331, %v4289
      %4355 = vst.msk [vmem:[%s262 + $0x5c] sm:$0xf] %vm4331, %v4290
      %4356 = vst.msk [vmem:[%s262 + $0x60] sm:$0xf] %vm4331, %v4291
      %4357 = vst.msk [vmem:[%s262 + $0x64] sm:$0xf] %vm4331, %v4292
      %4358 = vst.msk [vmem:[%s262 + $0x68] sm:$0xf] %vm4331, %v4293
      %4359 = vst.msk [vmem:[%s262 + $0x6c] sm:$0xf] %vm4331, %v4294
      %4360 = vst.msk [vmem:[%s262 + $0x70] sm:$0xf] %vm4331, %v4295
      %4361 = vst.msk [vmem:[%s262 + $0x74] sm:$0xf] %vm4331, %v4296
      %4362 = vst.msk [vmem:[%s262 + $0x78] sm:$0xf] %vm4331, %v4297
      %4363 = vst.msk [vmem:[%s262 + $0x7c] sm:$0xf] %vm4331, %v4298
      %vm4364 = vcmask 261120
      %v4365 = vsel %vm4364, %v4077, 0.0
      %v4366 = vsel %vm4364, %v4080, 0.0
      %v4367 = vadd.f32 %v4365, %v4366
      %v4368 = vsel %vm4364, %v4085, 0.0
      %v4369 = vadd.f32 %v4367, %v4368
      %v4370 = vsel %vm4364, %v4088, 0.0
      %v4371 = vadd.f32 %v4369, %v4370
      %v4372 = vsel %vm4364, %v4093, 0.0
      %v4373 = vadd.f32 %v4371, %v4372
      %v4374 = vsel %vm4364, %v4096, 0.0
      %v4375 = vadd.f32 %v4373, %v4374
      %v4376 = vsel %vm4364, %v4101, 0.0
      %v4377 = vadd.f32 %v4375, %v4376
      %v4378 = vsel %vm4364, %v4104, 0.0
      %v4379 = vadd.f32 %v4377, %v4378
      %v4380 = vsel %vm4364, %v4109, 0.0
      %v4381 = vadd.f32 %v4379, %v4380
      %v4382 = vsel %vm4364, %v4112, 0.0
      %v4383 = vadd.f32 %v4381, %v4382
      %v4384 = vsel %vm4364, %v4117, 0.0
      %v4385 = vadd.f32 %v4383, %v4384
      %v4386 = vsel %vm4364, %v4120, 0.0
      %v4387 = vadd.f32 %v4385, %v4386
      %v4388 = vsel %vm4364, %v4125, 0.0
      %v4389 = vadd.f32 %v4387, %v4388
      %v4390 = vsel %vm4364, %v4128, 0.0
      %v4391 = vadd.f32 %v4389, %v4390
      %v4392 = vsel %vm4364, %v4133, 0.0
      %v4393 = vadd.f32 %v4391, %v4392
      %v4394 = vsel %vm4364, %v4136, 0.0
      %v4395 = vadd.f32 %v4393, %v4394
      %v4396 = vsel %vm4364, %v4141, 0.0
      %v4397 = vadd.f32 %v4395, %v4396
      %v4398 = vsel %vm4364, %v4144, 0.0
      %v4399 = vadd.f32 %v4397, %v4398
      %v4400 = vsel %vm4364, %v4149, 0.0
      %v4401 = vadd.f32 %v4399, %v4400
      %v4402 = vsel %vm4364, %v4152, 0.0
      %v4403 = vadd.f32 %v4401, %v4402
      %v4404 = vsel %vm4364, %v4157, 0.0
      %v4405 = vadd.f32 %v4403, %v4404
      %v4406 = vsel %vm4364, %v4160, 0.0
      %v4407 = vadd.f32 %v4405, %v4406
      %v4408 = vsel %vm4364, %v4165, 0.0
      %v4409 = vadd.f32 %v4407, %v4408
      %v4410 = vsel %vm4364, %v4168, 0.0
      %v4411 = vadd.f32 %v4409, %v4410
      %v4412 = vsel %vm4364, %v4173, 0.0
      %v4413 = vadd.f32 %v4411, %v4412
      %v4414 = vsel %vm4364, %v4176, 0.0
      %v4415 = vadd.f32 %v4413, %v4414
      %v4416 = vsel %vm4364, %v4181, 0.0
      %v4417 = vadd.f32 %v4415, %v4416
      %v4418 = vsel %vm4364, %v4184, 0.0
      %v4419 = vadd.f32 %v4417, %v4418
      %v4420 = vsel %vm4364, %v4189, 0.0
      %v4421 = vadd.f32 %v4419, %v4420
      %v4422 = vsel %vm4364, %v4192, 0.0
      %v4423 = vadd.f32 %v4421, %v4422
      %v4424 = vsel %vm4364, %v4197, 0.0
      %v4425 = vadd.f32 %v4423, %v4424
      %v4426 = vsel %vm4364, %v4200, 0.0
      %v4427 = vadd.f32 %v4425, %v4426
      %v4428 = vrot.slane %v4427, 4
      %v4429 = vadd.f32 %v4427, %v4428
      %v4430 = vrot.slane %v4429, 2
      %v4431 = vadd.f32 %v4429, %v4430
      %v4432 = vrot.slane %v4431, 1
      %v4433 = vadd.f32 %v4431, %v4432
      %vm4434 = vcmask 253952
      %4435 = vst.msk [vmem:[%s265] sm:$0x1] %vm4434, %v4433
      %v4436 = vmul.f32 %v4077, %v4077
      %v4437 = vmul.f32 %v4080, %v4080
      %v4438 = vmul.f32 %v4085, %v4085
      %v4439 = vmul.f32 %v4088, %v4088
      %v4440 = vmul.f32 %v4093, %v4093
      %v4441 = vmul.f32 %v4096, %v4096
      %v4442 = vmul.f32 %v4101, %v4101
      %v4443 = vmul.f32 %v4104, %v4104
      %v4444 = vmul.f32 %v4109, %v4109
      %v4445 = vmul.f32 %v4112, %v4112
      %v4446 = vmul.f32 %v4117, %v4117
      %v4447 = vmul.f32 %v4120, %v4120
      %v4448 = vmul.f32 %v4125, %v4125
      %v4449 = vmul.f32 %v4128, %v4128
      %v4450 = vmul.f32 %v4133, %v4133
      %v4451 = vmul.f32 %v4136, %v4136
      %v4452 = vmul.f32 %v4141, %v4141
      %v4453 = vmul.f32 %v4144, %v4144
      %v4454 = vmul.f32 %v4149, %v4149
      %v4455 = vmul.f32 %v4152, %v4152
      %v4456 = vmul.f32 %v4157, %v4157
      %v4457 = vmul.f32 %v4160, %v4160
      %v4458 = vmul.f32 %v4165, %v4165
      %v4459 = vmul.f32 %v4168, %v4168
      %v4460 = vmul.f32 %v4173, %v4173
      %v4461 = vmul.f32 %v4176, %v4176
      %v4462 = vmul.f32 %v4181, %v4181
      %v4463 = vmul.f32 %v4184, %v4184
      %v4464 = vmul.f32 %v4189, %v4189
      %v4465 = vmul.f32 %v4192, %v4192
      %v4466 = vmul.f32 %v4197, %v4197
      %v4467 = vmul.f32 %v4200, %v4200
      %v4468 = vsel %vm4364, %v4436, 0.0
      %v4469 = vsel %vm4364, %v4437, 0.0
      %v4470 = vadd.f32 %v4468, %v4469
      %v4471 = vsel %vm4364, %v4438, 0.0
      %v4472 = vadd.f32 %v4470, %v4471
      %v4473 = vsel %vm4364, %v4439, 0.0
      %v4474 = vadd.f32 %v4472, %v4473
      %v4475 = vsel %vm4364, %v4440, 0.0
      %v4476 = vadd.f32 %v4474, %v4475
      %v4477 = vsel %vm4364, %v4441, 0.0
      %v4478 = vadd.f32 %v4476, %v4477
      %v4479 = vsel %vm4364, %v4442, 0.0
      %v4480 = vadd.f32 %v4478, %v4479
      %v4481 = vsel %vm4364, %v4443, 0.0
      %v4482 = vadd.f32 %v4480, %v4481
      %v4483 = vsel %vm4364, %v4444, 0.0
      %v4484 = vadd.f32 %v4482, %v4483
      %v4485 = vsel %vm4364, %v4445, 0.0
      %v4486 = vadd.f32 %v4484, %v4485
      %v4487 = vsel %vm4364, %v4446, 0.0
      %v4488 = vadd.f32 %v4486, %v4487
      %v4489 = vsel %vm4364, %v4447, 0.0
      %v4490 = vadd.f32 %v4488, %v4489
      %v4491 = vsel %vm4364, %v4448, 0.0
      %v4492 = vadd.f32 %v4490, %v4491
      %v4493 = vsel %vm4364, %v4449, 0.0
      %v4494 = vadd.f32 %v4492, %v4493
      %v4495 = vsel %vm4364, %v4450, 0.0
      %v4496 = vadd.f32 %v4494, %v4495
      %v4497 = vsel %vm4364, %v4451, 0.0
      %v4498 = vadd.f32 %v4496, %v4497
      %v4499 = vsel %vm4364, %v4452, 0.0
      %v4500 = vadd.f32 %v4498, %v4499
      %v4501 = vsel %vm4364, %v4453, 0.0
      %v4502 = vadd.f32 %v4500, %v4501
      %v4503 = vsel %vm4364, %v4454, 0.0
      %v4504 = vadd.f32 %v4502, %v4503
      %v4505 = vsel %vm4364, %v4455, 0.0
      %v4506 = vadd.f32 %v4504, %v4505
      %v4507 = vsel %vm4364, %v4456, 0.0
      %v4508 = vadd.f32 %v4506, %v4507
      %v4509 = vsel %vm4364, %v4457, 0.0
      %v4510 = vadd.f32 %v4508, %v4509
      %v4511 = vsel %vm4364, %v4458, 0.0
      %v4512 = vadd.f32 %v4510, %v4511
      %v4513 = vsel %vm4364, %v4459, 0.0
      %v4514 = vadd.f32 %v4512, %v4513
      %v4515 = vsel %vm4364, %v4460, 0.0
      %v4516 = vadd.f32 %v4514, %v4515
      %v4517 = vsel %vm4364, %v4461, 0.0
      %v4518 = vadd.f32 %v4516, %v4517
      %v4519 = vsel %vm4364, %v4462, 0.0
      %v4520 = vadd.f32 %v4518, %v4519
      %v4521 = vsel %vm4364, %v4463, 0.0
      %v4522 = vadd.f32 %v4520, %v4521
      %v4523 = vsel %vm4364, %v4464, 0.0
      %v4524 = vadd.f32 %v4522, %v4523
      %v4525 = vsel %vm4364, %v4465, 0.0
      %v4526 = vadd.f32 %v4524, %v4525
      %v4527 = vsel %vm4364, %v4466, 0.0
      %v4528 = vadd.f32 %v4526, %v4527
      %v4529 = vsel %vm4364, %v4467, 0.0
      %v4530 = vadd.f32 %v4528, %v4529
      %v4531 = vrot.slane %v4530, 4
      %v4532 = vadd.f32 %v4530, %v4531
      %v4533 = vrot.slane %v4532, 2
      %v4534 = vadd.f32 %v4532, %v4533
      %v4535 = vrot.slane %v4534, 1
      %v4536 = vadd.f32 %v4534, %v4535
      %4537 = vst.msk [vmem:[%s268] sm:$0x1] %vm4434, %v4536
      %p4538 = scmp.lt.s32.totalorder %s18, 1
      %s4539 = scalar_select %p4538, %s18, 1
      %s4540 = smul.addr %s4539, 32
      %s4541 = smul.addr %s4540, 4
      %s4542 = scalar_lea.vmem %s4, %s4541
      %p4543 = scmp.lt.s32.totalorder %s18, 1
      %s4544 = scalar_select %p4543, %s18, 1
      %s4545 = scalar_lea.vmem %s5, %s4544
      %p4546 = scmp.lt.s32.totalorder %s18, 1
      %s4547 = scalar_select %p4546, %s18, 1
      %s4548 = scalar_lea.vmem %s6, %s4547
      // Predicated region
      $region37: #{res_conv_layer_forward.3} parent=35 // pred_check
        %p4549 = pneg %p125
      $region38: #{res_conv_layer_forward.3} parent=35 // pred_check_branch
        %4551 = sbr.rel (%p4549) target = $region40
      $region39: #{res_conv_layer_forward.3} parent=35 // pred_region
        _
      $region40: #{res_conv_layer_forward.3} parent=35 // pred_fallthru
        _
      // Predicated region
      $region41: #{res_conv_layer_forward.3} parent=35 // pred_check
        %p4552 = pneg %p151
      $region42: #{res_conv_layer_forward.3} parent=35 // pred_check_branch
        %4554 = sbr.rel (%p4552) target = $region44
      $region43: #{res_conv_layer_forward.3} parent=35 // pred_region
        _
      $region44: #{res_conv_layer_forward.3} parent=35 // pred_fallthru
        _
      // Predicated region
      $region45: #{res_conv_layer_forward.3} parent=35 // pred_check
        %p4555 = pneg %p177
      $region46: #{res_conv_layer_forward.3} parent=35 // pred_check_branch
        %4557 = sbr.rel (%p4555) target = $region48
      $region47: #{res_conv_layer_forward.3} parent=35 // pred_region
        _
      $region48: #{res_conv_layer_forward.3} parent=35 // pred_fallthru
        _
    $region36: #{res_conv_layer_forward.3} parent=5 // pred_fallthru
      _
    %p4558 = scmp.le.s32.totalorder 2, %s13
    // Predicated region
    $region49: #{res_conv_layer_forward.3} parent=5 // pred_check
      %p4559 = pneg %p4558
    $region50: #{res_conv_layer_forward.3} parent=5 // pred_check_branch
      %4561 = sbr.rel (%p4559) target = $region52
    $region51: #{res_conv_layer_forward.3} parent=5 // pred_region
      %s4562 = ssub.s32 %s13, 2
      // Predicated region
      $region53: #{res_conv_layer_forward.3} parent=51 // pred_check
        %p4563 = pneg %p131
      $region54: #{res_conv_layer_forward.3} parent=51 // pred_check_branch
        %4565 = sbr.rel (%p4563) target = $region56
      $region55: #{res_conv_layer_forward.3} parent=51 // pred_region
        %p4566 = scmp.lt.s32.totalorder %s19, 1
        %s4567 = scalar_select %p4566, %s19, 1
        %s4568 = smul.addr %s4567, 32
        %s4569 = smul.addr %s4568, 4
        %s4570 = scalar_lea.vmem %s4, %s4569
      $region56: #{res_conv_layer_forward.3} parent=51 // pred_fallthru
        _
      // Predicated region
      $region57: #{res_conv_layer_forward.3} parent=51 // pred_check
        %p4571 = pneg %p157
      $region58: #{res_conv_layer_forward.3} parent=51 // pred_check_branch
        %4573 = sbr.rel (%p4571) target = $region60
      $region59: #{res_conv_layer_forward.3} parent=51 // pred_region
        %p4574 = scmp.lt.s32.totalorder %s19, 1
        %s4575 = scalar_select %p4574, %s19, 1
        %s4576 = scalar_lea.vmem %s5, %s4575
      $region60: #{res_conv_layer_forward.3} parent=51 // pred_fallthru
        _
      // Predicated region
      $region61: #{res_conv_layer_forward.3} parent=51 // pred_check
        %p4577 = pneg %p183
      $region62: #{res_conv_layer_forward.3} parent=51 // pred_check_branch
        %4579 = sbr.rel (%p4577) target = $region64
      $region63: #{res_conv_layer_forward.3} parent=51 // pred_region
        %p4580 = scmp.lt.s32.totalorder %s19, 1
        %s4581 = scalar_select %p4580, %s19, 1
        %s4582 = scalar_lea.vmem %s6, %s4581
      $region64: #{res_conv_layer_forward.3} parent=51 // pred_fallthru
        _
    $region52: #{res_conv_layer_forward.3} parent=5 // pred_fallthru
      _
  $region6: #{res_conv_layer_forward.3} parent=0 // loop_footer
    %s17 = sadd.s32 1, %s13
  $region7: #{res_conv_layer_forward.3} parent=0 // loop_footer_branch
    %12 = sbr.rel target = $region3
  $region8: #{res_conv_layer_forward.3} parent=0 // loop_exit
    _

</llo_original>
